<compile_context>
chip_gen: v7x
topology: tpu7x:2x2x1
jax: 0.10.0
libtpu: 0.0.40
codegen_flags: <defaults>
</compile_context>

<pallas_src>
import functools
import math

import jax
import jax.numpy as jnp
from jax.experimental import pallas as pl
from jax.experimental.pallas import tpu as pltpu

VMEM = pl.BlockSpec(memory_space=pltpu.MemorySpace.VMEM)
NEG_INF = -1e9


# ----------------------------------------------------------------------------
# In-kernel helpers
# ----------------------------------------------------------------------------
def _silu(x):
    return x * jax.nn.sigmoid(x)


def _ln(x, eps=1e-6):
    mu = jnp.mean(x, axis=-1, keepdims=True)
    var = jnp.mean((x - mu) ** 2, axis=-1, keepdims=True)
    return (x - mu) * jax.lax.rsqrt(var + eps)


def _modulate(x, shift, scale):
    return _ln(x) * (1.0 + scale) + shift


def _mm(x, w_ref, b_ref):
    # bf16 MXU operands, f32 accumulation; bias kept in f32.
    return jnp.dot(x.astype(jnp.bfloat16), w_ref[...],
                   preferred_element_type=jnp.float32) + b_ref[...]


def _masked_attention(q, k, v, bias, has_edge, num_heads):
    """q:[Nq,D] k,v:[Nk,D] f32; bias:[Nq,Nk] additive (-1e9 where no edge);
    has_edge:[Nq,1]. Heads iterated via static lane slices (no host transpose)."""
    d = q.shape[-1]
    dh = d // num_heads
    scale = 1.0 / math.sqrt(dh)
    outs = []
    for h in range(num_heads):
        sl = slice(h * dh, (h + 1) * dh)
        qh = q[:, sl].astype(jnp.bfloat16)
        kh = k[:, sl].astype(jnp.bfloat16)
        vh = v[:, sl].astype(jnp.bfloat16)
        logits = jax.lax.dot_general(
            qh, kh, (((1,), (1,)), ((), ())),
            preferred_element_type=jnp.float32) * scale + bias
        mx = jnp.max(logits, axis=-1, keepdims=True)
        e = jnp.exp(logits - mx)
        denom = jnp.sum(e, axis=-1, keepdims=True)
        p = e * pl.reciprocal(denom, approx=True)
        outs.append(jnp.dot(p.astype(jnp.bfloat16), vh,
                            preferred_element_type=jnp.float32))
    out = jnp.concatenate(outs, axis=-1)
    return out * has_edge  # rows with no incident edge produce 0


# ----------------------------------------------------------------------------
# Fused Pallas kernels
# ----------------------------------------------------------------------------
def _self_block_kernel(x_ref, sc_ref, bias_ref, edge_ref,
                       w_ad, b_ad, w_qkv, b_qkv, w_o, b_o,
                       w_m1, b_m1, w_m2, b_m2, o_ref, *, num_heads):
    d = x_ref.shape[-1]
    x = x_ref[...]

    mod = _mm(sc_ref[...], w_ad, b_ad)                       # [N, 6D]
    s_msa, sc_msa, g_msa = mod[:, 0:d], mod[:, d:2 * d], mod[:, 2 * d:3 * d]
    s_mlp, sc_mlp, g_mlp = mod[:, 3 * d:4 * d], mod[:, 4 * d:5 * d], mod[:, 5 * d:6 * d]

    h = _modulate(x, s_msa, sc_msa)
    qkv = _mm(h, w_qkv, b_qkv)                               # [N, 3D]
    q, k, v = qkv[:, 0:d], qkv[:, d:2 * d], qkv[:, 2 * d:3 * d]
    a = _masked_attention(q, k, v, bias_ref[...], edge_ref[...], num_heads)
    x = x + g_msa * _mm(a, w_o, b_o)

    h = _modulate(x, s_mlp, sc_mlp)
    h = jax.nn.gelu(_mm(h, w_m1, b_m1), approximate=True)
    h = _mm(h, w_m2, b_m2)
    o_ref[...] = x + g_mlp * h


def _cross_block_kernel(xq_ref, xkv_ref, sc_ref, bias_ref, edge_ref,
                        w_ad, b_ad, w_q, b_q, w_kv, b_kv, w_o, b_o,
                        w_m1, b_m1, w_m2, b_m2, o_ref, *, num_heads):
    d = xq_ref.shape[-1]
    x = xq_ref[...]

    mod = _mm(sc_ref[...], w_ad, b_ad)                       # [Nq, 6D]
    s_ca, sc_ca, g_ca = mod[:, 0:d], mod[:, d:2 * d], mod[:, 2 * d:3 * d]
    s_mlp, sc_mlp, g_mlp = mod[:, 3 * d:4 * d], mod[:, 4 * d:5 * d], mod[:, 5 * d:6 * d]

    hq = _modulate(x, s_ca, sc_ca)
    hkv = _ln(xkv_ref[...])                                  # plain LN on kv stream
    q = _mm(hq, w_q, b_q)                                    # [Nq, D]
    kv = _mm(hkv, w_kv, b_kv)                                # [Nk, 2D]
    k, v = kv[:, 0:d], kv[:, d:2 * d]
    a = _masked_attention(q, k, v, bias_ref[...], edge_ref[...], num_heads)
    x = x + g_ca * _mm(a, w_o, b_o)

    h = _modulate(x, s_mlp, sc_mlp)
    h = jax.nn.gelu(_mm(h, w_m1, b_m1), approximate=True)
    h = _mm(h, w_m2, b_m2)
    o_ref[...] = x + g_mlp * h


def _res_mlp_embed_kernel(x_ref, pos_ref, w1, b1, w2, b2, o_ref):
    # TODO(synk): residual taken from fc1 output (h + fc2(silu(h))), matching previous version.
    h = _mm(x_ref[...], w1, b1)
    h2 = _mm(_silu(h), w2, b2)
    o_ref[...] = h + h2 + pos_ref[...]


def _timestep_mlp_kernel(e_ref, w0, b0, w2, b2, o_ref):
    h = _silu(_mm(e_ref[...], w0, b0))
    o_ref[...] = _mm(h, w2, b2)


def _conditioning_kernel(t_ref, y_ref, n_ref, wd, bd, sc_ref, scs_ref):
    c = t_ref[...] + y_ref[...] + n_ref[...]
    c_small = _mm(c, wd, bd)
    sc_ref[...] = _silu(c)          # silu(c)       (reused by every block's adaLN)
    scs_ref[...] = _silu(c_small)   # silu(c_small)


def _final_layer_kernel(x_ref, sc_ref, w_ad, b_ad, w_l, b_l, o_ref):
    d = x_ref.shape[-1]
    mod = _mm(sc_ref[...], w_ad, b_ad)                       # [N, 2D]
    shift, scale = mod[:, 0:d], mod[:, d:2 * d]
    o_ref[...] = _mm(_modulate(x_ref[...], shift, scale), w_l, b_l)


# ----------------------------------------------------------------------------
# Kernel wrappers
# ----------------------------------------------------------------------------
def dit_self_block(x, silu_c, bias, has_edge, p, num_heads):
    return pl.pallas_call(
        functools.partial(_self_block_kernel, num_heads=num_heads),
        out_shape=jax.ShapeDtypeStruct(x.shape, jnp.float32),
        in_specs=[VMEM] * 14,
        out_specs=VMEM,
        input_output_aliases={0: 0},
    )(x, silu_c, bias, has_edge,
      p["adaln"]["w"], p["adaln"]["b"], p["qkv"]["w"], p["qkv"]["b"],
      p["o"]["w"], p["o"]["b"], p["mlp1"]["w"], p["mlp1"]["b"],
      p["mlp2"]["w"], p["mlp2"]["b"])


def dit_cross_block(xq, xkv, silu_c, bias, has_edge, p, num_heads):
    return pl.pallas_call(
        functools.partial(_cross_block_kernel, num_heads=num_heads),
        out_shape=jax.ShapeDtypeStruct(xq.shape, jnp.float32),
        in_specs=[VMEM] * 17,
        out_specs=VMEM,
        input_output_aliases={0: 0},
    )(xq, xkv, silu_c, bias, has_edge,
      p["adaln"]["w"], p["adaln"]["b"], p["q"]["w"], p["q"]["b"],
      p["kv"]["w"], p["kv"]["b"], p["o"]["w"], p["o"]["b"],
      p["mlp1"]["w"], p["mlp1"]["b"], p["mlp2"]["w"], p["mlp2"]["b"])


def embed_nodes(x, pos, p):
    n = x.shape[0]
    dout = p["fc2"]["w"].shape[1]
    return pl.pallas_call(
        _res_mlp_embed_kernel,
        out_shape=jax.ShapeDtypeStruct((n, dout), jnp.float32),
        in_specs=[VMEM] * 6,
        out_specs=VMEM,
    )(x, pos, p["fc1"]["w"], p["fc1"]["b"], p["fc2"]["w"], p["fc2"]["b"])


def timestep_embedder(t, p, freq_dim=256, max_period=10000.0):
    half = freq_dim // 2
    freqs = jnp.exp(-math.log(max_period)
                    * jnp.arange(half, dtype=jnp.float32) / half)
    args = t.astype(jnp.float32)[:, None] * freqs[None, :]
    emb = jnp.concatenate([jnp.cos(args), jnp.sin(args)], axis=-1)
    dout = p["mlp2"]["w"].shape[1]
    return pl.pallas_call(
        _timestep_mlp_kernel,
        out_shape=jax.ShapeDtypeStruct((t.shape[0], dout), jnp.float32),
        in_specs=[VMEM] * 5,
        out_specs=VMEM,
    )(emb, p["mlp0"]["w"], p["mlp0"]["b"], p["mlp2"]["w"], p["mlp2"]["b"])


def conditioning(t, y, n, p_down):
    ntot, H = t.shape
    AH = p_down["w"].shape[1]
    return pl.pallas_call(
        _conditioning_kernel,
        out_shape=(jax.ShapeDtypeStruct((ntot, H), jnp.float32),
                   jax.ShapeDtypeStruct((ntot, AH), jnp.float32)),
        in_specs=[VMEM] * 5,
        out_specs=(VMEM, VMEM),
    )(t, y, n, p_down["w"], p_down["b"])


def final_layer(x, silu_c, p):
    dout = p["linear"]["w"].shape[1]
    return pl.pallas_call(
        _final_layer_kernel,
        out_shape=jax.ShapeDtypeStruct((x.shape[0], dout), jnp.float32),
        in_specs=[VMEM] * 6,
        out_specs=VMEM,
    )(x, silu_c, p["adaln"]["w"], p["adaln"]["b"],
      p["linear"]["w"], p["linear"]["b"])


# ----------------------------------------------------------------------------
# Glue helpers (pure JAX, outside kernels)
# ----------------------------------------------------------------------------
def get_indices_within_scene(batch):
    n = batch.shape[0]
    idx = jnp.arange(n)
    is_new = jnp.concatenate([jnp.array([True]), batch[1:] != batch[:-1]])
    start = jnp.where(is_new, idx, 0)
    start = jax.lax.cummax(start, axis=0)
    return idx - start


def sincos_1d_pos_embed(dim, pos):
    omega = jnp.arange(dim // 2, dtype=jnp.float32) / (dim / 2.0)
    omega = 1.0 / (10000.0 ** omega)
    out = pos.astype(jnp.float32)[:, None] * omega[None, :]
    return jnp.concatenate([jnp.sin(out), jnp.cos(out)], axis=-1)


def edges_to_mask(edge_index, n_dst, n_src):
    src, dst = edge_index[0], edge_index[1]
    return jnp.zeros((n_dst, n_src), jnp.float32).at[dst, src].set(1.0)


def mask_to_bias(mask):
    bias = jnp.where(mask > 0.0, 0.0, NEG_INF).astype(jnp.float32)
    has_edge = (jnp.sum(mask, axis=-1, keepdims=True) > 0.0).astype(jnp.float32)
    return bias, has_edge


# ----------------------------------------------------------------------------
# Parameter initialization (deterministic, synthetic)
# ----------------------------------------------------------------------------
class KeyGen:
    def __init__(self, seed):
        self._key = jax.random.PRNGKey(seed)

    def __call__(self):
        self._key, k = jax.random.split(self._key)
        return k


def init_linear(kg, din, dout):
    lim = math.sqrt(6.0 / (din + dout))
    w = jax.random.uniform(kg(), (din, dout), jnp.float32, -lim, lim)
    # Weights stored bf16 (MXU-native, half the DMA bytes); bias kept f32.
    return {"w": w.astype(jnp.bfloat16), "b": jnp.zeros((1, dout), jnp.float32)}


def init_self_block(kg, d, mlp_ratio=4):
    return {
        "adaln": init_linear(kg, d, 6 * d),
        "qkv": init_linear(kg, d, 3 * d),          # fused Q|K|V
        "o": init_linear(kg, d, d),
        "mlp1": init_linear(kg, d, mlp_ratio * d),
        "mlp2": init_linear(kg, mlp_ratio * d, d),
    }


def init_cross_block(kg, dq, dkv, mlp_ratio=4):
    return {
        "adaln": init_linear(kg, dq, 6 * dq),
        "q": init_linear(kg, dq, dq),
        "kv": init_linear(kg, dkv, 2 * dq),        # fused K|V
        "o": init_linear(kg, dq, dq),
        "mlp1": init_linear(kg, dq, mlp_ratio * dq),
        "mlp2": init_linear(kg, mlp_ratio * dq, dq),
    }


def init_final_layer(kg, d, dout):
    return {"adaln": init_linear(kg, d, 2 * d), "linear": init_linear(kg, d, dout)}


def init_params(kg, cfg):
    H, AH = cfg["hidden_dim"], cfg["agent_hidden_dim"]
    p = {
        "scene_table": jax.random.normal(kg(), (cfg["num_map_ids"] * 2, H)) * 0.02,
        "num_agents_table": jax.random.normal(kg(), (cfg["max_num_agents"] + 1, H)) * 0.02,
        "num_lanes_table": jax.random.normal(kg(), (cfg["max_num_lanes"] + 1, H)) * 0.02,
        "t_embedder": {"mlp0": init_linear(kg, 256, H), "mlp2": init_linear(kg, H, H)},
        "downsample_c": init_linear(kg, H, AH),
        "lane_embedder": {"fc1": init_linear(kg, cfg["lane_latent_dim"], H),
                          "fc2": init_linear(kg, H, H)},
        "agent_embedder": {"fc1": init_linear(kg, cfg["agent_latent_dim"], AH),
                           "fc2": init_linear(kg, AH, AH)},
        "pos_emb_lane": sincos_1d_pos_embed(H, jnp.arange(cfg["max_num_lanes"])),
        "pos_emb_agent": sincos_1d_pos_embed(
            AH, cfg["max_num_lanes"] + jnp.arange(cfg["max_num_agents"])),
        "blocks": [],
        "pred_agent_noise": init_final_layer(kg, AH, cfg["agent_latent_dim"]),
        "pred_lane_noise": init_final_layer(kg, H, cfg["lane_latent_dim"]),
    }
    for _ in range(cfg["num_factorized_dit_blocks"]):
        blk = {
            "l2l": [init_self_block(kg, H) for _ in range(cfg["num_l2l_blocks"])],
            "a2a": init_self_block(kg, AH),
            "l2a": init_cross_block(kg, AH, H),
            "a2l": init_cross_block(kg, H, AH),
        }
        p["blocks"].append(blk)
    return p


# ----------------------------------------------------------------------------
# Full DiT forward
# ----------------------------------------------------------------------------
def dit_forward(params, cfg, x_agent, x_lane, data, agent_timestep, lane_timestep,
                unconditional=False):
    lane_batch = data["lane_batch"]
    agent_batch = data["agent_batch"]
    n_lane = x_lane.shape[0]
    n_agent = x_agent.shape[0]

    lane_idx = get_indices_within_scene(lane_batch)
    agent_idx = get_indices_within_scene(agent_batch)
    pos_lane = params["pos_emb_lane"][lane_idx]
    pos_agent = params["pos_emb_agent"][agent_idx]

    # Fused embedder + pos-emb add (one kernel per stream).
    xl = embed_nodes(x_lane[:, 0], pos_lane, params["lane_embedder"])
    xa = embed_nodes(x_agent[:, 0], pos_agent, params["agent_embedder"])

    scene_idx = cfg["num_map_ids"] * data["lg_type"] + data["map_id"]
    scene_type = params["scene_table"][scene_idx]          # (num_scenes, H)
    lane_scene = scene_type[lane_batch]
    agent_scene = scene_type[agent_batch]

    num_agents_emb = params["num_agents_table"][data["num_agents"]][agent_batch]
    num_lanes_emb = params["num_lanes_table"][data["num_lanes"]][lane_batch]

    t = timestep_embedder(jnp.concatenate([lane_timestep, agent_timestep], axis=-1),
                          params["t_embedder"])
    n = jnp.concatenate([num_lanes_emb, num_agents_emb], axis=0)
    y = jnp.concatenate([lane_scene, agent_scene], axis=0)

    # c = t + y + n ; c_small = downsample(c).  silu(.) hoisted out of the block loop.
    silu_c, silu_c_small = conditioning(t, y, n, params["downsample_c"])
    sc_lane = silu_c[:n_lane]
    sc_agent = silu_c_small[n_lane:]

    # Layer-invariant additive attention biases + has-edge flags, built once.
    l2l_mask = edges_to_mask(data["l2l_edge_index"], n_lane, n_lane)
    a2a_mask = edges_to_mask(data["a2a_edge_index"], n_agent, n_agent)
    l2a_mask = edges_to_mask(data["l2a_edge_index"], n_agent, n_lane)  # agents attend lanes
    a2l_mask = l2a_mask.T                                              # lanes attend agents
    l2l_bias, l2l_edge = mask_to_bias(l2l_mask)
    a2a_bias, a2a_edge = mask_to_bias(a2a_mask)
    l2a_bias, l2a_edge = mask_to_bias(l2a_mask)
    a2l_bias, a2l_edge = mask_to_bias(a2l_mask)

    for blk in params["blocks"]:
        for l2lp in blk["l2l"]:
            xl = dit_self_block(xl, sc_lane, l2l_bias, l2l_edge, l2lp,
                                cfg["num_heads"])
        xa = dit_self_block(xa, sc_agent, a2a_bias, a2a_edge, blk["a2a"],
                            cfg["agent_num_heads"])
        xa = dit_cross_block(xa, xl, sc_agent, l2a_bias, l2a_edge, blk["l2a"],
                             cfg["agent_num_heads"])
        xl = dit_cross_block(xl, xa, sc_lane, a2l_bias, a2l_edge, blk["a2l"],
                             cfg["num_heads"])

    xl_out = final_layer(xl, sc_lane, params["pred_lane_noise"])[:, None, :]
    xa_out = final_layer(xa, sc_agent, params["pred_agent_noise"])[:, None, :]
    return xa_out, xl_out


# ----------------------------------------------------------------------------
# main
# ----------------------------------------------------------------------------
if __name__ == "__main__":
    cfg = dict(
        hidden_dim=64, agent_hidden_dim=32,
        num_heads=4, agent_num_heads=2,
        lane_latent_dim=16, agent_latent_dim=8,
        num_l2l_blocks=1, num_factorized_dit_blocks=2,
        num_map_ids=3, max_num_agents=8, max_num_lanes=16,
    )

    kg = KeyGen(0)
    params = init_params(kg, cfg)

    # Synthetic batched graph data: 2 scenes, 12 lanes total, 7 agents total.
    key = jax.random.PRNGKey(0)
    k_xl, k_xa, k_tl, k_ta, k_e1, k_e2, k_e3 = jax.random.split(key, 7)

    n_lane, n_agent = 12, 7
    lane_batch = jnp.array([0] * 7 + [1] * 5, jnp.int32)
    agent_batch = jnp.array([0] * 4 + [1] * 3, jnp.int32)

    x_lane = jax.random.normal(k_xl, (n_lane, 1, cfg["lane_latent_dim"]), jnp.float32)
    x_agent = jax.random.normal(k_xa, (n_agent, 1, cfg["agent_latent_dim"]), jnp.float32)
    lane_timestep = jax.random.uniform(k_tl, (n_lane,), jnp.float32, 0.0, 1000.0)
    agent_timestep = jax.random.uniform(k_ta, (n_agent,), jnp.float32, 0.0, 1000.0)

    def rand_edges(k, n_src, n_dst, n_edges):
        k1, k2 = jax.random.split(k)
        src = jax.random.randint(k1, (n_edges,), 0, n_src, jnp.int32)
        dst = jax.random.randint(k2, (n_edges,), 0, n_dst, jnp.int32)
        return jnp.stack([src, dst])

    data = dict(
        lane_batch=lane_batch,
        agent_batch=agent_batch,
        lg_type=jnp.array([0, 1], jnp.int32),
        map_id=jnp.array([1, 2], jnp.int32),
        num_agents=jnp.array([4, 3], jnp.int32),
        num_lanes=jnp.array([7, 5], jnp.int32),
        l2l_edge_index=rand_edges(k_e1, n_lane, n_lane, 24),
        a2a_edge_index=rand_edges(k_e2, n_agent, n_agent, 14),
        l2a_edge_index=rand_edges(k_e3, n_lane, n_agent, 20),
    )

    @jax.jit
    def fwd(params, x_agent, x_lane, data, agent_timestep, lane_timestep):
        return dit_forward(params, cfg, x_agent, x_lane, data,
                           agent_timestep, lane_timestep, unconditional=False)

    xa_out, xl_out = fwd(params, x_agent, x_lane, data, agent_timestep, lane_timestep)
    jax.block_until_ready((xa_out, xl_out))

    assert xa_out.shape == (n_agent, 1, cfg["agent_latent_dim"])
    assert xl_out.shape == (n_lane, 1, cfg["lane_latent_dim"])
    assert jnp.all(jnp.isfinite(xa_out)) and jnp.all(jnp.isfinite(xl_out))
    print("KERNEL_OK")
</pallas_src>

<mosaic_0001>
module attributes {stable_mosaic.version = 11 : i64} {
  func.func @_timestep_mlp_kernel(%arg0: memref<19x256xf32, #tpu.memory_space<vmem>>, %arg1: memref<256x64xbf16, #tpu.memory_space<vmem>>, %arg2: memref<1x64xf32, #tpu.memory_space<vmem>>, %arg3: memref<64x64xbf16, #tpu.memory_space<vmem>>, %arg4: memref<1x64xf32, #tpu.memory_space<vmem>>, %arg5: memref<19x64xf32, #tpu.memory_space<vmem>>) attributes {dimension_semantics = [], scalar_prefetch = 0 : i64, scratch_operands = 0 : i64, tpu.core_type = #tpu.core_type<tc>} {
    %c0 = arith.constant 0 : index
    %c0_0 = arith.constant 0 : index
    %0 = vector.load %arg0[%c0, %c0_0] : memref<19x256xf32, #tpu.memory_space<vmem>>, vector<19x256xf32>
    %1 = arith.truncf %0 : vector<19x256xf32> to vector<19x256xbf16>
    %c0_1 = arith.constant 0 : index
    %c0_2 = arith.constant 0 : index
    %2 = vector.load %arg1[%c0_1, %c0_2] : memref<256x64xbf16, #tpu.memory_space<vmem>>, vector<256x64xbf16>
    %cst = arith.constant dense<0.000000e+00> : vector<19x64xf32>
    %3 = tpu.matmul %1, %2, %cst {dimension_numbers = #tpu.dot_dimension_numbers<[1], [0], [0], [1], [0, 0, 1, 1], [], []>} : vector<19x256xbf16>, vector<256x64xbf16>, vector<19x64xf32> -> vector<19x64xf32>
    %c0_3 = arith.constant 0 : index
    %c0_4 = arith.constant 0 : index
    %4 = vector.load %arg2[%c0_3, %c0_4] : memref<1x64xf32, #tpu.memory_space<vmem>>, vector<1x64xf32>
    %5 = vector.broadcast %4 : vector<1x64xf32> to vector<19x64xf32>
    %6 = arith.addf %3, %5 : vector<19x64xf32>
    %7 = arith.negf %6 : vector<19x64xf32>
    %8 = math.exp %7 : vector<19x64xf32>
    %cst_5 = arith.constant 1.000000e+00 : f32
    %9 = vector.broadcast %cst_5 : f32 to vector<19x64xf32>
    %10 = arith.addf %9, %8 : vector<19x64xf32>
    %11 = arith.divf %9, %10 : vector<19x64xf32>
    %12 = arith.mulf %6, %11 : vector<19x64xf32>
    %13 = arith.truncf %12 : vector<19x64xf32> to vector<19x64xbf16>
    %c0_6 = arith.constant 0 : index
    %c0_7 = arith.constant 0 : index
    %14 = vector.load %arg3[%c0_6, %c0_7] : memref<64x64xbf16, #tpu.memory_space<vmem>>, vector<64x64xbf16>
    %cst_8 = arith.constant dense<0.000000e+00> : vector<19x64xf32>
    %15 = tpu.matmul %13, %14, %cst_8 {dimension_numbers = #tpu.dot_dimension_numbers<[1], [0], [0], [1], [0, 0, 1, 1], [], []>} : vector<19x64xbf16>, vector<64x64xbf16>, vector<19x64xf32> -> vector<19x64xf32>
    %c0_9 = arith.constant 0 : index
    %c0_10 = arith.constant 0 : index
    %16 = vector.load %arg4[%c0_9, %c0_10] : memref<1x64xf32, #tpu.memory_space<vmem>>, vector<1x64xf32>
    %17 = vector.broadcast %16 : vector<1x64xf32> to vector<19x64xf32>
    %18 = arith.addf %15, %17 : vector<19x64xf32>
    %c0_11 = arith.constant 0 : index
    %c0_12 = arith.constant 0 : index
    %19 = vector.load %arg5[%c0_11, %c0_12] : memref<19x64xf32, #tpu.memory_space<vmem>>, vector<19x64xf32>
    tpu.vector_store %arg5[%c0_11, %c0_12], %18 {strides = array<i32>} : memref<19x64xf32, #tpu.memory_space<vmem>>, vector<19x64xf32>,
    return
  }
}

module attributes {stable_mosaic.version = 11 : i64} {
  func.func @_conditioning_kernel(%arg0: memref<19x64xf32, #tpu.memory_space<vmem>>, %arg1: memref<19x64xf32, #tpu.memory_space<vmem>>, %arg2: memref<19x64xf32, #tpu.memory_space<vmem>>, %arg3: memref<64x32xbf16, #tpu.memory_space<vmem>>, %arg4: memref<1x32xf32, #tpu.memory_space<vmem>>, %arg5: memref<19x64xf32, #tpu.memory_space<vmem>>, %arg6: memref<19x32xf32, #tpu.memory_space<vmem>>) attributes {dimension_semantics = [], scalar_prefetch = 0 : i64, scratch_operands = 0 : i64, tpu.core_type = #tpu.core_type<tc>} {
    %c0 = arith.constant 0 : index
    %c0_0 = arith.constant 0 : index
    %0 = vector.load %arg0[%c0, %c0_0] : memref<19x64xf32, #tpu.memory_space<vmem>>, vector<19x64xf32>
    %c0_1 = arith.constant 0 : index
    %c0_2 = arith.constant 0 : index
    %1 = vector.load %arg1[%c0_1, %c0_2] : memref<19x64xf32, #tpu.memory_space<vmem>>, vector<19x64xf32>
    %2 = arith.addf %0, %1 : vector<19x64xf32>
    %c0_3 = arith.constant 0 : index
    %c0_4 = arith.constant 0 : index
    %3 = vector.load %arg2[%c0_3, %c0_4] : memref<19x64xf32, #tpu.memory_space<vmem>>, vector<19x64xf32>
    %4 = arith.addf %2, %3 : vector<19x64xf32>
    %5 = arith.truncf %4 : vector<19x64xf32> to vector<19x64xbf16>
    %c0_5 = arith.constant 0 : index
    %c0_6 = arith.constant 0 : index
    %6 = vector.load %arg3[%c0_5, %c0_6] : memref<64x32xbf16, #tpu.memory_space<vmem>>, vector<64x32xbf16>
    %cst = arith.constant dense<0.000000e+00> : vector<19x32xf32>
    %7 = tpu.matmul %5, %6, %cst {dimension_numbers = #tpu.dot_dimension_numbers<[1], [0], [0], [1], [0, 0, 1, 1], [], []>} : vector<19x64xbf16>, vector<64x32xbf16>, vector<19x32xf32> -> vector<19x32xf32>
    %c0_7 = arith.constant 0 : index
    %c0_8 = arith.constant 0 : index
    %8 = vector.load %arg4[%c0_7, %c0_8] : memref<1x32xf32, #tpu.memory_space<vmem>>, vector<1x32xf32>
    %9 = vector.broadcast %8 : vector<1x32xf32> to vector<19x32xf32>
    %10 = arith.addf %7, %9 : vector<19x32xf32>
    %11 = arith.negf %4 : vector<19x64xf32>
    %12 = math.exp %11 : vector<19x64xf32>
    %cst_9 = arith.constant 1.000000e+00 : f32
    %13 = vector.broadcast %cst_9 : f32 to vector<19x64xf32>
    %14 = arith.addf %13, %12 : vector<19x64xf32>
    %15 = arith.divf %13, %14 : vector<19x64xf32>
    %16 = arith.mulf %4, %15 : vector<19x64xf32>
    %c0_10 = arith.constant 0 : index
    %c0_11 = arith.constant 0 : index
    %17 = vector.load %arg5[%c0_10, %c0_11] : memref<19x64xf32, #tpu.memory_space<vmem>>, vector<19x64xf32>
    tpu.vector_store %arg5[%c0_10, %c0_11], %16 {strides = array<i32>} : memref<19x64xf32, #tpu.memory_space<vmem>>, vector<19x64xf32>,
    %18 = arith.negf %10 : vector<19x32xf32>
    %19 = math.exp %18 : vector<19x32xf32>
    %cst_12 = arith.constant 1.000000e+00 : f32
    %20 = vector.broadcast %cst_12 : f32 to vector<19x32xf32>
    %21 = arith.addf %20, %19 : vector<19x32xf32>
    %22 = arith.divf %20, %21 : vector<19x32xf32>
    %23 = arith.mulf %10, %22 : vector<19x32xf32>
    %c0_13 = arith.constant 0 : index
    %c0_14 = arith.constant 0 : index
    %24 = vector.load %arg6[%c0_13, %c0_14] : memref<19x32xf32, #tpu.memory_space<vmem>>, vector<19x32xf32>
    tpu.vector_store %arg6[%c0_13, %c0_14], %23 {strides = array<i32>} : memref<19x32xf32, #tpu.memory_space<vmem>>, vector<19x32xf32>,
    return
  }
}

module attributes {stable_mosaic.version = 11 : i64} {
  func.func @_self_block_kernel(%arg0: memref<12x64xf32, #tpu.memory_space<vmem>>, %arg1: memref<12x64xf32, #tpu.memory_space<vmem>>, %arg2: memref<12x12xf32, #tpu.memory_space<vmem>>, %arg3: memref<12x1xf32, #tpu.memory_space<vmem>>, %arg4: memref<64x384xbf16, #tpu.memory_space<vmem>>, %arg5: memref<1x384xf32, #tpu.memory_space<vmem>>, %arg6: memref<64x192xbf16, #tpu.memory_space<vmem>>, %arg7: memref<1x192xf32, #tpu.memory_space<vmem>>, %arg8: memref<64x64xbf16, #tpu.memory_space<vmem>>, %arg9: memref<1x64xf32, #tpu.memory_space<vmem>>, %arg10: memref<64x256xbf16, #tpu.memory_space<vmem>>, %arg11: memref<1x256xf32, #tpu.memory_space<vmem>>, %arg12: memref<256x64xbf16, #tpu.memory_space<vmem>>, %arg13: memref<1x64xf32, #tpu.memory_space<vmem>>, %arg14: memref<12x64xf32, #tpu.memory_space<vmem>>) attributes {dimension_semantics = [], scalar_prefetch = 0 : i64, scratch_operands = 0 : i64, tpu.core_type = #tpu.core_type<tc>} {
    %c0 = arith.constant 0 : index
    %c0_0 = arith.constant 0 : index
    %0 = vector.load %arg0[%c0, %c0_0] : memref<12x64xf32, #tpu.memory_space<vmem>>, vector<12x64xf32>
    %c0_1 = arith.constant 0 : index
    %c0_2 = arith.constant 0 : index
    %1 = vector.load %arg1[%c0_1, %c0_2] : memref<12x64xf32, #tpu.memory_space<vmem>>, vector<12x64xf32>
    %2 = arith.truncf %1 : vector<12x64xf32> to vector<12x64xbf16>
    %c0_3 = arith.constant 0 : index
    %c0_4 = arith.constant 0 : index
    %3 = vector.load %arg4[%c0_3, %c0_4] : memref<64x384xbf16, #tpu.memory_space<vmem>>, vector<64x384xbf16>
    %cst = arith.constant dense<0.000000e+00> : vector<12x384xf32>
    %4 = tpu.matmul %2, %3, %cst {dimension_numbers = #tpu.dot_dimension_numbers<[1], [0], [0], [1], [0, 0, 1, 1], [], []>} : vector<12x64xbf16>, vector<64x384xbf16>, vector<12x384xf32> -> vector<12x384xf32>
    %c0_5 = arith.constant 0 : index
    %c0_6 = arith.constant 0 : index
    %5 = vector.load %arg5[%c0_5, %c0_6] : memref<1x384xf32, #tpu.memory_space<vmem>>, vector<1x384xf32>
    %6 = vector.broadcast %5 : vector<1x384xf32> to vector<12x384xf32>
    %7 = arith.addf %4, %6 : vector<12x384xf32>
    %8 = vector.extract_strided_slice %7 {offsets = [0, 0], sizes = [12, 64], strides = [1, 1]} : vector<12x384xf32> to vector<12x64xf32>
    %9 = vector.extract_strided_slice %7 {offsets = [0, 64], sizes = [12, 64], strides = [1, 1]} : vector<12x384xf32> to vector<12x64xf32>
    %10 = vector.extract_strided_slice %7 {offsets = [0, 128], sizes = [12, 64], strides = [1, 1]} : vector<12x384xf32> to vector<12x64xf32>
    %11 = vector.extract_strided_slice %7 {offsets = [0, 192], sizes = [12, 64], strides = [1, 1]} : vector<12x384xf32> to vector<12x64xf32>
    %12 = vector.extract_strided_slice %7 {offsets = [0, 256], sizes = [12, 64], strides = [1, 1]} : vector<12x384xf32> to vector<12x64xf32>
    %13 = vector.extract_strided_slice %7 {offsets = [0, 320], sizes = [12, 64], strides = [1, 1]} : vector<12x384xf32> to vector<12x64xf32>
    %cst_7 = arith.constant dense<0.000000e+00> : vector<12xf32>
    %14 = vector.multi_reduction <add>, %0, %cst_7 [1] : vector<12x64xf32> to vector<12xf32>
    %15 = vector.shape_cast %14 : vector<12xf32> to vector<12x1xf32>
    %cst_8 = arith.constant 6.400000e+01 : f32
    %16 = vector.broadcast %cst_8 : f32 to vector<12x1xf32>
    %17 = arith.divf %15, %16 : vector<12x1xf32>
    %18 = vector.broadcast %17 : vector<12x1xf32> to vector<12x64xf32>
    %19 = arith.subf %0, %18 : vector<12x64xf32>
    %20 = arith.mulf %19, %19 : vector<12x64xf32>
    %cst_9 = arith.constant dense<0.000000e+00> : vector<12xf32>
    %21 = vector.multi_reduction <add>, %20, %cst_9 [1] : vector<12x64xf32> to vector<12xf32>
    %22 = vector.shape_cast %21 : vector<12xf32> to vector<12x1xf32>
    %cst_10 = arith.constant 6.400000e+01 : f32
    %23 = vector.broadcast %cst_10 : f32 to vector<12x1xf32>
    %24 = arith.divf %22, %23 : vector<12x1xf32>
    %25 = vector.broadcast %17 : vector<12x1xf32> to vector<12x64xf32>
    %26 = arith.subf %0, %25 : vector<12x64xf32>
    %cst_11 = arith.constant 9.99999997E-7 : f32
    %27 = vector.broadcast %cst_11 : f32 to vector<12x1xf32>
    %28 = arith.addf %24, %27 : vector<12x1xf32>
    %29 = math.rsqrt %28 : vector<12x1xf32>
    %30 = vector.broadcast %29 : vector<12x1xf32> to vector<12x64xf32>
    %31 = arith.mulf %26, %30 : vector<12x64xf32>
    %cst_12 = arith.constant 1.000000e+00 : f32
    %32 = vector.broadcast %cst_12 : f32 to vector<12x64xf32>
    %33 = arith.addf %32, %9 : vector<12x64xf32>
    %34 = arith.mulf %31, %33 : vector<12x64xf32>
    %35 = arith.addf %34, %8 : vector<12x64xf32>
    %36 = arith.truncf %35 : vector<12x64xf32> to vector<12x64xbf16>
    %c0_13 = arith.constant 0 : index
    %c0_14 = arith.constant 0 : index
    %37 = vector.load %arg6[%c0_13, %c0_14] : memref<64x192xbf16, #tpu.memory_space<vmem>>, vector<64x192xbf16>
    %cst_15 = arith.constant dense<0.000000e+00> : vector<12x192xf32>
    %38 = tpu.matmul %36, %37, %cst_15 {dimension_numbers = #tpu.dot_dimension_numbers<[1], [0], [0], [1], [0, 0, 1, 1], [], []>} : vector<12x64xbf16>, vector<64x192xbf16>, vector<12x192xf32> -> vector<12x192xf32>
    %c0_16 = arith.constant 0 : index
    %c0_17 = arith.constant 0 : index
    %39 = vector.load %arg7[%c0_16, %c0_17] : memref<1x192xf32, #tpu.memory_space<vmem>>, vector<1x192xf32>
    %40 = vector.broadcast %39 : vector<1x192xf32> to vector<12x192xf32>
    %41 = arith.addf %38, %40 : vector<12x192xf32>
    %42 = vector.extract_strided_slice %41 {offsets = [0, 0], sizes = [12, 64], strides = [1, 1]} : vector<12x192xf32> to vector<12x64xf32>
    %43 = vector.extract_strided_slice %41 {offsets = [0, 64], sizes = [12, 64], strides = [1, 1]} : vector<12x192xf32> to vector<12x64xf32>
    %44 = vector.extract_strided_slice %41 {offsets = [0, 128], sizes = [12, 64], strides = [1, 1]} : vector<12x192xf32> to vector<12x64xf32>
    %c0_18 = arith.constant 0 : index
    %c0_19 = arith.constant 0 : index
    %45 = vector.load %arg2[%c0_18, %c0_19] : memref<12x12xf32, #tpu.memory_space<vmem>>, vector<12x12xf32>
    %c0_20 = arith.constant 0 : index
    %c0_21 = arith.constant 0 : index
    %46 = vector.load %arg3[%c0_20, %c0_21] : memref<12x1xf32, #tpu.memory_space<vmem>>, vector<12x1xf32>
    %47 = vector.extract_strided_slice %42 {offsets = [0, 0], sizes = [12, 16], strides = [1, 1]} : vector<12x64xf32> to vector<12x16xf32>
    %48 = arith.truncf %47 : vector<12x16xf32> to vector<12x16xbf16>
    %49 = vector.extract_strided_slice %43 {offsets = [0, 0], sizes = [12, 16], strides = [1, 1]} : vector<12x64xf32> to vector<12x16xf32>
    %50 = arith.truncf %49 : vector<12x16xf32> to vector<12x16xbf16>
    %51 = vector.extract_strided_slice %44 {offsets = [0, 0], sizes = [12, 16], strides = [1, 1]} : vector<12x64xf32> to vector<12x16xf32>
    %52 = arith.truncf %51 : vector<12x16xf32> to vector<12x16xbf16>
    %cst_22 = arith.constant dense<0.000000e+00> : vector<12x12xf32>
    %53 = tpu.matmul %48, %50, %cst_22 {dimension_numbers = #tpu.dot_dimension_numbers<[1], [1], [0], [0], [0, 0, 1, 0], [], []>} : vector<12x16xbf16>, vector<12x16xbf16>, vector<12x12xf32> -> vector<12x12xf32>
    %cst_23 = arith.constant 2.500000e-01 : f32
    %54 = vector.broadcast %cst_23 : f32 to vector<12x12xf32>
    %55 = arith.mulf %53, %54 : vector<12x12xf32>
    %56 = arith.addf %55, %45 : vector<12x12xf32>
    %cst_24 = arith.constant dense<0xFF800000> : vector<12xf32>
    %57 = vector.multi_reduction <maximumf>, %56, %cst_24 [1] : vector<12x12xf32> to vector<12xf32>
    %58 = vector.shape_cast %57 : vector<12xf32> to vector<12x1xf32>
    %59 = vector.broadcast %58 : vector<12x1xf32> to vector<12x12xf32>
    %60 = arith.subf %56, %59 : vector<12x12xf32>
    %61 = math.exp %60 : vector<12x12xf32>
    %cst_25 = arith.constant dense<0.000000e+00> : vector<12xf32>
    %62 = vector.multi_reduction <add>, %61, %cst_25 [1] : vector<12x12xf32> to vector<12xf32>
    %63 = vector.shape_cast %62 : vector<12xf32> to vector<12x1xf32>
    %64 = tpu.reciprocal %63 {approx = true} : vector<12x1xf32> -> vector<12x1xf32>
    %65 = vector.broadcast %64 : vector<12x1xf32> to vector<12x12xf32>
    %66 = arith.mulf %61, %65 : vector<12x12xf32>
    %67 = arith.truncf %66 : vector<12x12xf32> to vector<12x12xbf16>
    %cst_26 = arith.constant dense<0.000000e+00> : vector<12x16xf32>
    %68 = tpu.matmul %67, %52, %cst_26 {dimension_numbers = #tpu.dot_dimension_numbers<[1], [0], [0], [1], [0, 0, 1, 1], [], []>} : vector<12x12xbf16>, vector<12x16xbf16>, vector<12x16xf32> -> vector<12x16xf32>
    %69 = vector.extract_strided_slice %42 {offsets = [0, 16], sizes = [12, 16], strides = [1, 1]} : vector<12x64xf32> to vector<12x16xf32>
    %70 = arith.truncf %69 : vector<12x16xf32> to vector<12x16xbf16>
    %71 = vector.extract_strided_slice %43 {offsets = [0, 16], sizes = [12, 16], strides = [1, 1]} : vector<12x64xf32> to vector<12x16xf32>
    %72 = arith.truncf %71 : vector<12x16xf32> to vector<12x16xbf16>
    %73 = vector.extract_strided_slice %44 {offsets = [0, 16], sizes = [12, 16], strides = [1, 1]} : vector<12x64xf32> to vector<12x16xf32>
    %74 = arith.truncf %73 : vector<12x16xf32> to vector<12x16xbf16>
    %cst_27 = arith.constant dense<0.000000e+00> : vector<12x12xf32>
    %75 = tpu.matmul %70, %72, %cst_27 {dimension_numbers = #tpu.dot_dimension_numbers<[1], [1], [0], [0], [0, 0, 1, 0], [], []>} : vector<12x16xbf16>, vector<12x16xbf16>, vector<12x12xf32> -> vector<12x12xf32>
    %cst_28 = arith.constant 2.500000e-01 : f32
    %76 = vector.broadcast %cst_28 : f32 to vector<12x12xf32>
    %77 = arith.mulf %75, %76 : vector<12x12xf32>
    %78 = arith.addf %77, %45 : vector<12x12xf32>
    %cst_29 = arith.constant dense<0xFF800000> : vector<12xf32>
    %79 = vector.multi_reduction <maximumf>, %78, %cst_29 [1] : vector<12x12xf32> to vector<12xf32>
    %80 = vector.shape_cast %79 : vector<12xf32> to vector<12x1xf32>
    %81 = vector.broadcast %80 : vector<12x1xf32> to vector<12x12xf32>
    %82 = arith.subf %78, %81 : vector<12x12xf32>
    %83 = math.exp %82 : vector<12x12xf32>
    %cst_30 = arith.constant dense<0.000000e+00> : vector<12xf32>
    %84 = vector.multi_reduction <add>, %83, %cst_30 [1] : vector<12x12xf32> to vector<12xf32>
    %85 = vector.shape_cast %84 : vector<12xf32> to vector<12x1xf32>
    %86 = tpu.reciprocal %85 {approx = true} : vector<12x1xf32> -> vector<12x1xf32>
    %87 = vector.broadcast %86 : vector<12x1xf32> to vector<12x12xf32>
    %88 = arith.mulf %83, %87 : vector<12x12xf32>
    %89 = arith.truncf %88 : vector<12x12xf32> to vector<12x12xbf16>
    %cst_31 = arith.constant dense<0.000000e+00> : vector<12x16xf32>
    %90 = tpu.matmul %89, %74, %cst_31 {dimension_numbers = #tpu.dot_dimension_numbers<[1], [0], [0], [1], [0, 0, 1, 1], [], []>} : vector<12x12xbf16>, vector<12x16xbf16>, vector<12x16xf32> -> vector<12x16xf32>
    %91 = vector.extract_strided_slice %42 {offsets = [0, 32], sizes = [12, 16], strides = [1, 1]} : vector<12x64xf32> to vector<12x16xf32>
    %92 = arith.truncf %91 : vector<12x16xf32> to vector<12x16xbf16>
    %93 = vector.extract_strided_slice %43 {offsets = [0, 32], sizes = [12, 16], strides = [1, 1]} : vector<12x64xf32> to vector<12x16xf32>
    %94 = arith.truncf %93 : vector<12x16xf32> to vector<12x16xbf16>
    %95 = vector.extract_strided_slice %44 {offsets = [0, 32], sizes = [12, 16], strides = [1, 1]} : vector<12x64xf32> to vector<12x16xf32>
    %96 = arith.truncf %95 : vector<12x16xf32> to vector<12x16xbf16>
    %cst_32 = arith.constant dense<0.000000e+00> : vector<12x12xf32>
    %97 = tpu.matmul %92, %94, %cst_32 {dimension_numbers = #tpu.dot_dimension_numbers<[1], [1], [0], [0], [0, 0, 1, 0], [], []>} : vector<12x16xbf16>, vector<12x16xbf16>, vector<12x12xf32> -> vector<12x12xf32>
    %cst_33 = arith.constant 2.500000e-01 : f32
    %98 = vector.broadcast %cst_33 : f32 to vector<12x12xf32>
    %99 = arith.mulf %97, %98 : vector<12x12xf32>
    %100 = arith.addf %99, %45 : vector<12x12xf32>
    %cst_34 = arith.constant dense<0xFF800000> : vector<12xf32>
    %101 = vector.multi_reduction <maximumf>, %100, %cst_34 [1] : vector<12x12xf32> to vector<12xf32>
    %102 = vector.shape_cast %101 : vector<12xf32> to vector<12x1xf32>
    %103 = vector.broadcast %102 : vector<12x1xf32> to vector<12x12xf32>
    %104 = arith.subf %100, %103 : vector<12x12xf32>
    %105 = math.exp %104 : vector<12x12xf32>
    %cst_35 = arith.constant dense<0.000000e+00> : vector<12xf32>
    %106 = vector.multi_reduction <add>, %105, %cst_35 [1] : vector<12x12xf32> to vector<12xf32>
    %107 = vector.shape_cast %106 : vector<12xf32> to vector<12x1xf32>
    %108 = tpu.reciprocal %107 {approx = true} : vector<12x1xf32> -> vector<12x1xf32>
    %109 = vector.broadcast %108 : vector<12x1xf32> to vector<12x12xf32>
    %110 = arith.mulf %105, %109 : vector<12x12xf32>
    %111 = arith.truncf %110 : vector<12x12xf32> to vector<12x12xbf16>
    %cst_36 = arith.constant dense<0.000000e+00> : vector<12x16xf32>
    %112 = tpu.matmul %111, %96, %cst_36 {dimension_numbers = #tpu.dot_dimension_numbers<[1], [0], [0], [1], [0, 0, 1, 1], [], []>} : vector<12x12xbf16>, vector<12x16xbf16>, vector<12x16xf32> -> vector<12x16xf32>
    %113 = vector.extract_strided_slice %42 {offsets = [0, 48], sizes = [12, 16], strides = [1, 1]} : vector<12x64xf32> to vector<12x16xf32>
    %114 = arith.truncf %113 : vector<12x16xf32> to vector<12x16xbf16>
    %115 = vector.extract_strided_slice %43 {offsets = [0, 48], sizes = [12, 16], strides = [1, 1]} : vector<12x64xf32> to vector<12x16xf32>
    %116 = arith.truncf %115 : vector<12x16xf32> to vector<12x16xbf16>
    %117 = vector.extract_strided_slice %44 {offsets = [0, 48], sizes = [12, 16], strides = [1, 1]} : vector<12x64xf32> to vector<12x16xf32>
    %118 = arith.truncf %117 : vector<12x16xf32> to vector<12x16xbf16>
    %cst_37 = arith.constant dense<0.000000e+00> : vector<12x12xf32>
    %119 = tpu.matmul %114, %116, %cst_37 {dimension_numbers = #tpu.dot_dimension_numbers<[1], [1], [0], [0], [0, 0, 1, 0], [], []>} : vector<12x16xbf16>, vector<12x16xbf16>, vector<12x12xf32> -> vector<12x12xf32>
    %cst_38 = arith.constant 2.500000e-01 : f32
    %120 = vector.broadcast %cst_38 : f32 to vector<12x12xf32>
    %121 = arith.mulf %119, %120 : vector<12x12xf32>
    %122 = arith.addf %121, %45 : vector<12x12xf32>
    %cst_39 = arith.constant dense<0xFF800000> : vector<12xf32>
    %123 = vector.multi_reduction <maximumf>, %122, %cst_39 [1] : vector<12x12xf32> to vector<12xf32>
    %124 = vector.shape_cast %123 : vector<12xf32> to vector<12x1xf32>
    %125 = vector.broadcast %124 : vector<12x1xf32> to vector<12x12xf32>
    %126 = arith.subf %122, %125 : vector<12x12xf32>
    %127 = math.exp %126 : vector<12x12xf32>
    %cst_40 = arith.constant dense<0.000000e+00> : vector<12xf32>
    %128 = vector.multi_reduction <add>, %127, %cst_40 [1] : vector<12x12xf32> to vector<12xf32>
    %129 = vector.shape_cast %128 : vector<12xf32> to vector<12x1xf32>
    %130 = tpu.reciprocal %129 {approx = true} : vector<12x1xf32> -> vector<12x1xf32>
    %131 = vector.broadcast %130 : vector<12x1xf32> to vector<12x12xf32>
    %132 = arith.mulf %127, %131 : vector<12x12xf32>
    %133 = arith.truncf %132 : vector<12x12xf32> to vector<12x12xbf16>
    %cst_41 = arith.constant dense<0.000000e+00> : vector<12x16xf32>
    %134 = tpu.matmul %133, %118, %cst_41 {dimension_numbers = #tpu.dot_dimension_numbers<[1], [0], [0], [1], [0, 0, 1, 1], [], []>} : vector<12x12xbf16>, vector<12x16xbf16>, vector<12x16xf32> -> vector<12x16xf32>
    %135 = tpu.concatenate %68, %90, %112, %134 in 1 : vector<12x16xf32>, vector<12x16xf32>, vector<12x16xf32>, vector<12x16xf32> -> vector<12x64xf32>
    %136 = vector.broadcast %46 : vector<12x1xf32> to vector<12x64xf32>
    %137 = arith.mulf %135, %136 : vector<12x64xf32>
    %138 = arith.truncf %137 : vector<12x64xf32> to vector<12x64xbf16>
    %c0_42 = arith.constant 0 : index
    %c0_43 = arith.constant 0 : index
    %139 = vector.load %arg8[%c0_42, %c0_43] : memref<64x64xbf16, #tpu.memory_space<vmem>>, vector<64x64xbf16>
    %cst_44 = arith.constant dense<0.000000e+00> : vector<12x64xf32>
    %140 = tpu.matmul %138, %139, %cst_44 {dimension_numbers = #tpu.dot_dimension_numbers<[1], [0], [0], [1], [0, 0, 1, 1], [], []>} : vector<12x64xbf16>, vector<64x64xbf16>, vector<12x64xf32> -> vector<12x64xf32>
    %c0_45 = arith.constant 0 : index
    %c0_46 = arith.constant 0 : index
    %141 = vector.load %arg9[%c0_45, %c0_46] : memref<1x64xf32, #tpu.memory_space<vmem>>, vector<1x64xf32>
    %142 = vector.broadcast %141 : vector<1x64xf32> to vector<12x64xf32>
    %143 = arith.addf %140, %142 : vector<12x64xf32>
    %144 = arith.mulf %10, %143 : vector<12x64xf32>
    %145 = arith.addf %0, %144 : vector<12x64xf32>
    %cst_47 = arith.constant dense<0.000000e+00> : vector<12xf32>
    %146 = vector.multi_reduction <add>, %145, %cst_47 [1] : vector<12x64xf32> to vector<12xf32>
    %147 = vector.shape_cast %146 : vector<12xf32> to vector<12x1xf32>
    %cst_48 = arith.constant 6.400000e+01 : f32
    %148 = vector.broadcast %cst_48 : f32 to vector<12x1xf32>
    %149 = arith.divf %147, %148 : vector<12x1xf32>
    %150 = vector.broadcast %149 : vector<12x1xf32> to vector<12x64xf32>
    %151 = arith.subf %145, %150 : vector<12x64xf32>
    %152 = arith.mulf %151, %151 : vector<12x64xf32>
    %cst_49 = arith.constant dense<0.000000e+00> : vector<12xf32>
    %153 = vector.multi_reduction <add>, %152, %cst_49 [1] : vector<12x64xf32> to vector<12xf32>
    %154 = vector.shape_cast %153 : vector<12xf32> to vector<12x1xf32>
    %cst_50 = arith.constant 6.400000e+01 : f32
    %155 = vector.broadcast %cst_50 : f32 to vector<12x1xf32>
    %156 = arith.divf %154, %155 : vector<12x1xf32>
    %157 = vector.broadcast %149 : vector<12x1xf32> to vector<12x64xf32>
    %158 = arith.subf %145, %157 : vector<12x64xf32>
    %cst_51 = arith.constant 9.99999997E-7 : f32
    %159 = vector.broadcast %cst_51 : f32 to vector<12x1xf32>
    %160 = arith.addf %156, %159 : vector<12x1xf32>
    %161 = math.rsqrt %160 : vector<12x1xf32>
    %162 = vector.broadcast %161 : vector<12x1xf32> to vector<12x64xf32>
    %163 = arith.mulf %158, %162 : vector<12x64xf32>
    %cst_52 = arith.constant 1.000000e+00 : f32
    %164 = vector.broadcast %cst_52 : f32 to vector<12x64xf32>
    %165 = arith.addf %164, %12 : vector<12x64xf32>
    %166 = arith.mulf %163, %165 : vector<12x64xf32>
    %167 = arith.addf %166, %11 : vector<12x64xf32>
    %168 = arith.truncf %167 : vector<12x64xf32> to vector<12x64xbf16>
    %c0_53 = arith.constant 0 : index
    %c0_54 = arith.constant 0 : index
    %169 = vector.load %arg10[%c0_53, %c0_54] : memref<64x256xbf16, #tpu.memory_space<vmem>>, vector<64x256xbf16>
    %cst_55 = arith.constant dense<0.000000e+00> : vector<12x256xf32>
    %170 = tpu.matmul %168, %169, %cst_55 {dimension_numbers = #tpu.dot_dimension_numbers<[1], [0], [0], [1], [0, 0, 1, 1], [], []>} : vector<12x64xbf16>, vector<64x256xbf16>, vector<12x256xf32> -> vector<12x256xf32>
    %c0_56 = arith.constant 0 : index
    %c0_57 = arith.constant 0 : index
    %171 = vector.load %arg11[%c0_56, %c0_57] : memref<1x256xf32, #tpu.memory_space<vmem>>, vector<1x256xf32>
    %172 = vector.broadcast %171 : vector<1x256xf32> to vector<12x256xf32>
    %173 = arith.addf %170, %172 : vector<12x256xf32>
    %174 = arith.mulf %173, %173 : vector<12x256xf32>
    %175 = arith.mulf %173, %174 : vector<12x256xf32>
    %cst_58 = arith.constant 4.471500e-02 : f32
    %176 = vector.broadcast %cst_58 : f32 to vector<12x256xf32>
    %177 = arith.mulf %176, %175 : vector<12x256xf32>
    %178 = arith.addf %173, %177 : vector<12x256xf32>
    %cst_59 = arith.constant 0.797884583 : f32
    %179 = vector.broadcast %cst_59 : f32 to vector<12x256xf32>
    %180 = arith.mulf %179, %178 : vector<12x256xf32>
    %181 = math.tanh %180 : vector<12x256xf32>
    %cst_60 = arith.constant 1.000000e+00 : f32
    %182 = vector.broadcast %cst_60 : f32 to vector<12x256xf32>
    %183 = arith.addf %182, %181 : vector<12x256xf32>
    %cst_61 = arith.constant 5.000000e-01 : f32
    %184 = vector.broadcast %cst_61 : f32 to vector<12x256xf32>
    %185 = arith.mulf %184, %183 : vector<12x256xf32>
    %186 = arith.mulf %173, %185 : vector<12x256xf32>
    %187 = arith.truncf %186 : vector<12x256xf32> to vector<12x256xbf16>
    %c0_62 = arith.constant 0 : index
    %c0_63 = arith.constant 0 : index
    %188 = vector.load %arg12[%c0_62, %c0_63] : memref<256x64xbf16, #tpu.memory_space<vmem>>, vector<256x64xbf16>
    %cst_64 = arith.constant dense<0.000000e+00> : vector<12x64xf32>
    %189 = tpu.matmul %187, %188, %cst_64 {dimension_numbers = #tpu.dot_dimension_numbers<[1], [0], [0], [1], [0, 0, 1, 1], [], []>} : vector<12x256xbf16>, vector<256x64xbf16>, vector<12x64xf32> -> vector<12x64xf32>
    %c0_65 = arith.constant 0 : index
    %c0_66 = arith.constant 0 : index
    %190 = vector.load %arg13[%c0_65, %c0_66] : memref<1x64xf32, #tpu.memory_space<vmem>>, vector<1x64xf32>
    %191 = vector.broadcast %190 : vector<1x64xf32> to vector<12x64xf32>
    %192 = arith.addf %189, %191 : vector<12x64xf32>
    %193 = arith.mulf %13, %192 : vector<12x64xf32>
    %194 = arith.addf %145, %193 : vector<12x64xf32>
    %c0_67 = arith.constant 0 : index
    %c0_68 = arith.constant 0 : index
    %195 = vector.load %arg14[%c0_67, %c0_68] : memref<12x64xf32, #tpu.memory_space<vmem>>, vector<12x64xf32>
    tpu.vector_store %arg14[%c0_67, %c0_68], %194 {strides = array<i32>} : memref<12x64xf32, #tpu.memory_space<vmem>>, vector<12x64xf32>,
    return
  }
}

module attributes {stable_mosaic.version = 11 : i64} {
  func.func @_res_mlp_embed_kernel(%arg0: memref<12x16xf32, #tpu.memory_space<vmem>>, %arg1: memref<12x64xf32, #tpu.memory_space<vmem>>, %arg2: memref<16x64xbf16, #tpu.memory_space<vmem>>, %arg3: memref<1x64xf32, #tpu.memory_space<vmem>>, %arg4: memref<64x64xbf16, #tpu.memory_space<vmem>>, %arg5: memref<1x64xf32, #tpu.memory_space<vmem>>, %arg6: memref<12x64xf32, #tpu.memory_space<vmem>>) attributes {dimension_semantics = [], scalar_prefetch = 0 : i64, scratch_operands = 0 : i64, tpu.core_type = #tpu.core_type<tc>} {
    %c0 = arith.constant 0 : index
    %c0_0 = arith.constant 0 : index
    %0 = vector.load %arg0[%c0, %c0_0] : memref<12x16xf32, #tpu.memory_space<vmem>>, vector<12x16xf32>
    %1 = arith.truncf %0 : vector<12x16xf32> to vector<12x16xbf16>
    %c0_1 = arith.constant 0 : index
    %c0_2 = arith.constant 0 : index
    %2 = vector.load %arg2[%c0_1, %c0_2] : memref<16x64xbf16, #tpu.memory_space<vmem>>, vector<16x64xbf16>
    %cst = arith.constant dense<0.000000e+00> : vector<12x64xf32>
    %3 = tpu.matmul %1, %2, %cst {dimension_numbers = #tpu.dot_dimension_numbers<[1], [0], [0], [1], [0, 0, 1, 1], [], []>} : vector<12x16xbf16>, vector<16x64xbf16>, vector<12x64xf32> -> vector<12x64xf32>
    %c0_3 = arith.constant 0 : index
    %c0_4 = arith.constant 0 : index
    %4 = vector.load %arg3[%c0_3, %c0_4] : memref<1x64xf32, #tpu.memory_space<vmem>>, vector<1x64xf32>
    %5 = vector.broadcast %4 : vector<1x64xf32> to vector<12x64xf32>
    %6 = arith.addf %3, %5 : vector<12x64xf32>
    %7 = arith.negf %6 : vector<12x64xf32>
    %8 = math.exp %7 : vector<12x64xf32>
    %cst_5 = arith.constant 1.000000e+00 : f32
    %9 = vector.broadcast %cst_5 : f32 to vector<12x64xf32>
    %10 = arith.addf %9, %8 : vector<12x64xf32>
    %11 = arith.divf %9, %10 : vector<12x64xf32>
    %12 = arith.mulf %6, %11 : vector<12x64xf32>
    %13 = arith.truncf %12 : vector<12x64xf32> to vector<12x64xbf16>
    %c0_6 = arith.constant 0 : index
    %c0_7 = arith.constant 0 : index
    %14 = vector.load %arg4[%c0_6, %c0_7] : memref<64x64xbf16, #tpu.memory_space<vmem>>, vector<64x64xbf16>
    %cst_8 = arith.constant dense<0.000000e+00> : vector<12x64xf32>
    %15 = tpu.matmul %13, %14, %cst_8 {dimension_numbers = #tpu.dot_dimension_numbers<[1], [0], [0], [1], [0, 0, 1, 1], [], []>} : vector<12x64xbf16>, vector<64x64xbf16>, vector<12x64xf32> -> vector<12x64xf32>
    %c0_9 = arith.constant 0 : index
    %c0_10 = arith.constant 0 : index
    %16 = vector.load %arg5[%c0_9, %c0_10] : memref<1x64xf32, #tpu.memory_space<vmem>>, vector<1x64xf32>
    %17 = vector.broadcast %16 : vector<1x64xf32> to vector<12x64xf32>
    %18 = arith.addf %15, %17 : vector<12x64xf32>
    %19 = arith.addf %6, %18 : vector<12x64xf32>
    %c0_11 = arith.constant 0 : index
    %c0_12 = arith.constant 0 : index
    %20 = vector.load %arg1[%c0_11, %c0_12] : memref<12x64xf32, #tpu.memory_space<vmem>>, vector<12x64xf32>
    %21 = arith.addf %19, %20 : vector<12x64xf32>
    %c0_13 = arith.constant 0 : index
    %c0_14 = arith.constant 0 : index
    %22 = vector.load %arg6[%c0_13, %c0_14] : memref<12x64xf32, #tpu.memory_space<vmem>>, vector<12x64xf32>
    tpu.vector_store %arg6[%c0_13, %c0_14], %21 {strides = array<i32>} : memref<12x64xf32, #tpu.memory_space<vmem>>, vector<12x64xf32>,
    return
  }
}

module attributes {stable_mosaic.version = 11 : i64} {
  func.func @_res_mlp_embed_kernel(%arg0: memref<7x8xf32, #tpu.memory_space<vmem>>, %arg1: memref<7x32xf32, #tpu.memory_space<vmem>>, %arg2: memref<8x32xbf16, #tpu.memory_space<vmem>>, %arg3: memref<1x32xf32, #tpu.memory_space<vmem>>, %arg4: memref<32x32xbf16, #tpu.memory_space<vmem>>, %arg5: memref<1x32xf32, #tpu.memory_space<vmem>>, %arg6: memref<7x32xf32, #tpu.memory_space<vmem>>) attributes {dimension_semantics = [], scalar_prefetch = 0 : i64, scratch_operands = 0 : i64, tpu.core_type = #tpu.core_type<tc>} {
    %c0 = arith.constant 0 : index
    %c0_0 = arith.constant 0 : index
    %0 = vector.load %arg0[%c0, %c0_0] : memref<7x8xf32, #tpu.memory_space<vmem>>, vector<7x8xf32>
    %1 = arith.truncf %0 : vector<7x8xf32> to vector<7x8xbf16>
    %c0_1 = arith.constant 0 : index
    %c0_2 = arith.constant 0 : index
    %2 = vector.load %arg2[%c0_1, %c0_2] : memref<8x32xbf16, #tpu.memory_space<vmem>>, vector<8x32xbf16>
    %cst = arith.constant dense<0.000000e+00> : vector<7x32xf32>
    %3 = tpu.matmul %1, %2, %cst {dimension_numbers = #tpu.dot_dimension_numbers<[1], [0], [0], [1], [0, 0, 1, 1], [], []>} : vector<7x8xbf16>, vector<8x32xbf16>, vector<7x32xf32> -> vector<7x32xf32>
    %c0_3 = arith.constant 0 : index
    %c0_4 = arith.constant 0 : index
    %4 = vector.load %arg3[%c0_3, %c0_4] : memref<1x32xf32, #tpu.memory_space<vmem>>, vector<1x32xf32>
    %5 = vector.broadcast %4 : vector<1x32xf32> to vector<7x32xf32>
    %6 = arith.addf %3, %5 : vector<7x32xf32>
    %7 = arith.negf %6 : vector<7x32xf32>
    %8 = math.exp %7 : vector<7x32xf32>
    %cst_5 = arith.constant 1.000000e+00 : f32
    %9 = vector.broadcast %cst_5 : f32 to vector<7x32xf32>
    %10 = arith.addf %9, %8 : vector<7x32xf32>
    %11 = arith.divf %9, %10 : vector<7x32xf32>
    %12 = arith.mulf %6, %11 : vector<7x32xf32>
    %13 = arith.truncf %12 : vector<7x32xf32> to vector<7x32xbf16>
    %c0_6 = arith.constant 0 : index
    %c0_7 = arith.constant 0 : index
    %14 = vector.load %arg4[%c0_6, %c0_7] : memref<32x32xbf16, #tpu.memory_space<vmem>>, vector<32x32xbf16>
    %cst_8 = arith.constant dense<0.000000e+00> : vector<7x32xf32>
    %15 = tpu.matmul %13, %14, %cst_8 {dimension_numbers = #tpu.dot_dimension_numbers<[1], [0], [0], [1], [0, 0, 1, 1], [], []>} : vector<7x32xbf16>, vector<32x32xbf16>, vector<7x32xf32> -> vector<7x32xf32>
    %c0_9 = arith.constant 0 : index
    %c0_10 = arith.constant 0 : index
    %16 = vector.load %arg5[%c0_9, %c0_10] : memref<1x32xf32, #tpu.memory_space<vmem>>, vector<1x32xf32>
    %17 = vector.broadcast %16 : vector<1x32xf32> to vector<7x32xf32>
    %18 = arith.addf %15, %17 : vector<7x32xf32>
    %19 = arith.addf %6, %18 : vector<7x32xf32>
    %c0_11 = arith.constant 0 : index
    %c0_12 = arith.constant 0 : index
    %20 = vector.load %arg1[%c0_11, %c0_12] : memref<7x32xf32, #tpu.memory_space<vmem>>, vector<7x32xf32>
    %21 = arith.addf %19, %20 : vector<7x32xf32>
    %c0_13 = arith.constant 0 : index
    %c0_14 = arith.constant 0 : index
    %22 = vector.load %arg6[%c0_13, %c0_14] : memref<7x32xf32, #tpu.memory_space<vmem>>, vector<7x32xf32>
    tpu.vector_store %arg6[%c0_13, %c0_14], %21 {strides = array<i32>} : memref<7x32xf32, #tpu.memory_space<vmem>>, vector<7x32xf32>,
    return
  }
}

module attributes {stable_mosaic.version = 11 : i64} {
  func.func @_self_block_kernel(%arg0: memref<7x32xf32, #tpu.memory_space<vmem>>, %arg1: memref<7x32xf32, #tpu.memory_space<vmem>>, %arg2: memref<7x7xf32, #tpu.memory_space<vmem>>, %arg3: memref<7x1xf32, #tpu.memory_space<vmem>>, %arg4: memref<32x192xbf16, #tpu.memory_space<vmem>>, %arg5: memref<1x192xf32, #tpu.memory_space<vmem>>, %arg6: memref<32x96xbf16, #tpu.memory_space<vmem>>, %arg7: memref<1x96xf32, #tpu.memory_space<vmem>>, %arg8: memref<32x32xbf16, #tpu.memory_space<vmem>>, %arg9: memref<1x32xf32, #tpu.memory_space<vmem>>, %arg10: memref<32x128xbf16, #tpu.memory_space<vmem>>, %arg11: memref<1x128xf32, #tpu.memory_space<vmem>>, %arg12: memref<128x32xbf16, #tpu.memory_space<vmem>>, %arg13: memref<1x32xf32, #tpu.memory_space<vmem>>, %arg14: memref<7x32xf32, #tpu.memory_space<vmem>>) attributes {dimension_semantics = [], scalar_prefetch = 0 : i64, scratch_operands = 0 : i64, tpu.core_type = #tpu.core_type<tc>} {
    %c0 = arith.constant 0 : index
    %c0_0 = arith.constant 0 : index
    %0 = vector.load %arg0[%c0, %c0_0] : memref<7x32xf32, #tpu.memory_space<vmem>>, vector<7x32xf32>
    %c0_1 = arith.constant 0 : index
    %c0_2 = arith.constant 0 : index
    %1 = vector.load %arg1[%c0_1, %c0_2] : memref<7x32xf32, #tpu.memory_space<vmem>>, vector<7x32xf32>
    %2 = arith.truncf %1 : vector<7x32xf32> to vector<7x32xbf16>
    %c0_3 = arith.constant 0 : index
    %c0_4 = arith.constant 0 : index
    %3 = vector.load %arg4[%c0_3, %c0_4] : memref<32x192xbf16, #tpu.memory_space<vmem>>, vector<32x192xbf16>
    %cst = arith.constant dense<0.000000e+00> : vector<7x192xf32>
    %4 = tpu.matmul %2, %3, %cst {dimension_numbers = #tpu.dot_dimension_numbers<[1], [0], [0], [1], [0, 0, 1, 1], [], []>} : vector<7x32xbf16>, vector<32x192xbf16>, vector<7x192xf32> -> vector<7x192xf32>
    %c0_5 = arith.constant 0 : index
    %c0_6 = arith.constant 0 : index
    %5 = vector.load %arg5[%c0_5, %c0_6] : memref<1x192xf32, #tpu.memory_space<vmem>>, vector<1x192xf32>
    %6 = vector.broadcast %5 : vector<1x192xf32> to vector<7x192xf32>
    %7 = arith.addf %4, %6 : vector<7x192xf32>
    %8 = vector.extract_strided_slice %7 {offsets = [0, 0], sizes = [7, 32], strides = [1, 1]} : vector<7x192xf32> to vector<7x32xf32>
    %9 = vector.extract_strided_slice %7 {offsets = [0, 32], sizes = [7, 32], strides = [1, 1]} : vector<7x192xf32> to vector<7x32xf32>
    %10 = vector.extract_strided_slice %7 {offsets = [0, 64], sizes = [7, 32], strides = [1, 1]} : vector<7x192xf32> to vector<7x32xf32>
    %11 = vector.extract_strided_slice %7 {offsets = [0, 96], sizes = [7, 32], strides = [1, 1]} : vector<7x192xf32> to vector<7x32xf32>
    %12 = vector.extract_strided_slice %7 {offsets = [0, 128], sizes = [7, 32], strides = [1, 1]} : vector<7x192xf32> to vector<7x32xf32>
    %13 = vector.extract_strided_slice %7 {offsets = [0, 160], sizes = [7, 32], strides = [1, 1]} : vector<7x192xf32> to vector<7x32xf32>
    %cst_7 = arith.constant dense<0.000000e+00> : vector<7xf32>
    %14 = vector.multi_reduction <add>, %0, %cst_7 [1] : vector<7x32xf32> to vector<7xf32>
    %15 = vector.shape_cast %14 : vector<7xf32> to vector<7x1xf32>
    %cst_8 = arith.constant 3.200000e+01 : f32
    %16 = vector.broadcast %cst_8 : f32 to vector<7x1xf32>
    %17 = arith.divf %15, %16 : vector<7x1xf32>
    %18 = vector.broadcast %17 : vector<7x1xf32> to vector<7x32xf32>
    %19 = arith.subf %0, %18 : vector<7x32xf32>
    %20 = arith.mulf %19, %19 : vector<7x32xf32>
    %cst_9 = arith.constant dense<0.000000e+00> : vector<7xf32>
    %21 = vector.multi_reduction <add>, %20, %cst_9 [1] : vector<7x32xf32> to vector<7xf32>
    %22 = vector.shape_cast %21 : vector<7xf32> to vector<7x1xf32>
    %cst_10 = arith.constant 3.200000e+01 : f32
    %23 = vector.broadcast %cst_10 : f32 to vector<7x1xf32>
    %24 = arith.divf %22, %23 : vector<7x1xf32>
    %25 = vector.broadcast %17 : vector<7x1xf32> to vector<7x32xf32>
    %26 = arith.subf %0, %25 : vector<7x32xf32>
    %cst_11 = arith.constant 9.99999997E-7 : f32
    %27 = vector.broadcast %cst_11 : f32 to vector<7x1xf32>
    %28 = arith.addf %24, %27 : vector<7x1xf32>
    %29 = math.rsqrt %28 : vector<7x1xf32>
    %30 = vector.broadcast %29 : vector<7x1xf32> to vector<7x32xf32>
    %31 = arith.mulf %26, %30 : vector<7x32xf32>
    %cst_12 = arith.constant 1.000000e+00 : f32
    %32 = vector.broadcast %cst_12 : f32 to vector<7x32xf32>
    %33 = arith.addf %32, %9 : vector<7x32xf32>
    %34 = arith.mulf %31, %33 : vector<7x32xf32>
    %35 = arith.addf %34, %8 : vector<7x32xf32>
    %36 = arith.truncf %35 : vector<7x32xf32> to vector<7x32xbf16>
    %c0_13 = arith.constant 0 : index
    %c0_14 = arith.constant 0 : index
    %37 = vector.load %arg6[%c0_13, %c0_14] : memref<32x96xbf16, #tpu.memory_space<vmem>>, vector<32x96xbf16>
    %cst_15 = arith.constant dense<0.000000e+00> : vector<7x96xf32>
    %38 = tpu.matmul %36, %37, %cst_15 {dimension_numbers = #tpu.dot_dimension_numbers<[1], [0], [0], [1], [0, 0, 1, 1], [], []>} : vector<7x32xbf16>, vector<32x96xbf16>, vector<7x96xf32> -> vector<7x96xf32>
    %c0_16 = arith.constant 0 : index
    %c0_17 = arith.constant 0 : index
    %39 = vector.load %arg7[%c0_16, %c0_17] : memref<1x96xf32, #tpu.memory_space<vmem>>, vector<1x96xf32>
    %40 = vector.broadcast %39 : vector<1x96xf32> to vector<7x96xf32>
    %41 = arith.addf %38, %40 : vector<7x96xf32>
    %42 = vector.extract_strided_slice %41 {offsets = [0, 0], sizes = [7, 32], strides = [1, 1]} : vector<7x96xf32> to vector<7x32xf32>
    %43 = vector.extract_strided_slice %41 {offsets = [0, 32], sizes = [7, 32], strides = [1, 1]} : vector<7x96xf32> to vector<7x32xf32>
    %44 = vector.extract_strided_slice %41 {offsets = [0, 64], sizes = [7, 32], strides = [1, 1]} : vector<7x96xf32> to vector<7x32xf32>
    %c0_18 = arith.constant 0 : index
    %c0_19 = arith.constant 0 : index
    %45 = vector.load %arg2[%c0_18, %c0_19] : memref<7x7xf32, #tpu.memory_space<vmem>>, vector<7x7xf32>
    %c0_20 = arith.constant 0 : index
    %c0_21 = arith.constant 0 : index
    %46 = vector.load %arg3[%c0_20, %c0_21] : memref<7x1xf32, #tpu.memory_space<vmem>>, vector<7x1xf32>
    %47 = vector.extract_strided_slice %42 {offsets = [0, 0], sizes = [7, 16], strides = [1, 1]} : vector<7x32xf32> to vector<7x16xf32>
    %48 = arith.truncf %47 : vector<7x16xf32> to vector<7x16xbf16>
    %49 = vector.extract_strided_slice %43 {offsets = [0, 0], sizes = [7, 16], strides = [1, 1]} : vector<7x32xf32> to vector<7x16xf32>
    %50 = arith.truncf %49 : vector<7x16xf32> to vector<7x16xbf16>
    %51 = vector.extract_strided_slice %44 {offsets = [0, 0], sizes = [7, 16], strides = [1, 1]} : vector<7x32xf32> to vector<7x16xf32>
    %52 = arith.truncf %51 : vector<7x16xf32> to vector<7x16xbf16>
    %cst_22 = arith.constant dense<0.000000e+00> : vector<7x7xf32>
    %53 = tpu.matmul %48, %50, %cst_22 {dimension_numbers = #tpu.dot_dimension_numbers<[1], [1], [0], [0], [0, 0, 1, 0], [], []>} : vector<7x16xbf16>, vector<7x16xbf16>, vector<7x7xf32> -> vector<7x7xf32>
    %cst_23 = arith.constant 2.500000e-01 : f32
    %54 = vector.broadcast %cst_23 : f32 to vector<7x7xf32>
    %55 = arith.mulf %53, %54 : vector<7x7xf32>
    %56 = arith.addf %55, %45 : vector<7x7xf32>
    %cst_24 = arith.constant dense<0xFF800000> : vector<7xf32>
    %57 = vector.multi_reduction <maximumf>, %56, %cst_24 [1] : vector<7x7xf32> to vector<7xf32>
    %58 = vector.shape_cast %57 : vector<7xf32> to vector<7x1xf32>
    %59 = vector.broadcast %58 : vector<7x1xf32> to vector<7x7xf32>
    %60 = arith.subf %56, %59 : vector<7x7xf32>
    %61 = math.exp %60 : vector<7x7xf32>
    %cst_25 = arith.constant dense<0.000000e+00> : vector<7xf32>
    %62 = vector.multi_reduction <add>, %61, %cst_25 [1] : vector<7x7xf32> to vector<7xf32>
    %63 = vector.shape_cast %62 : vector<7xf32> to vector<7x1xf32>
    %64 = tpu.reciprocal %63 {approx = true} : vector<7x1xf32> -> vector<7x1xf32>
    %65 = vector.broadcast %64 : vector<7x1xf32> to vector<7x7xf32>
    %66 = arith.mulf %61, %65 : vector<7x7xf32>
    %67 = arith.truncf %66 : vector<7x7xf32> to vector<7x7xbf16>
    %cst_26 = arith.constant dense<0.000000e+00> : vector<7x16xf32>
    %68 = tpu.matmul %67, %52, %cst_26 {dimension_numbers = #tpu.dot_dimension_numbers<[1], [0], [0], [1], [0, 0, 1, 1], [], []>} : vector<7x7xbf16>, vector<7x16xbf16>, vector<7x16xf32> -> vector<7x16xf32>
    %69 = vector.extract_strided_slice %42 {offsets = [0, 16], sizes = [7, 16], strides = [1, 1]} : vector<7x32xf32> to vector<7x16xf32>
    %70 = arith.truncf %69 : vector<7x16xf32> to vector<7x16xbf16>
    %71 = vector.extract_strided_slice %43 {offsets = [0, 16], sizes = [7, 16], strides = [1, 1]} : vector<7x32xf32> to vector<7x16xf32>
    %72 = arith.truncf %71 : vector<7x16xf32> to vector<7x16xbf16>
    %73 = vector.extract_strided_slice %44 {offsets = [0, 16], sizes = [7, 16], strides = [1, 1]} : vector<7x32xf32> to vector<7x16xf32>
    %74 = arith.truncf %73 : vector<7x16xf32> to vector<7x16xbf16>
    %cst_27 = arith.constant dense<0.000000e+00> : vector<7x7xf32>
    %75 = tpu.matmul %70, %72, %cst_27 {dimension_numbers = #tpu.dot_dimension_numbers<[1], [1], [0], [0], [0, 0, 1, 0], [], []>} : vector<7x16xbf16>, vector<7x16xbf16>, vector<7x7xf32> -> vector<7x7xf32>
    %cst_28 = arith.constant 2.500000e-01 : f32
    %76 = vector.broadcast %cst_28 : f32 to vector<7x7xf32>
    %77 = arith.mulf %75, %76 : vector<7x7xf32>
    %78 = arith.addf %77, %45 : vector<7x7xf32>
    %cst_29 = arith.constant dense<0xFF800000> : vector<7xf32>
    %79 = vector.multi_reduction <maximumf>, %78, %cst_29 [1] : vector<7x7xf32> to vector<7xf32>
    %80 = vector.shape_cast %79 : vector<7xf32> to vector<7x1xf32>
    %81 = vector.broadcast %80 : vector<7x1xf32> to vector<7x7xf32>
    %82 = arith.subf %78, %81 : vector<7x7xf32>
    %83 = math.exp %82 : vector<7x7xf32>
    %cst_30 = arith.constant dense<0.000000e+00> : vector<7xf32>
    %84 = vector.multi_reduction <add>, %83, %cst_30 [1] : vector<7x7xf32> to vector<7xf32>
    %85 = vector.shape_cast %84 : vector<7xf32> to vector<7x1xf32>
    %86 = tpu.reciprocal %85 {approx = true} : vector<7x1xf32> -> vector<7x1xf32>
    %87 = vector.broadcast %86 : vector<7x1xf32> to vector<7x7xf32>
    %88 = arith.mulf %83, %87 : vector<7x7xf32>
    %89 = arith.truncf %88 : vector<7x7xf32> to vector<7x7xbf16>
    %cst_31 = arith.constant dense<0.000000e+00> : vector<7x16xf32>
    %90 = tpu.matmul %89, %74, %cst_31 {dimension_numbers = #tpu.dot_dimension_numbers<[1], [0], [0], [1], [0, 0, 1, 1], [], []>} : vector<7x7xbf16>, vector<7x16xbf16>, vector<7x16xf32> -> vector<7x16xf32>
    %91 = tpu.concatenate %68, %90 in 1 : vector<7x16xf32>, vector<7x16xf32> -> vector<7x32xf32>
    %92 = vector.broadcast %46 : vector<7x1xf32> to vector<7x32xf32>
    %93 = arith.mulf %91, %92 : vector<7x32xf32>
    %94 = arith.truncf %93 : vector<7x32xf32> to vector<7x32xbf16>
    %c0_32 = arith.constant 0 : index
    %c0_33 = arith.constant 0 : index
    %95 = vector.load %arg8[%c0_32, %c0_33] : memref<32x32xbf16, #tpu.memory_space<vmem>>, vector<32x32xbf16>
    %cst_34 = arith.constant dense<0.000000e+00> : vector<7x32xf32>
    %96 = tpu.matmul %94, %95, %cst_34 {dimension_numbers = #tpu.dot_dimension_numbers<[1], [0], [0], [1], [0, 0, 1, 1], [], []>} : vector<7x32xbf16>, vector<32x32xbf16>, vector<7x32xf32> -> vector<7x32xf32>
    %c0_35 = arith.constant 0 : index
    %c0_36 = arith.constant 0 : index
    %97 = vector.load %arg9[%c0_35, %c0_36] : memref<1x32xf32, #tpu.memory_space<vmem>>, vector<1x32xf32>
    %98 = vector.broadcast %97 : vector<1x32xf32> to vector<7x32xf32>
    %99 = arith.addf %96, %98 : vector<7x32xf32>
    %100 = arith.mulf %10, %99 : vector<7x32xf32>
    %101 = arith.addf %0, %100 : vector<7x32xf32>
    %cst_37 = arith.constant dense<0.000000e+00> : vector<7xf32>
    %102 = vector.multi_reduction <add>, %101, %cst_37 [1] : vector<7x32xf32> to vector<7xf32>
    %103 = vector.shape_cast %102 : vector<7xf32> to vector<7x1xf32>
    %cst_38 = arith.constant 3.200000e+01 : f32
    %104 = vector.broadcast %cst_38 : f32 to vector<7x1xf32>
    %105 = arith.divf %103, %104 : vector<7x1xf32>
    %106 = vector.broadcast %105 : vector<7x1xf32> to vector<7x32xf32>
    %107 = arith.subf %101, %106 : vector<7x32xf32>
    %108 = arith.mulf %107, %107 : vector<7x32xf32>
    %cst_39 = arith.constant dense<0.000000e+00> : vector<7xf32>
    %109 = vector.multi_reduction <add>, %108, %cst_39 [1] : vector<7x32xf32> to vector<7xf32>
    %110 = vector.shape_cast %109 : vector<7xf32> to vector<7x1xf32>
    %cst_40 = arith.constant 3.200000e+01 : f32
    %111 = vector.broadcast %cst_40 : f32 to vector<7x1xf32>
    %112 = arith.divf %110, %111 : vector<7x1xf32>
    %113 = vector.broadcast %105 : vector<7x1xf32> to vector<7x32xf32>
    %114 = arith.subf %101, %113 : vector<7x32xf32>
    %cst_41 = arith.constant 9.99999997E-7 : f32
    %115 = vector.broadcast %cst_41 : f32 to vector<7x1xf32>
    %116 = arith.addf %112, %115 : vector<7x1xf32>
    %117 = math.rsqrt %116 : vector<7x1xf32>
    %118 = vector.broadcast %117 : vector<7x1xf32> to vector<7x32xf32>
    %119 = arith.mulf %114, %118 : vector<7x32xf32>
    %cst_42 = arith.constant 1.000000e+00 : f32
    %120 = vector.broadcast %cst_42 : f32 to vector<7x32xf32>
    %121 = arith.addf %120, %12 : vector<7x32xf32>
    %122 = arith.mulf %119, %121 : vector<7x32xf32>
    %123 = arith.addf %122, %11 : vector<7x32xf32>
    %124 = arith.truncf %123 : vector<7x32xf32> to vector<7x32xbf16>
    %c0_43 = arith.constant 0 : index
    %c0_44 = arith.constant 0 : index
    %125 = vector.load %arg10[%c0_43, %c0_44] : memref<32x128xbf16, #tpu.memory_space<vmem>>, vector<32x128xbf16>
    %cst_45 = arith.constant dense<0.000000e+00> : vector<7x128xf32>
    %126 = tpu.matmul %124, %125, %cst_45 {dimension_numbers = #tpu.dot_dimension_numbers<[1], [0], [0], [1], [0, 0, 1, 1], [], []>} : vector<7x32xbf16>, vector<32x128xbf16>, vector<7x128xf32> -> vector<7x128xf32>
    %c0_46 = arith.constant 0 : index
    %c0_47 = arith.constant 0 : index
    %127 = vector.load %arg11[%c0_46, %c0_47] : memref<1x128xf32, #tpu.memory_space<vmem>>, vector<1x128xf32>
    %128 = vector.broadcast %127 : vector<1x128xf32> to vector<7x128xf32>
    %129 = arith.addf %126, %128 : vector<7x128xf32>
    %130 = arith.mulf %129, %129 : vector<7x128xf32>
    %131 = arith.mulf %129, %130 : vector<7x128xf32>
    %cst_48 = arith.constant 4.471500e-02 : f32
    %132 = vector.broadcast %cst_48 : f32 to vector<7x128xf32>
    %133 = arith.mulf %132, %131 : vector<7x128xf32>
    %134 = arith.addf %129, %133 : vector<7x128xf32>
    %cst_49 = arith.constant 0.797884583 : f32
    %135 = vector.broadcast %cst_49 : f32 to vector<7x128xf32>
    %136 = arith.mulf %135, %134 : vector<7x128xf32>
    %137 = math.tanh %136 : vector<7x128xf32>
    %cst_50 = arith.constant 1.000000e+00 : f32
    %138 = vector.broadcast %cst_50 : f32 to vector<7x128xf32>
    %139 = arith.addf %138, %137 : vector<7x128xf32>
    %cst_51 = arith.constant 5.000000e-01 : f32
    %140 = vector.broadcast %cst_51 : f32 to vector<7x128xf32>
    %141 = arith.mulf %140, %139 : vector<7x128xf32>
    %142 = arith.mulf %129, %141 : vector<7x128xf32>
    %143 = arith.truncf %142 : vector<7x128xf32> to vector<7x128xbf16>
    %c0_52 = arith.constant 0 : index
    %c0_53 = arith.constant 0 : index
    %144 = vector.load %arg12[%c0_52, %c0_53] : memref<128x32xbf16, #tpu.memory_space<vmem>>, vector<128x32xbf16>
    %cst_54 = arith.constant dense<0.000000e+00> : vector<7x32xf32>
    %145 = tpu.matmul %143, %144, %cst_54 {dimension_numbers = #tpu.dot_dimension_numbers<[1], [0], [0], [1], [0, 0, 1, 1], [], []>} : vector<7x128xbf16>, vector<128x32xbf16>, vector<7x32xf32> -> vector<7x32xf32>
    %c0_55 = arith.constant 0 : index
    %c0_56 = arith.constant 0 : index
    %146 = vector.load %arg13[%c0_55, %c0_56] : memref<1x32xf32, #tpu.memory_space<vmem>>, vector<1x32xf32>
    %147 = vector.broadcast %146 : vector<1x32xf32> to vector<7x32xf32>
    %148 = arith.addf %145, %147 : vector<7x32xf32>
    %149 = arith.mulf %13, %148 : vector<7x32xf32>
    %150 = arith.addf %101, %149 : vector<7x32xf32>
    %c0_57 = arith.constant 0 : index
    %c0_58 = arith.constant 0 : index
    %151 = vector.load %arg14[%c0_57, %c0_58] : memref<7x32xf32, #tpu.memory_space<vmem>>, vector<7x32xf32>
    tpu.vector_store %arg14[%c0_57, %c0_58], %150 {strides = array<i32>} : memref<7x32xf32, #tpu.memory_space<vmem>>, vector<7x32xf32>,
    return
  }
}

module attributes {stable_mosaic.version = 11 : i64} {
  func.func @_cross_block_kernel(%arg0: memref<7x32xf32, #tpu.memory_space<vmem>>, %arg1: memref<12x64xf32, #tpu.memory_space<vmem>>, %arg2: memref<7x32xf32, #tpu.memory_space<vmem>>, %arg3: memref<7x12xf32, #tpu.memory_space<vmem>>, %arg4: memref<7x1xf32, #tpu.memory_space<vmem>>, %arg5: memref<32x192xbf16, #tpu.memory_space<vmem>>, %arg6: memref<1x192xf32, #tpu.memory_space<vmem>>, %arg7: memref<32x32xbf16, #tpu.memory_space<vmem>>, %arg8: memref<1x32xf32, #tpu.memory_space<vmem>>, %arg9: memref<64x64xbf16, #tpu.memory_space<vmem>>, %arg10: memref<1x64xf32, #tpu.memory_space<vmem>>, %arg11: memref<32x32xbf16, #tpu.memory_space<vmem>>, %arg12: memref<1x32xf32, #tpu.memory_space<vmem>>, %arg13: memref<32x128xbf16, #tpu.memory_space<vmem>>, %arg14: memref<1x128xf32, #tpu.memory_space<vmem>>, %arg15: memref<128x32xbf16, #tpu.memory_space<vmem>>, %arg16: memref<1x32xf32, #tpu.memory_space<vmem>>, %arg17: memref<7x32xf32, #tpu.memory_space<vmem>>) attributes {dimension_semantics = [], scalar_prefetch = 0 : i64, scratch_operands = 0 : i64, tpu.core_type = #tpu.core_type<tc>} {
    %c0 = arith.constant 0 : index
    %c0_0 = arith.constant 0 : index
    %0 = vector.load %arg0[%c0, %c0_0] : memref<7x32xf32, #tpu.memory_space<vmem>>, vector<7x32xf32>
    %c0_1 = arith.constant 0 : index
    %c0_2 = arith.constant 0 : index
    %1 = vector.load %arg2[%c0_1, %c0_2] : memref<7x32xf32, #tpu.memory_space<vmem>>, vector<7x32xf32>
    %2 = arith.truncf %1 : vector<7x32xf32> to vector<7x32xbf16>
    %c0_3 = arith.constant 0 : index
    %c0_4 = arith.constant 0 : index
    %3 = vector.load %arg5[%c0_3, %c0_4] : memref<32x192xbf16, #tpu.memory_space<vmem>>, vector<32x192xbf16>
    %cst = arith.constant dense<0.000000e+00> : vector<7x192xf32>
    %4 = tpu.matmul %2, %3, %cst {dimension_numbers = #tpu.dot_dimension_numbers<[1], [0], [0], [1], [0, 0, 1, 1], [], []>} : vector<7x32xbf16>, vector<32x192xbf16>, vector<7x192xf32> -> vector<7x192xf32>
    %c0_5 = arith.constant 0 : index
    %c0_6 = arith.constant 0 : index
    %5 = vector.load %arg6[%c0_5, %c0_6] : memref<1x192xf32, #tpu.memory_space<vmem>>, vector<1x192xf32>
    %6 = vector.broadcast %5 : vector<1x192xf32> to vector<7x192xf32>
    %7 = arith.addf %4, %6 : vector<7x192xf32>
    %8 = vector.extract_strided_slice %7 {offsets = [0, 0], sizes = [7, 32], strides = [1, 1]} : vector<7x192xf32> to vector<7x32xf32>
    %9 = vector.extract_strided_slice %7 {offsets = [0, 32], sizes = [7, 32], strides = [1, 1]} : vector<7x192xf32> to vector<7x32xf32>
    %10 = vector.extract_strided_slice %7 {offsets = [0, 64], sizes = [7, 32], strides = [1, 1]} : vector<7x192xf32> to vector<7x32xf32>
    %11 = vector.extract_strided_slice %7 {offsets = [0, 96], sizes = [7, 32], strides = [1, 1]} : vector<7x192xf32> to vector<7x32xf32>
    %12 = vector.extract_strided_slice %7 {offsets = [0, 128], sizes = [7, 32], strides = [1, 1]} : vector<7x192xf32> to vector<7x32xf32>
    %13 = vector.extract_strided_slice %7 {offsets = [0, 160], sizes = [7, 32], strides = [1, 1]} : vector<7x192xf32> to vector<7x32xf32>
    %cst_7 = arith.constant dense<0.000000e+00> : vector<7xf32>
    %14 = vector.multi_reduction <add>, %0, %cst_7 [1] : vector<7x32xf32> to vector<7xf32>
    %15 = vector.shape_cast %14 : vector<7xf32> to vector<7x1xf32>
    %cst_8 = arith.constant 3.200000e+01 : f32
    %16 = vector.broadcast %cst_8 : f32 to vector<7x1xf32>
    %17 = arith.divf %15, %16 : vector<7x1xf32>
    %18 = vector.broadcast %17 : vector<7x1xf32> to vector<7x32xf32>
    %19 = arith.subf %0, %18 : vector<7x32xf32>
    %20 = arith.mulf %19, %19 : vector<7x32xf32>
    %cst_9 = arith.constant dense<0.000000e+00> : vector<7xf32>
    %21 = vector.multi_reduction <add>, %20, %cst_9 [1] : vector<7x32xf32> to vector<7xf32>
    %22 = vector.shape_cast %21 : vector<7xf32> to vector<7x1xf32>
    %cst_10 = arith.constant 3.200000e+01 : f32
    %23 = vector.broadcast %cst_10 : f32 to vector<7x1xf32>
    %24 = arith.divf %22, %23 : vector<7x1xf32>
    %25 = vector.broadcast %17 : vector<7x1xf32> to vector<7x32xf32>
    %26 = arith.subf %0, %25 : vector<7x32xf32>
    %cst_11 = arith.constant 9.99999997E-7 : f32
    %27 = vector.broadcast %cst_11 : f32 to vector<7x1xf32>
    %28 = arith.addf %24, %27 : vector<7x1xf32>
    %29 = math.rsqrt %28 : vector<7x1xf32>
    %30 = vector.broadcast %29 : vector<7x1xf32> to vector<7x32xf32>
    %31 = arith.mulf %26, %30 : vector<7x32xf32>
    %cst_12 = arith.constant 1.000000e+00 : f32
    %32 = vector.broadcast %cst_12 : f32 to vector<7x32xf32>
    %33 = arith.addf %32, %9 : vector<7x32xf32>
    %34 = arith.mulf %31, %33 : vector<7x32xf32>
    %35 = arith.addf %34, %8 : vector<7x32xf32>
    %c0_13 = arith.constant 0 : index
    %c0_14 = arith.constant 0 : index
    %36 = vector.load %arg1[%c0_13, %c0_14] : memref<12x64xf32, #tpu.memory_space<vmem>>, vector<12x64xf32>
    %cst_15 = arith.constant dense<0.000000e+00> : vector<12xf32>
    %37 = vector.multi_reduction <add>, %36, %cst_15 [1] : vector<12x64xf32> to vector<12xf32>
    %38 = vector.shape_cast %37 : vector<12xf32> to vector<12x1xf32>
    %cst_16 = arith.constant 6.400000e+01 : f32
    %39 = vector.broadcast %cst_16 : f32 to vector<12x1xf32>
    %40 = arith.divf %38, %39 : vector<12x1xf32>
    %41 = vector.broadcast %40 : vector<12x1xf32> to vector<12x64xf32>
    %42 = arith.subf %36, %41 : vector<12x64xf32>
    %43 = arith.mulf %42, %42 : vector<12x64xf32>
    %cst_17 = arith.constant dense<0.000000e+00> : vector<12xf32>
    %44 = vector.multi_reduction <add>, %43, %cst_17 [1] : vector<12x64xf32> to vector<12xf32>
    %45 = vector.shape_cast %44 : vector<12xf32> to vector<12x1xf32>
    %cst_18 = arith.constant 6.400000e+01 : f32
    %46 = vector.broadcast %cst_18 : f32 to vector<12x1xf32>
    %47 = arith.divf %45, %46 : vector<12x1xf32>
    %48 = vector.broadcast %40 : vector<12x1xf32> to vector<12x64xf32>
    %49 = arith.subf %36, %48 : vector<12x64xf32>
    %cst_19 = arith.constant 9.99999997E-7 : f32
    %50 = vector.broadcast %cst_19 : f32 to vector<12x1xf32>
    %51 = arith.addf %47, %50 : vector<12x1xf32>
    %52 = math.rsqrt %51 : vector<12x1xf32>
    %53 = vector.broadcast %52 : vector<12x1xf32> to vector<12x64xf32>
    %54 = arith.mulf %49, %53 : vector<12x64xf32>
    %55 = arith.truncf %35 : vector<7x32xf32> to vector<7x32xbf16>
    %c0_20 = arith.constant 0 : index
    %c0_21 = arith.constant 0 : index
    %56 = vector.load %arg7[%c0_20, %c0_21] : memref<32x32xbf16, #tpu.memory_space<vmem>>, vector<32x32xbf16>
    %cst_22 = arith.constant dense<0.000000e+00> : vector<7x32xf32>
    %57 = tpu.matmul %55, %56, %cst_22 {dimension_numbers = #tpu.dot_dimension_numbers<[1], [0], [0], [1], [0, 0, 1, 1], [], []>} : vector<7x32xbf16>, vector<32x32xbf16>, vector<7x32xf32> -> vector<7x32xf32>
    %c0_23 = arith.constant 0 : index
    %c0_24 = arith.constant 0 : index
    %58 = vector.load %arg8[%c0_23, %c0_24] : memref<1x32xf32, #tpu.memory_space<vmem>>, vector<1x32xf32>
    %59 = vector.broadcast %58 : vector<1x32xf32> to vector<7x32xf32>
    %60 = arith.addf %57, %59 : vector<7x32xf32>
    %61 = arith.truncf %54 : vector<12x64xf32> to vector<12x64xbf16>
    %c0_25 = arith.constant 0 : index
    %c0_26 = arith.constant 0 : index
    %62 = vector.load %arg9[%c0_25, %c0_26] : memref<64x64xbf16, #tpu.memory_space<vmem>>, vector<64x64xbf16>
    %cst_27 = arith.constant dense<0.000000e+00> : vector<12x64xf32>
    %63 = tpu.matmul %61, %62, %cst_27 {dimension_numbers = #tpu.dot_dimension_numbers<[1], [0], [0], [1], [0, 0, 1, 1], [], []>} : vector<12x64xbf16>, vector<64x64xbf16>, vector<12x64xf32> -> vector<12x64xf32>
    %c0_28 = arith.constant 0 : index
    %c0_29 = arith.constant 0 : index
    %64 = vector.load %arg10[%c0_28, %c0_29] : memref<1x64xf32, #tpu.memory_space<vmem>>, vector<1x64xf32>
    %65 = vector.broadcast %64 : vector<1x64xf32> to vector<12x64xf32>
    %66 = arith.addf %63, %65 : vector<12x64xf32>
    %67 = vector.extract_strided_slice %66 {offsets = [0, 0], sizes = [12, 32], strides = [1, 1]} : vector<12x64xf32> to vector<12x32xf32>
    %68 = vector.extract_strided_slice %66 {offsets = [0, 32], sizes = [12, 32], strides = [1, 1]} : vector<12x64xf32> to vector<12x32xf32>
    %c0_30 = arith.constant 0 : index
    %c0_31 = arith.constant 0 : index
    %69 = vector.load %arg3[%c0_30, %c0_31] : memref<7x12xf32, #tpu.memory_space<vmem>>, vector<7x12xf32>
    %c0_32 = arith.constant 0 : index
    %c0_33 = arith.constant 0 : index
    %70 = vector.load %arg4[%c0_32, %c0_33] : memref<7x1xf32, #tpu.memory_space<vmem>>, vector<7x1xf32>
    %71 = vector.extract_strided_slice %60 {offsets = [0, 0], sizes = [7, 16], strides = [1, 1]} : vector<7x32xf32> to vector<7x16xf32>
    %72 = arith.truncf %71 : vector<7x16xf32> to vector<7x16xbf16>
    %73 = vector.extract_strided_slice %67 {offsets = [0, 0], sizes = [12, 16], strides = [1, 1]} : vector<12x32xf32> to vector<12x16xf32>
    %74 = arith.truncf %73 : vector<12x16xf32> to vector<12x16xbf16>
    %75 = vector.extract_strided_slice %68 {offsets = [0, 0], sizes = [12, 16], strides = [1, 1]} : vector<12x32xf32> to vector<12x16xf32>
    %76 = arith.truncf %75 : vector<12x16xf32> to vector<12x16xbf16>
    %cst_34 = arith.constant dense<0.000000e+00> : vector<7x12xf32>
    %77 = tpu.matmul %72, %74, %cst_34 {dimension_numbers = #tpu.dot_dimension_numbers<[1], [1], [0], [0], [0, 0, 1, 0], [], []>} : vector<7x16xbf16>, vector<12x16xbf16>, vector<7x12xf32> -> vector<7x12xf32>
    %cst_35 = arith.constant 2.500000e-01 : f32
    %78 = vector.broadcast %cst_35 : f32 to vector<7x12xf32>
    %79 = arith.mulf %77, %78 : vector<7x12xf32>
    %80 = arith.addf %79, %69 : vector<7x12xf32>
    %cst_36 = arith.constant dense<0xFF800000> : vector<7xf32>
    %81 = vector.multi_reduction <maximumf>, %80, %cst_36 [1] : vector<7x12xf32> to vector<7xf32>
    %82 = vector.shape_cast %81 : vector<7xf32> to vector<7x1xf32>
    %83 = vector.broadcast %82 : vector<7x1xf32> to vector<7x12xf32>
    %84 = arith.subf %80, %83 : vector<7x12xf32>
    %85 = math.exp %84 : vector<7x12xf32>
    %cst_37 = arith.constant dense<0.000000e+00> : vector<7xf32>
    %86 = vector.multi_reduction <add>, %85, %cst_37 [1] : vector<7x12xf32> to vector<7xf32>
    %87 = vector.shape_cast %86 : vector<7xf32> to vector<7x1xf32>
    %88 = tpu.reciprocal %87 {approx = true} : vector<7x1xf32> -> vector<7x1xf32>
    %89 = vector.broadcast %88 : vector<7x1xf32> to vector<7x12xf32>
    %90 = arith.mulf %85, %89 : vector<7x12xf32>
    %91 = arith.truncf %90 : vector<7x12xf32> to vector<7x12xbf16>
    %cst_38 = arith.constant dense<0.000000e+00> : vector<7x16xf32>
    %92 = tpu.matmul %91, %76, %cst_38 {dimension_numbers = #tpu.dot_dimension_numbers<[1], [0], [0], [1], [0, 0, 1, 1], [], []>} : vector<7x12xbf16>, vector<12x16xbf16>, vector<7x16xf32> -> vector<7x16xf32>
    %93 = vector.extract_strided_slice %60 {offsets = [0, 16], sizes = [7, 16], strides = [1, 1]} : vector<7x32xf32> to vector<7x16xf32>
    %94 = arith.truncf %93 : vector<7x16xf32> to vector<7x16xbf16>
    %95 = vector.extract_strided_slice %67 {offsets = [0, 16], sizes = [12, 16], strides = [1, 1]} : vector<12x32xf32> to vector<12x16xf32>
    %96 = arith.truncf %95 : vector<12x16xf32> to vector<12x16xbf16>
    %97 = vector.extract_strided_slice %68 {offsets = [0, 16], sizes = [12, 16], strides = [1, 1]} : vector<12x32xf32> to vector<12x16xf32>
    %98 = arith.truncf %97 : vector<12x16xf32> to vector<12x16xbf16>
    %cst_39 = arith.constant dense<0.000000e+00> : vector<7x12xf32>
    %99 = tpu.matmul %94, %96, %cst_39 {dimension_numbers = #tpu.dot_dimension_numbers<[1], [1], [0], [0], [0, 0, 1, 0], [], []>} : vector<7x16xbf16>, vector<12x16xbf16>, vector<7x12xf32> -> vector<7x12xf32>
    %cst_40 = arith.constant 2.500000e-01 : f32
    %100 = vector.broadcast %cst_40 : f32 to vector<7x12xf32>
    %101 = arith.mulf %99, %100 : vector<7x12xf32>
    %102 = arith.addf %101, %69 : vector<7x12xf32>
    %cst_41 = arith.constant dense<0xFF800000> : vector<7xf32>
    %103 = vector.multi_reduction <maximumf>, %102, %cst_41 [1] : vector<7x12xf32> to vector<7xf32>
    %104 = vector.shape_cast %103 : vector<7xf32> to vector<7x1xf32>
    %105 = vector.broadcast %104 : vector<7x1xf32> to vector<7x12xf32>
    %106 = arith.subf %102, %105 : vector<7x12xf32>
    %107 = math.exp %106 : vector<7x12xf32>
    %cst_42 = arith.constant dense<0.000000e+00> : vector<7xf32>
    %108 = vector.multi_reduction <add>, %107, %cst_42 [1] : vector<7x12xf32> to vector<7xf32>
    %109 = vector.shape_cast %108 : vector<7xf32> to vector<7x1xf32>
    %110 = tpu.reciprocal %109 {approx = true} : vector<7x1xf32> -> vector<7x1xf32>
    %111 = vector.broadcast %110 : vector<7x1xf32> to vector<7x12xf32>
    %112 = arith.mulf %107, %111 : vector<7x12xf32>
    %113 = arith.truncf %112 : vector<7x12xf32> to vector<7x12xbf16>
    %cst_43 = arith.constant dense<0.000000e+00> : vector<7x16xf32>
    %114 = tpu.matmul %113, %98, %cst_43 {dimension_numbers = #tpu.dot_dimension_numbers<[1], [0], [0], [1], [0, 0, 1, 1], [], []>} : vector<7x12xbf16>, vector<12x16xbf16>, vector<7x16xf32> -> vector<7x16xf32>
    %115 = tpu.concatenate %92, %114 in 1 : vector<7x16xf32>, vector<7x16xf32> -> vector<7x32xf32>
    %116 = vector.broadcast %70 : vector<7x1xf32> to vector<7x32xf32>
    %117 = arith.mulf %115, %116 : vector<7x32xf32>
    %118 = arith.truncf %117 : vector<7x32xf32> to vector<7x32xbf16>
    %c0_44 = arith.constant 0 : index
    %c0_45 = arith.constant 0 : index
    %119 = vector.load %arg11[%c0_44, %c0_45] : memref<32x32xbf16, #tpu.memory_space<vmem>>, vector<32x32xbf16>
    %cst_46 = arith.constant dense<0.000000e+00> : vector<7x32xf32>
    %120 = tpu.matmul %118, %119, %cst_46 {dimension_numbers = #tpu.dot_dimension_numbers<[1], [0], [0], [1], [0, 0, 1, 1], [], []>} : vector<7x32xbf16>, vector<32x32xbf16>, vector<7x32xf32> -> vector<7x32xf32>
    %c0_47 = arith.constant 0 : index
    %c0_48 = arith.constant 0 : index
    %121 = vector.load %arg12[%c0_47, %c0_48] : memref<1x32xf32, #tpu.memory_space<vmem>>, vector<1x32xf32>
    %122 = vector.broadcast %121 : vector<1x32xf32> to vector<7x32xf32>
    %123 = arith.addf %120, %122 : vector<7x32xf32>
    %124 = arith.mulf %10, %123 : vector<7x32xf32>
    %125 = arith.addf %0, %124 : vector<7x32xf32>
    %cst_49 = arith.constant dense<0.000000e+00> : vector<7xf32>
    %126 = vector.multi_reduction <add>, %125, %cst_49 [1] : vector<7x32xf32> to vector<7xf32>
    %127 = vector.shape_cast %126 : vector<7xf32> to vector<7x1xf32>
    %cst_50 = arith.constant 3.200000e+01 : f32
    %128 = vector.broadcast %cst_50 : f32 to vector<7x1xf32>
    %129 = arith.divf %127, %128 : vector<7x1xf32>
    %130 = vector.broadcast %129 : vector<7x1xf32> to vector<7x32xf32>
    %131 = arith.subf %125, %130 : vector<7x32xf32>
    %132 = arith.mulf %131, %131 : vector<7x32xf32>
    %cst_51 = arith.constant dense<0.000000e+00> : vector<7xf32>
    %133 = vector.multi_reduction <add>, %132, %cst_51 [1] : vector<7x32xf32> to vector<7xf32>
    %134 = vector.shape_cast %133 : vector<7xf32> to vector<7x1xf32>
    %cst_52 = arith.constant 3.200000e+01 : f32
    %135 = vector.broadcast %cst_52 : f32 to vector<7x1xf32>
    %136 = arith.divf %134, %135 : vector<7x1xf32>
    %137 = vector.broadcast %129 : vector<7x1xf32> to vector<7x32xf32>
    %138 = arith.subf %125, %137 : vector<7x32xf32>
    %cst_53 = arith.constant 9.99999997E-7 : f32
    %139 = vector.broadcast %cst_53 : f32 to vector<7x1xf32>
    %140 = arith.addf %136, %139 : vector<7x1xf32>
    %141 = math.rsqrt %140 : vector<7x1xf32>
    %142 = vector.broadcast %141 : vector<7x1xf32> to vector<7x32xf32>
    %143 = arith.mulf %138, %142 : vector<7x32xf32>
    %cst_54 = arith.constant 1.000000e+00 : f32
    %144 = vector.broadcast %cst_54 : f32 to vector<7x32xf32>
    %145 = arith.addf %144, %12 : vector<7x32xf32>
    %146 = arith.mulf %143, %145 : vector<7x32xf32>
    %147 = arith.addf %146, %11 : vector<7x32xf32>
    %148 = arith.truncf %147 : vector<7x32xf32> to vector<7x32xbf16>
    %c0_55 = arith.constant 0 : index
    %c0_56 = arith.constant 0 : index
    %149 = vector.load %arg13[%c0_55, %c0_56] : memref<32x128xbf16, #tpu.memory_space<vmem>>, vector<32x128xbf16>
    %cst_57 = arith.constant dense<0.000000e+00> : vector<7x128xf32>
    %150 = tpu.matmul %148, %149, %cst_57 {dimension_numbers = #tpu.dot_dimension_numbers<[1], [0], [0], [1], [0, 0, 1, 1], [], []>} : vector<7x32xbf16>, vector<32x128xbf16>, vector<7x128xf32> -> vector<7x128xf32>
    %c0_58 = arith.constant 0 : index
    %c0_59 = arith.constant 0 : index
    %151 = vector.load %arg14[%c0_58, %c0_59] : memref<1x128xf32, #tpu.memory_space<vmem>>, vector<1x128xf32>
    %152 = vector.broadcast %151 : vector<1x128xf32> to vector<7x128xf32>
    %153 = arith.addf %150, %152 : vector<7x128xf32>
    %154 = arith.mulf %153, %153 : vector<7x128xf32>
    %155 = arith.mulf %153, %154 : vector<7x128xf32>
    %cst_60 = arith.constant 4.471500e-02 : f32
    %156 = vector.broadcast %cst_60 : f32 to vector<7x128xf32>
    %157 = arith.mulf %156, %155 : vector<7x128xf32>
    %158 = arith.addf %153, %157 : vector<7x128xf32>
    %cst_61 = arith.constant 0.797884583 : f32
    %159 = vector.broadcast %cst_61 : f32 to vector<7x128xf32>
    %160 = arith.mulf %159, %158 : vector<7x128xf32>
    %161 = math.tanh %160 : vector<7x128xf32>
    %cst_62 = arith.constant 1.000000e+00 : f32
    %162 = vector.broadcast %cst_62 : f32 to vector<7x128xf32>
    %163 = arith.addf %162, %161 : vector<7x128xf32>
    %cst_63 = arith.constant 5.000000e-01 : f32
    %164 = vector.broadcast %cst_63 : f32 to vector<7x128xf32>
    %165 = arith.mulf %164, %163 : vector<7x128xf32>
    %166 = arith.mulf %153, %165 : vector<7x128xf32>
    %167 = arith.truncf %166 : vector<7x128xf32> to vector<7x128xbf16>
    %c0_64 = arith.constant 0 : index
    %c0_65 = arith.constant 0 : index
    %168 = vector.load %arg15[%c0_64, %c0_65] : memref<128x32xbf16, #tpu.memory_space<vmem>>, vector<128x32xbf16>
    %cst_66 = arith.constant dense<0.000000e+00> : vector<7x32xf32>
    %169 = tpu.matmul %167, %168, %cst_66 {dimension_numbers = #tpu.dot_dimension_numbers<[1], [0], [0], [1], [0, 0, 1, 1], [], []>} : vector<7x128xbf16>, vector<128x32xbf16>, vector<7x32xf32> -> vector<7x32xf32>
    %c0_67 = arith.constant 0 : index
    %c0_68 = arith.constant 0 : index
    %170 = vector.load %arg16[%c0_67, %c0_68] : memref<1x32xf32, #tpu.memory_space<vmem>>, vector<1x32xf32>
    %171 = vector.broadcast %170 : vector<1x32xf32> to vector<7x32xf32>
    %172 = arith.addf %169, %171 : vector<7x32xf32>
    %173 = arith.mulf %13, %172 : vector<7x32xf32>
    %174 = arith.addf %125, %173 : vector<7x32xf32>
    %c0_69 = arith.constant 0 : index
    %c0_70 = arith.constant 0 : index
    %175 = vector.load %arg17[%c0_69, %c0_70] : memref<7x32xf32, #tpu.memory_space<vmem>>, vector<7x32xf32>
    tpu.vector_store %arg17[%c0_69, %c0_70], %174 {strides = array<i32>} : memref<7x32xf32, #tpu.memory_space<vmem>>, vector<7x32xf32>,
    return
  }
}

module attributes {stable_mosaic.version = 11 : i64} {
  func.func @_cross_block_kernel(%arg0: memref<12x64xf32, #tpu.memory_space<vmem>>, %arg1: memref<7x32xf32, #tpu.memory_space<vmem>>, %arg2: memref<12x64xf32, #tpu.memory_space<vmem>>, %arg3: memref<12x7xf32, #tpu.memory_space<vmem>>, %arg4: memref<12x1xf32, #tpu.memory_space<vmem>>, %arg5: memref<64x384xbf16, #tpu.memory_space<vmem>>, %arg6: memref<1x384xf32, #tpu.memory_space<vmem>>, %arg7: memref<64x64xbf16, #tpu.memory_space<vmem>>, %arg8: memref<1x64xf32, #tpu.memory_space<vmem>>, %arg9: memref<32x128xbf16, #tpu.memory_space<vmem>>, %arg10: memref<1x128xf32, #tpu.memory_space<vmem>>, %arg11: memref<64x64xbf16, #tpu.memory_space<vmem>>, %arg12: memref<1x64xf32, #tpu.memory_space<vmem>>, %arg13: memref<64x256xbf16, #tpu.memory_space<vmem>>, %arg14: memref<1x256xf32, #tpu.memory_space<vmem>>, %arg15: memref<256x64xbf16, #tpu.memory_space<vmem>>, %arg16: memref<1x64xf32, #tpu.memory_space<vmem>>, %arg17: memref<12x64xf32, #tpu.memory_space<vmem>>) attributes {dimension_semantics = [], scalar_prefetch = 0 : i64, scratch_operands = 0 : i64, tpu.core_type = #tpu.core_type<tc>} {
    %c0 = arith.constant 0 : index
    %c0_0 = arith.constant 0 : index
    %0 = vector.load %arg0[%c0, %c0_0] : memref<12x64xf32, #tpu.memory_space<vmem>>, vector<12x64xf32>
    %c0_1 = arith.constant 0 : index
    %c0_2 = arith.constant 0 : index
    %1 = vector.load %arg2[%c0_1, %c0_2] : memref<12x64xf32, #tpu.memory_space<vmem>>, vector<12x64xf32>
    %2 = arith.truncf %1 : vector<12x64xf32> to vector<12x64xbf16>
    %c0_3 = arith.constant 0 : index
    %c0_4 = arith.constant 0 : index
    %3 = vector.load %arg5[%c0_3, %c0_4] : memref<64x384xbf16, #tpu.memory_space<vmem>>, vector<64x384xbf16>
    %cst = arith.constant dense<0.000000e+00> : vector<12x384xf32>
    %4 = tpu.matmul %2, %3, %cst {dimension_numbers = #tpu.dot_dimension_numbers<[1], [0], [0], [1], [0, 0, 1, 1], [], []>} : vector<12x64xbf16>, vector<64x384xbf16>, vector<12x384xf32> -> vector<12x384xf32>
    %c0_5 = arith.constant 0 : index
    %c0_6 = arith.constant 0 : index
    %5 = vector.load %arg6[%c0_5, %c0_6] : memref<1x384xf32, #tpu.memory_space<vmem>>, vector<1x384xf32>
    %6 = vector.broadcast %5 : vector<1x384xf32> to vector<12x384xf32>
    %7 = arith.addf %4, %6 : vector<12x384xf32>
    %8 = vector.extract_strided_slice %7 {offsets = [0, 0], sizes = [12, 64], strides = [1, 1]} : vector<12x384xf32> to vector<12x64xf32>
    %9 = vector.extract_strided_slice %7 {offsets = [0, 64], sizes = [12, 64], strides = [1, 1]} : vector<12x384xf32> to vector<12x64xf32>
    %10 = vector.extract_strided_slice %7 {offsets = [0, 128], sizes = [12, 64], strides = [1, 1]} : vector<12x384xf32> to vector<12x64xf32>
    %11 = vector.extract_strided_slice %7 {offsets = [0, 192], sizes = [12, 64], strides = [1, 1]} : vector<12x384xf32> to vector<12x64xf32>
    %12 = vector.extract_strided_slice %7 {offsets = [0, 256], sizes = [12, 64], strides = [1, 1]} : vector<12x384xf32> to vector<12x64xf32>
    %13 = vector.extract_strided_slice %7 {offsets = [0, 320], sizes = [12, 64], strides = [1, 1]} : vector<12x384xf32> to vector<12x64xf32>
    %cst_7 = arith.constant dense<0.000000e+00> : vector<12xf32>
    %14 = vector.multi_reduction <add>, %0, %cst_7 [1] : vector<12x64xf32> to vector<12xf32>
    %15 = vector.shape_cast %14 : vector<12xf32> to vector<12x1xf32>
    %cst_8 = arith.constant 6.400000e+01 : f32
    %16 = vector.broadcast %cst_8 : f32 to vector<12x1xf32>
    %17 = arith.divf %15, %16 : vector<12x1xf32>
    %18 = vector.broadcast %17 : vector<12x1xf32> to vector<12x64xf32>
    %19 = arith.subf %0, %18 : vector<12x64xf32>
    %20 = arith.mulf %19, %19 : vector<12x64xf32>
    %cst_9 = arith.constant dense<0.000000e+00> : vector<12xf32>
    %21 = vector.multi_reduction <add>, %20, %cst_9 [1] : vector<12x64xf32> to vector<12xf32>
    %22 = vector.shape_cast %21 : vector<12xf32> to vector<12x1xf32>
    %cst_10 = arith.constant 6.400000e+01 : f32
    %23 = vector.broadcast %cst_10 : f32 to vector<12x1xf32>
    %24 = arith.divf %22, %23 : vector<12x1xf32>
    %25 = vector.broadcast %17 : vector<12x1xf32> to vector<12x64xf32>
    %26 = arith.subf %0, %25 : vector<12x64xf32>
    %cst_11 = arith.constant 9.99999997E-7 : f32
    %27 = vector.broadcast %cst_11 : f32 to vector<12x1xf32>
    %28 = arith.addf %24, %27 : vector<12x1xf32>
    %29 = math.rsqrt %28 : vector<12x1xf32>
    %30 = vector.broadcast %29 : vector<12x1xf32> to vector<12x64xf32>
    %31 = arith.mulf %26, %30 : vector<12x64xf32>
    %cst_12 = arith.constant 1.000000e+00 : f32
    %32 = vector.broadcast %cst_12 : f32 to vector<12x64xf32>
    %33 = arith.addf %32, %9 : vector<12x64xf32>
    %34 = arith.mulf %31, %33 : vector<12x64xf32>
    %35 = arith.addf %34, %8 : vector<12x64xf32>
    %c0_13 = arith.constant 0 : index
    %c0_14 = arith.constant 0 : index
    %36 = vector.load %arg1[%c0_13, %c0_14] : memref<7x32xf32, #tpu.memory_space<vmem>>, vector<7x32xf32>
    %cst_15 = arith.constant dense<0.000000e+00> : vector<7xf32>
    %37 = vector.multi_reduction <add>, %36, %cst_15 [1] : vector<7x32xf32> to vector<7xf32>
    %38 = vector.shape_cast %37 : vector<7xf32> to vector<7x1xf32>
    %cst_16 = arith.constant 3.200000e+01 : f32
    %39 = vector.broadcast %cst_16 : f32 to vector<7x1xf32>
    %40 = arith.divf %38, %39 : vector<7x1xf32>
    %41 = vector.broadcast %40 : vector<7x1xf32> to vector<7x32xf32>
    %42 = arith.subf %36, %41 : vector<7x32xf32>
    %43 = arith.mulf %42, %42 : vector<7x32xf32>
    %cst_17 = arith.constant dense<0.000000e+00> : vector<7xf32>
    %44 = vector.multi_reduction <add>, %43, %cst_17 [1] : vector<7x32xf32> to vector<7xf32>
    %45 = vector.shape_cast %44 : vector<7xf32> to vector<7x1xf32>
    %cst_18 = arith.constant 3.200000e+01 : f32
    %46 = vector.broadcast %cst_18 : f32 to vector<7x1xf32>
    %47 = arith.divf %45, %46 : vector<7x1xf32>
    %48 = vector.broadcast %40 : vector<7x1xf32> to vector<7x32xf32>
    %49 = arith.subf %36, %48 : vector<7x32xf32>
    %cst_19 = arith.constant 9.99999997E-7 : f32
    %50 = vector.broadcast %cst_19 : f32 to vector<7x1xf32>
    %51 = arith.addf %47, %50 : vector<7x1xf32>
    %52 = math.rsqrt %51 : vector<7x1xf32>
    %53 = vector.broadcast %52 : vector<7x1xf32> to vector<7x32xf32>
    %54 = arith.mulf %49, %53 : vector<7x32xf32>
    %55 = arith.truncf %35 : vector<12x64xf32> to vector<12x64xbf16>
    %c0_20 = arith.constant 0 : index
    %c0_21 = arith.constant 0 : index
    %56 = vector.load %arg7[%c0_20, %c0_21] : memref<64x64xbf16, #tpu.memory_space<vmem>>, vector<64x64xbf16>
    %cst_22 = arith.constant dense<0.000000e+00> : vector<12x64xf32>
    %57 = tpu.matmul %55, %56, %cst_22 {dimension_numbers = #tpu.dot_dimension_numbers<[1], [0], [0], [1], [0, 0, 1, 1], [], []>} : vector<12x64xbf16>, vector<64x64xbf16>, vector<12x64xf32> -> vector<12x64xf32>
    %c0_23 = arith.constant 0 : index
    %c0_24 = arith.constant 0 : index
    %58 = vector.load %arg8[%c0_23, %c0_24] : memref<1x64xf32, #tpu.memory_space<vmem>>, vector<1x64xf32>
    %59 = vector.broadcast %58 : vector<1x64xf32> to vector<12x64xf32>
    %60 = arith.addf %57, %59 : vector<12x64xf32>
    %61 = arith.truncf %54 : vector<7x32xf32> to vector<7x32xbf16>
    %c0_25 = arith.constant 0 : index
    %c0_26 = arith.constant 0 : index
    %62 = vector.load %arg9[%c0_25, %c0_26] : memref<32x128xbf16, #tpu.memory_space<vmem>>, vector<32x128xbf16>
    %cst_27 = arith.constant dense<0.000000e+00> : vector<7x128xf32>
    %63 = tpu.matmul %61, %62, %cst_27 {dimension_numbers = #tpu.dot_dimension_numbers<[1], [0], [0], [1], [0, 0, 1, 1], [], []>} : vector<7x32xbf16>, vector<32x128xbf16>, vector<7x128xf32> -> vector<7x128xf32>
    %c0_28 = arith.constant 0 : index
    %c0_29 = arith.constant 0 : index
    %64 = vector.load %arg10[%c0_28, %c0_29] : memref<1x128xf32, #tpu.memory_space<vmem>>, vector<1x128xf32>
    %65 = vector.broadcast %64 : vector<1x128xf32> to vector<7x128xf32>
    %66 = arith.addf %63, %65 : vector<7x128xf32>
    %67 = vector.extract_strided_slice %66 {offsets = [0, 0], sizes = [7, 64], strides = [1, 1]} : vector<7x128xf32> to vector<7x64xf32>
    %68 = vector.extract_strided_slice %66 {offsets = [0, 64], sizes = [7, 64], strides = [1, 1]} : vector<7x128xf32> to vector<7x64xf32>
    %c0_30 = arith.constant 0 : index
    %c0_31 = arith.constant 0 : index
    %69 = vector.load %arg3[%c0_30, %c0_31] : memref<12x7xf32, #tpu.memory_space<vmem>>, vector<12x7xf32>
    %c0_32 = arith.constant 0 : index
    %c0_33 = arith.constant 0 : index
    %70 = vector.load %arg4[%c0_32, %c0_33] : memref<12x1xf32, #tpu.memory_space<vmem>>, vector<12x1xf32>
    %71 = vector.extract_strided_slice %60 {offsets = [0, 0], sizes = [12, 16], strides = [1, 1]} : vector<12x64xf32> to vector<12x16xf32>
    %72 = arith.truncf %71 : vector<12x16xf32> to vector<12x16xbf16>
    %73 = vector.extract_strided_slice %67 {offsets = [0, 0], sizes = [7, 16], strides = [1, 1]} : vector<7x64xf32> to vector<7x16xf32>
    %74 = arith.truncf %73 : vector<7x16xf32> to vector<7x16xbf16>
    %75 = vector.extract_strided_slice %68 {offsets = [0, 0], sizes = [7, 16], strides = [1, 1]} : vector<7x64xf32> to vector<7x16xf32>
    %76 = arith.truncf %75 : vector<7x16xf32> to vector<7x16xbf16>
    %cst_34 = arith.constant dense<0.000000e+00> : vector<12x7xf32>
    %77 = tpu.matmul %72, %74, %cst_34 {dimension_numbers = #tpu.dot_dimension_numbers<[1], [1], [0], [0], [0, 0, 1, 0], [], []>} : vector<12x16xbf16>, vector<7x16xbf16>, vector<12x7xf32> -> vector<12x7xf32>
    %cst_35 = arith.constant 2.500000e-01 : f32
    %78 = vector.broadcast %cst_35 : f32 to vector<12x7xf32>
    %79 = arith.mulf %77, %78 : vector<12x7xf32>
    %80 = arith.addf %79, %69 : vector<12x7xf32>
    %cst_36 = arith.constant dense<0xFF800000> : vector<12xf32>
    %81 = vector.multi_reduction <maximumf>, %80, %cst_36 [1] : vector<12x7xf32> to vector<12xf32>
    %82 = vector.shape_cast %81 : vector<12xf32> to vector<12x1xf32>
    %83 = vector.broadcast %82 : vector<12x1xf32> to vector<12x7xf32>
    %84 = arith.subf %80, %83 : vector<12x7xf32>
    %85 = math.exp %84 : vector<12x7xf32>
    %cst_37 = arith.constant dense<0.000000e+00> : vector<12xf32>
    %86 = vector.multi_reduction <add>, %85, %cst_37 [1] : vector<12x7xf32> to vector<12xf32>
    %87 = vector.shape_cast %86 : vector<12xf32> to vector<12x1xf32>
    %88 = tpu.reciprocal %87 {approx = true} : vector<12x1xf32> -> vector<12x1xf32>
    %89 = vector.broadcast %88 : vector<12x1xf32> to vector<12x7xf32>
    %90 = arith.mulf %85, %89 : vector<12x7xf32>
    %91 = arith.truncf %90 : vector<12x7xf32> to vector<12x7xbf16>
    %cst_38 = arith.constant dense<0.000000e+00> : vector<12x16xf32>
    %92 = tpu.matmul %91, %76, %cst_38 {dimension_numbers = #tpu.dot_dimension_numbers<[1], [0], [0], [1], [0, 0, 1, 1], [], []>} : vector<12x7xbf16>, vector<7x16xbf16>, vector<12x16xf32> -> vector<12x16xf32>
    %93 = vector.extract_strided_slice %60 {offsets = [0, 16], sizes = [12, 16], strides = [1, 1]} : vector<12x64xf32> to vector<12x16xf32>
    %94 = arith.truncf %93 : vector<12x16xf32> to vector<12x16xbf16>
    %95 = vector.extract_strided_slice %67 {offsets = [0, 16], sizes = [7, 16], strides = [1, 1]} : vector<7x64xf32> to vector<7x16xf32>
    %96 = arith.truncf %95 : vector<7x16xf32> to vector<7x16xbf16>
    %97 = vector.extract_strided_slice %68 {offsets = [0, 16], sizes = [7, 16], strides = [1, 1]} : vector<7x64xf32> to vector<7x16xf32>
    %98 = arith.truncf %97 : vector<7x16xf32> to vector<7x16xbf16>
    %cst_39 = arith.constant dense<0.000000e+00> : vector<12x7xf32>
    %99 = tpu.matmul %94, %96, %cst_39 {dimension_numbers = #tpu.dot_dimension_numbers<[1], [1], [0], [0], [0, 0, 1, 0], [], []>} : vector<12x16xbf16>, vector<7x16xbf16>, vector<12x7xf32> -> vector<12x7xf32>
    %cst_40 = arith.constant 2.500000e-01 : f32
    %100 = vector.broadcast %cst_40 : f32 to vector<12x7xf32>
    %101 = arith.mulf %99, %100 : vector<12x7xf32>
    %102 = arith.addf %101, %69 : vector<12x7xf32>
    %cst_41 = arith.constant dense<0xFF800000> : vector<12xf32>
    %103 = vector.multi_reduction <maximumf>, %102, %cst_41 [1] : vector<12x7xf32> to vector<12xf32>
    %104 = vector.shape_cast %103 : vector<12xf32> to vector<12x1xf32>
    %105 = vector.broadcast %104 : vector<12x1xf32> to vector<12x7xf32>
    %106 = arith.subf %102, %105 : vector<12x7xf32>
    %107 = math.exp %106 : vector<12x7xf32>
    %cst_42 = arith.constant dense<0.000000e+00> : vector<12xf32>
    %108 = vector.multi_reduction <add>, %107, %cst_42 [1] : vector<12x7xf32> to vector<12xf32>
    %109 = vector.shape_cast %108 : vector<12xf32> to vector<12x1xf32>
    %110 = tpu.reciprocal %109 {approx = true} : vector<12x1xf32> -> vector<12x1xf32>
    %111 = vector.broadcast %110 : vector<12x1xf32> to vector<12x7xf32>
    %112 = arith.mulf %107, %111 : vector<12x7xf32>
    %113 = arith.truncf %112 : vector<12x7xf32> to vector<12x7xbf16>
    %cst_43 = arith.constant dense<0.000000e+00> : vector<12x16xf32>
    %114 = tpu.matmul %113, %98, %cst_43 {dimension_numbers = #tpu.dot_dimension_numbers<[1], [0], [0], [1], [0, 0, 1, 1], [], []>} : vector<12x7xbf16>, vector<7x16xbf16>, vector<12x16xf32> -> vector<12x16xf32>
    %115 = vector.extract_strided_slice %60 {offsets = [0, 32], sizes = [12, 16], strides = [1, 1]} : vector<12x64xf32> to vector<12x16xf32>
    %116 = arith.truncf %115 : vector<12x16xf32> to vector<12x16xbf16>
    %117 = vector.extract_strided_slice %67 {offsets = [0, 32], sizes = [7, 16], strides = [1, 1]} : vector<7x64xf32> to vector<7x16xf32>
    %118 = arith.truncf %117 : vector<7x16xf32> to vector<7x16xbf16>
    %119 = vector.extract_strided_slice %68 {offsets = [0, 32], sizes = [7, 16], strides = [1, 1]} : vector<7x64xf32> to vector<7x16xf32>
    %120 = arith.truncf %119 : vector<7x16xf32> to vector<7x16xbf16>
    %cst_44 = arith.constant dense<0.000000e+00> : vector<12x7xf32>
    %121 = tpu.matmul %116, %118, %cst_44 {dimension_numbers = #tpu.dot_dimension_numbers<[1], [1], [0], [0], [0, 0, 1, 0], [], []>} : vector<12x16xbf16>, vector<7x16xbf16>, vector<12x7xf32> -> vector<12x7xf32>
    %cst_45 = arith.constant 2.500000e-01 : f32
    %122 = vector.broadcast %cst_45 : f32 to vector<12x7xf32>
    %123 = arith.mulf %121, %122 : vector<12x7xf32>
    %124 = arith.addf %123, %69 : vector<12x7xf32>
    %cst_46 = arith.constant dense<0xFF800000> : vector<12xf32>
    %125 = vector.multi_reduction <maximumf>, %124, %cst_46 [1] : vector<12x7xf32> to vector<12xf32>
    %126 = vector.shape_cast %125 : vector<12xf32> to vector<12x1xf32>
    %127 = vector.broadcast %126 : vector<12x1xf32> to vector<12x7xf32>
    %128 = arith.subf %124, %127 : vector<12x7xf32>
    %129 = math.exp %128 : vector<12x7xf32>
    %cst_47 = arith.constant dense<0.000000e+00> : vector<12xf32>
    %130 = vector.multi_reduction <add>, %129, %cst_47 [1] : vector<12x7xf32> to vector<12xf32>
    %131 = vector.shape_cast %130 : vector<12xf32> to vector<12x1xf32>
    %132 = tpu.reciprocal %131 {approx = true} : vector<12x1xf32> -> vector<12x1xf32>
    %133 = vector.broadcast %132 : vector<12x1xf32> to vector<12x7xf32>
    %134 = arith.mulf %129, %133 : vector<12x7xf32>
    %135 = arith.truncf %134 : vector<12x7xf32> to vector<12x7xbf16>
    %cst_48 = arith.constant dense<0.000000e+00> : vector<12x16xf32>
    %136 = tpu.matmul %135, %120, %cst_48 {dimension_numbers = #tpu.dot_dimension_numbers<[1], [0], [0], [1], [0, 0, 1, 1], [], []>} : vector<12x7xbf16>, vector<7x16xbf16>, vector<12x16xf32> -> vector<12x16xf32>
    %137 = vector.extract_strided_slice %60 {offsets = [0, 48], sizes = [12, 16], strides = [1, 1]} : vector<12x64xf32> to vector<12x16xf32>
    %138 = arith.truncf %137 : vector<12x16xf32> to vector<12x16xbf16>
    %139 = vector.extract_strided_slice %67 {offsets = [0, 48], sizes = [7, 16], strides = [1, 1]} : vector<7x64xf32> to vector<7x16xf32>
    %140 = arith.truncf %139 : vector<7x16xf32> to vector<7x16xbf16>
    %141 = vector.extract_strided_slice %68 {offsets = [0, 48], sizes = [7, 16], strides = [1, 1]} : vector<7x64xf32> to vector<7x16xf32>
    %142 = arith.truncf %141 : vector<7x16xf32> to vector<7x16xbf16>
    %cst_49 = arith.constant dense<0.000000e+00> : vector<12x7xf32>
    %143 = tpu.matmul %138, %140, %cst_49 {dimension_numbers = #tpu.dot_dimension_numbers<[1], [1], [0], [0], [0, 0, 1, 0], [], []>} : vector<12x16xbf16>, vector<7x16xbf16>, vector<12x7xf32> -> vector<12x7xf32>
    %cst_50 = arith.constant 2.500000e-01 : f32
    %144 = vector.broadcast %cst_50 : f32 to vector<12x7xf32>
    %145 = arith.mulf %143, %144 : vector<12x7xf32>
    %146 = arith.addf %145, %69 : vector<12x7xf32>
    %cst_51 = arith.constant dense<0xFF800000> : vector<12xf32>
    %147 = vector.multi_reduction <maximumf>, %146, %cst_51 [1] : vector<12x7xf32> to vector<12xf32>
    %148 = vector.shape_cast %147 : vector<12xf32> to vector<12x1xf32>
    %149 = vector.broadcast %148 : vector<12x1xf32> to vector<12x7xf32>
    %150 = arith.subf %146, %149 : vector<12x7xf32>
    %151 = math.exp %150 : vector<12x7xf32>
    %cst_52 = arith.constant dense<0.000000e+00> : vector<12xf32>
    %152 = vector.multi_reduction <add>, %151, %cst_52 [1] : vector<12x7xf32> to vector<12xf32>
    %153 = vector.shape_cast %152 : vector<12xf32> to vector<12x1xf32>
    %154 = tpu.reciprocal %153 {approx = true} : vector<12x1xf32> -> vector<12x1xf32>
    %155 = vector.broadcast %154 : vector<12x1xf32> to vector<12x7xf32>
    %156 = arith.mulf %151, %155 : vector<12x7xf32>
    %157 = arith.truncf %156 : vector<12x7xf32> to vector<12x7xbf16>
    %cst_53 = arith.constant dense<0.000000e+00> : vector<12x16xf32>
    %158 = tpu.matmul %157, %142, %cst_53 {dimension_numbers = #tpu.dot_dimension_numbers<[1], [0], [0], [1], [0, 0, 1, 1], [], []>} : vector<12x7xbf16>, vector<7x16xbf16>, vector<12x16xf32> -> vector<12x16xf32>
    %159 = tpu.concatenate %92, %114, %136, %158 in 1 : vector<12x16xf32>, vector<12x16xf32>, vector<12x16xf32>, vector<12x16xf32> -> vector<12x64xf32>
    %160 = vector.broadcast %70 : vector<12x1xf32> to vector<12x64xf32>
    %161 = arith.mulf %159, %160 : vector<12x64xf32>
    %162 = arith.truncf %161 : vector<12x64xf32> to vector<12x64xbf16>
    %c0_54 = arith.constant 0 : index
    %c0_55 = arith.constant 0 : index
    %163 = vector.load %arg11[%c0_54, %c0_55] : memref<64x64xbf16, #tpu.memory_space<vmem>>, vector<64x64xbf16>
    %cst_56 = arith.constant dense<0.000000e+00> : vector<12x64xf32>
    %164 = tpu.matmul %162, %163, %cst_56 {dimension_numbers = #tpu.dot_dimension_numbers<[1], [0], [0], [1], [0, 0, 1, 1], [], []>} : vector<12x64xbf16>, vector<64x64xbf16>, vector<12x64xf32> -> vector<12x64xf32>
    %c0_57 = arith.constant 0 : index
    %c0_58 = arith.constant 0 : index
    %165 = vector.load %arg12[%c0_57, %c0_58] : memref<1x64xf32, #tpu.memory_space<vmem>>, vector<1x64xf32>
    %166 = vector.broadcast %165 : vector<1x64xf32> to vector<12x64xf32>
    %167 = arith.addf %164, %166 : vector<12x64xf32>
    %168 = arith.mulf %10, %167 : vector<12x64xf32>
    %169 = arith.addf %0, %168 : vector<12x64xf32>
    %cst_59 = arith.constant dense<0.000000e+00> : vector<12xf32>
    %170 = vector.multi_reduction <add>, %169, %cst_59 [1] : vector<12x64xf32> to vector<12xf32>
    %171 = vector.shape_cast %170 : vector<12xf32> to vector<12x1xf32>
    %cst_60 = arith.constant 6.400000e+01 : f32
    %172 = vector.broadcast %cst_60 : f32 to vector<12x1xf32>
    %173 = arith.divf %171, %172 : vector<12x1xf32>
    %174 = vector.broadcast %173 : vector<12x1xf32> to vector<12x64xf32>
    %175 = arith.subf %169, %174 : vector<12x64xf32>
    %176 = arith.mulf %175, %175 : vector<12x64xf32>
    %cst_61 = arith.constant dense<0.000000e+00> : vector<12xf32>
    %177 = vector.multi_reduction <add>, %176, %cst_61 [1] : vector<12x64xf32> to vector<12xf32>
    %178 = vector.shape_cast %177 : vector<12xf32> to vector<12x1xf32>
    %cst_62 = arith.constant 6.400000e+01 : f32
    %179 = vector.broadcast %cst_62 : f32 to vector<12x1xf32>
    %180 = arith.divf %178, %179 : vector<12x1xf32>
    %181 = vector.broadcast %173 : vector<12x1xf32> to vector<12x64xf32>
    %182 = arith.subf %169, %181 : vector<12x64xf32>
    %cst_63 = arith.constant 9.99999997E-7 : f32
    %183 = vector.broadcast %cst_63 : f32 to vector<12x1xf32>
    %184 = arith.addf %180, %183 : vector<12x1xf32>
    %185 = math.rsqrt %184 : vector<12x1xf32>
    %186 = vector.broadcast %185 : vector<12x1xf32> to vector<12x64xf32>
    %187 = arith.mulf %182, %186 : vector<12x64xf32>
    %cst_64 = arith.constant 1.000000e+00 : f32
    %188 = vector.broadcast %cst_64 : f32 to vector<12x64xf32>
    %189 = arith.addf %188, %12 : vector<12x64xf32>
    %190 = arith.mulf %187, %189 : vector<12x64xf32>
    %191 = arith.addf %190, %11 : vector<12x64xf32>
    %192 = arith.truncf %191 : vector<12x64xf32> to vector<12x64xbf16>
    %c0_65 = arith.constant 0 : index
    %c0_66 = arith.constant 0 : index
    %193 = vector.load %arg13[%c0_65, %c0_66] : memref<64x256xbf16, #tpu.memory_space<vmem>>, vector<64x256xbf16>
    %cst_67 = arith.constant dense<0.000000e+00> : vector<12x256xf32>
    %194 = tpu.matmul %192, %193, %cst_67 {dimension_numbers = #tpu.dot_dimension_numbers<[1], [0], [0], [1], [0, 0, 1, 1], [], []>} : vector<12x64xbf16>, vector<64x256xbf16>, vector<12x256xf32> -> vector<12x256xf32>
    %c0_68 = arith.constant 0 : index
    %c0_69 = arith.constant 0 : index
    %195 = vector.load %arg14[%c0_68, %c0_69] : memref<1x256xf32, #tpu.memory_space<vmem>>, vector<1x256xf32>
    %196 = vector.broadcast %195 : vector<1x256xf32> to vector<12x256xf32>
    %197 = arith.addf %194, %196 : vector<12x256xf32>
    %198 = arith.mulf %197, %197 : vector<12x256xf32>
    %199 = arith.mulf %197, %198 : vector<12x256xf32>
    %cst_70 = arith.constant 4.471500e-02 : f32
    %200 = vector.broadcast %cst_70 : f32 to vector<12x256xf32>
    %201 = arith.mulf %200, %199 : vector<12x256xf32>
    %202 = arith.addf %197, %201 : vector<12x256xf32>
    %cst_71 = arith.constant 0.797884583 : f32
    %203 = vector.broadcast %cst_71 : f32 to vector<12x256xf32>
    %204 = arith.mulf %203, %202 : vector<12x256xf32>
    %205 = math.tanh %204 : vector<12x256xf32>
    %cst_72 = arith.constant 1.000000e+00 : f32
    %206 = vector.broadcast %cst_72 : f32 to vector<12x256xf32>
    %207 = arith.addf %206, %205 : vector<12x256xf32>
    %cst_73 = arith.constant 5.000000e-01 : f32
    %208 = vector.broadcast %cst_73 : f32 to vector<12x256xf32>
    %209 = arith.mulf %208, %207 : vector<12x256xf32>
    %210 = arith.mulf %197, %209 : vector<12x256xf32>
    %211 = arith.truncf %210 : vector<12x256xf32> to vector<12x256xbf16>
    %c0_74 = arith.constant 0 : index
    %c0_75 = arith.constant 0 : index
    %212 = vector.load %arg15[%c0_74, %c0_75] : memref<256x64xbf16, #tpu.memory_space<vmem>>, vector<256x64xbf16>
    %cst_76 = arith.constant dense<0.000000e+00> : vector<12x64xf32>
    %213 = tpu.matmul %211, %212, %cst_76 {dimension_numbers = #tpu.dot_dimension_numbers<[1], [0], [0], [1], [0, 0, 1, 1], [], []>} : vector<12x256xbf16>, vector<256x64xbf16>, vector<12x64xf32> -> vector<12x64xf32>
    %c0_77 = arith.constant 0 : index
    %c0_78 = arith.constant 0 : index
    %214 = vector.load %arg16[%c0_77, %c0_78] : memref<1x64xf32, #tpu.memory_space<vmem>>, vector<1x64xf32>
    %215 = vector.broadcast %214 : vector<1x64xf32> to vector<12x64xf32>
    %216 = arith.addf %213, %215 : vector<12x64xf32>
    %217 = arith.mulf %13, %216 : vector<12x64xf32>
    %218 = arith.addf %169, %217 : vector<12x64xf32>
    %c0_79 = arith.constant 0 : index
    %c0_80 = arith.constant 0 : index
    %219 = vector.load %arg17[%c0_79, %c0_80] : memref<12x64xf32, #tpu.memory_space<vmem>>, vector<12x64xf32>
    tpu.vector_store %arg17[%c0_79, %c0_80], %218 {strides = array<i32>} : memref<12x64xf32, #tpu.memory_space<vmem>>, vector<12x64xf32>,
    return
  }
}

module attributes {stable_mosaic.version = 11 : i64} {
  func.func @_final_layer_kernel(%arg0: memref<12x64xf32, #tpu.memory_space<vmem>>, %arg1: memref<12x64xf32, #tpu.memory_space<vmem>>, %arg2: memref<64x128xbf16, #tpu.memory_space<vmem>>, %arg3: memref<1x128xf32, #tpu.memory_space<vmem>>, %arg4: memref<64x16xbf16, #tpu.memory_space<vmem>>, %arg5: memref<1x16xf32, #tpu.memory_space<vmem>>, %arg6: memref<12x16xf32, #tpu.memory_space<vmem>>) attributes {dimension_semantics = [], scalar_prefetch = 0 : i64, scratch_operands = 0 : i64, tpu.core_type = #tpu.core_type<tc>} {
    %c0 = arith.constant 0 : index
    %c0_0 = arith.constant 0 : index
    %0 = vector.load %arg1[%c0, %c0_0] : memref<12x64xf32, #tpu.memory_space<vmem>>, vector<12x64xf32>
    %1 = arith.truncf %0 : vector<12x64xf32> to vector<12x64xbf16>
    %c0_1 = arith.constant 0 : index
    %c0_2 = arith.constant 0 : index
    %2 = vector.load %arg2[%c0_1, %c0_2] : memref<64x128xbf16, #tpu.memory_space<vmem>>, vector<64x128xbf16>
    %cst = arith.constant dense<0.000000e+00> : vector<12x128xf32>
    %3 = tpu.matmul %1, %2, %cst {dimension_numbers = #tpu.dot_dimension_numbers<[1], [0], [0], [1], [0, 0, 1, 1], [], []>} : vector<12x64xbf16>, vector<64x128xbf16>, vector<12x128xf32> -> vector<12x128xf32>
    %c0_3 = arith.constant 0 : index
    %c0_4 = arith.constant 0 : index
    %4 = vector.load %arg3[%c0_3, %c0_4] : memref<1x128xf32, #tpu.memory_space<vmem>>, vector<1x128xf32>
    %5 = vector.broadcast %4 : vector<1x128xf32> to vector<12x128xf32>
    %6 = arith.addf %3, %5 : vector<12x128xf32>
    %7 = vector.extract_strided_slice %6 {offsets = [0, 0], sizes = [12, 64], strides = [1, 1]} : vector<12x128xf32> to vector<12x64xf32>
    %8 = vector.extract_strided_slice %6 {offsets = [0, 64], sizes = [12, 64], strides = [1, 1]} : vector<12x128xf32> to vector<12x64xf32>
    %c0_5 = arith.constant 0 : index
    %c0_6 = arith.constant 0 : index
    %9 = vector.load %arg0[%c0_5, %c0_6] : memref<12x64xf32, #tpu.memory_space<vmem>>, vector<12x64xf32>
    %cst_7 = arith.constant dense<0.000000e+00> : vector<12xf32>
    %10 = vector.multi_reduction <add>, %9, %cst_7 [1] : vector<12x64xf32> to vector<12xf32>
    %11 = vector.shape_cast %10 : vector<12xf32> to vector<12x1xf32>
    %cst_8 = arith.constant 6.400000e+01 : f32
    %12 = vector.broadcast %cst_8 : f32 to vector<12x1xf32>
    %13 = arith.divf %11, %12 : vector<12x1xf32>
    %14 = vector.broadcast %13 : vector<12x1xf32> to vector<12x64xf32>
    %15 = arith.subf %9, %14 : vector<12x64xf32>
    %16 = arith.mulf %15, %15 : vector<12x64xf32>
    %cst_9 = arith.constant dense<0.000000e+00> : vector<12xf32>
    %17 = vector.multi_reduction <add>, %16, %cst_9 [1] : vector<12x64xf32> to vector<12xf32>
    %18 = vector.shape_cast %17 : vector<12xf32> to vector<12x1xf32>
    %cst_10 = arith.constant 6.400000e+01 : f32
    %19 = vector.broadcast %cst_10 : f32 to vector<12x1xf32>
    %20 = arith.divf %18, %19 : vector<12x1xf32>
    %21 = vector.broadcast %13 : vector<12x1xf32> to vector<12x64xf32>
    %22 = arith.subf %9, %21 : vector<12x64xf32>
    %cst_11 = arith.constant 9.99999997E-7 : f32
    %23 = vector.broadcast %cst_11 : f32 to vector<12x1xf32>
    %24 = arith.addf %20, %23 : vector<12x1xf32>
    %25 = math.rsqrt %24 : vector<12x1xf32>
    %26 = vector.broadcast %25 : vector<12x1xf32> to vector<12x64xf32>
    %27 = arith.mulf %22, %26 : vector<12x64xf32>
    %cst_12 = arith.constant 1.000000e+00 : f32
    %28 = vector.broadcast %cst_12 : f32 to vector<12x64xf32>
    %29 = arith.addf %28, %8 : vector<12x64xf32>
    %30 = arith.mulf %27, %29 : vector<12x64xf32>
    %31 = arith.addf %30, %7 : vector<12x64xf32>
    %32 = arith.truncf %31 : vector<12x64xf32> to vector<12x64xbf16>
    %c0_13 = arith.constant 0 : index
    %c0_14 = arith.constant 0 : index
    %33 = vector.load %arg4[%c0_13, %c0_14] : memref<64x16xbf16, #tpu.memory_space<vmem>>, vector<64x16xbf16>
    %cst_15 = arith.constant dense<0.000000e+00> : vector<12x16xf32>
    %34 = tpu.matmul %32, %33, %cst_15 {dimension_numbers = #tpu.dot_dimension_numbers<[1], [0], [0], [1], [0, 0, 1, 1], [], []>} : vector<12x64xbf16>, vector<64x16xbf16>, vector<12x16xf32> -> vector<12x16xf32>
    %c0_16 = arith.constant 0 : index
    %c0_17 = arith.constant 0 : index
    %35 = vector.load %arg5[%c0_16, %c0_17] : memref<1x16xf32, #tpu.memory_space<vmem>>, vector<1x16xf32>
    %36 = vector.broadcast %35 : vector<1x16xf32> to vector<12x16xf32>
    %37 = arith.addf %34, %36 : vector<12x16xf32>
    %c0_18 = arith.constant 0 : index
    %c0_19 = arith.constant 0 : index
    %38 = vector.load %arg6[%c0_18, %c0_19] : memref<12x16xf32, #tpu.memory_space<vmem>>, vector<12x16xf32>
    tpu.vector_store %arg6[%c0_18, %c0_19], %37 {strides = array<i32>} : memref<12x16xf32, #tpu.memory_space<vmem>>, vector<12x16xf32>,
    return
  }
}

module attributes {stable_mosaic.version = 11 : i64} {
  func.func @_final_layer_kernel(%arg0: memref<7x32xf32, #tpu.memory_space<vmem>>, %arg1: memref<7x32xf32, #tpu.memory_space<vmem>>, %arg2: memref<32x64xbf16, #tpu.memory_space<vmem>>, %arg3: memref<1x64xf32, #tpu.memory_space<vmem>>, %arg4: memref<32x8xbf16, #tpu.memory_space<vmem>>, %arg5: memref<1x8xf32, #tpu.memory_space<vmem>>, %arg6: memref<7x8xf32, #tpu.memory_space<vmem>>) attributes {dimension_semantics = [], scalar_prefetch = 0 : i64, scratch_operands = 0 : i64, tpu.core_type = #tpu.core_type<tc>} {
    %c0 = arith.constant 0 : index
    %c0_0 = arith.constant 0 : index
    %0 = vector.load %arg1[%c0, %c0_0] : memref<7x32xf32, #tpu.memory_space<vmem>>, vector<7x32xf32>
    %1 = arith.truncf %0 : vector<7x32xf32> to vector<7x32xbf16>
    %c0_1 = arith.constant 0 : index
    %c0_2 = arith.constant 0 : index
    %2 = vector.load %arg2[%c0_1, %c0_2] : memref<32x64xbf16, #tpu.memory_space<vmem>>, vector<32x64xbf16>
    %cst = arith.constant dense<0.000000e+00> : vector<7x64xf32>
    %3 = tpu.matmul %1, %2, %cst {dimension_numbers = #tpu.dot_dimension_numbers<[1], [0], [0], [1], [0, 0, 1, 1], [], []>} : vector<7x32xbf16>, vector<32x64xbf16>, vector<7x64xf32> -> vector<7x64xf32>
    %c0_3 = arith.constant 0 : index
    %c0_4 = arith.constant 0 : index
    %4 = vector.load %arg3[%c0_3, %c0_4] : memref<1x64xf32, #tpu.memory_space<vmem>>, vector<1x64xf32>
    %5 = vector.broadcast %4 : vector<1x64xf32> to vector<7x64xf32>
    %6 = arith.addf %3, %5 : vector<7x64xf32>
    %7 = vector.extract_strided_slice %6 {offsets = [0, 0], sizes = [7, 32], strides = [1, 1]} : vector<7x64xf32> to vector<7x32xf32>
    %8 = vector.extract_strided_slice %6 {offsets = [0, 32], sizes = [7, 32], strides = [1, 1]} : vector<7x64xf32> to vector<7x32xf32>
    %c0_5 = arith.constant 0 : index
    %c0_6 = arith.constant 0 : index
    %9 = vector.load %arg0[%c0_5, %c0_6] : memref<7x32xf32, #tpu.memory_space<vmem>>, vector<7x32xf32>
    %cst_7 = arith.constant dense<0.000000e+00> : vector<7xf32>
    %10 = vector.multi_reduction <add>, %9, %cst_7 [1] : vector<7x32xf32> to vector<7xf32>
    %11 = vector.shape_cast %10 : vector<7xf32> to vector<7x1xf32>
    %cst_8 = arith.constant 3.200000e+01 : f32
    %12 = vector.broadcast %cst_8 : f32 to vector<7x1xf32>
    %13 = arith.divf %11, %12 : vector<7x1xf32>
    %14 = vector.broadcast %13 : vector<7x1xf32> to vector<7x32xf32>
    %15 = arith.subf %9, %14 : vector<7x32xf32>
    %16 = arith.mulf %15, %15 : vector<7x32xf32>
    %cst_9 = arith.constant dense<0.000000e+00> : vector<7xf32>
    %17 = vector.multi_reduction <add>, %16, %cst_9 [1] : vector<7x32xf32> to vector<7xf32>
    %18 = vector.shape_cast %17 : vector<7xf32> to vector<7x1xf32>
    %cst_10 = arith.constant 3.200000e+01 : f32
    %19 = vector.broadcast %cst_10 : f32 to vector<7x1xf32>
    %20 = arith.divf %18, %19 : vector<7x1xf32>
    %21 = vector.broadcast %13 : vector<7x1xf32> to vector<7x32xf32>
    %22 = arith.subf %9, %21 : vector<7x32xf32>
    %cst_11 = arith.constant 9.99999997E-7 : f32
    %23 = vector.broadcast %cst_11 : f32 to vector<7x1xf32>
    %24 = arith.addf %20, %23 : vector<7x1xf32>
    %25 = math.rsqrt %24 : vector<7x1xf32>
    %26 = vector.broadcast %25 : vector<7x1xf32> to vector<7x32xf32>
    %27 = arith.mulf %22, %26 : vector<7x32xf32>
    %cst_12 = arith.constant 1.000000e+00 : f32
    %28 = vector.broadcast %cst_12 : f32 to vector<7x32xf32>
    %29 = arith.addf %28, %8 : vector<7x32xf32>
    %30 = arith.mulf %27, %29 : vector<7x32xf32>
    %31 = arith.addf %30, %7 : vector<7x32xf32>
    %32 = arith.truncf %31 : vector<7x32xf32> to vector<7x32xbf16>
    %c0_13 = arith.constant 0 : index
    %c0_14 = arith.constant 0 : index
    %33 = vector.load %arg4[%c0_13, %c0_14] : memref<32x8xbf16, #tpu.memory_space<vmem>>, vector<32x8xbf16>
    %cst_15 = arith.constant dense<0.000000e+00> : vector<7x8xf32>
    %34 = tpu.matmul %32, %33, %cst_15 {dimension_numbers = #tpu.dot_dimension_numbers<[1], [0], [0], [1], [0, 0, 1, 1], [], []>} : vector<7x32xbf16>, vector<32x8xbf16>, vector<7x8xf32> -> vector<7x8xf32>
    %c0_16 = arith.constant 0 : index
    %c0_17 = arith.constant 0 : index
    %35 = vector.load %arg5[%c0_16, %c0_17] : memref<1x8xf32, #tpu.memory_space<vmem>>, vector<1x8xf32>
    %36 = vector.broadcast %35 : vector<1x8xf32> to vector<7x8xf32>
    %37 = arith.addf %34, %36 : vector<7x8xf32>
    %c0_18 = arith.constant 0 : index
    %c0_19 = arith.constant 0 : index
    %38 = vector.load %arg6[%c0_18, %c0_19] : memref<7x8xf32, #tpu.memory_space<vmem>>, vector<7x8xf32>
    tpu.vector_store %arg6[%c0_18, %c0_19], %37 {strides = array<i32>} : memref<7x8xf32, #tpu.memory_space<vmem>>, vector<7x8xf32>,
    return
  }
}

</mosaic_0001>

<llo_original>
// kernel: fwd.17
$region0: #{fwd.17}
  #allocation0 [shape = 'u32[]', space=smem, size = 0x4, offset = 0x4, fixed_abs, tag = 'smem constant byte address 0x4 - core index']
  #allocation1 [shape = 'u32[144,128]{1,0:T(1,128)}', space=vmem, size = 0x12000, scoped, tag = 'internal scratch']
  %s0 = inlined_call_operand.vmem [shape: f32[19,64], index: 0, kind: input, shape index: {}]
  %s1 = inlined_call_operand.vmem [shape: f32[19,64], index: 1, kind: input, shape index: {}]
  %s2 = inlined_call_operand.vmem [shape: f32[19,64], index: 2, kind: input, shape index: {}]
  %s3 = inlined_call_operand.vmem [shape: bf16[64,32], index: 3, kind: input, shape index: {}]
  %s4 = inlined_call_operand.vmem [shape: f32[1,32], index: 4, kind: input, shape index: {}]
  %s5 = inlined_call_operand.vmem [shape: f32[19,64], index: 5, kind: output, shape index: {0}]
  %s6 = inlined_call_operand.vmem [shape: f32[19,32], index: 6, kind: output, shape index: {1}]
  %7 = xla_tuple %s5, %s6
  %s8 = sld [smem:[#allocation0]]
  $region38: #{fwd.17} parent=0
    _
  %s10 = ssub.s32 1, %s8
  %s11 = scalar_select 0, %s10, %s8
  // Predicated region
  $region2: #{fwd.17} parent=0 // pred_check
    _
  $region3: #{fwd.17} parent=0 // pred_check_branch
    %13 = sbr.rel (0) target = $region5
  $region4: #{fwd.17} parent=0 // pred_region
    _
  $region5: #{fwd.17} parent=0 // pred_fallthru
    _
  // Predicated region
  $region6: #{fwd.17} parent=0 // pred_check
    _
  $region7: #{fwd.17} parent=0 // pred_check_branch
    %15 = sbr.rel (0) target = $region9
  $region8: #{fwd.17} parent=0 // pred_region
    _
  $region9: #{fwd.17} parent=0 // pred_fallthru
    _
  // Predicated region
  $region10: #{fwd.17} parent=0 // pred_check
    _
  $region11: #{fwd.17} parent=0 // pred_check_branch
    %17 = sbr.rel (0) target = $region13
  $region12: #{fwd.17} parent=0 // pred_region
    _
  $region13: #{fwd.17} parent=0 // pred_fallthru
    _
  // Predicated region
  $region14: #{fwd.17} parent=0 // pred_check
    _
  $region15: #{fwd.17} parent=0 // pred_check_branch
    %19 = sbr.rel (0) target = $region17
  $region16: #{fwd.17} parent=0 // pred_region
    _
  $region17: #{fwd.17} parent=0 // pred_fallthru
    _
  // Predicated region
  $region18: #{fwd.17} parent=0 // pred_check
    _
  $region19: #{fwd.17} parent=0 // pred_check_branch
    %21 = sbr.rel (0) target = $region21
  $region20: #{fwd.17} parent=0 // pred_region
    _
  $region21: #{fwd.17} parent=0 // pred_fallthru
    _
  %v23 = vld [vmem:[%s0] sm:$0xff]
  %v24 = vld [vmem:[%s0 + $0x8] sm:$0xff]
  %v25 = vld [vmem:[%s0 + $0x10] sm:$0x7]
  %v26 = vld [vmem:[%s1] sm:$0xff]
  %v27 = vld [vmem:[%s1 + $0x8] sm:$0xff]
  %v28 = vld [vmem:[%s1 + $0x10] sm:$0x7]
  %v29 = vadd.f32 %v23, %v26
  %v30 = vadd.f32 %v24, %v27
  %v31 = vadd.f32 %v25, %v28
  %v32 = vld [vmem:[%s2] sm:$0xff]
  %v33 = vld [vmem:[%s2 + $0x8] sm:$0xff]
  %v34 = vld [vmem:[%s2 + $0x10] sm:$0x7]
  %v35 = vadd.f32 %v29, %v32
  %v36 = vadd.f32 %v30, %v33
  %v37 = vadd.f32 %v31, %v34
  %v38 = vpack.c.bf16 %v36, %v35
  %v39 = vpack.c.bf16 %v37, %v37
  %v40 = vld [vmem:[%s3] sm:$0xf]
  %v41 = vld [vmem:[%s3 + $0x4] sm:$0xf]
  %v42 = vld [vmem:[%s3 + $0x8] sm:$0xf]
  %v43 = vld [vmem:[%s3 + $0xc] sm:$0xf]
  %v44 = vld [vmem:[%s3 + $0x10] sm:$0xf]
  %v45 = vld [vmem:[%s3 + $0x14] sm:$0xf]
  %v46 = vld [vmem:[%s3 + $0x18] sm:$0xf]
  %v47 = vld [vmem:[%s3 + $0x1c] sm:$0xf]
  %v48 = vld [vmem:[%s4] sm:$0x1]
  %v50 = vlaneseq
  %v51 = vshrl.u32 %v50, 7
  %v52 = vsub.s32 0, %v51
  %v53 = vrot.slane %v48, %v52
  %v63 = vunpack.c.l.b16 %v40
  %v64 = vunpack.c.l.b16 %v41
  %v65 = vunpack.c.l.b16 %v42
  %v66 = vunpack.c.l.b16 %v43
  %v67 = vunpack.c.l.b16 %v44
  %v68 = vunpack.c.l.b16 %v45
  %v69 = vunpack.c.l.b16 %v46
  %v70 = vunpack.c.l.b16 %v47
  %v71 = vpack.c.b16 %v64, %v63
  %v72 = vpack.c.b16 %v66, %v65
  %v73 = vpack.c.b16 %v68, %v67
  %v74 = vpack.c.b16 %v70, %v69
  %vm79 = vcmask 523264
  %v81 = vsel %vm79, %v38, 0
  %v84 = vsel %vm79, %v39, 0
  %86 = vmatprep.subr.bf16.mxu0 0
  %87 = vmatpush1.bf16.msra.mxu0 %v71
  %88 = vmatprep.subr.bf16.mxu0 0
  %89 = vmatpush1.bf16.msra.mxu0 %v72
  %90 = vmatprep.subr.bf16.mxu0 0
  %91 = vmatpush1.bf16.msra.mxu0 %v73
  %92 = vmatprep.subr.bf16.mxu0 0
  %93 = vmatpush1.bf16.msra.mxu0 %v74
  %94 = vmatprep.subr.bf16.mxu0 0
  %95 = vmatpush1.bf16.msra.mxu0 0
  %96 = vmatprep.subr.bf16.mxu0 0
  %97 = vmatpush1.bf16.msra.mxu0 0
  %98 = vmatprep.subr.bf16.mxu0 0
  %99 = vmatpush1.bf16.msra.mxu0 0
  %100 = vmatprep.subr.bf16.mxu0 0
  %101 = vmatpush1.bf16.msra.mxu0 0
  %102 = vmatprep.subr.bf16.mxu0 0
  %103 = vmatpush1.bf16.msra.mxu0 0
  %104 = vmatprep.subr.bf16.mxu0 0
  %105 = vmatpush1.bf16.msra.mxu0 0
  %106 = vmatprep.subr.bf16.mxu0 0
  %107 = vmatpush1.bf16.msra.mxu0 0
  %108 = vmatprep.subr.bf16.mxu0 0
  %109 = vmatpush1.bf16.msra.mxu0 0
  %110 = vmatprep.subr.bf16.mxu0 0
  %111 = vmatpush1.bf16.msra.mxu0 0
  %112 = vmatprep.subr.bf16.mxu0 0
  %113 = vmatpush1.bf16.msra.mxu0 0
  %114 = vmatprep.subr.bf16.mxu0 0
  %115 = vmatpush1.bf16.msra.mxu0 0
  %116 = vmatprep.subr.bf16.mxu0 0
  %117 = vmatpush1.bf16.msra.mxu0 0
  %118 = vmatprep.mubr.bf16.mxu0 0
  %119 = vmatmul.mubr.bf16.gmra.mrb[0].mxu0 %v81
  %v120 = vpop.f32.mrb[0].mxu0
  %v121 = vadd.f32 %v53, %v120
  %v122 = vpop.f32.mrb[0].mxu0
  %v123 = vpop.f32.mrb[0].mxu0
  %v124 = vadd.f32 %v53, %v123
  %v125 = vpop.f32.mrb[0].mxu0
  %126 = vmatprep.mubr.bf16.mxu0 0
  %127 = vmatmul.mubr.bf16.gmra.mrb[0].mxu0 %v84
  %v128 = vpop.f32.mrb[0].mxu0
  %v129 = vadd.f32 %v53, %v128
  %v130 = vpop.f32.mrb[0].mxu0
  %v131 = vpop.f32.mrb[0].mxu0
  %v132 = vpop.f32.mrb[0].mxu0
  %133 = vdwg.mxu0
  %v134 = vxor.u32 %v35, 2147483648
  %v135 = vxor.u32 %v36, 2147483648
  %v136 = vxor.u32 %v37, 2147483648
  %v137 = vmul.f32 %v134, 1.442695
  %v138 = vpow.pop %v137
  %v139 = vmul.f32 %v135, 1.442695
  %v140 = vpow.pop %v139
  %v141 = vmul.f32 %v136, 1.442695
  %v142 = vpow.pop %v141
  %v143 = vadd.f32 %v138, 1.0
  %v144 = vadd.f32 %v140, 1.0
  %v145 = vadd.f32 %v142, 1.0
  %v146 = vrcp.pop %v143
  %v147 = vmul.f32 1.0, %v146
  %v148 = vrcp.pop %v144
  %v149 = vmul.f32 1.0, %v148
  %v150 = vrcp.pop %v145
  %v151 = vmul.f32 1.0, %v150
  %v152 = vmul.f32 %v35, %v147
  %v153 = vmul.f32 %v36, %v149
  %v154 = vmul.f32 %v37, %v151
  %155 = vst.msk [vmem:[%s5] sm:$0xff] %vm79, %v152
  %156 = vst.msk [vmem:[%s5 + $0x8] sm:$0xff] %vm79, %v153
  %vm157 = vcmask 518144
  %158 = vst.msk [vmem:[%s5 + $0x10] sm:$0x7] %vm157, %v154
  %v159 = vxor.u32 %v121, 2147483648
  %v160 = vxor.u32 %v124, 2147483648
  %v161 = vxor.u32 %v129, 2147483648
  %v162 = vmul.f32 %v159, 1.442695
  %v163 = vpow.pop %v162
  %v164 = vmul.f32 %v160, 1.442695
  %v165 = vpow.pop %v164
  %v166 = vmul.f32 %v161, 1.442695
  %v167 = vpow.pop %v166
  %v168 = vadd.f32 %v163, 1.0
  %v169 = vadd.f32 %v165, 1.0
  %v170 = vadd.f32 %v167, 1.0
  %v171 = vrcp.pop %v168
  %v172 = vmul.f32 1.0, %v171
  %v173 = vrcp.pop %v169
  %v174 = vmul.f32 1.0, %v173
  %v175 = vrcp.pop %v170
  %v176 = vmul.f32 1.0, %v175
  %v177 = vmul.f32 %v121, %v172
  %v178 = vmul.f32 %v124, %v174
  %v179 = vmul.f32 %v129, %v176
  %vm180 = vcmask 261120
  %181 = vst.msk [vmem:[%s6] sm:$0xff] %vm180, %v177
  %182 = vst.msk [vmem:[%s6 + $0x8] sm:$0xff] %vm180, %v178
  %vm183 = vcmask 256000
  %184 = vst.msk [vmem:[%s6 + $0x10] sm:$0x7] %vm183, %v179
  // Predicated region
  $region22: #{fwd.17} parent=0 // pred_check
    _
  $region23: #{fwd.17} parent=0 // pred_check_branch
    %186 = sbr.rel (0) target = $region25
  $region24: #{fwd.17} parent=0 // pred_region
    _
  $region25: #{fwd.17} parent=0 // pred_fallthru
    _
  // Predicated region
  $region26: #{fwd.17} parent=0 // pred_check
    _
  $region27: #{fwd.17} parent=0 // pred_check_branch
    %188 = sbr.rel (0) target = $region29
  $region28: #{fwd.17} parent=0 // pred_region
    _
  $region29: #{fwd.17} parent=0 // pred_fallthru
    _
  // Predicated region
  $region30: #{fwd.17} parent=0 // pred_check
    _
  $region31: #{fwd.17} parent=0 // pred_check_branch
    %190 = sbr.rel (0) target = $region33
  $region32: #{fwd.17} parent=0 // pred_region
    _
  $region33: #{fwd.17} parent=0 // pred_fallthru
    _
  // Predicated region
  $region34: #{fwd.17} parent=0 // pred_check
    _
  $region35: #{fwd.17} parent=0 // pred_check_branch
    %192 = sbr.rel (0) target = $region37
  $region36: #{fwd.17} parent=0 // pred_region
    _
  $region37: #{fwd.17} parent=0 // pred_fallthru
    _

// kernel: fwd.16
$region0: #{fwd.16}
  #allocation0 [shape = 'u32[]', space=smem, size = 0x4, offset = 0x4, fixed_abs, tag = 'smem constant byte address 0x4 - core index']
  #allocation1 [shape = 'u32[144,128]{1,0:T(1,128)}', space=vmem, size = 0x12000, scoped, tag = 'internal scratch']
  %s0 = inlined_call_operand.vmem [shape: f32[19,256], index: 0, kind: input, shape index: {}]
  %s1 = inlined_call_operand.vmem [shape: bf16[256,64], index: 1, kind: input, shape index: {}]
  %s2 = inlined_call_operand.vmem [shape: f32[1,64], index: 2, kind: input, shape index: {}]
  %s3 = inlined_call_operand.vmem [shape: bf16[64,64], index: 3, kind: input, shape index: {}]
  %s4 = inlined_call_operand.vmem [shape: f32[1,64], index: 4, kind: input, shape index: {}]
  %s5 = inlined_call_operand.vmem [shape: f32[19,64], index: 5, kind: output, shape index: {}]
  %s6 = sld [smem:[#allocation0]]
  $region30: #{fwd.16} parent=0
    _
  %s8 = ssub.s32 1, %s6
  %s9 = scalar_select 0, %s8, %s6
  // Predicated region
  $region2: #{fwd.16} parent=0 // pred_check
    _
  $region3: #{fwd.16} parent=0 // pred_check_branch
    %11 = sbr.rel (0) target = $region5
  $region4: #{fwd.16} parent=0 // pred_region
    _
  $region5: #{fwd.16} parent=0 // pred_fallthru
    _
  // Predicated region
  $region6: #{fwd.16} parent=0 // pred_check
    _
  $region7: #{fwd.16} parent=0 // pred_check_branch
    %13 = sbr.rel (0) target = $region9
  $region8: #{fwd.16} parent=0 // pred_region
    _
  $region9: #{fwd.16} parent=0 // pred_fallthru
    _
  // Predicated region
  $region10: #{fwd.16} parent=0 // pred_check
    _
  $region11: #{fwd.16} parent=0 // pred_check_branch
    %15 = sbr.rel (0) target = $region13
  $region12: #{fwd.16} parent=0 // pred_region
    _
  $region13: #{fwd.16} parent=0 // pred_fallthru
    _
  // Predicated region
  $region14: #{fwd.16} parent=0 // pred_check
    _
  $region15: #{fwd.16} parent=0 // pred_check_branch
    %17 = sbr.rel (0) target = $region17
  $region16: #{fwd.16} parent=0 // pred_region
    _
  $region17: #{fwd.16} parent=0 // pred_fallthru
    _
  // Predicated region
  $region18: #{fwd.16} parent=0 // pred_check
    _
  $region19: #{fwd.16} parent=0 // pred_check_branch
    %19 = sbr.rel (0) target = $region21
  $region20: #{fwd.16} parent=0 // pred_region
    _
  $region21: #{fwd.16} parent=0 // pred_fallthru
    _
  %v21 = vld [vmem:[%s0] sm:$0xff]
  %v22 = vld [vmem:[%s0 + $0x8] sm:$0xff]
  %v23 = vld [vmem:[%s0 + $0x10] sm:$0xff]
  %v24 = vld [vmem:[%s0 + $0x18] sm:$0xff]
  %v25 = vld [vmem:[%s0 + $0x20] sm:$0x7]
  %v26 = vld [vmem:[%s0 + $0x28] sm:$0x7]
  %v27 = vpack.c.bf16 %v23, %v21
  %v28 = vpack.c.bf16 %v24, %v22
  %v29 = vpack.c.bf16 %v25, %v25
  %v30 = vpack.c.bf16 %v26, %v26
  %v31 = vld [vmem:[%s1] sm:$0xf]
  %v32 = vld [vmem:[%s1 + $0x4] sm:$0xf]
  %v33 = vld [vmem:[%s1 + $0x8] sm:$0xf]
  %v34 = vld [vmem:[%s1 + $0xc] sm:$0xf]
  %v35 = vld [vmem:[%s1 + $0x10] sm:$0xf]
  %v36 = vld [vmem:[%s1 + $0x14] sm:$0xf]
  %v37 = vld [vmem:[%s1 + $0x18] sm:$0xf]
  %v38 = vld [vmem:[%s1 + $0x1c] sm:$0xf]
  %v39 = vld [vmem:[%s1 + $0x20] sm:$0xf]
  %v40 = vld [vmem:[%s1 + $0x24] sm:$0xf]
  %v41 = vld [vmem:[%s1 + $0x28] sm:$0xf]
  %v42 = vld [vmem:[%s1 + $0x2c] sm:$0xf]
  %v43 = vld [vmem:[%s1 + $0x30] sm:$0xf]
  %v44 = vld [vmem:[%s1 + $0x34] sm:$0xf]
  %v45 = vld [vmem:[%s1 + $0x38] sm:$0xf]
  %v46 = vld [vmem:[%s1 + $0x3c] sm:$0xf]
  %v47 = vld [vmem:[%s1 + $0x40] sm:$0xf]
  %v48 = vld [vmem:[%s1 + $0x44] sm:$0xf]
  %v49 = vld [vmem:[%s1 + $0x48] sm:$0xf]
  %v50 = vld [vmem:[%s1 + $0x4c] sm:$0xf]
  %v51 = vld [vmem:[%s1 + $0x50] sm:$0xf]
  %v52 = vld [vmem:[%s1 + $0x54] sm:$0xf]
  %v53 = vld [vmem:[%s1 + $0x58] sm:$0xf]
  %v54 = vld [vmem:[%s1 + $0x5c] sm:$0xf]
  %v55 = vld [vmem:[%s1 + $0x60] sm:$0xf]
  %v56 = vld [vmem:[%s1 + $0x64] sm:$0xf]
  %v57 = vld [vmem:[%s1 + $0x68] sm:$0xf]
  %v58 = vld [vmem:[%s1 + $0x6c] sm:$0xf]
  %v59 = vld [vmem:[%s1 + $0x70] sm:$0xf]
  %v60 = vld [vmem:[%s1 + $0x74] sm:$0xf]
  %v61 = vld [vmem:[%s1 + $0x78] sm:$0xf]
  %v62 = vld [vmem:[%s1 + $0x7c] sm:$0xf]
  %v63 = vld [vmem:[%s2] sm:$0x1]
  %v65 = vlaneseq
  %v66 = vshrl.u32 %v65, 7
  %v67 = vsub.s32 0, %v66
  %v68 = vrot.slane %v63, %v67
  %v102 = vunpack.c.l.b16 %v31
  %v103 = vunpack.c.l.b16 %v32
  %v104 = vunpack.c.l.b16 %v33
  %v105 = vunpack.c.l.b16 %v34
  %v106 = vunpack.c.l.b16 %v35
  %v107 = vunpack.c.l.b16 %v36
  %v108 = vunpack.c.l.b16 %v37
  %v109 = vunpack.c.l.b16 %v38
  %v110 = vunpack.c.l.b16 %v39
  %v111 = vunpack.c.l.b16 %v40
  %v112 = vunpack.c.l.b16 %v41
  %v113 = vunpack.c.l.b16 %v42
  %v114 = vunpack.c.l.b16 %v43
  %v115 = vunpack.c.l.b16 %v44
  %v116 = vunpack.c.l.b16 %v45
  %v117 = vunpack.c.l.b16 %v46
  %v118 = vunpack.c.l.b16 %v47
  %v119 = vunpack.c.l.b16 %v48
  %v120 = vunpack.c.l.b16 %v49
  %v121 = vunpack.c.l.b16 %v50
  %v122 = vunpack.c.l.b16 %v51
  %v123 = vunpack.c.l.b16 %v52
  %v124 = vunpack.c.l.b16 %v53
  %v125 = vunpack.c.l.b16 %v54
  %v126 = vunpack.c.l.b16 %v55
  %v127 = vunpack.c.l.b16 %v56
  %v128 = vunpack.c.l.b16 %v57
  %v129 = vunpack.c.l.b16 %v58
  %v130 = vunpack.c.l.b16 %v59
  %v131 = vunpack.c.l.b16 %v60
  %v132 = vunpack.c.l.b16 %v61
  %v133 = vunpack.c.l.b16 %v62
  %v134 = vpack.c.b16 %v103, %v102
  %v135 = vpack.c.b16 %v105, %v104
  %v136 = vpack.c.b16 %v107, %v106
  %v137 = vpack.c.b16 %v109, %v108
  %v138 = vpack.c.b16 %v111, %v110
  %v139 = vpack.c.b16 %v113, %v112
  %v140 = vpack.c.b16 %v115, %v114
  %v141 = vpack.c.b16 %v117, %v116
  %v142 = vpack.c.b16 %v119, %v118
  %v143 = vpack.c.b16 %v121, %v120
  %v144 = vpack.c.b16 %v123, %v122
  %v145 = vpack.c.b16 %v125, %v124
  %v146 = vpack.c.b16 %v127, %v126
  %v147 = vpack.c.b16 %v129, %v128
  %v148 = vpack.c.b16 %v131, %v130
  %v149 = vpack.c.b16 %v133, %v132
  %166 = vmatprep.subr.bf16.mxu0 0
  %167 = vmatpush1.bf16.msra.mxu0 %v134
  %168 = vmatprep.subr.bf16.mxu0 0
  %169 = vmatpush1.bf16.msra.mxu0 %v135
  %170 = vmatprep.subr.bf16.mxu0 0
  %171 = vmatpush1.bf16.msra.mxu0 %v136
  %172 = vmatprep.subr.bf16.mxu0 0
  %173 = vmatpush1.bf16.msra.mxu0 %v137
  %174 = vmatprep.subr.bf16.mxu0 0
  %175 = vmatpush1.bf16.msra.mxu0 %v138
  %176 = vmatprep.subr.bf16.mxu0 0
  %177 = vmatpush1.bf16.msra.mxu0 %v139
  %178 = vmatprep.subr.bf16.mxu0 0
  %179 = vmatpush1.bf16.msra.mxu0 %v140
  %180 = vmatprep.subr.bf16.mxu0 0
  %181 = vmatpush1.bf16.msra.mxu0 %v141
  %182 = vmatprep.subr.bf16.mxu0 0
  %183 = vmatpush1.bf16.msra.mxu0 %v142
  %184 = vmatprep.subr.bf16.mxu0 0
  %185 = vmatpush1.bf16.msra.mxu0 %v143
  %186 = vmatprep.subr.bf16.mxu0 0
  %187 = vmatpush1.bf16.msra.mxu0 %v144
  %188 = vmatprep.subr.bf16.mxu0 0
  %189 = vmatpush1.bf16.msra.mxu0 %v145
  %190 = vmatprep.subr.bf16.mxu0 0
  %191 = vmatpush1.bf16.msra.mxu0 %v146
  %192 = vmatprep.subr.bf16.mxu0 0
  %193 = vmatpush1.bf16.msra.mxu0 %v147
  %194 = vmatprep.subr.bf16.mxu0 0
  %195 = vmatpush1.bf16.msra.mxu0 %v148
  %196 = vmatprep.subr.bf16.mxu0 0
  %197 = vmatpush1.bf16.msra.mxu0 %v149
  %198 = vmatprep.mubr.bf16.mxu0 %v28
  %199 = vmatmul.mubr.bf16.gmra.mrb[0].mxu0 %v27
  %v200 = vpop.f32.mrb[0].mxu0
  %v201 = vadd.f32 %v68, %v200
  %v202 = vpop.f32.mrb[0].mxu0
  %v203 = vpop.f32.mrb[0].mxu0
  %v204 = vadd.f32 %v68, %v203
  %v205 = vpop.f32.mrb[0].mxu0
  %206 = vmatprep.mubr.bf16.mxu0 %v30
  %207 = vmatmul.mubr.bf16.gmra.mrb[0].mxu0 %v29
  %v208 = vpop.f32.mrb[0].mxu0
  %v209 = vadd.f32 %v68, %v208
  %v210 = vpop.f32.mrb[0].mxu0
  %v211 = vpop.f32.mrb[0].mxu0
  %v212 = vpop.f32.mrb[0].mxu0
  %213 = vdwg.mxu0
  %v214 = vxor.u32 %v201, 2147483648
  %v215 = vxor.u32 %v204, 2147483648
  %v216 = vxor.u32 %v209, 2147483648
  %v217 = vmul.f32 %v214, 1.442695
  %v218 = vpow.pop %v217
  %v219 = vmul.f32 %v215, 1.442695
  %v220 = vpow.pop %v219
  %v221 = vmul.f32 %v216, 1.442695
  %v222 = vpow.pop %v221
  %v223 = vadd.f32 %v218, 1.0
  %v224 = vadd.f32 %v220, 1.0
  %v225 = vadd.f32 %v222, 1.0
  %v226 = vrcp.pop %v223
  %v227 = vmul.f32 1.0, %v226
  %v228 = vrcp.pop %v224
  %v229 = vmul.f32 1.0, %v228
  %v230 = vrcp.pop %v225
  %v231 = vmul.f32 1.0, %v230
  %v232 = vmul.f32 %v201, %v227
  %v233 = vmul.f32 %v204, %v229
  %v234 = vmul.f32 %v209, %v231
  %v235 = vpack.c.bf16 %v233, %v232
  %v236 = vpack.c.bf16 %v234, %v234
  %v237 = vld [vmem:[%s3] sm:$0xf]
  %v238 = vld [vmem:[%s3 + $0x4] sm:$0xf]
  %v239 = vld [vmem:[%s3 + $0x8] sm:$0xf]
  %v240 = vld [vmem:[%s3 + $0xc] sm:$0xf]
  %v241 = vld [vmem:[%s3 + $0x10] sm:$0xf]
  %v242 = vld [vmem:[%s3 + $0x14] sm:$0xf]
  %v243 = vld [vmem:[%s3 + $0x18] sm:$0xf]
  %v244 = vld [vmem:[%s3 + $0x1c] sm:$0xf]
  %v245 = vld [vmem:[%s4] sm:$0x1]
  %v247 = vlaneseq
  %v248 = vshrl.u32 %v247, 7
  %v249 = vsub.s32 0, %v248
  %v250 = vrot.slane %v245, %v249
  %v260 = vunpack.c.l.b16 %v237
  %v261 = vunpack.c.l.b16 %v238
  %v262 = vunpack.c.l.b16 %v239
  %v263 = vunpack.c.l.b16 %v240
  %v264 = vunpack.c.l.b16 %v241
  %v265 = vunpack.c.l.b16 %v242
  %v266 = vunpack.c.l.b16 %v243
  %v267 = vunpack.c.l.b16 %v244
  %v268 = vpack.c.b16 %v261, %v260
  %v269 = vpack.c.b16 %v263, %v262
  %v270 = vpack.c.b16 %v265, %v264
  %v271 = vpack.c.b16 %v267, %v266
  %vm276 = vcmask 523264
  %v278 = vsel %vm276, %v235, 0
  %v281 = vsel %vm276, %v236, 0
  %283 = vmatprep.subr.bf16.mxu0 0
  %284 = vmatpush1.bf16.msra.mxu0 %v268
  %285 = vmatprep.subr.bf16.mxu0 0
  %286 = vmatpush1.bf16.msra.mxu0 %v269
  %287 = vmatprep.subr.bf16.mxu0 0
  %288 = vmatpush1.bf16.msra.mxu0 %v270
  %289 = vmatprep.subr.bf16.mxu0 0
  %290 = vmatpush1.bf16.msra.mxu0 %v271
  %291 = vmatprep.subr.bf16.mxu0 0
  %292 = vmatpush1.bf16.msra.mxu0 0
  %293 = vmatprep.subr.bf16.mxu0 0
  %294 = vmatpush1.bf16.msra.mxu0 0
  %295 = vmatprep.subr.bf16.mxu0 0
  %296 = vmatpush1.bf16.msra.mxu0 0
  %297 = vmatprep.subr.bf16.mxu0 0
  %298 = vmatpush1.bf16.msra.mxu0 0
  %299 = vmatprep.subr.bf16.mxu0 0
  %300 = vmatpush1.bf16.msra.mxu0 0
  %301 = vmatprep.subr.bf16.mxu0 0
  %302 = vmatpush1.bf16.msra.mxu0 0
  %303 = vmatprep.subr.bf16.mxu0 0
  %304 = vmatpush1.bf16.msra.mxu0 0
  %305 = vmatprep.subr.bf16.mxu0 0
  %306 = vmatpush1.bf16.msra.mxu0 0
  %307 = vmatprep.subr.bf16.mxu0 0
  %308 = vmatpush1.bf16.msra.mxu0 0
  %309 = vmatprep.subr.bf16.mxu0 0
  %310 = vmatpush1.bf16.msra.mxu0 0
  %311 = vmatprep.subr.bf16.mxu0 0
  %312 = vmatpush1.bf16.msra.mxu0 0
  %313 = vmatprep.subr.bf16.mxu0 0
  %314 = vmatpush1.bf16.msra.mxu0 0
  %315 = vmatprep.mubr.bf16.mxu0 0
  %316 = vmatmul.mubr.bf16.gmra.mrb[0].mxu0 %v278
  %v317 = vpop.f32.mrb[0].mxu0
  %v318 = vadd.f32 %v250, %v317
  %v319 = vpop.f32.mrb[0].mxu0
  %v320 = vpop.f32.mrb[0].mxu0
  %v321 = vadd.f32 %v250, %v320
  %v322 = vpop.f32.mrb[0].mxu0
  %323 = vmatprep.mubr.bf16.mxu0 0
  %324 = vmatmul.mubr.bf16.gmra.mrb[0].mxu0 %v281
  %v325 = vpop.f32.mrb[0].mxu0
  %v326 = vadd.f32 %v250, %v325
  %v327 = vpop.f32.mrb[0].mxu0
  %v328 = vpop.f32.mrb[0].mxu0
  %v329 = vpop.f32.mrb[0].mxu0
  %330 = vdwg.mxu0
  %331 = vst.msk [vmem:[%s5] sm:$0xff] %vm276, %v318
  %332 = vst.msk [vmem:[%s5 + $0x8] sm:$0xff] %vm276, %v321
  %vm333 = vcmask 518144
  %334 = vst.msk [vmem:[%s5 + $0x10] sm:$0x7] %vm333, %v326
  // Predicated region
  $region22: #{fwd.16} parent=0 // pred_check
    _
  $region23: #{fwd.16} parent=0 // pred_check_branch
    %336 = sbr.rel (0) target = $region25
  $region24: #{fwd.16} parent=0 // pred_region
    _
  $region25: #{fwd.16} parent=0 // pred_fallthru
    _
  // Predicated region
  $region26: #{fwd.16} parent=0 // pred_check
    _
  $region27: #{fwd.16} parent=0 // pred_check_branch
    %338 = sbr.rel (0) target = $region29
  $region28: #{fwd.16} parent=0 // pred_region
    _
  $region29: #{fwd.16} parent=0 // pred_fallthru
    _

// kernel: fwd.14
$region0: #{fwd.14}
  #allocation0 [shape = 'u32[]', space=smem, size = 0x4, offset = 0x4, fixed_abs, tag = 'smem constant byte address 0x4 - core index']
  #allocation1 [shape = 'u32[144,128]{1,0:T(1,128)}', space=vmem, size = 0x12000, scoped, tag = 'internal scratch']
  %s0 = inlined_call_operand.vmem [shape: f32[12,16], index: 0, kind: input, shape index: {}]
  %s1 = inlined_call_operand.vmem [shape: f32[12,64], index: 1, kind: input, shape index: {}]
  %s2 = inlined_call_operand.vmem [shape: bf16[16,64], index: 2, kind: input, shape index: {}]
  %s3 = inlined_call_operand.vmem [shape: f32[1,64], index: 3, kind: input, shape index: {}]
  %s4 = inlined_call_operand.vmem [shape: bf16[64,64], index: 4, kind: input, shape index: {}]
  %s5 = inlined_call_operand.vmem [shape: f32[1,64], index: 5, kind: input, shape index: {}]
  %s6 = inlined_call_operand.vmem [shape: f32[12,64], index: 6, kind: output, shape index: {}]
  %s7 = sld [smem:[#allocation0]]
  $region34: #{fwd.14} parent=0
    _
  %s9 = ssub.s32 1, %s7
  %s10 = scalar_select 0, %s9, %s7
  // Predicated region
  $region2: #{fwd.14} parent=0 // pred_check
    _
  $region3: #{fwd.14} parent=0 // pred_check_branch
    %12 = sbr.rel (0) target = $region5
  $region4: #{fwd.14} parent=0 // pred_region
    _
  $region5: #{fwd.14} parent=0 // pred_fallthru
    _
  // Predicated region
  $region6: #{fwd.14} parent=0 // pred_check
    _
  $region7: #{fwd.14} parent=0 // pred_check_branch
    %14 = sbr.rel (0) target = $region9
  $region8: #{fwd.14} parent=0 // pred_region
    _
  $region9: #{fwd.14} parent=0 // pred_fallthru
    _
  // Predicated region
  $region10: #{fwd.14} parent=0 // pred_check
    _
  $region11: #{fwd.14} parent=0 // pred_check_branch
    %16 = sbr.rel (0) target = $region13
  $region12: #{fwd.14} parent=0 // pred_region
    _
  $region13: #{fwd.14} parent=0 // pred_fallthru
    _
  // Predicated region
  $region14: #{fwd.14} parent=0 // pred_check
    _
  $region15: #{fwd.14} parent=0 // pred_check_branch
    %18 = sbr.rel (0) target = $region17
  $region16: #{fwd.14} parent=0 // pred_region
    _
  $region17: #{fwd.14} parent=0 // pred_fallthru
    _
  // Predicated region
  $region18: #{fwd.14} parent=0 // pred_check
    _
  $region19: #{fwd.14} parent=0 // pred_check_branch
    %20 = sbr.rel (0) target = $region21
  $region20: #{fwd.14} parent=0 // pred_region
    _
  $region21: #{fwd.14} parent=0 // pred_fallthru
    _
  // Predicated region
  $region22: #{fwd.14} parent=0 // pred_check
    _
  $region23: #{fwd.14} parent=0 // pred_check_branch
    %22 = sbr.rel (0) target = $region25
  $region24: #{fwd.14} parent=0 // pred_region
    _
  $region25: #{fwd.14} parent=0 // pred_fallthru
    _
  %v24 = vld [vmem:[%s0] sm:$0xff]
  %v25 = vld [vmem:[%s0 + $0x8] sm:$0xf]
  %v26 = vpack.c.bf16 %v25, %v24
  %v27 = vld [vmem:[%s2] sm:$0xf]
  %v28 = vld [vmem:[%s2 + $0x4] sm:$0xf]
  %v29 = vld [vmem:[%s3] sm:$0x1]
  %v31 = vlaneseq
  %v32 = vshrl.u32 %v31, 7
  %v33 = vsub.s32 0, %v32
  %v34 = vrot.slane %v29, %v33
  %v38 = vunpack.c.l.b16 %v27
  %v39 = vunpack.c.l.b16 %v28
  %v40 = vpack.c.b16 %v39, %v38
  %vm42 = vcmask 130048
  %v44 = vsel %vm42, %v26, 0
  %46 = vmatprep.subr.bf16.mxu0 0
  %47 = vmatpush1.bf16.msra.mxu0 %v40
  %48 = vmatprep.subr.bf16.mxu0 0
  %49 = vmatpush1.bf16.msra.mxu0 0
  %50 = vmatprep.subr.bf16.mxu0 0
  %51 = vmatpush1.bf16.msra.mxu0 0
  %52 = vmatprep.subr.bf16.mxu0 0
  %53 = vmatpush1.bf16.msra.mxu0 0
  %54 = vmatprep.subr.bf16.mxu0 0
  %55 = vmatpush1.bf16.msra.mxu0 0
  %56 = vmatprep.subr.bf16.mxu0 0
  %57 = vmatpush1.bf16.msra.mxu0 0
  %58 = vmatprep.subr.bf16.mxu0 0
  %59 = vmatpush1.bf16.msra.mxu0 0
  %60 = vmatprep.subr.bf16.mxu0 0
  %61 = vmatpush1.bf16.msra.mxu0 0
  %62 = vmatprep.subr.bf16.mxu0 0
  %63 = vmatpush1.bf16.msra.mxu0 0
  %64 = vmatprep.subr.bf16.mxu0 0
  %65 = vmatpush1.bf16.msra.mxu0 0
  %66 = vmatprep.subr.bf16.mxu0 0
  %67 = vmatpush1.bf16.msra.mxu0 0
  %68 = vmatprep.subr.bf16.mxu0 0
  %69 = vmatpush1.bf16.msra.mxu0 0
  %70 = vmatprep.subr.bf16.mxu0 0
  %71 = vmatpush1.bf16.msra.mxu0 0
  %72 = vmatprep.subr.bf16.mxu0 0
  %73 = vmatpush1.bf16.msra.mxu0 0
  %74 = vmatprep.subr.bf16.mxu0 0
  %75 = vmatpush1.bf16.msra.mxu0 0
  %76 = vmatprep.subr.bf16.mxu0 0
  %77 = vmatpush1.bf16.msra.mxu0 0
  %78 = vmatprep.mubr.bf16.mxu0 0
  %79 = vmatmul.mubr.bf16.gmra.mrb[0].mxu0 %v44
  %v80 = vpop.f32.mrb[0].mxu0
  %v81 = vadd.f32 %v34, %v80
  %v82 = vpop.f32.mrb[0].mxu0
  %v83 = vpop.f32.mrb[0].mxu0
  %v84 = vadd.f32 %v34, %v83
  %v85 = vpop.f32.mrb[0].mxu0
  %86 = vdwg.mxu0
  %v87 = vxor.u32 %v81, 2147483648
  %v88 = vxor.u32 %v84, 2147483648
  %v89 = vmul.f32 %v87, 1.442695
  %v90 = vpow.pop %v89
  %v91 = vmul.f32 %v88, 1.442695
  %v92 = vpow.pop %v91
  %v93 = vadd.f32 %v90, 1.0
  %v94 = vadd.f32 %v92, 1.0
  %v95 = vrcp.pop %v93
  %v96 = vmul.f32 1.0, %v95
  %v97 = vrcp.pop %v94
  %v98 = vmul.f32 1.0, %v97
  %v99 = vmul.f32 %v81, %v96
  %v100 = vmul.f32 %v84, %v98
  %v101 = vpack.c.bf16 %v100, %v99
  %v102 = vld [vmem:[%s4] sm:$0xf]
  %v103 = vld [vmem:[%s4 + $0x4] sm:$0xf]
  %v104 = vld [vmem:[%s4 + $0x8] sm:$0xf]
  %v105 = vld [vmem:[%s4 + $0xc] sm:$0xf]
  %v106 = vld [vmem:[%s4 + $0x10] sm:$0xf]
  %v107 = vld [vmem:[%s4 + $0x14] sm:$0xf]
  %v108 = vld [vmem:[%s4 + $0x18] sm:$0xf]
  %v109 = vld [vmem:[%s4 + $0x1c] sm:$0xf]
  %v110 = vld [vmem:[%s5] sm:$0x1]
  %v112 = vlaneseq
  %v113 = vshrl.u32 %v112, 7
  %v114 = vsub.s32 0, %v113
  %v115 = vrot.slane %v110, %v114
  %v125 = vunpack.c.l.b16 %v102
  %v126 = vunpack.c.l.b16 %v103
  %v127 = vunpack.c.l.b16 %v104
  %v128 = vunpack.c.l.b16 %v105
  %v129 = vunpack.c.l.b16 %v106
  %v130 = vunpack.c.l.b16 %v107
  %v131 = vunpack.c.l.b16 %v108
  %v132 = vunpack.c.l.b16 %v109
  %v133 = vpack.c.b16 %v126, %v125
  %v134 = vpack.c.b16 %v128, %v127
  %v135 = vpack.c.b16 %v130, %v129
  %v136 = vpack.c.b16 %v132, %v131
  %vm141 = vcmask 523264
  %v143 = vsel %vm141, %v101, 0
  %145 = vmatprep.subr.bf16.mxu0 0
  %146 = vmatpush1.bf16.msra.mxu0 %v133
  %147 = vmatprep.subr.bf16.mxu0 0
  %148 = vmatpush1.bf16.msra.mxu0 %v134
  %149 = vmatprep.subr.bf16.mxu0 0
  %150 = vmatpush1.bf16.msra.mxu0 %v135
  %151 = vmatprep.subr.bf16.mxu0 0
  %152 = vmatpush1.bf16.msra.mxu0 %v136
  %153 = vmatprep.subr.bf16.mxu0 0
  %154 = vmatpush1.bf16.msra.mxu0 0
  %155 = vmatprep.subr.bf16.mxu0 0
  %156 = vmatpush1.bf16.msra.mxu0 0
  %157 = vmatprep.subr.bf16.mxu0 0
  %158 = vmatpush1.bf16.msra.mxu0 0
  %159 = vmatprep.subr.bf16.mxu0 0
  %160 = vmatpush1.bf16.msra.mxu0 0
  %161 = vmatprep.subr.bf16.mxu0 0
  %162 = vmatpush1.bf16.msra.mxu0 0
  %163 = vmatprep.subr.bf16.mxu0 0
  %164 = vmatpush1.bf16.msra.mxu0 0
  %165 = vmatprep.subr.bf16.mxu0 0
  %166 = vmatpush1.bf16.msra.mxu0 0
  %167 = vmatprep.subr.bf16.mxu0 0
  %168 = vmatpush1.bf16.msra.mxu0 0
  %169 = vmatprep.subr.bf16.mxu0 0
  %170 = vmatpush1.bf16.msra.mxu0 0
  %171 = vmatprep.subr.bf16.mxu0 0
  %172 = vmatpush1.bf16.msra.mxu0 0
  %173 = vmatprep.subr.bf16.mxu0 0
  %174 = vmatpush1.bf16.msra.mxu0 0
  %175 = vmatprep.subr.bf16.mxu0 0
  %176 = vmatpush1.bf16.msra.mxu0 0
  %177 = vmatprep.mubr.bf16.mxu0 0
  %178 = vmatmul.mubr.bf16.gmra.mrb[0].mxu0 %v143
  %v179 = vpop.f32.mrb[0].mxu0
  %v180 = vadd.f32 %v115, %v179
  %v181 = vpop.f32.mrb[0].mxu0
  %v182 = vpop.f32.mrb[0].mxu0
  %v183 = vadd.f32 %v115, %v182
  %v184 = vpop.f32.mrb[0].mxu0
  %185 = vdwg.mxu0
  %v186 = vadd.f32 %v81, %v180
  %v187 = vadd.f32 %v84, %v183
  %v188 = vld [vmem:[%s1] sm:$0xff]
  %v189 = vld [vmem:[%s1 + $0x8] sm:$0xf]
  %v190 = vadd.f32 %v186, %v188
  %v191 = vadd.f32 %v187, %v189
  %192 = vst.msk [vmem:[%s6] sm:$0xff] %vm141, %v190
  %vm193 = vcmask 519168
  %194 = vst.msk [vmem:[%s6 + $0x8] sm:$0xf] %vm193, %v191
  // Predicated region
  $region26: #{fwd.14} parent=0 // pred_check
    _
  $region27: #{fwd.14} parent=0 // pred_check_branch
    %196 = sbr.rel (0) target = $region29
  $region28: #{fwd.14} parent=0 // pred_region
    _
  $region29: #{fwd.14} parent=0 // pred_fallthru
    _
  // Predicated region
  $region30: #{fwd.14} parent=0 // pred_check
    _
  $region31: #{fwd.14} parent=0 // pred_check_branch
    %198 = sbr.rel (0) target = $region33
  $region32: #{fwd.14} parent=0 // pred_region
    _
  $region33: #{fwd.14} parent=0 // pred_fallthru
    _

// kernel: fwd.18
$region0: #{fwd.18}
  #allocation0 [shape = 'u32[]', space=smem, size = 0x4, offset = 0x4, fixed_abs, tag = 'smem constant byte address 0x4 - core index']
  #allocation1 [shape = 'u32[144,128]{1,0:T(1,128)}', space=vmem, size = 0x12000, scoped, tag = 'internal scratch']
  %s0 = inlined_call_operand.vmem [shape: f32[12,64], index: 0, kind: input, shape index: {}, may-alias: {0,14}]
  %s1 = inlined_call_operand.vmem [shape: f32[12,64], index: 1, kind: input, shape index: {}]
  %s2 = inlined_call_operand.vmem [shape: f32[12,12], index: 2, kind: input, shape index: {}]
  %s3 = inlined_call_operand.vmem [shape: f32[12,1], index: 3, kind: input, shape index: {}]
  %s4 = inlined_call_operand.vmem [shape: bf16[64,384], index: 4, kind: input, shape index: {}]
  %s5 = inlined_call_operand.vmem [shape: f32[1,384], index: 5, kind: input, shape index: {}]
  %s6 = inlined_call_operand.vmem [shape: bf16[64,192], index: 6, kind: input, shape index: {}]
  %s7 = inlined_call_operand.vmem [shape: f32[1,192], index: 7, kind: input, shape index: {}]
  %s8 = inlined_call_operand.vmem [shape: bf16[64,64], index: 8, kind: input, shape index: {}]
  %s9 = inlined_call_operand.vmem [shape: f32[1,64], index: 9, kind: input, shape index: {}]
  %s10 = inlined_call_operand.vmem [shape: bf16[64,256], index: 10, kind: input, shape index: {}]
  %s11 = inlined_call_operand.vmem [shape: f32[1,256], index: 11, kind: input, shape index: {}]
  %s12 = inlined_call_operand.vmem [shape: bf16[256,64], index: 12, kind: input, shape index: {}]
  %s13 = inlined_call_operand.vmem [shape: f32[1,64], index: 13, kind: input, shape index: {}]
  %s14 = inlined_call_operand.vmem [shape: f32[12,64], index: 14, kind: output, shape index: {}, may-alias: {0,14}]
  %s15 = sld [smem:[#allocation0]]
  $region66: #{fwd.18} parent=0
    _
  %s17 = ssub.s32 1, %s15
  %s18 = scalar_select 0, %s17, %s15
  // Predicated region
  $region2: #{fwd.18} parent=0 // pred_check
    _
  $region3: #{fwd.18} parent=0 // pred_check_branch
    %20 = sbr.rel (0) target = $region5
  $region4: #{fwd.18} parent=0 // pred_region
    _
  $region5: #{fwd.18} parent=0 // pred_fallthru
    _
  // Predicated region
  $region6: #{fwd.18} parent=0 // pred_check
    _
  $region7: #{fwd.18} parent=0 // pred_check_branch
    %22 = sbr.rel (0) target = $region9
  $region8: #{fwd.18} parent=0 // pred_region
    _
  $region9: #{fwd.18} parent=0 // pred_fallthru
    _
  // Predicated region
  $region10: #{fwd.18} parent=0 // pred_check
    _
  $region11: #{fwd.18} parent=0 // pred_check_branch
    %24 = sbr.rel (0) target = $region13
  $region12: #{fwd.18} parent=0 // pred_region
    _
  $region13: #{fwd.18} parent=0 // pred_fallthru
    _
  // Predicated region
  $region14: #{fwd.18} parent=0 // pred_check
    _
  $region15: #{fwd.18} parent=0 // pred_check_branch
    %26 = sbr.rel (0) target = $region17
  $region16: #{fwd.18} parent=0 // pred_region
    _
  $region17: #{fwd.18} parent=0 // pred_fallthru
    _
  // Predicated region
  $region18: #{fwd.18} parent=0 // pred_check
    _
  $region19: #{fwd.18} parent=0 // pred_check_branch
    %28 = sbr.rel (0) target = $region21
  $region20: #{fwd.18} parent=0 // pred_region
    _
  $region21: #{fwd.18} parent=0 // pred_fallthru
    _
  // Predicated region
  $region22: #{fwd.18} parent=0 // pred_check
    _
  $region23: #{fwd.18} parent=0 // pred_check_branch
    %30 = sbr.rel (0) target = $region25
  $region24: #{fwd.18} parent=0 // pred_region
    _
  $region25: #{fwd.18} parent=0 // pred_fallthru
    _
  // Predicated region
  $region26: #{fwd.18} parent=0 // pred_check
    _
  $region27: #{fwd.18} parent=0 // pred_check_branch
    %32 = sbr.rel (0) target = $region29
  $region28: #{fwd.18} parent=0 // pred_region
    _
  $region29: #{fwd.18} parent=0 // pred_fallthru
    _
  // Predicated region
  $region30: #{fwd.18} parent=0 // pred_check
    _
  $region31: #{fwd.18} parent=0 // pred_check_branch
    %34 = sbr.rel (0) target = $region33
  $region32: #{fwd.18} parent=0 // pred_region
    _
  $region33: #{fwd.18} parent=0 // pred_fallthru
    _
  // Predicated region
  $region34: #{fwd.18} parent=0 // pred_check
    _
  $region35: #{fwd.18} parent=0 // pred_check_branch
    %36 = sbr.rel (0) target = $region37
  $region36: #{fwd.18} parent=0 // pred_region
    _
  $region37: #{fwd.18} parent=0 // pred_fallthru
    _
  // Predicated region
  $region38: #{fwd.18} parent=0 // pred_check
    _
  $region39: #{fwd.18} parent=0 // pred_check_branch
    %38 = sbr.rel (0) target = $region41
  $region40: #{fwd.18} parent=0 // pred_region
    _
  $region41: #{fwd.18} parent=0 // pred_fallthru
    _
  // Predicated region
  $region42: #{fwd.18} parent=0 // pred_check
    _
  $region43: #{fwd.18} parent=0 // pred_check_branch
    %40 = sbr.rel (0) target = $region45
  $region44: #{fwd.18} parent=0 // pred_region
    _
  $region45: #{fwd.18} parent=0 // pred_fallthru
    _
  // Predicated region
  $region46: #{fwd.18} parent=0 // pred_check
    _
  $region47: #{fwd.18} parent=0 // pred_check_branch
    %42 = sbr.rel (0) target = $region49
  $region48: #{fwd.18} parent=0 // pred_region
    _
  $region49: #{fwd.18} parent=0 // pred_fallthru
    _
  // Predicated region
  $region50: #{fwd.18} parent=0 // pred_check
    _
  $region51: #{fwd.18} parent=0 // pred_check_branch
    %44 = sbr.rel (0) target = $region53
  $region52: #{fwd.18} parent=0 // pred_region
    _
  $region53: #{fwd.18} parent=0 // pred_fallthru
    _
  // Predicated region
  $region54: #{fwd.18} parent=0 // pred_check
    _
  $region55: #{fwd.18} parent=0 // pred_check_branch
    %46 = sbr.rel (0) target = $region57
  $region56: #{fwd.18} parent=0 // pred_region
    _
  $region57: #{fwd.18} parent=0 // pred_fallthru
    _
  %v48 = vld [vmem:[%s0] sm:$0xff]
  %v49 = vld [vmem:[%s0 + $0x8] sm:$0xf]
  %v50 = vld [vmem:[%s1] sm:$0xff]
  %v51 = vld [vmem:[%s1 + $0x8] sm:$0xf]
  %v52 = vpack.c.bf16 %v51, %v50
  %v53 = vld [vmem:[%s4] sm:$0xff]
  %v54 = vld [vmem:[%s4 + $0x8] sm:$0xf]
  %v55 = vld [vmem:[%s4 + $0xc] sm:$0xff]
  %v56 = vld [vmem:[%s4 + $0x14] sm:$0xf]
  %v57 = vld [vmem:[%s4 + $0x18] sm:$0xff]
  %v58 = vld [vmem:[%s4 + $0x20] sm:$0xf]
  %v59 = vld [vmem:[%s4 + $0x24] sm:$0xff]
  %v60 = vld [vmem:[%s4 + $0x2c] sm:$0xf]
  %v61 = vld [vmem:[%s4 + $0x30] sm:$0xff]
  %v62 = vld [vmem:[%s4 + $0x38] sm:$0xf]
  %v63 = vld [vmem:[%s4 + $0x3c] sm:$0xff]
  %v64 = vld [vmem:[%s4 + $0x44] sm:$0xf]
  %v65 = vld [vmem:[%s4 + $0x48] sm:$0xff]
  %v66 = vld [vmem:[%s4 + $0x50] sm:$0xf]
  %v67 = vld [vmem:[%s4 + $0x54] sm:$0xff]
  %v68 = vld [vmem:[%s4 + $0x5c] sm:$0xf]
  %v69 = vld [vmem:[%s5] sm:$0x7]
  %v71 = vlaneseq
  %v72 = vshrl.u32 %v71, 7
  %v73 = vsub.s32 0, %v72
  %v74 = vrot.slane %v69, %v73
  %v75 = vlaneseq
  %v76 = vshrl.u32 %v75, 7
  %v77 = vsub.s32 1, %v76
  %v78 = vrot.slane %v69, %v77
  %v79 = vlaneseq
  %v80 = vshrl.u32 %v79, 7
  %v81 = vsub.s32 2, %v80
  %v82 = vrot.slane %v69, %v81
  %v102 = vunpack.c.l.b16 %v53
  %v103 = vunpack.c.h.b16 %v53
  %v104 = vunpack.c.l.b16 %v54
  %v105 = vunpack.c.l.b16 %v55
  %v106 = vunpack.c.h.b16 %v55
  %v107 = vunpack.c.l.b16 %v56
  %v108 = vunpack.c.l.b16 %v57
  %v109 = vunpack.c.h.b16 %v57
  %v110 = vunpack.c.l.b16 %v58
  %v111 = vunpack.c.l.b16 %v59
  %v112 = vunpack.c.h.b16 %v59
  %v113 = vunpack.c.l.b16 %v60
  %v114 = vunpack.c.l.b16 %v61
  %v115 = vunpack.c.h.b16 %v61
  %v116 = vunpack.c.l.b16 %v62
  %v117 = vunpack.c.l.b16 %v63
  %v118 = vunpack.c.h.b16 %v63
  %v119 = vunpack.c.l.b16 %v64
  %v120 = vunpack.c.l.b16 %v65
  %v121 = vunpack.c.h.b16 %v65
  %v122 = vunpack.c.l.b16 %v66
  %v123 = vunpack.c.l.b16 %v67
  %v124 = vunpack.c.h.b16 %v67
  %v125 = vunpack.c.l.b16 %v68
  %v126 = vpack.c.b16 %v105, %v102
  %v127 = vpack.c.b16 %v106, %v103
  %v128 = vpack.c.b16 %v107, %v104
  %v129 = vpack.c.b16 %v111, %v108
  %v130 = vpack.c.b16 %v112, %v109
  %v131 = vpack.c.b16 %v113, %v110
  %v132 = vpack.c.b16 %v117, %v114
  %v133 = vpack.c.b16 %v118, %v115
  %v134 = vpack.c.b16 %v119, %v116
  %v135 = vpack.c.b16 %v123, %v120
  %v136 = vpack.c.b16 %v124, %v121
  %v137 = vpack.c.b16 %v125, %v122
  %vm150 = vcmask 523264
  %v152 = vsel %vm150, %v52, 0
  %154 = vmatprep.subr.bf16.mxu0 %v127
  %155 = vmatpush1.bf16.msra.mxu0 %v126
  %156 = vmatprep.subr.bf16.mxu0 %v130
  %157 = vmatpush1.bf16.msra.mxu0 %v129
  %158 = vmatprep.subr.bf16.mxu0 %v133
  %159 = vmatpush1.bf16.msra.mxu0 %v132
  %160 = vmatprep.subr.bf16.mxu0 %v136
  %161 = vmatpush1.bf16.msra.mxu0 %v135
  %162 = vmatprep.subr.bf16.mxu0 0
  %163 = vmatpush1.bf16.msra.mxu0 0
  %164 = vmatprep.subr.bf16.mxu0 0
  %165 = vmatpush1.bf16.msra.mxu0 0
  %166 = vmatprep.subr.bf16.mxu0 0
  %167 = vmatpush1.bf16.msra.mxu0 0
  %168 = vmatprep.subr.bf16.mxu0 0
  %169 = vmatpush1.bf16.msra.mxu0 0
  %170 = vmatprep.subr.bf16.mxu0 0
  %171 = vmatpush1.bf16.msra.mxu0 0
  %172 = vmatprep.subr.bf16.mxu0 0
  %173 = vmatpush1.bf16.msra.mxu0 0
  %174 = vmatprep.subr.bf16.mxu0 0
  %175 = vmatpush1.bf16.msra.mxu0 0
  %176 = vmatprep.subr.bf16.mxu0 0
  %177 = vmatpush1.bf16.msra.mxu0 0
  %178 = vmatprep.subr.bf16.mxu0 0
  %179 = vmatpush1.bf16.msra.mxu0 0
  %180 = vmatprep.subr.bf16.mxu0 0
  %181 = vmatpush1.bf16.msra.mxu0 0
  %182 = vmatprep.subr.bf16.mxu0 0
  %183 = vmatpush1.bf16.msra.mxu0 0
  %184 = vmatprep.subr.bf16.mxu0 0
  %185 = vmatpush1.bf16.msra.mxu0 0
  %186 = vmatprep.mubr.bf16.mxu0 0
  %187 = vmatmul.mubr.bf16.gmra.mrb[0].mxu0 %v152
  %v188 = vpop.f32.mrb[0].mxu0
  %v189 = vadd.f32 %v74, %v188
  %v190 = vpop.f32.mrb[0].mxu0
  %v191 = vadd.f32 %v78, %v190
  %v192 = vpop.f32.mrb[0].mxu0
  %v193 = vadd.f32 %v74, %v192
  %v194 = vpop.f32.mrb[0].mxu0
  %v195 = vadd.f32 %v78, %v194
  %196 = vdwg.mxu0
  %197 = vmatprep.subr.bf16.mxu0 0
  %198 = vmatpush1.bf16.msra.mxu0 %v128
  %199 = vmatprep.subr.bf16.mxu0 0
  %200 = vmatpush1.bf16.msra.mxu0 %v131
  %201 = vmatprep.subr.bf16.mxu0 0
  %202 = vmatpush1.bf16.msra.mxu0 %v134
  %203 = vmatprep.subr.bf16.mxu0 0
  %204 = vmatpush1.bf16.msra.mxu0 %v137
  %205 = vmatprep.subr.bf16.mxu0 0
  %206 = vmatpush1.bf16.msra.mxu0 0
  %207 = vmatprep.subr.bf16.mxu0 0
  %208 = vmatpush1.bf16.msra.mxu0 0
  %209 = vmatprep.subr.bf16.mxu0 0
  %210 = vmatpush1.bf16.msra.mxu0 0
  %211 = vmatprep.subr.bf16.mxu0 0
  %212 = vmatpush1.bf16.msra.mxu0 0
  %213 = vmatprep.subr.bf16.mxu0 0
  %214 = vmatpush1.bf16.msra.mxu0 0
  %215 = vmatprep.subr.bf16.mxu0 0
  %216 = vmatpush1.bf16.msra.mxu0 0
  %217 = vmatprep.subr.bf16.mxu0 0
  %218 = vmatpush1.bf16.msra.mxu0 0
  %219 = vmatprep.subr.bf16.mxu0 0
  %220 = vmatpush1.bf16.msra.mxu0 0
  %221 = vmatprep.subr.bf16.mxu0 0
  %222 = vmatpush1.bf16.msra.mxu0 0
  %223 = vmatprep.subr.bf16.mxu0 0
  %224 = vmatpush1.bf16.msra.mxu0 0
  %225 = vmatprep.subr.bf16.mxu0 0
  %226 = vmatpush1.bf16.msra.mxu0 0
  %227 = vmatprep.subr.bf16.mxu0 0
  %228 = vmatpush1.bf16.msra.mxu0 0
  %229 = vmatprep.mubr.bf16.mxu0 0
  %230 = vmatmul.mubr.bf16.gmra.mrb[0].mxu0 %v152
  %v231 = vpop.f32.mrb[0].mxu0
  %v232 = vadd.f32 %v82, %v231
  %v233 = vpop.f32.mrb[0].mxu0
  %v234 = vpop.f32.mrb[0].mxu0
  %v235 = vadd.f32 %v82, %v234
  %v236 = vpop.f32.mrb[0].mxu0
  %237 = vdwg.mxu0
  %v238 = vsel %vm150, %v48, 0.0
  %239 = vadd.xlane.f32.xlu0 %v238
  %v240 = vpop.xlane.xlu0 %239
  %vm241 = vcmask 519168
  %v242 = vsel %vm241, %v49, 0.0
  %243 = vadd.xlane.f32.xlu0 %v242
  %v244 = vpop.xlane.xlu0 %243
  %v245 = vrcp.pop 64.0
  %v246 = vmul.f32 %v240, %v245
  %v247 = vmul.f32 %v244, %v245
  %v248 = vsub.f32 %v48, %v246
  %v249 = vsub.f32 %v49, %v247
  %v250 = vmul.f32 %v248, %v248
  %v251 = vmul.f32 %v249, %v249
  %v252 = vsel %vm150, %v250, 0.0
  %253 = vadd.xlane.f32.xlu0 %v252
  %v254 = vpop.xlane.xlu0 %253
  %v255 = vsel %vm241, %v251, 0.0
  %256 = vadd.xlane.f32.xlu0 %v255
  %v257 = vpop.xlane.xlu0 %256
  %v258 = vmul.f32 %v254, %v245
  %v259 = vmul.f32 %v257, %v245
  %v260 = vadd.f32 %v258, 1e-06
  %v261 = vadd.f32 %v259, 1e-06
  %v262 = vrsqrt.pop %v260
  %v263 = vrsqrt.pop %v261
  %v264 = vmul.f32 %v248, %v262
  %v265 = vmul.f32 %v249, %v263
  %v266 = vadd.f32 %v189, 1.0
  %v267 = vadd.f32 %v193, 1.0
  %270 = vrot.lane.b32.xlu0 %v266, 64
  %v271 = vpop.permute.xlu0 %270
  %272 = vrot.lane.b32.xlu0 %v267, 64
  %v273 = vpop.permute.xlu0 %272
  %v276 = vmul.f32 %v264, %v271
  %v277 = vmul.f32 %v265, %v273
  %v278 = vadd.f32 %v276, %v189
  %v279 = vadd.f32 %v277, %v193
  %v280 = vpack.c.bf16 %v279, %v278
  %v281 = vld [vmem:[%s6] sm:$0xff]
  %v282 = vld [vmem:[%s6 + $0x8] sm:$0xff]
  %v283 = vld [vmem:[%s6 + $0x10] sm:$0xff]
  %v284 = vld [vmem:[%s6 + $0x18] sm:$0xff]
  %v285 = vld [vmem:[%s6 + $0x20] sm:$0xff]
  %v286 = vld [vmem:[%s6 + $0x28] sm:$0xff]
  %v287 = vld [vmem:[%s6 + $0x30] sm:$0xff]
  %v288 = vld [vmem:[%s6 + $0x38] sm:$0xff]
  %v289 = vld [vmem:[%s7] sm:$0x3]
  %v291 = vlaneseq
  %v292 = vshrl.u32 %v291, 7
  %v293 = vsub.s32 0, %v292
  %v294 = vrot.slane %v289, %v293
  %v295 = vlaneseq
  %v296 = vshrl.u32 %v295, 7
  %v297 = vsub.s32 1, %v296
  %v298 = vrot.slane %v289, %v297
  %v309 = vunpack.c.l.b16 %v281
  %v310 = vunpack.c.h.b16 %v281
  %v311 = vunpack.c.l.b16 %v282
  %v312 = vunpack.c.h.b16 %v282
  %v313 = vunpack.c.l.b16 %v283
  %v314 = vunpack.c.h.b16 %v283
  %v315 = vunpack.c.l.b16 %v284
  %v316 = vunpack.c.h.b16 %v284
  %v317 = vunpack.c.l.b16 %v285
  %v318 = vunpack.c.h.b16 %v285
  %v319 = vunpack.c.l.b16 %v286
  %v320 = vunpack.c.h.b16 %v286
  %v321 = vunpack.c.l.b16 %v287
  %v322 = vunpack.c.h.b16 %v287
  %v323 = vunpack.c.l.b16 %v288
  %v324 = vunpack.c.h.b16 %v288
  %v325 = vpack.c.b16 %v311, %v309
  %v326 = vpack.c.b16 %v312, %v310
  %v327 = vpack.c.b16 %v315, %v313
  %v328 = vpack.c.b16 %v316, %v314
  %v329 = vpack.c.b16 %v319, %v317
  %v330 = vpack.c.b16 %v320, %v318
  %v331 = vpack.c.b16 %v323, %v321
  %v332 = vpack.c.b16 %v324, %v322
  %v342 = vsel %vm150, %v280, 0
  %344 = vmatprep.subr.bf16.mxu0 %v326
  %345 = vmatpush1.bf16.msra.mxu0 %v325
  %346 = vmatprep.subr.bf16.mxu0 %v328
  %347 = vmatpush1.bf16.msra.mxu0 %v327
  %348 = vmatprep.subr.bf16.mxu0 %v330
  %349 = vmatpush1.bf16.msra.mxu0 %v329
  %350 = vmatprep.subr.bf16.mxu0 %v332
  %351 = vmatpush1.bf16.msra.mxu0 %v331
  %352 = vmatprep.subr.bf16.mxu0 0
  %353 = vmatpush1.bf16.msra.mxu0 0
  %354 = vmatprep.subr.bf16.mxu0 0
  %355 = vmatpush1.bf16.msra.mxu0 0
  %356 = vmatprep.subr.bf16.mxu0 0
  %357 = vmatpush1.bf16.msra.mxu0 0
  %358 = vmatprep.subr.bf16.mxu0 0
  %359 = vmatpush1.bf16.msra.mxu0 0
  %360 = vmatprep.subr.bf16.mxu0 0
  %361 = vmatpush1.bf16.msra.mxu0 0
  %362 = vmatprep.subr.bf16.mxu0 0
  %363 = vmatpush1.bf16.msra.mxu0 0
  %364 = vmatprep.subr.bf16.mxu0 0
  %365 = vmatpush1.bf16.msra.mxu0 0
  %366 = vmatprep.subr.bf16.mxu0 0
  %367 = vmatpush1.bf16.msra.mxu0 0
  %368 = vmatprep.subr.bf16.mxu0 0
  %369 = vmatpush1.bf16.msra.mxu0 0
  %370 = vmatprep.subr.bf16.mxu0 0
  %371 = vmatpush1.bf16.msra.mxu0 0
  %372 = vmatprep.subr.bf16.mxu0 0
  %373 = vmatpush1.bf16.msra.mxu0 0
  %374 = vmatprep.subr.bf16.mxu0 0
  %375 = vmatpush1.bf16.msra.mxu0 0
  %376 = vmatprep.mubr.bf16.mxu0 0
  %377 = vmatmul.mubr.bf16.gmra.mrb[0].mxu0 %v342
  %v378 = vpop.f32.mrb[0].mxu0
  %v379 = vadd.f32 %v294, %v378
  %v380 = vpop.f32.mrb[0].mxu0
  %v381 = vadd.f32 %v298, %v380
  %v382 = vpop.f32.mrb[0].mxu0
  %v383 = vadd.f32 %v294, %v382
  %v384 = vpop.f32.mrb[0].mxu0
  %v385 = vadd.f32 %v298, %v384
  %386 = vdwg.mxu0
  %v387 = vld [vmem:[%s2] sm:$0xff]
  %v388 = vld [vmem:[%s2 + $0x8] sm:$0xf]
  %v389 = vld [vmem:[%s3] sm:$0xff]
  %v390 = vld [vmem:[%s3 + $0x8] sm:$0xf]
  %v391 = vpack.c.bf16 %v383, %v379
  %v392 = vpack.c.bf16 %v385, %v381
  %394 = vrot.lane.b32.xlu0 %v391, 64
  %v395 = vpop.permute.xlu0 %394
  %vm396 = vcmask 130048
  %v398 = vsel %vm396, %v391, 0
  %v401 = vsel %vm396, %v395, 0
  %403 = vmatprep.subr.bf16.mxu0 0
  %404 = vmatpush1.bf16.xpose.msra.mxu0 %v401
  %405 = vmatprep.subr.bf16.mxu0 0
  %406 = vmatpush1.bf16.xpose.msra.mxu0 0
  %407 = vmatprep.subr.bf16.mxu0 0
  %408 = vmatpush1.bf16.xpose.msra.mxu0 0
  %409 = vmatprep.subr.bf16.mxu0 0
  %410 = vmatpush1.bf16.xpose.msra.mxu0 0
  %411 = vmatprep.subr.bf16.mxu0 0
  %412 = vmatpush1.bf16.xpose.msra.mxu0 0
  %413 = vmatprep.subr.bf16.mxu0 0
  %414 = vmatpush1.bf16.xpose.msra.mxu0 0
  %415 = vmatprep.subr.bf16.mxu0 0
  %416 = vmatpush1.bf16.xpose.msra.mxu0 0
  %417 = vmatprep.subr.bf16.mxu0 0
  %418 = vmatpush1.bf16.xpose.msra.mxu0 0
  %419 = vmatprep.subr.bf16.mxu0 0
  %420 = vmatpush1.bf16.xpose.msra.mxu0 0
  %421 = vmatprep.subr.bf16.mxu0 0
  %422 = vmatpush1.bf16.xpose.msra.mxu0 0
  %423 = vmatprep.subr.bf16.mxu0 0
  %424 = vmatpush1.bf16.xpose.msra.mxu0 0
  %425 = vmatprep.subr.bf16.mxu0 0
  %426 = vmatpush1.bf16.xpose.msra.mxu0 0
  %427 = vmatprep.subr.bf16.mxu0 0
  %428 = vmatpush1.bf16.xpose.msra.mxu0 0
  %429 = vmatprep.subr.bf16.mxu0 0
  %430 = vmatpush1.bf16.xpose.msra.mxu0 0
  %431 = vmatprep.subr.bf16.mxu0 0
  %432 = vmatpush1.bf16.xpose.msra.mxu0 0
  %433 = vmatprep.subr.bf16.mxu0 0
  %434 = vmatpush1.bf16.xpose.msra.mxu0 0
  %435 = vmatprep.mubr.bf16.mxu0 0
  %436 = vmatmul.mubr.bf16.gmra.mrb[0].mxu0 %v398
  %v437 = vpop.f32.mrb[0].mxu0
  %v438 = vadd.f32 0.0, %v437
  %v439 = vpop.f32.mrb[0].mxu0
  %v440 = vpop.f32.mrb[0].mxu0
  %v441 = vadd.f32 0.0, %v440
  %v442 = vpop.f32.mrb[0].mxu0
  %443 = vdwg.mxu0
  %v444 = vmul.f32 %v438, 0.25
  %v445 = vmul.f32 %v441, 0.25
  %v446 = vadd.f32 %v444, %v387
  %v447 = vadd.f32 %v445, %v388
  %vm448 = vcmask 97280
  %v449 = vsel %vm448, %v446, -inf
  %450 = vmax.xlane.f32.xlu0 %v449
  %v451 = vpop.xlane.xlu0 %450
  %vm452 = vcmask 93184
  %v453 = vsel %vm452, %v447, -inf
  %454 = vmax.xlane.f32.xlu0 %v453
  %v455 = vpop.xlane.xlu0 %454
  %v456 = vsub.f32 %v446, %v451
  %v457 = vsub.f32 %v447, %v455
  %v458 = vmul.f32 %v456, 1.442695
  %v459 = vpow.pop %v458
  %v460 = vmul.f32 %v457, 1.442695
  %v461 = vpow.pop %v460
  %v462 = vsel %vm448, %v459, 0.0
  %463 = vadd.xlane.f32.xlu0 %v462
  %v464 = vpop.xlane.xlu0 %463
  %v465 = vsel %vm452, %v461, 0.0
  %466 = vadd.xlane.f32.xlu0 %v465
  %v467 = vpop.xlane.xlu0 %466
  %v468 = vrcp.pop %v464
  %v469 = vrcp.pop %v467
  %v470 = vmul.f32 %v459, %v468
  %v471 = vmul.f32 %v461, %v469
  %v472 = vpack.c.bf16 %v471, %v470
  %v474 = vsel %vm448, %v472, 0
  %vm476 = vcmask 1045504
  %v478 = vsel %vm476, %v392, 0
  %480 = vmatprep.subr.bf16.mxu0 0
  %481 = vmatpush1.bf16.msra.mxu0 %v478
  %482 = vmatprep.subr.bf16.mxu0 0
  %483 = vmatpush1.bf16.msra.mxu0 0
  %484 = vmatprep.subr.bf16.mxu0 0
  %485 = vmatpush1.bf16.msra.mxu0 0
  %486 = vmatprep.subr.bf16.mxu0 0
  %487 = vmatpush1.bf16.msra.mxu0 0
  %488 = vmatprep.subr.bf16.mxu0 0
  %489 = vmatpush1.bf16.msra.mxu0 0
  %490 = vmatprep.subr.bf16.mxu0 0
  %491 = vmatpush1.bf16.msra.mxu0 0
  %492 = vmatprep.subr.bf16.mxu0 0
  %493 = vmatpush1.bf16.msra.mxu0 0
  %494 = vmatprep.subr.bf16.mxu0 0
  %495 = vmatpush1.bf16.msra.mxu0 0
  %496 = vmatprep.subr.bf16.mxu0 0
  %497 = vmatpush1.bf16.msra.mxu0 0
  %498 = vmatprep.subr.bf16.mxu0 0
  %499 = vmatpush1.bf16.msra.mxu0 0
  %500 = vmatprep.subr.bf16.mxu0 0
  %501 = vmatpush1.bf16.msra.mxu0 0
  %502 = vmatprep.subr.bf16.mxu0 0
  %503 = vmatpush1.bf16.msra.mxu0 0
  %504 = vmatprep.subr.bf16.mxu0 0
  %505 = vmatpush1.bf16.msra.mxu0 0
  %506 = vmatprep.subr.bf16.mxu0 0
  %507 = vmatpush1.bf16.msra.mxu0 0
  %508 = vmatprep.subr.bf16.mxu0 0
  %509 = vmatpush1.bf16.msra.mxu0 0
  %510 = vmatprep.subr.bf16.mxu0 0
  %511 = vmatpush1.bf16.msra.mxu0 0
  %512 = vmatprep.mubr.bf16.mxu0 0
  %513 = vmatmul.mubr.bf16.gmra.mrb[0].mxu0 %v474
  %v514 = vpop.f32.mrb[0].mxu0
  %v515 = vadd.f32 0.0, %v514
  %v516 = vpop.f32.mrb[0].mxu0
  %v517 = vpop.f32.mrb[0].mxu0
  %v518 = vadd.f32 0.0, %v517
  %v519 = vpop.f32.mrb[0].mxu0
  %520 = vdwg.mxu0
  %521 = vrot.lane.b32.xlu0 %v391, 112
  %v522 = vpop.permute.xlu0 %521
  %523 = vrot.lane.b32.xlu0 %v391, 48
  %v524 = vpop.permute.xlu0 %523
  %v526 = vsel %vm396, %v522, 0
  %v529 = vsel %vm396, %v524, 0
  %531 = vmatprep.subr.bf16.mxu0 0
  %532 = vmatpush1.bf16.xpose.msra.mxu0 %v529
  %533 = vmatprep.subr.bf16.mxu0 0
  %534 = vmatpush1.bf16.xpose.msra.mxu0 0
  %535 = vmatprep.subr.bf16.mxu0 0
  %536 = vmatpush1.bf16.xpose.msra.mxu0 0
  %537 = vmatprep.subr.bf16.mxu0 0
  %538 = vmatpush1.bf16.xpose.msra.mxu0 0
  %539 = vmatprep.subr.bf16.mxu0 0
  %540 = vmatpush1.bf16.xpose.msra.mxu0 0
  %541 = vmatprep.subr.bf16.mxu0 0
  %542 = vmatpush1.bf16.xpose.msra.mxu0 0
  %543 = vmatprep.subr.bf16.mxu0 0
  %544 = vmatpush1.bf16.xpose.msra.mxu0 0
  %545 = vmatprep.subr.bf16.mxu0 0
  %546 = vmatpush1.bf16.xpose.msra.mxu0 0
  %547 = vmatprep.subr.bf16.mxu0 0
  %548 = vmatpush1.bf16.xpose.msra.mxu0 0
  %549 = vmatprep.subr.bf16.mxu0 0
  %550 = vmatpush1.bf16.xpose.msra.mxu0 0
  %551 = vmatprep.subr.bf16.mxu0 0
  %552 = vmatpush1.bf16.xpose.msra.mxu0 0
  %553 = vmatprep.subr.bf16.mxu0 0
  %554 = vmatpush1.bf16.xpose.msra.mxu0 0
  %555 = vmatprep.subr.bf16.mxu0 0
  %556 = vmatpush1.bf16.xpose.msra.mxu0 0
  %557 = vmatprep.subr.bf16.mxu0 0
  %558 = vmatpush1.bf16.xpose.msra.mxu0 0
  %559 = vmatprep.subr.bf16.mxu0 0
  %560 = vmatpush1.bf16.xpose.msra.mxu0 0
  %561 = vmatprep.subr.bf16.mxu0 0
  %562 = vmatpush1.bf16.xpose.msra.mxu0 0
  %563 = vmatprep.mubr.bf16.mxu0 0
  %564 = vmatmul.mubr.bf16.gmra.mrb[0].mxu0 %v526
  %v565 = vpop.f32.mrb[0].mxu0
  %v566 = vadd.f32 0.0, %v565
  %v567 = vpop.f32.mrb[0].mxu0
  %v568 = vpop.f32.mrb[0].mxu0
  %v569 = vadd.f32 0.0, %v568
  %v570 = vpop.f32.mrb[0].mxu0
  %571 = vdwg.mxu0
  %v572 = vmul.f32 %v566, 0.25
  %v573 = vmul.f32 %v569, 0.25
  %v574 = vadd.f32 %v572, %v387
  %v575 = vadd.f32 %v573, %v388
  %v576 = vsel %vm448, %v574, -inf
  %577 = vmax.xlane.f32.xlu0 %v576
  %v578 = vpop.xlane.xlu0 %577
  %v579 = vsel %vm452, %v575, -inf
  %580 = vmax.xlane.f32.xlu0 %v579
  %v581 = vpop.xlane.xlu0 %580
  %v582 = vsub.f32 %v574, %v578
  %v583 = vsub.f32 %v575, %v581
  %v584 = vmul.f32 %v582, 1.442695
  %v585 = vpow.pop %v584
  %v586 = vmul.f32 %v583, 1.442695
  %v587 = vpow.pop %v586
  %v588 = vsel %vm448, %v585, 0.0
  %589 = vadd.xlane.f32.xlu0 %v588
  %v590 = vpop.xlane.xlu0 %589
  %v591 = vsel %vm452, %v587, 0.0
  %592 = vadd.xlane.f32.xlu0 %v591
  %v593 = vpop.xlane.xlu0 %592
  %v594 = vrcp.pop %v590
  %v595 = vrcp.pop %v593
  %v596 = vmul.f32 %v585, %v594
  %v597 = vmul.f32 %v587, %v595
  %v598 = vpack.c.bf16 %v597, %v596
  %600 = vrot.lane.b32.xlu0 %v392, 112
  %v601 = vpop.permute.xlu0 %600
  %v603 = vsel %vm448, %v598, 0
  %v606 = vsel %vm476, %v601, 0
  %608 = vmatprep.subr.bf16.mxu0 0
  %609 = vmatpush1.bf16.msra.mxu0 %v606
  %610 = vmatprep.subr.bf16.mxu0 0
  %611 = vmatpush1.bf16.msra.mxu0 0
  %612 = vmatprep.subr.bf16.mxu0 0
  %613 = vmatpush1.bf16.msra.mxu0 0
  %614 = vmatprep.subr.bf16.mxu0 0
  %615 = vmatpush1.bf16.msra.mxu0 0
  %616 = vmatprep.subr.bf16.mxu0 0
  %617 = vmatpush1.bf16.msra.mxu0 0
  %618 = vmatprep.subr.bf16.mxu0 0
  %619 = vmatpush1.bf16.msra.mxu0 0
  %620 = vmatprep.subr.bf16.mxu0 0
  %621 = vmatpush1.bf16.msra.mxu0 0
  %622 = vmatprep.subr.bf16.mxu0 0
  %623 = vmatpush1.bf16.msra.mxu0 0
  %624 = vmatprep.subr.bf16.mxu0 0
  %625 = vmatpush1.bf16.msra.mxu0 0
  %626 = vmatprep.subr.bf16.mxu0 0
  %627 = vmatpush1.bf16.msra.mxu0 0
  %628 = vmatprep.subr.bf16.mxu0 0
  %629 = vmatpush1.bf16.msra.mxu0 0
  %630 = vmatprep.subr.bf16.mxu0 0
  %631 = vmatpush1.bf16.msra.mxu0 0
  %632 = vmatprep.subr.bf16.mxu0 0
  %633 = vmatpush1.bf16.msra.mxu0 0
  %634 = vmatprep.subr.bf16.mxu0 0
  %635 = vmatpush1.bf16.msra.mxu0 0
  %636 = vmatprep.subr.bf16.mxu0 0
  %637 = vmatpush1.bf16.msra.mxu0 0
  %638 = vmatprep.subr.bf16.mxu0 0
  %639 = vmatpush1.bf16.msra.mxu0 0
  %640 = vmatprep.mubr.bf16.mxu0 0
  %641 = vmatmul.mubr.bf16.gmra.mrb[0].mxu0 %v603
  %v642 = vpop.f32.mrb[0].mxu0
  %v643 = vadd.f32 0.0, %v642
  %v644 = vpop.f32.mrb[0].mxu0
  %v645 = vpop.f32.mrb[0].mxu0
  %v646 = vadd.f32 0.0, %v645
  %v647 = vpop.f32.mrb[0].mxu0
  %648 = vdwg.mxu0
  %649 = vrot.lane.b32.xlu0 %v391, 96
  %v650 = vpop.permute.xlu0 %649
  %651 = vrot.lane.b32.xlu0 %v391, 32
  %v652 = vpop.permute.xlu0 %651
  %v654 = vsel %vm396, %v650, 0
  %v657 = vsel %vm396, %v652, 0
  %659 = vmatprep.subr.bf16.mxu0 0
  %660 = vmatpush1.bf16.xpose.msra.mxu0 %v657
  %661 = vmatprep.subr.bf16.mxu0 0
  %662 = vmatpush1.bf16.xpose.msra.mxu0 0
  %663 = vmatprep.subr.bf16.mxu0 0
  %664 = vmatpush1.bf16.xpose.msra.mxu0 0
  %665 = vmatprep.subr.bf16.mxu0 0
  %666 = vmatpush1.bf16.xpose.msra.mxu0 0
  %667 = vmatprep.subr.bf16.mxu0 0
  %668 = vmatpush1.bf16.xpose.msra.mxu0 0
  %669 = vmatprep.subr.bf16.mxu0 0
  %670 = vmatpush1.bf16.xpose.msra.mxu0 0
  %671 = vmatprep.subr.bf16.mxu0 0
  %672 = vmatpush1.bf16.xpose.msra.mxu0 0
  %673 = vmatprep.subr.bf16.mxu0 0
  %674 = vmatpush1.bf16.xpose.msra.mxu0 0
  %675 = vmatprep.subr.bf16.mxu0 0
  %676 = vmatpush1.bf16.xpose.msra.mxu0 0
  %677 = vmatprep.subr.bf16.mxu0 0
  %678 = vmatpush1.bf16.xpose.msra.mxu0 0
  %679 = vmatprep.subr.bf16.mxu0 0
  %680 = vmatpush1.bf16.xpose.msra.mxu0 0
  %681 = vmatprep.subr.bf16.mxu0 0
  %682 = vmatpush1.bf16.xpose.msra.mxu0 0
  %683 = vmatprep.subr.bf16.mxu0 0
  %684 = vmatpush1.bf16.xpose.msra.mxu0 0
  %685 = vmatprep.subr.bf16.mxu0 0
  %686 = vmatpush1.bf16.xpose.msra.mxu0 0
  %687 = vmatprep.subr.bf16.mxu0 0
  %688 = vmatpush1.bf16.xpose.msra.mxu0 0
  %689 = vmatprep.subr.bf16.mxu0 0
  %690 = vmatpush1.bf16.xpose.msra.mxu0 0
  %691 = vmatprep.mubr.bf16.mxu0 0
  %692 = vmatmul.mubr.bf16.gmra.mrb[0].mxu0 %v654
  %v693 = vpop.f32.mrb[0].mxu0
  %v694 = vadd.f32 0.0, %v693
  %v695 = vpop.f32.mrb[0].mxu0
  %v696 = vpop.f32.mrb[0].mxu0
  %v697 = vadd.f32 0.0, %v696
  %v698 = vpop.f32.mrb[0].mxu0
  %699 = vdwg.mxu0
  %v700 = vmul.f32 %v694, 0.25
  %v701 = vmul.f32 %v697, 0.25
  %v702 = vadd.f32 %v700, %v387
  %v703 = vadd.f32 %v701, %v388
  %v704 = vsel %vm448, %v702, -inf
  %705 = vmax.xlane.f32.xlu0 %v704
  %v706 = vpop.xlane.xlu0 %705
  %v707 = vsel %vm452, %v703, -inf
  %708 = vmax.xlane.f32.xlu0 %v707
  %v709 = vpop.xlane.xlu0 %708
  %v710 = vsub.f32 %v702, %v706
  %v711 = vsub.f32 %v703, %v709
  %v712 = vmul.f32 %v710, 1.442695
  %v713 = vpow.pop %v712
  %v714 = vmul.f32 %v711, 1.442695
  %v715 = vpow.pop %v714
  %v716 = vsel %vm448, %v713, 0.0
  %717 = vadd.xlane.f32.xlu0 %v716
  %v718 = vpop.xlane.xlu0 %717
  %v719 = vsel %vm452, %v715, 0.0
  %720 = vadd.xlane.f32.xlu0 %v719
  %v721 = vpop.xlane.xlu0 %720
  %v722 = vrcp.pop %v718
  %v723 = vrcp.pop %v721
  %v724 = vmul.f32 %v713, %v722
  %v725 = vmul.f32 %v715, %v723
  %v726 = vpack.c.bf16 %v725, %v724
  %727 = vrot.lane.b32.xlu0 %v392, 96
  %v728 = vpop.permute.xlu0 %727
  %v730 = vsel %vm448, %v726, 0
  %v733 = vsel %vm476, %v728, 0
  %735 = vmatprep.subr.bf16.mxu0 0
  %736 = vmatpush1.bf16.msra.mxu0 %v733
  %737 = vmatprep.subr.bf16.mxu0 0
  %738 = vmatpush1.bf16.msra.mxu0 0
  %739 = vmatprep.subr.bf16.mxu0 0
  %740 = vmatpush1.bf16.msra.mxu0 0
  %741 = vmatprep.subr.bf16.mxu0 0
  %742 = vmatpush1.bf16.msra.mxu0 0
  %743 = vmatprep.subr.bf16.mxu0 0
  %744 = vmatpush1.bf16.msra.mxu0 0
  %745 = vmatprep.subr.bf16.mxu0 0
  %746 = vmatpush1.bf16.msra.mxu0 0
  %747 = vmatprep.subr.bf16.mxu0 0
  %748 = vmatpush1.bf16.msra.mxu0 0
  %749 = vmatprep.subr.bf16.mxu0 0
  %750 = vmatpush1.bf16.msra.mxu0 0
  %751 = vmatprep.subr.bf16.mxu0 0
  %752 = vmatpush1.bf16.msra.mxu0 0
  %753 = vmatprep.subr.bf16.mxu0 0
  %754 = vmatpush1.bf16.msra.mxu0 0
  %755 = vmatprep.subr.bf16.mxu0 0
  %756 = vmatpush1.bf16.msra.mxu0 0
  %757 = vmatprep.subr.bf16.mxu0 0
  %758 = vmatpush1.bf16.msra.mxu0 0
  %759 = vmatprep.subr.bf16.mxu0 0
  %760 = vmatpush1.bf16.msra.mxu0 0
  %761 = vmatprep.subr.bf16.mxu0 0
  %762 = vmatpush1.bf16.msra.mxu0 0
  %763 = vmatprep.subr.bf16.mxu0 0
  %764 = vmatpush1.bf16.msra.mxu0 0
  %765 = vmatprep.subr.bf16.mxu0 0
  %766 = vmatpush1.bf16.msra.mxu0 0
  %767 = vmatprep.mubr.bf16.mxu0 0
  %768 = vmatmul.mubr.bf16.gmra.mrb[0].mxu0 %v730
  %v769 = vpop.f32.mrb[0].mxu0
  %v770 = vadd.f32 0.0, %v769
  %v771 = vpop.f32.mrb[0].mxu0
  %v772 = vpop.f32.mrb[0].mxu0
  %v773 = vadd.f32 0.0, %v772
  %v774 = vpop.f32.mrb[0].mxu0
  %775 = vdwg.mxu0
  %776 = vrot.lane.b32.xlu0 %v391, 80
  %v777 = vpop.permute.xlu0 %776
  %778 = vrot.lane.b32.xlu0 %v391, 16
  %v779 = vpop.permute.xlu0 %778
  %v781 = vsel %vm396, %v777, 0
  %v784 = vsel %vm396, %v779, 0
  %786 = vmatprep.subr.bf16.mxu0 0
  %787 = vmatpush1.bf16.xpose.msra.mxu0 %v784
  %788 = vmatprep.subr.bf16.mxu0 0
  %789 = vmatpush1.bf16.xpose.msra.mxu0 0
  %790 = vmatprep.subr.bf16.mxu0 0
  %791 = vmatpush1.bf16.xpose.msra.mxu0 0
  %792 = vmatprep.subr.bf16.mxu0 0
  %793 = vmatpush1.bf16.xpose.msra.mxu0 0
  %794 = vmatprep.subr.bf16.mxu0 0
  %795 = vmatpush1.bf16.xpose.msra.mxu0 0
  %796 = vmatprep.subr.bf16.mxu0 0
  %797 = vmatpush1.bf16.xpose.msra.mxu0 0
  %798 = vmatprep.subr.bf16.mxu0 0
  %799 = vmatpush1.bf16.xpose.msra.mxu0 0
  %800 = vmatprep.subr.bf16.mxu0 0
  %801 = vmatpush1.bf16.xpose.msra.mxu0 0
  %802 = vmatprep.subr.bf16.mxu0 0
  %803 = vmatpush1.bf16.xpose.msra.mxu0 0
  %804 = vmatprep.subr.bf16.mxu0 0
  %805 = vmatpush1.bf16.xpose.msra.mxu0 0
  %806 = vmatprep.subr.bf16.mxu0 0
  %807 = vmatpush1.bf16.xpose.msra.mxu0 0
  %808 = vmatprep.subr.bf16.mxu0 0
  %809 = vmatpush1.bf16.xpose.msra.mxu0 0
  %810 = vmatprep.subr.bf16.mxu0 0
  %811 = vmatpush1.bf16.xpose.msra.mxu0 0
  %812 = vmatprep.subr.bf16.mxu0 0
  %813 = vmatpush1.bf16.xpose.msra.mxu0 0
  %814 = vmatprep.subr.bf16.mxu0 0
  %815 = vmatpush1.bf16.xpose.msra.mxu0 0
  %816 = vmatprep.subr.bf16.mxu0 0
  %817 = vmatpush1.bf16.xpose.msra.mxu0 0
  %818 = vmatprep.mubr.bf16.mxu0 0
  %819 = vmatmul.mubr.bf16.gmra.mrb[0].mxu0 %v781
  %v820 = vpop.f32.mrb[0].mxu0
  %v821 = vadd.f32 0.0, %v820
  %v822 = vpop.f32.mrb[0].mxu0
  %v823 = vpop.f32.mrb[0].mxu0
  %v824 = vadd.f32 0.0, %v823
  %v825 = vpop.f32.mrb[0].mxu0
  %826 = vdwg.mxu0
  %v827 = vmul.f32 %v821, 0.25
  %v828 = vmul.f32 %v824, 0.25
  %v829 = vadd.f32 %v827, %v387
  %v830 = vadd.f32 %v828, %v388
  %v831 = vsel %vm448, %v829, -inf
  %832 = vmax.xlane.f32.xlu0 %v831
  %v833 = vpop.xlane.xlu0 %832
  %v834 = vsel %vm452, %v830, -inf
  %835 = vmax.xlane.f32.xlu0 %v834
  %v836 = vpop.xlane.xlu0 %835
  %v837 = vsub.f32 %v829, %v833
  %v838 = vsub.f32 %v830, %v836
  %v839 = vmul.f32 %v837, 1.442695
  %v840 = vpow.pop %v839
  %v841 = vmul.f32 %v838, 1.442695
  %v842 = vpow.pop %v841
  %v843 = vsel %vm448, %v840, 0.0
  %844 = vadd.xlane.f32.xlu0 %v843
  %v845 = vpop.xlane.xlu0 %844
  %v846 = vsel %vm452, %v842, 0.0
  %847 = vadd.xlane.f32.xlu0 %v846
  %v848 = vpop.xlane.xlu0 %847
  %v849 = vrcp.pop %v845
  %v850 = vrcp.pop %v848
  %v851 = vmul.f32 %v840, %v849
  %v852 = vmul.f32 %v842, %v850
  %v853 = vpack.c.bf16 %v852, %v851
  %854 = vrot.lane.b32.xlu0 %v392, 80
  %v855 = vpop.permute.xlu0 %854
  %v857 = vsel %vm448, %v853, 0
  %v860 = vsel %vm476, %v855, 0
  %862 = vmatprep.subr.bf16.mxu0 0
  %863 = vmatpush1.bf16.msra.mxu0 %v860
  %864 = vmatprep.subr.bf16.mxu0 0
  %865 = vmatpush1.bf16.msra.mxu0 0
  %866 = vmatprep.subr.bf16.mxu0 0
  %867 = vmatpush1.bf16.msra.mxu0 0
  %868 = vmatprep.subr.bf16.mxu0 0
  %869 = vmatpush1.bf16.msra.mxu0 0
  %870 = vmatprep.subr.bf16.mxu0 0
  %871 = vmatpush1.bf16.msra.mxu0 0
  %872 = vmatprep.subr.bf16.mxu0 0
  %873 = vmatpush1.bf16.msra.mxu0 0
  %874 = vmatprep.subr.bf16.mxu0 0
  %875 = vmatpush1.bf16.msra.mxu0 0
  %876 = vmatprep.subr.bf16.mxu0 0
  %877 = vmatpush1.bf16.msra.mxu0 0
  %878 = vmatprep.subr.bf16.mxu0 0
  %879 = vmatpush1.bf16.msra.mxu0 0
  %880 = vmatprep.subr.bf16.mxu0 0
  %881 = vmatpush1.bf16.msra.mxu0 0
  %882 = vmatprep.subr.bf16.mxu0 0
  %883 = vmatpush1.bf16.msra.mxu0 0
  %884 = vmatprep.subr.bf16.mxu0 0
  %885 = vmatpush1.bf16.msra.mxu0 0
  %886 = vmatprep.subr.bf16.mxu0 0
  %887 = vmatpush1.bf16.msra.mxu0 0
  %888 = vmatprep.subr.bf16.mxu0 0
  %889 = vmatpush1.bf16.msra.mxu0 0
  %890 = vmatprep.subr.bf16.mxu0 0
  %891 = vmatpush1.bf16.msra.mxu0 0
  %892 = vmatprep.subr.bf16.mxu0 0
  %893 = vmatpush1.bf16.msra.mxu0 0
  %894 = vmatprep.mubr.bf16.mxu0 0
  %895 = vmatmul.mubr.bf16.gmra.mrb[0].mxu0 %v857
  %v896 = vpop.f32.mrb[0].mxu0
  %v897 = vadd.f32 0.0, %v896
  %v898 = vpop.f32.mrb[0].mxu0
  %v899 = vpop.f32.mrb[0].mxu0
  %v900 = vadd.f32 0.0, %v899
  %v901 = vpop.f32.mrb[0].mxu0
  %902 = vdwg.mxu0
  %905 = vrot.lane.b32.xlu0 %v643, 16
  %v906 = vpop.permute.xlu0 %905
  %907 = vrot.lane.b32.xlu0 %v646, 16
  %v908 = vpop.permute.xlu0 %907
  %913 = vrot.lane.b32.xlu0 %v770, 32
  %v914 = vpop.permute.xlu0 %913
  %915 = vrot.lane.b32.xlu0 %v773, 32
  %v916 = vpop.permute.xlu0 %915
  %921 = vrot.lane.b32.xlu0 %v897, 48
  %v922 = vpop.permute.xlu0 %921
  %923 = vrot.lane.b32.xlu0 %v900, 48
  %v924 = vpop.permute.xlu0 %923
  %v927 = vsel %vm396, %v515, %v906
  %v928 = vsel %vm396, %v518, %v908
  %vm929 = vcmask 261120
  %v930 = vsel %vm929, %v927, %v914
  %v931 = vsel %vm929, %v928, %v916
  %vm932 = vcmask 392192
  %v933 = vsel %vm932, %v930, %v922
  %v934 = vsel %vm932, %v931, %v924
  %936 = vset.pattern.permute.xlu0 0
  %937 = vperm.xlu0 %936, %v389
  %v938 = vpop.permute.xlu0 %937
  %941 = vset.pattern.permute.xlu0 0
  %942 = vperm.xlu0 %941, %v390
  %v943 = vpop.permute.xlu0 %942
  %v945 = vmul.f32 %v933, %v938
  %v946 = vmul.f32 %v934, %v943
  %v947 = vpack.c.bf16 %v946, %v945
  %v948 = vld [vmem:[%s8] sm:$0xf]
  %v949 = vld [vmem:[%s8 + $0x4] sm:$0xf]
  %v950 = vld [vmem:[%s8 + $0x8] sm:$0xf]
  %v951 = vld [vmem:[%s8 + $0xc] sm:$0xf]
  %v952 = vld [vmem:[%s8 + $0x10] sm:$0xf]
  %v953 = vld [vmem:[%s8 + $0x14] sm:$0xf]
  %v954 = vld [vmem:[%s8 + $0x18] sm:$0xf]
  %v955 = vld [vmem:[%s8 + $0x1c] sm:$0xf]
  %v956 = vld [vmem:[%s9] sm:$0x1]
  %v958 = vlaneseq
  %v959 = vshrl.u32 %v958, 7
  %v960 = vsub.s32 0, %v959
  %v961 = vrot.slane %v956, %v960
  %v971 = vunpack.c.l.b16 %v948
  %v972 = vunpack.c.l.b16 %v949
  %v973 = vunpack.c.l.b16 %v950
  %v974 = vunpack.c.l.b16 %v951
  %v975 = vunpack.c.l.b16 %v952
  %v976 = vunpack.c.l.b16 %v953
  %v977 = vunpack.c.l.b16 %v954
  %v978 = vunpack.c.l.b16 %v955
  %v979 = vpack.c.b16 %v972, %v971
  %v980 = vpack.c.b16 %v974, %v973
  %v981 = vpack.c.b16 %v976, %v975
  %v982 = vpack.c.b16 %v978, %v977
  %v988 = vsel %vm150, %v947, 0
  %990 = vmatprep.subr.bf16.mxu0 0
  %991 = vmatpush1.bf16.msra.mxu0 %v979
  %992 = vmatprep.subr.bf16.mxu0 0
  %993 = vmatpush1.bf16.msra.mxu0 %v980
  %994 = vmatprep.subr.bf16.mxu0 0
  %995 = vmatpush1.bf16.msra.mxu0 %v981
  %996 = vmatprep.subr.bf16.mxu0 0
  %997 = vmatpush1.bf16.msra.mxu0 %v982
  %998 = vmatprep.subr.bf16.mxu0 0
  %999 = vmatpush1.bf16.msra.mxu0 0
  %1000 = vmatprep.subr.bf16.mxu0 0
  %1001 = vmatpush1.bf16.msra.mxu0 0
  %1002 = vmatprep.subr.bf16.mxu0 0
  %1003 = vmatpush1.bf16.msra.mxu0 0
  %1004 = vmatprep.subr.bf16.mxu0 0
  %1005 = vmatpush1.bf16.msra.mxu0 0
  %1006 = vmatprep.subr.bf16.mxu0 0
  %1007 = vmatpush1.bf16.msra.mxu0 0
  %1008 = vmatprep.subr.bf16.mxu0 0
  %1009 = vmatpush1.bf16.msra.mxu0 0
  %1010 = vmatprep.subr.bf16.mxu0 0
  %1011 = vmatpush1.bf16.msra.mxu0 0
  %1012 = vmatprep.subr.bf16.mxu0 0
  %1013 = vmatpush1.bf16.msra.mxu0 0
  %1014 = vmatprep.subr.bf16.mxu0 0
  %1015 = vmatpush1.bf16.msra.mxu0 0
  %1016 = vmatprep.subr.bf16.mxu0 0
  %1017 = vmatpush1.bf16.msra.mxu0 0
  %1018 = vmatprep.subr.bf16.mxu0 0
  %1019 = vmatpush1.bf16.msra.mxu0 0
  %1020 = vmatprep.subr.bf16.mxu0 0
  %1021 = vmatpush1.bf16.msra.mxu0 0
  %1022 = vmatprep.mubr.bf16.mxu0 0
  %1023 = vmatmul.mubr.bf16.gmra.mrb[0].mxu0 %v988
  %v1024 = vpop.f32.mrb[0].mxu0
  %v1025 = vadd.f32 %v961, %v1024
  %v1026 = vpop.f32.mrb[0].mxu0
  %v1027 = vpop.f32.mrb[0].mxu0
  %v1028 = vadd.f32 %v961, %v1027
  %v1029 = vpop.f32.mrb[0].mxu0
  %1030 = vdwg.mxu0
  %v1031 = vmul.f32 %v191, %v1025
  %v1032 = vmul.f32 %v195, %v1028
  %v1033 = vadd.f32 %v48, %v1031
  %v1034 = vadd.f32 %v49, %v1032
  %v1035 = vsel %vm150, %v1033, 0.0
  %1036 = vadd.xlane.f32.xlu0 %v1035
  %v1037 = vpop.xlane.xlu0 %1036
  %v1038 = vsel %vm241, %v1034, 0.0
  %1039 = vadd.xlane.f32.xlu0 %v1038
  %v1040 = vpop.xlane.xlu0 %1039
  %v1041 = vmul.f32 %v1037, %v245
  %v1042 = vmul.f32 %v1040, %v245
  %v1043 = vsub.f32 %v1033, %v1041
  %v1044 = vsub.f32 %v1034, %v1042
  %v1045 = vmul.f32 %v1043, %v1043
  %v1046 = vmul.f32 %v1044, %v1044
  %v1047 = vsel %vm150, %v1045, 0.0
  %1048 = vadd.xlane.f32.xlu0 %v1047
  %v1049 = vpop.xlane.xlu0 %1048
  %v1050 = vsel %vm241, %v1046, 0.0
  %1051 = vadd.xlane.f32.xlu0 %v1050
  %v1052 = vpop.xlane.xlu0 %1051
  %v1053 = vmul.f32 %v1049, %v245
  %v1054 = vmul.f32 %v1052, %v245
  %v1055 = vadd.f32 %v1053, 1e-06
  %v1056 = vadd.f32 %v1054, 1e-06
  %v1057 = vrsqrt.pop %v1055
  %v1058 = vrsqrt.pop %v1056
  %v1059 = vmul.f32 %v1043, %v1057
  %v1060 = vmul.f32 %v1044, %v1058
  %v1061 = vadd.f32 %v232, 1.0
  %v1062 = vadd.f32 %v235, 1.0
  %v1063 = vmul.f32 %v1059, %v1061
  %v1064 = vmul.f32 %v1060, %v1062
  %1067 = vrot.lane.b32.xlu0 %v191, 64
  %v1068 = vpop.permute.xlu0 %1067
  %1069 = vrot.lane.b32.xlu0 %v195, 64
  %v1070 = vpop.permute.xlu0 %1069
  %v1073 = vadd.f32 %v1063, %v1068
  %v1074 = vadd.f32 %v1064, %v1070
  %v1075 = vpack.c.bf16 %v1074, %v1073
  %v1076 = vld [vmem:[%s10] sm:$0xff]
  %v1077 = vld [vmem:[%s10 + $0x8] sm:$0xff]
  %v1078 = vld [vmem:[%s10 + $0x10] sm:$0xff]
  %v1079 = vld [vmem:[%s10 + $0x18] sm:$0xff]
  %v1080 = vld [vmem:[%s10 + $0x20] sm:$0xff]
  %v1081 = vld [vmem:[%s10 + $0x28] sm:$0xff]
  %v1082 = vld [vmem:[%s10 + $0x30] sm:$0xff]
  %v1083 = vld [vmem:[%s10 + $0x38] sm:$0xff]
  %v1084 = vld [vmem:[%s11] sm:$0x3]
  %v1086 = vlaneseq
  %v1087 = vshrl.u32 %v1086, 7
  %v1088 = vsub.s32 0, %v1087
  %v1089 = vrot.slane %v1084, %v1088
  %v1090 = vlaneseq
  %v1091 = vshrl.u32 %v1090, 7
  %v1092 = vsub.s32 1, %v1091
  %v1093 = vrot.slane %v1084, %v1092
  %v1104 = vunpack.c.l.b16 %v1076
  %v1105 = vunpack.c.h.b16 %v1076
  %v1106 = vunpack.c.l.b16 %v1077
  %v1107 = vunpack.c.h.b16 %v1077
  %v1108 = vunpack.c.l.b16 %v1078
  %v1109 = vunpack.c.h.b16 %v1078
  %v1110 = vunpack.c.l.b16 %v1079
  %v1111 = vunpack.c.h.b16 %v1079
  %v1112 = vunpack.c.l.b16 %v1080
  %v1113 = vunpack.c.h.b16 %v1080
  %v1114 = vunpack.c.l.b16 %v1081
  %v1115 = vunpack.c.h.b16 %v1081
  %v1116 = vunpack.c.l.b16 %v1082
  %v1117 = vunpack.c.h.b16 %v1082
  %v1118 = vunpack.c.l.b16 %v1083
  %v1119 = vunpack.c.h.b16 %v1083
  %v1120 = vpack.c.b16 %v1106, %v1104
  %v1121 = vpack.c.b16 %v1107, %v1105
  %v1122 = vpack.c.b16 %v1110, %v1108
  %v1123 = vpack.c.b16 %v1111, %v1109
  %v1124 = vpack.c.b16 %v1114, %v1112
  %v1125 = vpack.c.b16 %v1115, %v1113
  %v1126 = vpack.c.b16 %v1118, %v1116
  %v1127 = vpack.c.b16 %v1119, %v1117
  %v1137 = vsel %vm150, %v1075, 0
  %1139 = vmatprep.subr.bf16.mxu0 %v1121
  %1140 = vmatpush1.bf16.msra.mxu0 %v1120
  %1141 = vmatprep.subr.bf16.mxu0 %v1123
  %1142 = vmatpush1.bf16.msra.mxu0 %v1122
  %1143 = vmatprep.subr.bf16.mxu0 %v1125
  %1144 = vmatpush1.bf16.msra.mxu0 %v1124
  %1145 = vmatprep.subr.bf16.mxu0 %v1127
  %1146 = vmatpush1.bf16.msra.mxu0 %v1126
  %1147 = vmatprep.subr.bf16.mxu0 0
  %1148 = vmatpush1.bf16.msra.mxu0 0
  %1149 = vmatprep.subr.bf16.mxu0 0
  %1150 = vmatpush1.bf16.msra.mxu0 0
  %1151 = vmatprep.subr.bf16.mxu0 0
  %1152 = vmatpush1.bf16.msra.mxu0 0
  %1153 = vmatprep.subr.bf16.mxu0 0
  %1154 = vmatpush1.bf16.msra.mxu0 0
  %1155 = vmatprep.subr.bf16.mxu0 0
  %1156 = vmatpush1.bf16.msra.mxu0 0
  %1157 = vmatprep.subr.bf16.mxu0 0
  %1158 = vmatpush1.bf16.msra.mxu0 0
  %1159 = vmatprep.subr.bf16.mxu0 0
  %1160 = vmatpush1.bf16.msra.mxu0 0
  %1161 = vmatprep.subr.bf16.mxu0 0
  %1162 = vmatpush1.bf16.msra.mxu0 0
  %1163 = vmatprep.subr.bf16.mxu0 0
  %1164 = vmatpush1.bf16.msra.mxu0 0
  %1165 = vmatprep.subr.bf16.mxu0 0
  %1166 = vmatpush1.bf16.msra.mxu0 0
  %1167 = vmatprep.subr.bf16.mxu0 0
  %1168 = vmatpush1.bf16.msra.mxu0 0
  %1169 = vmatprep.subr.bf16.mxu0 0
  %1170 = vmatpush1.bf16.msra.mxu0 0
  %1171 = vmatprep.mubr.bf16.mxu0 0
  %1172 = vmatmul.mubr.bf16.gmra.mrb[0].mxu0 %v1137
  %v1173 = vpop.f32.mrb[0].mxu0
  %v1174 = vadd.f32 %v1089, %v1173
  %v1175 = vpop.f32.mrb[0].mxu0
  %v1176 = vadd.f32 %v1093, %v1175
  %v1177 = vpop.f32.mrb[0].mxu0
  %v1178 = vadd.f32 %v1089, %v1177
  %v1179 = vpop.f32.mrb[0].mxu0
  %v1180 = vadd.f32 %v1093, %v1179
  %1181 = vdwg.mxu0
  %v1182 = vmul.f32 %v1174, %v1174
  %v1183 = vmul.f32 %v1176, %v1176
  %v1184 = vmul.f32 %v1178, %v1178
  %v1185 = vmul.f32 %v1180, %v1180
  %v1186 = vmul.f32 %v1174, %v1182
  %v1187 = vmul.f32 %v1176, %v1183
  %v1188 = vmul.f32 %v1178, %v1184
  %v1189 = vmul.f32 %v1180, %v1185
  %v1190 = vmul.f32 %v1186, 0.044715
  %v1191 = vmul.f32 %v1187, 0.044715
  %v1192 = vmul.f32 %v1188, 0.044715
  %v1193 = vmul.f32 %v1189, 0.044715
  %v1194 = vadd.f32 %v1174, %v1190
  %v1195 = vadd.f32 %v1176, %v1191
  %v1196 = vadd.f32 %v1178, %v1192
  %v1197 = vadd.f32 %v1180, %v1193
  %v1198 = vmul.f32 %v1194, 0.7978846
  %v1199 = vmul.f32 %v1195, 0.7978846
  %v1200 = vmul.f32 %v1196, 0.7978846
  %v1201 = vmul.f32 %v1197, 0.7978846
  %v1202 = vtanh.pop %v1198
  %v1203 = vtanh.pop %v1199
  %v1204 = vtanh.pop %v1200
  %v1205 = vtanh.pop %v1201
  %v1206 = vadd.f32 %v1202, 1.0
  %v1207 = vadd.f32 %v1203, 1.0
  %v1208 = vadd.f32 %v1204, 1.0
  %v1209 = vadd.f32 %v1205, 1.0
  %v1210 = vmul.f32 %v1206, 0.5
  %v1211 = vmul.f32 %v1207, 0.5
  %v1212 = vmul.f32 %v1208, 0.5
  %v1213 = vmul.f32 %v1209, 0.5
  %v1214 = vmul.f32 %v1174, %v1210
  %v1215 = vmul.f32 %v1176, %v1211
  %v1216 = vmul.f32 %v1178, %v1212
  %v1217 = vmul.f32 %v1180, %v1213
  %v1218 = vpack.c.bf16 %v1216, %v1214
  %v1219 = vpack.c.bf16 %v1217, %v1215
  %v1220 = vld [vmem:[%s12] sm:$0xf]
  %v1221 = vld [vmem:[%s12 + $0x4] sm:$0xf]
  %v1222 = vld [vmem:[%s12 + $0x8] sm:$0xf]
  %v1223 = vld [vmem:[%s12 + $0xc] sm:$0xf]
  %v1224 = vld [vmem:[%s12 + $0x10] sm:$0xf]
  %v1225 = vld [vmem:[%s12 + $0x14] sm:$0xf]
  %v1226 = vld [vmem:[%s12 + $0x18] sm:$0xf]
  %v1227 = vld [vmem:[%s12 + $0x1c] sm:$0xf]
  %v1228 = vld [vmem:[%s12 + $0x20] sm:$0xf]
  %v1229 = vld [vmem:[%s12 + $0x24] sm:$0xf]
  %v1230 = vld [vmem:[%s12 + $0x28] sm:$0xf]
  %v1231 = vld [vmem:[%s12 + $0x2c] sm:$0xf]
  %v1232 = vld [vmem:[%s12 + $0x30] sm:$0xf]
  %v1233 = vld [vmem:[%s12 + $0x34] sm:$0xf]
  %v1234 = vld [vmem:[%s12 + $0x38] sm:$0xf]
  %v1235 = vld [vmem:[%s12 + $0x3c] sm:$0xf]
  %v1236 = vld [vmem:[%s12 + $0x40] sm:$0xf]
  %v1237 = vld [vmem:[%s12 + $0x44] sm:$0xf]
  %v1238 = vld [vmem:[%s12 + $0x48] sm:$0xf]
  %v1239 = vld [vmem:[%s12 + $0x4c] sm:$0xf]
  %v1240 = vld [vmem:[%s12 + $0x50] sm:$0xf]
  %v1241 = vld [vmem:[%s12 + $0x54] sm:$0xf]
  %v1242 = vld [vmem:[%s12 + $0x58] sm:$0xf]
  %v1243 = vld [vmem:[%s12 + $0x5c] sm:$0xf]
  %v1244 = vld [vmem:[%s12 + $0x60] sm:$0xf]
  %v1245 = vld [vmem:[%s12 + $0x64] sm:$0xf]
  %v1246 = vld [vmem:[%s12 + $0x68] sm:$0xf]
  %v1247 = vld [vmem:[%s12 + $0x6c] sm:$0xf]
  %v1248 = vld [vmem:[%s12 + $0x70] sm:$0xf]
  %v1249 = vld [vmem:[%s12 + $0x74] sm:$0xf]
  %v1250 = vld [vmem:[%s12 + $0x78] sm:$0xf]
  %v1251 = vld [vmem:[%s12 + $0x7c] sm:$0xf]
  %v1252 = vld [vmem:[%s13] sm:$0x1]
  %v1254 = vlaneseq
  %v1255 = vshrl.u32 %v1254, 7
  %v1256 = vsub.s32 0, %v1255
  %v1257 = vrot.slane %v1252, %v1256
  %v1291 = vunpack.c.l.b16 %v1220
  %v1292 = vunpack.c.l.b16 %v1221
  %v1293 = vunpack.c.l.b16 %v1222
  %v1294 = vunpack.c.l.b16 %v1223
  %v1295 = vunpack.c.l.b16 %v1224
  %v1296 = vunpack.c.l.b16 %v1225
  %v1297 = vunpack.c.l.b16 %v1226
  %v1298 = vunpack.c.l.b16 %v1227
  %v1299 = vunpack.c.l.b16 %v1228
  %v1300 = vunpack.c.l.b16 %v1229
  %v1301 = vunpack.c.l.b16 %v1230
  %v1302 = vunpack.c.l.b16 %v1231
  %v1303 = vunpack.c.l.b16 %v1232
  %v1304 = vunpack.c.l.b16 %v1233
  %v1305 = vunpack.c.l.b16 %v1234
  %v1306 = vunpack.c.l.b16 %v1235
  %v1307 = vunpack.c.l.b16 %v1236
  %v1308 = vunpack.c.l.b16 %v1237
  %v1309 = vunpack.c.l.b16 %v1238
  %v1310 = vunpack.c.l.b16 %v1239
  %v1311 = vunpack.c.l.b16 %v1240
  %v1312 = vunpack.c.l.b16 %v1241
  %v1313 = vunpack.c.l.b16 %v1242
  %v1314 = vunpack.c.l.b16 %v1243
  %v1315 = vunpack.c.l.b16 %v1244
  %v1316 = vunpack.c.l.b16 %v1245
  %v1317 = vunpack.c.l.b16 %v1246
  %v1318 = vunpack.c.l.b16 %v1247
  %v1319 = vunpack.c.l.b16 %v1248
  %v1320 = vunpack.c.l.b16 %v1249
  %v1321 = vunpack.c.l.b16 %v1250
  %v1322 = vunpack.c.l.b16 %v1251
  %v1323 = vpack.c.b16 %v1292, %v1291
  %v1324 = vpack.c.b16 %v1294, %v1293
  %v1325 = vpack.c.b16 %v1296, %v1295
  %v1326 = vpack.c.b16 %v1298, %v1297
  %v1327 = vpack.c.b16 %v1300, %v1299
  %v1328 = vpack.c.b16 %v1302, %v1301
  %v1329 = vpack.c.b16 %v1304, %v1303
  %v1330 = vpack.c.b16 %v1306, %v1305
  %v1331 = vpack.c.b16 %v1308, %v1307
  %v1332 = vpack.c.b16 %v1310, %v1309
  %v1333 = vpack.c.b16 %v1312, %v1311
  %v1334 = vpack.c.b16 %v1314, %v1313
  %v1335 = vpack.c.b16 %v1316, %v1315
  %v1336 = vpack.c.b16 %v1318, %v1317
  %v1337 = vpack.c.b16 %v1320, %v1319
  %v1338 = vpack.c.b16 %v1322, %v1321
  %1355 = vmatprep.subr.bf16.mxu0 0
  %1356 = vmatpush1.bf16.msra.mxu0 %v1323
  %1357 = vmatprep.subr.bf16.mxu0 0
  %1358 = vmatpush1.bf16.msra.mxu0 %v1324
  %1359 = vmatprep.subr.bf16.mxu0 0
  %1360 = vmatpush1.bf16.msra.mxu0 %v1325
  %1361 = vmatprep.subr.bf16.mxu0 0
  %1362 = vmatpush1.bf16.msra.mxu0 %v1326
  %1363 = vmatprep.subr.bf16.mxu0 0
  %1364 = vmatpush1.bf16.msra.mxu0 %v1327
  %1365 = vmatprep.subr.bf16.mxu0 0
  %1366 = vmatpush1.bf16.msra.mxu0 %v1328
  %1367 = vmatprep.subr.bf16.mxu0 0
  %1368 = vmatpush1.bf16.msra.mxu0 %v1329
  %1369 = vmatprep.subr.bf16.mxu0 0
  %1370 = vmatpush1.bf16.msra.mxu0 %v1330
  %1371 = vmatprep.subr.bf16.mxu0 0
  %1372 = vmatpush1.bf16.msra.mxu0 %v1331
  %1373 = vmatprep.subr.bf16.mxu0 0
  %1374 = vmatpush1.bf16.msra.mxu0 %v1332
  %1375 = vmatprep.subr.bf16.mxu0 0
  %1376 = vmatpush1.bf16.msra.mxu0 %v1333
  %1377 = vmatprep.subr.bf16.mxu0 0
  %1378 = vmatpush1.bf16.msra.mxu0 %v1334
  %1379 = vmatprep.subr.bf16.mxu0 0
  %1380 = vmatpush1.bf16.msra.mxu0 %v1335
  %1381 = vmatprep.subr.bf16.mxu0 0
  %1382 = vmatpush1.bf16.msra.mxu0 %v1336
  %1383 = vmatprep.subr.bf16.mxu0 0
  %1384 = vmatpush1.bf16.msra.mxu0 %v1337
  %1385 = vmatprep.subr.bf16.mxu0 0
  %1386 = vmatpush1.bf16.msra.mxu0 %v1338
  %1387 = vmatprep.mubr.bf16.mxu0 %v1219
  %1388 = vmatmul.mubr.bf16.gmra.mrb[0].mxu0 %v1218
  %v1389 = vpop.f32.mrb[0].mxu0
  %v1390 = vadd.f32 %v1257, %v1389
  %v1391 = vpop.f32.mrb[0].mxu0
  %v1392 = vpop.f32.mrb[0].mxu0
  %v1393 = vadd.f32 %v1257, %v1392
  %v1394 = vpop.f32.mrb[0].mxu0
  %1395 = vdwg.mxu0
  %1398 = vrot.lane.b32.xlu0 %v1390, 64
  %v1399 = vpop.permute.xlu0 %1398
  %1400 = vrot.lane.b32.xlu0 %v1393, 64
  %v1401 = vpop.permute.xlu0 %1400
  %v1404 = vmul.f32 %v232, %v1399
  %v1405 = vmul.f32 %v235, %v1401
  %1408 = vrot.lane.b32.xlu0 %v1404, 64
  %v1409 = vpop.permute.xlu0 %1408
  %1410 = vrot.lane.b32.xlu0 %v1405, 64
  %v1411 = vpop.permute.xlu0 %1410
  %v1414 = vadd.f32 %v1033, %v1409
  %v1415 = vadd.f32 %v1034, %v1411
  %1416 = vst.msk [vmem:[%s14] sm:$0xff] %vm150, %v1414
  %1417 = vst.msk [vmem:[%s14 + $0x8] sm:$0xf] %vm241, %v1415
  // Predicated region
  $region58: #{fwd.18} parent=0 // pred_check
    _
  $region59: #{fwd.18} parent=0 // pred_check_branch
    %1419 = sbr.rel (0) target = $region61
  $region60: #{fwd.18} parent=0 // pred_region
    _
  $region61: #{fwd.18} parent=0 // pred_fallthru
    _
  // Predicated region
  $region62: #{fwd.18} parent=0 // pred_check
    _
  $region63: #{fwd.18} parent=0 // pred_check_branch
    %1421 = sbr.rel (0) target = $region65
  $region64: #{fwd.18} parent=0 // pred_region
    _
  $region65: #{fwd.18} parent=0 // pred_fallthru
    _

// kernel: fwd.15
$region0: #{fwd.15}
  #allocation0 [shape = 'u32[]', space=smem, size = 0x4, offset = 0x4, fixed_abs, tag = 'smem constant byte address 0x4 - core index']
  #allocation1 [shape = 'u32[144,128]{1,0:T(1,128)}', space=vmem, size = 0x12000, scoped, tag = 'internal scratch']
  %s0 = inlined_call_operand.vmem [shape: f32[7,8], index: 0, kind: input, shape index: {}]
  %s1 = inlined_call_operand.vmem [shape: f32[7,32], index: 1, kind: input, shape index: {}]
  %s2 = inlined_call_operand.vmem [shape: bf16[8,32], index: 2, kind: input, shape index: {}]
  %s3 = inlined_call_operand.vmem [shape: f32[1,32], index: 3, kind: input, shape index: {}]
  %s4 = inlined_call_operand.vmem [shape: bf16[32,32], index: 4, kind: input, shape index: {}]
  %s5 = inlined_call_operand.vmem [shape: f32[1,32], index: 5, kind: input, shape index: {}]
  %s6 = inlined_call_operand.vmem [shape: f32[7,32], index: 6, kind: output, shape index: {}]
  %s7 = sld [smem:[#allocation0]]
  $region34: #{fwd.15} parent=0
    _
  %s9 = ssub.s32 1, %s7
  %s10 = scalar_select 0, %s9, %s7
  // Predicated region
  $region2: #{fwd.15} parent=0 // pred_check
    _
  $region3: #{fwd.15} parent=0 // pred_check_branch
    %12 = sbr.rel (0) target = $region5
  $region4: #{fwd.15} parent=0 // pred_region
    _
  $region5: #{fwd.15} parent=0 // pred_fallthru
    _
  // Predicated region
  $region6: #{fwd.15} parent=0 // pred_check
    _
  $region7: #{fwd.15} parent=0 // pred_check_branch
    %14 = sbr.rel (0) target = $region9
  $region8: #{fwd.15} parent=0 // pred_region
    _
  $region9: #{fwd.15} parent=0 // pred_fallthru
    _
  // Predicated region
  $region10: #{fwd.15} parent=0 // pred_check
    _
  $region11: #{fwd.15} parent=0 // pred_check_branch
    %16 = sbr.rel (0) target = $region13
  $region12: #{fwd.15} parent=0 // pred_region
    _
  $region13: #{fwd.15} parent=0 // pred_fallthru
    _
  // Predicated region
  $region14: #{fwd.15} parent=0 // pred_check
    _
  $region15: #{fwd.15} parent=0 // pred_check_branch
    %18 = sbr.rel (0) target = $region17
  $region16: #{fwd.15} parent=0 // pred_region
    _
  $region17: #{fwd.15} parent=0 // pred_fallthru
    _
  // Predicated region
  $region18: #{fwd.15} parent=0 // pred_check
    _
  $region19: #{fwd.15} parent=0 // pred_check_branch
    %20 = sbr.rel (0) target = $region21
  $region20: #{fwd.15} parent=0 // pred_region
    _
  $region21: #{fwd.15} parent=0 // pred_fallthru
    _
  // Predicated region
  $region22: #{fwd.15} parent=0 // pred_check
    _
  $region23: #{fwd.15} parent=0 // pred_check_branch
    %22 = sbr.rel (0) target = $region25
  $region24: #{fwd.15} parent=0 // pred_region
    _
  $region25: #{fwd.15} parent=0 // pred_fallthru
    _
  %v24 = vld [vmem:[%s0] sm:$0x7f]
  %v25 = vpack.c.bf16 %v24, %v24
  %v26 = vld [vmem:[%s2] sm:$0xf]
  %v27 = vld [vmem:[%s3] sm:$0x1]
  %v29 = vlaneseq
  %v30 = vshrl.u32 %v29, 7
  %v31 = vsub.s32 0, %v30
  %v32 = vrot.slane %v27, %v31
  %vm34 = vcmask 64512
  %v36 = vsel %vm34, %v25, 0
  %vm38 = vcmask 1043456
  %v40 = vsel %vm38, %v26, 0
  %42 = vmatprep.subr.bf16.mxu0 0
  %43 = vmatpush1.bf16.msra.mxu0 %v40
  %44 = vmatprep.subr.bf16.mxu0 0
  %45 = vmatpush1.bf16.msra.mxu0 0
  %46 = vmatprep.subr.bf16.mxu0 0
  %47 = vmatpush1.bf16.msra.mxu0 0
  %48 = vmatprep.subr.bf16.mxu0 0
  %49 = vmatpush1.bf16.msra.mxu0 0
  %50 = vmatprep.subr.bf16.mxu0 0
  %51 = vmatpush1.bf16.msra.mxu0 0
  %52 = vmatprep.subr.bf16.mxu0 0
  %53 = vmatpush1.bf16.msra.mxu0 0
  %54 = vmatprep.subr.bf16.mxu0 0
  %55 = vmatpush1.bf16.msra.mxu0 0
  %56 = vmatprep.subr.bf16.mxu0 0
  %57 = vmatpush1.bf16.msra.mxu0 0
  %58 = vmatprep.subr.bf16.mxu0 0
  %59 = vmatpush1.bf16.msra.mxu0 0
  %60 = vmatprep.subr.bf16.mxu0 0
  %61 = vmatpush1.bf16.msra.mxu0 0
  %62 = vmatprep.subr.bf16.mxu0 0
  %63 = vmatpush1.bf16.msra.mxu0 0
  %64 = vmatprep.subr.bf16.mxu0 0
  %65 = vmatpush1.bf16.msra.mxu0 0
  %66 = vmatprep.subr.bf16.mxu0 0
  %67 = vmatpush1.bf16.msra.mxu0 0
  %68 = vmatprep.subr.bf16.mxu0 0
  %69 = vmatpush1.bf16.msra.mxu0 0
  %70 = vmatprep.subr.bf16.mxu0 0
  %71 = vmatpush1.bf16.msra.mxu0 0
  %72 = vmatprep.subr.bf16.mxu0 0
  %73 = vmatpush1.bf16.msra.mxu0 0
  %74 = vmatprep.mubr.bf16.mxu0 0
  %75 = vmatmul.mubr.bf16.gmra.mrb[0].mxu0 %v36
  %v76 = vpop.f32.mrb[0].mxu0
  %v77 = vadd.f32 %v32, %v76
  %v78 = vpop.f32.mrb[0].mxu0
  %v79 = vpop.f32.mrb[0].mxu0
  %v80 = vpop.f32.mrb[0].mxu0
  %81 = vdwg.mxu0
  %v82 = vxor.u32 %v77, 2147483648
  %v83 = vmul.f32 %v82, 1.442695
  %v84 = vpow.pop %v83
  %v85 = vadd.f32 %v84, 1.0
  %v86 = vrcp.pop %v85
  %v87 = vmul.f32 1.0, %v86
  %v88 = vmul.f32 %v77, %v87
  %v89 = vpack.c.bf16 %v88, %v88
  %v90 = vld [vmem:[%s4] sm:$0xf]
  %v91 = vld [vmem:[%s4 + $0x4] sm:$0xf]
  %v92 = vld [vmem:[%s4 + $0x8] sm:$0xf]
  %v93 = vld [vmem:[%s4 + $0xc] sm:$0xf]
  %v94 = vld [vmem:[%s5] sm:$0x1]
  %v96 = vlaneseq
  %v97 = vshrl.u32 %v96, 7
  %v98 = vsub.s32 0, %v97
  %v99 = vrot.slane %v94, %v98
  %v105 = vunpack.c.l.b16 %v90
  %v106 = vunpack.c.l.b16 %v91
  %v107 = vunpack.c.l.b16 %v92
  %v108 = vunpack.c.l.b16 %v93
  %v109 = vpack.c.b16 %v106, %v105
  %v110 = vpack.c.b16 %v108, %v107
  %vm113 = vcmask 261120
  %v115 = vsel %vm113, %v89, 0
  %117 = vmatprep.subr.bf16.mxu0 0
  %118 = vmatpush1.bf16.msra.mxu0 %v109
  %119 = vmatprep.subr.bf16.mxu0 0
  %120 = vmatpush1.bf16.msra.mxu0 %v110
  %121 = vmatprep.subr.bf16.mxu0 0
  %122 = vmatpush1.bf16.msra.mxu0 0
  %123 = vmatprep.subr.bf16.mxu0 0
  %124 = vmatpush1.bf16.msra.mxu0 0
  %125 = vmatprep.subr.bf16.mxu0 0
  %126 = vmatpush1.bf16.msra.mxu0 0
  %127 = vmatprep.subr.bf16.mxu0 0
  %128 = vmatpush1.bf16.msra.mxu0 0
  %129 = vmatprep.subr.bf16.mxu0 0
  %130 = vmatpush1.bf16.msra.mxu0 0
  %131 = vmatprep.subr.bf16.mxu0 0
  %132 = vmatpush1.bf16.msra.mxu0 0
  %133 = vmatprep.subr.bf16.mxu0 0
  %134 = vmatpush1.bf16.msra.mxu0 0
  %135 = vmatprep.subr.bf16.mxu0 0
  %136 = vmatpush1.bf16.msra.mxu0 0
  %137 = vmatprep.subr.bf16.mxu0 0
  %138 = vmatpush1.bf16.msra.mxu0 0
  %139 = vmatprep.subr.bf16.mxu0 0
  %140 = vmatpush1.bf16.msra.mxu0 0
  %141 = vmatprep.subr.bf16.mxu0 0
  %142 = vmatpush1.bf16.msra.mxu0 0
  %143 = vmatprep.subr.bf16.mxu0 0
  %144 = vmatpush1.bf16.msra.mxu0 0
  %145 = vmatprep.subr.bf16.mxu0 0
  %146 = vmatpush1.bf16.msra.mxu0 0
  %147 = vmatprep.subr.bf16.mxu0 0
  %148 = vmatpush1.bf16.msra.mxu0 0
  %149 = vmatprep.mubr.bf16.mxu0 0
  %150 = vmatmul.mubr.bf16.gmra.mrb[0].mxu0 %v115
  %v151 = vpop.f32.mrb[0].mxu0
  %v152 = vadd.f32 %v99, %v151
  %v153 = vpop.f32.mrb[0].mxu0
  %v154 = vpop.f32.mrb[0].mxu0
  %v155 = vpop.f32.mrb[0].mxu0
  %156 = vdwg.mxu0
  %v157 = vadd.f32 %v77, %v152
  %v158 = vld [vmem:[%s1] sm:$0x7f]
  %v159 = vadd.f32 %v157, %v158
  %vm160 = vcmask 260096
  %161 = vst.msk [vmem:[%s6] sm:$0x7f] %vm160, %v159
  // Predicated region
  $region26: #{fwd.15} parent=0 // pred_check
    _
  $region27: #{fwd.15} parent=0 // pred_check_branch
    %163 = sbr.rel (0) target = $region29
  $region28: #{fwd.15} parent=0 // pred_region
    _
  $region29: #{fwd.15} parent=0 // pred_fallthru
    _
  // Predicated region
  $region30: #{fwd.15} parent=0 // pred_check
    _
  $region31: #{fwd.15} parent=0 // pred_check_branch
    %165 = sbr.rel (0) target = $region33
  $region32: #{fwd.15} parent=0 // pred_region
    _
  $region33: #{fwd.15} parent=0 // pred_fallthru
    _

// kernel: fwd.19
$region0: #{fwd.19}
  #allocation0 [shape = 'u32[]', space=smem, size = 0x4, offset = 0x4, fixed_abs, tag = 'smem constant byte address 0x4 - core index']
  #allocation1 [shape = 'u32[144,128]{1,0:T(1,128)}', space=vmem, size = 0x12000, scoped, tag = 'internal scratch']
  %s0 = inlined_call_operand.vmem [shape: f32[7,32], index: 0, kind: input, shape index: {}, may-alias: {0,14}]
  %s1 = inlined_call_operand.vmem [shape: f32[7,32], index: 1, kind: input, shape index: {}]
  %s2 = inlined_call_operand.vmem [shape: f32[7,7], index: 2, kind: input, shape index: {}]
  %s3 = inlined_call_operand.vmem [shape: f32[7,1], index: 3, kind: input, shape index: {}]
  %s4 = inlined_call_operand.vmem [shape: bf16[32,192], index: 4, kind: input, shape index: {}]
  %s5 = inlined_call_operand.vmem [shape: f32[1,192], index: 5, kind: input, shape index: {}]
  %s6 = inlined_call_operand.vmem [shape: bf16[32,96], index: 6, kind: input, shape index: {}]
  %s7 = inlined_call_operand.vmem [shape: f32[1,96], index: 7, kind: input, shape index: {}]
  %s8 = inlined_call_operand.vmem [shape: bf16[32,32], index: 8, kind: input, shape index: {}]
  %s9 = inlined_call_operand.vmem [shape: f32[1,32], index: 9, kind: input, shape index: {}]
  %s10 = inlined_call_operand.vmem [shape: bf16[32,128], index: 10, kind: input, shape index: {}]
  %s11 = inlined_call_operand.vmem [shape: f32[1,128], index: 11, kind: input, shape index: {}]
  %s12 = inlined_call_operand.vmem [shape: bf16[128,32], index: 12, kind: input, shape index: {}]
  %s13 = inlined_call_operand.vmem [shape: f32[1,32], index: 13, kind: input, shape index: {}]
  %s14 = inlined_call_operand.vmem [shape: f32[7,32], index: 14, kind: output, shape index: {}, may-alias: {0,14}]
  %s15 = sld [smem:[#allocation0]]
  $region66: #{fwd.19} parent=0
    _
  %s17 = ssub.s32 1, %s15
  %s18 = scalar_select 0, %s17, %s15
  // Predicated region
  $region2: #{fwd.19} parent=0 // pred_check
    _
  $region3: #{fwd.19} parent=0 // pred_check_branch
    %20 = sbr.rel (0) target = $region5
  $region4: #{fwd.19} parent=0 // pred_region
    _
  $region5: #{fwd.19} parent=0 // pred_fallthru
    _
  // Predicated region
  $region6: #{fwd.19} parent=0 // pred_check
    _
  $region7: #{fwd.19} parent=0 // pred_check_branch
    %22 = sbr.rel (0) target = $region9
  $region8: #{fwd.19} parent=0 // pred_region
    _
  $region9: #{fwd.19} parent=0 // pred_fallthru
    _
  // Predicated region
  $region10: #{fwd.19} parent=0 // pred_check
    _
  $region11: #{fwd.19} parent=0 // pred_check_branch
    %24 = sbr.rel (0) target = $region13
  $region12: #{fwd.19} parent=0 // pred_region
    _
  $region13: #{fwd.19} parent=0 // pred_fallthru
    _
  // Predicated region
  $region14: #{fwd.19} parent=0 // pred_check
    _
  $region15: #{fwd.19} parent=0 // pred_check_branch
    %26 = sbr.rel (0) target = $region17
  $region16: #{fwd.19} parent=0 // pred_region
    _
  $region17: #{fwd.19} parent=0 // pred_fallthru
    _
  // Predicated region
  $region18: #{fwd.19} parent=0 // pred_check
    _
  $region19: #{fwd.19} parent=0 // pred_check_branch
    %28 = sbr.rel (0) target = $region21
  $region20: #{fwd.19} parent=0 // pred_region
    _
  $region21: #{fwd.19} parent=0 // pred_fallthru
    _
  // Predicated region
  $region22: #{fwd.19} parent=0 // pred_check
    _
  $region23: #{fwd.19} parent=0 // pred_check_branch
    %30 = sbr.rel (0) target = $region25
  $region24: #{fwd.19} parent=0 // pred_region
    _
  $region25: #{fwd.19} parent=0 // pred_fallthru
    _
  // Predicated region
  $region26: #{fwd.19} parent=0 // pred_check
    _
  $region27: #{fwd.19} parent=0 // pred_check_branch
    %32 = sbr.rel (0) target = $region29
  $region28: #{fwd.19} parent=0 // pred_region
    _
  $region29: #{fwd.19} parent=0 // pred_fallthru
    _
  // Predicated region
  $region30: #{fwd.19} parent=0 // pred_check
    _
  $region31: #{fwd.19} parent=0 // pred_check_branch
    %34 = sbr.rel (0) target = $region33
  $region32: #{fwd.19} parent=0 // pred_region
    _
  $region33: #{fwd.19} parent=0 // pred_fallthru
    _
  // Predicated region
  $region34: #{fwd.19} parent=0 // pred_check
    _
  $region35: #{fwd.19} parent=0 // pred_check_branch
    %36 = sbr.rel (0) target = $region37
  $region36: #{fwd.19} parent=0 // pred_region
    _
  $region37: #{fwd.19} parent=0 // pred_fallthru
    _
  // Predicated region
  $region38: #{fwd.19} parent=0 // pred_check
    _
  $region39: #{fwd.19} parent=0 // pred_check_branch
    %38 = sbr.rel (0) target = $region41
  $region40: #{fwd.19} parent=0 // pred_region
    _
  $region41: #{fwd.19} parent=0 // pred_fallthru
    _
  // Predicated region
  $region42: #{fwd.19} parent=0 // pred_check
    _
  $region43: #{fwd.19} parent=0 // pred_check_branch
    %40 = sbr.rel (0) target = $region45
  $region44: #{fwd.19} parent=0 // pred_region
    _
  $region45: #{fwd.19} parent=0 // pred_fallthru
    _
  // Predicated region
  $region46: #{fwd.19} parent=0 // pred_check
    _
  $region47: #{fwd.19} parent=0 // pred_check_branch
    %42 = sbr.rel (0) target = $region49
  $region48: #{fwd.19} parent=0 // pred_region
    _
  $region49: #{fwd.19} parent=0 // pred_fallthru
    _
  // Predicated region
  $region50: #{fwd.19} parent=0 // pred_check
    _
  $region51: #{fwd.19} parent=0 // pred_check_branch
    %44 = sbr.rel (0) target = $region53
  $region52: #{fwd.19} parent=0 // pred_region
    _
  $region53: #{fwd.19} parent=0 // pred_fallthru
    _
  // Predicated region
  $region54: #{fwd.19} parent=0 // pred_check
    _
  $region55: #{fwd.19} parent=0 // pred_check_branch
    %46 = sbr.rel (0) target = $region57
  $region56: #{fwd.19} parent=0 // pred_region
    _
  $region57: #{fwd.19} parent=0 // pred_fallthru
    _
  %v48 = vld [vmem:[%s0] sm:$0x7f]
  %v49 = vld [vmem:[%s1] sm:$0x7f]
  %v50 = vpack.c.bf16 %v49, %v49
  %v51 = vld [vmem:[%s4] sm:$0xff]
  %v52 = vld [vmem:[%s4 + $0x8] sm:$0xff]
  %v53 = vld [vmem:[%s4 + $0x10] sm:$0xff]
  %v54 = vld [vmem:[%s4 + $0x18] sm:$0xff]
  %v55 = vld [vmem:[%s5] sm:$0x3]
  %v57 = vlaneseq
  %v58 = vshrl.u32 %v57, 7
  %v59 = vsub.s32 0, %v58
  %v60 = vrot.slane %v55, %v59
  %v61 = vlaneseq
  %v62 = vshrl.u32 %v61, 7
  %v63 = vsub.s32 1, %v62
  %v64 = vrot.slane %v55, %v63
  %v71 = vunpack.c.l.b16 %v51
  %v72 = vunpack.c.h.b16 %v51
  %v73 = vunpack.c.l.b16 %v52
  %v74 = vunpack.c.h.b16 %v52
  %v75 = vunpack.c.l.b16 %v53
  %v76 = vunpack.c.h.b16 %v53
  %v77 = vunpack.c.l.b16 %v54
  %v78 = vunpack.c.h.b16 %v54
  %v79 = vpack.c.b16 %v73, %v71
  %v80 = vpack.c.b16 %v74, %v72
  %v81 = vpack.c.b16 %v77, %v75
  %v82 = vpack.c.b16 %v78, %v76
  %vm87 = vcmask 261120
  %v89 = vsel %vm87, %v50, 0
  %91 = vmatprep.subr.bf16.mxu0 %v80
  %92 = vmatpush1.bf16.msra.mxu0 %v79
  %93 = vmatprep.subr.bf16.mxu0 %v82
  %94 = vmatpush1.bf16.msra.mxu0 %v81
  %95 = vmatprep.subr.bf16.mxu0 0
  %96 = vmatpush1.bf16.msra.mxu0 0
  %97 = vmatprep.subr.bf16.mxu0 0
  %98 = vmatpush1.bf16.msra.mxu0 0
  %99 = vmatprep.subr.bf16.mxu0 0
  %100 = vmatpush1.bf16.msra.mxu0 0
  %101 = vmatprep.subr.bf16.mxu0 0
  %102 = vmatpush1.bf16.msra.mxu0 0
  %103 = vmatprep.subr.bf16.mxu0 0
  %104 = vmatpush1.bf16.msra.mxu0 0
  %105 = vmatprep.subr.bf16.mxu0 0
  %106 = vmatpush1.bf16.msra.mxu0 0
  %107 = vmatprep.subr.bf16.mxu0 0
  %108 = vmatpush1.bf16.msra.mxu0 0
  %109 = vmatprep.subr.bf16.mxu0 0
  %110 = vmatpush1.bf16.msra.mxu0 0
  %111 = vmatprep.subr.bf16.mxu0 0
  %112 = vmatpush1.bf16.msra.mxu0 0
  %113 = vmatprep.subr.bf16.mxu0 0
  %114 = vmatpush1.bf16.msra.mxu0 0
  %115 = vmatprep.subr.bf16.mxu0 0
  %116 = vmatpush1.bf16.msra.mxu0 0
  %117 = vmatprep.subr.bf16.mxu0 0
  %118 = vmatpush1.bf16.msra.mxu0 0
  %119 = vmatprep.subr.bf16.mxu0 0
  %120 = vmatpush1.bf16.msra.mxu0 0
  %121 = vmatprep.subr.bf16.mxu0 0
  %122 = vmatpush1.bf16.msra.mxu0 0
  %123 = vmatprep.mubr.bf16.mxu0 0
  %124 = vmatmul.mubr.bf16.gmra.mrb[0].mxu0 %v89
  %v125 = vpop.f32.mrb[0].mxu0
  %v126 = vadd.f32 %v60, %v125
  %v127 = vpop.f32.mrb[0].mxu0
  %v128 = vadd.f32 %v64, %v127
  %v129 = vpop.f32.mrb[0].mxu0
  %v130 = vpop.f32.mrb[0].mxu0
  %131 = vdwg.mxu0
  %vm132 = vcmask 260096
  %v133 = vsel %vm132, %v48, 0.0
  %134 = vadd.xlane.f32.xlu0 %v133
  %v135 = vpop.xlane.xlu0 %134
  %v136 = vrcp.pop 32.0
  %v137 = vmul.f32 %v135, %v136
  %v138 = vsub.f32 %v48, %v137
  %v139 = vmul.f32 %v138, %v138
  %v140 = vsel %vm132, %v139, 0.0
  %141 = vadd.xlane.f32.xlu0 %v140
  %v142 = vpop.xlane.xlu0 %141
  %v143 = vmul.f32 %v142, %v136
  %v144 = vadd.f32 %v143, 1e-06
  %v145 = vrsqrt.pop %v144
  %v146 = vmul.f32 %v138, %v145
  %v147 = vadd.f32 %v126, 1.0
  %149 = vrot.lane.b32.xlu0 %v147, 96
  %v150 = vpop.permute.xlu0 %149
  %v152 = vmul.f32 %v146, %v150
  %v153 = vadd.f32 %v152, %v126
  %v154 = vpack.c.bf16 %v153, %v153
  %v155 = vld [vmem:[%s6] sm:$0xf]
  %v156 = vld [vmem:[%s6 + $0x4] sm:$0xf]
  %v157 = vld [vmem:[%s6 + $0x8] sm:$0xf]
  %v158 = vld [vmem:[%s6 + $0xc] sm:$0xf]
  %v159 = vld [vmem:[%s7] sm:$0x1]
  %v161 = vlaneseq
  %v162 = vshrl.u32 %v161, 7
  %v163 = vsub.s32 0, %v162
  %v164 = vrot.slane %v159, %v163
  %v170 = vunpack.c.l.b16 %v155
  %v171 = vunpack.c.l.b16 %v156
  %v172 = vunpack.c.l.b16 %v157
  %v173 = vunpack.c.l.b16 %v158
  %v174 = vpack.c.b16 %v171, %v170
  %v175 = vpack.c.b16 %v173, %v172
  %v179 = vsel %vm87, %v154, 0
  %181 = vmatprep.subr.bf16.mxu0 0
  %182 = vmatpush1.bf16.msra.mxu0 %v174
  %183 = vmatprep.subr.bf16.mxu0 0
  %184 = vmatpush1.bf16.msra.mxu0 %v175
  %185 = vmatprep.subr.bf16.mxu0 0
  %186 = vmatpush1.bf16.msra.mxu0 0
  %187 = vmatprep.subr.bf16.mxu0 0
  %188 = vmatpush1.bf16.msra.mxu0 0
  %189 = vmatprep.subr.bf16.mxu0 0
  %190 = vmatpush1.bf16.msra.mxu0 0
  %191 = vmatprep.subr.bf16.mxu0 0
  %192 = vmatpush1.bf16.msra.mxu0 0
  %193 = vmatprep.subr.bf16.mxu0 0
  %194 = vmatpush1.bf16.msra.mxu0 0
  %195 = vmatprep.subr.bf16.mxu0 0
  %196 = vmatpush1.bf16.msra.mxu0 0
  %197 = vmatprep.subr.bf16.mxu0 0
  %198 = vmatpush1.bf16.msra.mxu0 0
  %199 = vmatprep.subr.bf16.mxu0 0
  %200 = vmatpush1.bf16.msra.mxu0 0
  %201 = vmatprep.subr.bf16.mxu0 0
  %202 = vmatpush1.bf16.msra.mxu0 0
  %203 = vmatprep.subr.bf16.mxu0 0
  %204 = vmatpush1.bf16.msra.mxu0 0
  %205 = vmatprep.subr.bf16.mxu0 0
  %206 = vmatpush1.bf16.msra.mxu0 0
  %207 = vmatprep.subr.bf16.mxu0 0
  %208 = vmatpush1.bf16.msra.mxu0 0
  %209 = vmatprep.subr.bf16.mxu0 0
  %210 = vmatpush1.bf16.msra.mxu0 0
  %211 = vmatprep.subr.bf16.mxu0 0
  %212 = vmatpush1.bf16.msra.mxu0 0
  %213 = vmatprep.mubr.bf16.mxu0 0
  %214 = vmatmul.mubr.bf16.gmra.mrb[0].mxu0 %v179
  %v215 = vpop.f32.mrb[0].mxu0
  %v216 = vadd.f32 %v164, %v215
  %v217 = vpop.f32.mrb[0].mxu0
  %v218 = vpop.f32.mrb[0].mxu0
  %v219 = vpop.f32.mrb[0].mxu0
  %220 = vdwg.mxu0
  %v221 = vld [vmem:[%s2] sm:$0x7f]
  %v222 = vld [vmem:[%s3] sm:$0x7f]
  %v223 = vpack.c.bf16 %v216, %v216
  %225 = vrot.lane.b32.xlu0 %v223, 96
  %v226 = vpop.permute.xlu0 %225
  %vm227 = vcmask 130048
  %v229 = vsel %vm227, %v223, 0
  %v232 = vsel %vm227, %v226, 0
  %234 = vmatprep.subr.bf16.mxu0 0
  %235 = vmatpush1.bf16.xpose.msra.mxu0 %v232
  %236 = vmatprep.subr.bf16.mxu0 0
  %237 = vmatpush1.bf16.xpose.msra.mxu0 0
  %238 = vmatprep.subr.bf16.mxu0 0
  %239 = vmatpush1.bf16.xpose.msra.mxu0 0
  %240 = vmatprep.subr.bf16.mxu0 0
  %241 = vmatpush1.bf16.xpose.msra.mxu0 0
  %242 = vmatprep.subr.bf16.mxu0 0
  %243 = vmatpush1.bf16.xpose.msra.mxu0 0
  %244 = vmatprep.subr.bf16.mxu0 0
  %245 = vmatpush1.bf16.xpose.msra.mxu0 0
  %246 = vmatprep.subr.bf16.mxu0 0
  %247 = vmatpush1.bf16.xpose.msra.mxu0 0
  %248 = vmatprep.subr.bf16.mxu0 0
  %249 = vmatpush1.bf16.xpose.msra.mxu0 0
  %250 = vmatprep.subr.bf16.mxu0 0
  %251 = vmatpush1.bf16.xpose.msra.mxu0 0
  %252 = vmatprep.subr.bf16.mxu0 0
  %253 = vmatpush1.bf16.xpose.msra.mxu0 0
  %254 = vmatprep.subr.bf16.mxu0 0
  %255 = vmatpush1.bf16.xpose.msra.mxu0 0
  %256 = vmatprep.subr.bf16.mxu0 0
  %257 = vmatpush1.bf16.xpose.msra.mxu0 0
  %258 = vmatprep.subr.bf16.mxu0 0
  %259 = vmatpush1.bf16.xpose.msra.mxu0 0
  %260 = vmatprep.subr.bf16.mxu0 0
  %261 = vmatpush1.bf16.xpose.msra.mxu0 0
  %262 = vmatprep.subr.bf16.mxu0 0
  %263 = vmatpush1.bf16.xpose.msra.mxu0 0
  %264 = vmatprep.subr.bf16.mxu0 0
  %265 = vmatpush1.bf16.xpose.msra.mxu0 0
  %266 = vmatprep.mubr.bf16.mxu0 0
  %267 = vmatmul.mubr.bf16.gmra.mrb[0].mxu0 %v229
  %v268 = vpop.f32.mrb[0].mxu0
  %v269 = vadd.f32 0.0, %v268
  %v270 = vpop.f32.mrb[0].mxu0
  %v271 = vpop.f32.mrb[0].mxu0
  %v272 = vpop.f32.mrb[0].mxu0
  %273 = vdwg.mxu0
  %v274 = vmul.f32 %v269, 0.25
  %v275 = vadd.f32 %v274, %v221
  %vm276 = vcmask 55296
  %v277 = vsel %vm276, %v275, -inf
  %278 = vmax.xlane.f32.xlu0 %v277
  %v279 = vpop.xlane.xlu0 %278
  %v280 = vsub.f32 %v275, %v279
  %v281 = vmul.f32 %v280, 1.442695
  %v282 = vpow.pop %v281
  %v283 = vsel %vm276, %v282, 0.0
  %284 = vadd.xlane.f32.xlu0 %v283
  %v285 = vpop.xlane.xlu0 %284
  %v286 = vrcp.pop %v285
  %v287 = vmul.f32 %v282, %v286
  %v288 = vpack.c.bf16 %v287, %v287
  %289 = vrot.lane.b32.xlu0 %v223, 64
  %v290 = vpop.permute.xlu0 %289
  %vm291 = vcmask 56320
  %v293 = vsel %vm291, %v288, 0
  %vm295 = vcmask 1042432
  %vm296 = vcmask 1043456
  %v297 = vsel %vm295, 4294967295, 65535
  %v298 = vsel %vm296, %v297, 0
  %v300 = vand.u32 %v290, %v298
  %302 = vmatprep.subr.bf16.mxu0 0
  %303 = vmatpush1.bf16.msra.mxu0 %v300
  %304 = vmatprep.subr.bf16.mxu0 0
  %305 = vmatpush1.bf16.msra.mxu0 0
  %306 = vmatprep.subr.bf16.mxu0 0
  %307 = vmatpush1.bf16.msra.mxu0 0
  %308 = vmatprep.subr.bf16.mxu0 0
  %309 = vmatpush1.bf16.msra.mxu0 0
  %310 = vmatprep.subr.bf16.mxu0 0
  %311 = vmatpush1.bf16.msra.mxu0 0
  %312 = vmatprep.subr.bf16.mxu0 0
  %313 = vmatpush1.bf16.msra.mxu0 0
  %314 = vmatprep.subr.bf16.mxu0 0
  %315 = vmatpush1.bf16.msra.mxu0 0
  %316 = vmatprep.subr.bf16.mxu0 0
  %317 = vmatpush1.bf16.msra.mxu0 0
  %318 = vmatprep.subr.bf16.mxu0 0
  %319 = vmatpush1.bf16.msra.mxu0 0
  %320 = vmatprep.subr.bf16.mxu0 0
  %321 = vmatpush1.bf16.msra.mxu0 0
  %322 = vmatprep.subr.bf16.mxu0 0
  %323 = vmatpush1.bf16.msra.mxu0 0
  %324 = vmatprep.subr.bf16.mxu0 0
  %325 = vmatpush1.bf16.msra.mxu0 0
  %326 = vmatprep.subr.bf16.mxu0 0
  %327 = vmatpush1.bf16.msra.mxu0 0
  %328 = vmatprep.subr.bf16.mxu0 0
  %329 = vmatpush1.bf16.msra.mxu0 0
  %330 = vmatprep.subr.bf16.mxu0 0
  %331 = vmatpush1.bf16.msra.mxu0 0
  %332 = vmatprep.subr.bf16.mxu0 0
  %333 = vmatpush1.bf16.msra.mxu0 0
  %334 = vmatprep.mubr.bf16.mxu0 0
  %335 = vmatmul.mubr.bf16.gmra.mrb[0].mxu0 %v293
  %v336 = vpop.f32.mrb[0].mxu0
  %v337 = vadd.f32 0.0, %v336
  %v338 = vpop.f32.mrb[0].mxu0
  %v339 = vpop.f32.mrb[0].mxu0
  %v340 = vpop.f32.mrb[0].mxu0
  %341 = vdwg.mxu0
  %342 = vrot.lane.b32.xlu0 %v223, 112
  %v343 = vpop.permute.xlu0 %342
  %344 = vrot.lane.b32.xlu0 %v223, 80
  %v345 = vpop.permute.xlu0 %344
  %v347 = vsel %vm227, %v343, 0
  %v350 = vsel %vm227, %v345, 0
  %352 = vmatprep.subr.bf16.mxu0 0
  %353 = vmatpush1.bf16.xpose.msra.mxu0 %v350
  %354 = vmatprep.subr.bf16.mxu0 0
  %355 = vmatpush1.bf16.xpose.msra.mxu0 0
  %356 = vmatprep.subr.bf16.mxu0 0
  %357 = vmatpush1.bf16.xpose.msra.mxu0 0
  %358 = vmatprep.subr.bf16.mxu0 0
  %359 = vmatpush1.bf16.xpose.msra.mxu0 0
  %360 = vmatprep.subr.bf16.mxu0 0
  %361 = vmatpush1.bf16.xpose.msra.mxu0 0
  %362 = vmatprep.subr.bf16.mxu0 0
  %363 = vmatpush1.bf16.xpose.msra.mxu0 0
  %364 = vmatprep.subr.bf16.mxu0 0
  %365 = vmatpush1.bf16.xpose.msra.mxu0 0
  %366 = vmatprep.subr.bf16.mxu0 0
  %367 = vmatpush1.bf16.xpose.msra.mxu0 0
  %368 = vmatprep.subr.bf16.mxu0 0
  %369 = vmatpush1.bf16.xpose.msra.mxu0 0
  %370 = vmatprep.subr.bf16.mxu0 0
  %371 = vmatpush1.bf16.xpose.msra.mxu0 0
  %372 = vmatprep.subr.bf16.mxu0 0
  %373 = vmatpush1.bf16.xpose.msra.mxu0 0
  %374 = vmatprep.subr.bf16.mxu0 0
  %375 = vmatpush1.bf16.xpose.msra.mxu0 0
  %376 = vmatprep.subr.bf16.mxu0 0
  %377 = vmatpush1.bf16.xpose.msra.mxu0 0
  %378 = vmatprep.subr.bf16.mxu0 0
  %379 = vmatpush1.bf16.xpose.msra.mxu0 0
  %380 = vmatprep.subr.bf16.mxu0 0
  %381 = vmatpush1.bf16.xpose.msra.mxu0 0
  %382 = vmatprep.subr.bf16.mxu0 0
  %383 = vmatpush1.bf16.xpose.msra.mxu0 0
  %384 = vmatprep.mubr.bf16.mxu0 0
  %385 = vmatmul.mubr.bf16.gmra.mrb[0].mxu0 %v347
  %v386 = vpop.f32.mrb[0].mxu0
  %v387 = vadd.f32 0.0, %v386
  %v388 = vpop.f32.mrb[0].mxu0
  %v389 = vpop.f32.mrb[0].mxu0
  %v390 = vpop.f32.mrb[0].mxu0
  %391 = vdwg.mxu0
  %v392 = vmul.f32 %v387, 0.25
  %v393 = vadd.f32 %v392, %v221
  %v394 = vsel %vm276, %v393, -inf
  %395 = vmax.xlane.f32.xlu0 %v394
  %v396 = vpop.xlane.xlu0 %395
  %v397 = vsub.f32 %v393, %v396
  %v398 = vmul.f32 %v397, 1.442695
  %v399 = vpow.pop %v398
  %v400 = vsel %vm276, %v399, 0.0
  %401 = vadd.xlane.f32.xlu0 %v400
  %v402 = vpop.xlane.xlu0 %401
  %v403 = vrcp.pop %v402
  %v404 = vmul.f32 %v399, %v403
  %v405 = vpack.c.bf16 %v404, %v404
  %406 = vrot.lane.b32.xlu0 %v223, 48
  %v407 = vpop.permute.xlu0 %406
  %v409 = vsel %vm291, %v405, 0
  %v412 = vand.u32 %v407, %v298
  %414 = vmatprep.subr.bf16.mxu0 0
  %415 = vmatpush1.bf16.msra.mxu0 %v412
  %416 = vmatprep.subr.bf16.mxu0 0
  %417 = vmatpush1.bf16.msra.mxu0 0
  %418 = vmatprep.subr.bf16.mxu0 0
  %419 = vmatpush1.bf16.msra.mxu0 0
  %420 = vmatprep.subr.bf16.mxu0 0
  %421 = vmatpush1.bf16.msra.mxu0 0
  %422 = vmatprep.subr.bf16.mxu0 0
  %423 = vmatpush1.bf16.msra.mxu0 0
  %424 = vmatprep.subr.bf16.mxu0 0
  %425 = vmatpush1.bf16.msra.mxu0 0
  %426 = vmatprep.subr.bf16.mxu0 0
  %427 = vmatpush1.bf16.msra.mxu0 0
  %428 = vmatprep.subr.bf16.mxu0 0
  %429 = vmatpush1.bf16.msra.mxu0 0
  %430 = vmatprep.subr.bf16.mxu0 0
  %431 = vmatpush1.bf16.msra.mxu0 0
  %432 = vmatprep.subr.bf16.mxu0 0
  %433 = vmatpush1.bf16.msra.mxu0 0
  %434 = vmatprep.subr.bf16.mxu0 0
  %435 = vmatpush1.bf16.msra.mxu0 0
  %436 = vmatprep.subr.bf16.mxu0 0
  %437 = vmatpush1.bf16.msra.mxu0 0
  %438 = vmatprep.subr.bf16.mxu0 0
  %439 = vmatpush1.bf16.msra.mxu0 0
  %440 = vmatprep.subr.bf16.mxu0 0
  %441 = vmatpush1.bf16.msra.mxu0 0
  %442 = vmatprep.subr.bf16.mxu0 0
  %443 = vmatpush1.bf16.msra.mxu0 0
  %444 = vmatprep.subr.bf16.mxu0 0
  %445 = vmatpush1.bf16.msra.mxu0 0
  %446 = vmatprep.mubr.bf16.mxu0 0
  %447 = vmatmul.mubr.bf16.gmra.mrb[0].mxu0 %v409
  %v448 = vpop.f32.mrb[0].mxu0
  %v449 = vadd.f32 0.0, %v448
  %v450 = vpop.f32.mrb[0].mxu0
  %v451 = vpop.f32.mrb[0].mxu0
  %v452 = vpop.f32.mrb[0].mxu0
  %453 = vdwg.mxu0
  %455 = vrot.lane.b32.xlu0 %v449, 16
  %v456 = vpop.permute.xlu0 %455
  %v458 = vsel %vm227, %v337, %v456
  %460 = vset.pattern.permute.xlu0 0
  %461 = vperm.xlu0 %460, %v222
  %v462 = vpop.permute.xlu0 %461
  %v464 = vmul.f32 %v458, %v462
  %v465 = vpack.c.bf16 %v464, %v464
  %v466 = vld [vmem:[%s8] sm:$0xf]
  %v467 = vld [vmem:[%s8 + $0x4] sm:$0xf]
  %v468 = vld [vmem:[%s8 + $0x8] sm:$0xf]
  %v469 = vld [vmem:[%s8 + $0xc] sm:$0xf]
  %v470 = vld [vmem:[%s9] sm:$0x1]
  %v472 = vlaneseq
  %v473 = vshrl.u32 %v472, 7
  %v474 = vsub.s32 0, %v473
  %v475 = vrot.slane %v470, %v474
  %v481 = vunpack.c.l.b16 %v466
  %v482 = vunpack.c.l.b16 %v467
  %v483 = vunpack.c.l.b16 %v468
  %v484 = vunpack.c.l.b16 %v469
  %v485 = vpack.c.b16 %v482, %v481
  %v486 = vpack.c.b16 %v484, %v483
  %v490 = vsel %vm87, %v465, 0
  %492 = vmatprep.subr.bf16.mxu0 0
  %493 = vmatpush1.bf16.msra.mxu0 %v485
  %494 = vmatprep.subr.bf16.mxu0 0
  %495 = vmatpush1.bf16.msra.mxu0 %v486
  %496 = vmatprep.subr.bf16.mxu0 0
  %497 = vmatpush1.bf16.msra.mxu0 0
  %498 = vmatprep.subr.bf16.mxu0 0
  %499 = vmatpush1.bf16.msra.mxu0 0
  %500 = vmatprep.subr.bf16.mxu0 0
  %501 = vmatpush1.bf16.msra.mxu0 0
  %502 = vmatprep.subr.bf16.mxu0 0
  %503 = vmatpush1.bf16.msra.mxu0 0
  %504 = vmatprep.subr.bf16.mxu0 0
  %505 = vmatpush1.bf16.msra.mxu0 0
  %506 = vmatprep.subr.bf16.mxu0 0
  %507 = vmatpush1.bf16.msra.mxu0 0
  %508 = vmatprep.subr.bf16.mxu0 0
  %509 = vmatpush1.bf16.msra.mxu0 0
  %510 = vmatprep.subr.bf16.mxu0 0
  %511 = vmatpush1.bf16.msra.mxu0 0
  %512 = vmatprep.subr.bf16.mxu0 0
  %513 = vmatpush1.bf16.msra.mxu0 0
  %514 = vmatprep.subr.bf16.mxu0 0
  %515 = vmatpush1.bf16.msra.mxu0 0
  %516 = vmatprep.subr.bf16.mxu0 0
  %517 = vmatpush1.bf16.msra.mxu0 0
  %518 = vmatprep.subr.bf16.mxu0 0
  %519 = vmatpush1.bf16.msra.mxu0 0
  %520 = vmatprep.subr.bf16.mxu0 0
  %521 = vmatpush1.bf16.msra.mxu0 0
  %522 = vmatprep.subr.bf16.mxu0 0
  %523 = vmatpush1.bf16.msra.mxu0 0
  %524 = vmatprep.mubr.bf16.mxu0 0
  %525 = vmatmul.mubr.bf16.gmra.mrb[0].mxu0 %v490
  %v526 = vpop.f32.mrb[0].mxu0
  %v527 = vadd.f32 %v475, %v526
  %v528 = vpop.f32.mrb[0].mxu0
  %v529 = vpop.f32.mrb[0].mxu0
  %v530 = vpop.f32.mrb[0].mxu0
  %531 = vdwg.mxu0
  %533 = vrot.lane.b32.xlu0 %v527, 64
  %v534 = vpop.permute.xlu0 %533
  %v536 = vmul.f32 %v126, %v534
  %538 = vrot.lane.b32.xlu0 %v536, 64
  %v539 = vpop.permute.xlu0 %538
  %v541 = vadd.f32 %v48, %v539
  %v542 = vsel %vm132, %v541, 0.0
  %543 = vadd.xlane.f32.xlu0 %v542
  %v544 = vpop.xlane.xlu0 %543
  %v545 = vmul.f32 %v544, %v136
  %v546 = vsub.f32 %v541, %v545
  %v547 = vmul.f32 %v546, %v546
  %v548 = vsel %vm132, %v547, 0.0
  %549 = vadd.xlane.f32.xlu0 %v548
  %v550 = vpop.xlane.xlu0 %549
  %v551 = vmul.f32 %v550, %v136
  %v552 = vadd.f32 %v551, 1e-06
  %v553 = vrsqrt.pop %v552
  %v554 = vmul.f32 %v546, %v553
  %v555 = vadd.f32 %v128, 1.0
  %v556 = vmul.f32 %v554, %v555
  %558 = vrot.lane.b32.xlu0 %v126, 32
  %v559 = vpop.permute.xlu0 %558
  %v561 = vadd.f32 %v556, %v559
  %v562 = vpack.c.bf16 %v561, %v561
  %v563 = vld [vmem:[%s10] sm:$0xf]
  %v564 = vld [vmem:[%s10 + $0x4] sm:$0xf]
  %v565 = vld [vmem:[%s10 + $0x8] sm:$0xf]
  %v566 = vld [vmem:[%s10 + $0xc] sm:$0xf]
  %v567 = vld [vmem:[%s11] sm:$0x1]
  %v569 = vlaneseq
  %v570 = vshrl.u32 %v569, 7
  %v571 = vsub.s32 0, %v570
  %v572 = vrot.slane %v567, %v571
  %v578 = vunpack.c.l.b16 %v563
  %v579 = vunpack.c.l.b16 %v564
  %v580 = vunpack.c.l.b16 %v565
  %v581 = vunpack.c.l.b16 %v566
  %v582 = vpack.c.b16 %v579, %v578
  %v583 = vpack.c.b16 %v581, %v580
  %v587 = vsel %vm87, %v562, 0
  %589 = vmatprep.subr.bf16.mxu0 0
  %590 = vmatpush1.bf16.msra.mxu0 %v582
  %591 = vmatprep.subr.bf16.mxu0 0
  %592 = vmatpush1.bf16.msra.mxu0 %v583
  %593 = vmatprep.subr.bf16.mxu0 0
  %594 = vmatpush1.bf16.msra.mxu0 0
  %595 = vmatprep.subr.bf16.mxu0 0
  %596 = vmatpush1.bf16.msra.mxu0 0
  %597 = vmatprep.subr.bf16.mxu0 0
  %598 = vmatpush1.bf16.msra.mxu0 0
  %599 = vmatprep.subr.bf16.mxu0 0
  %600 = vmatpush1.bf16.msra.mxu0 0
  %601 = vmatprep.subr.bf16.mxu0 0
  %602 = vmatpush1.bf16.msra.mxu0 0
  %603 = vmatprep.subr.bf16.mxu0 0
  %604 = vmatpush1.bf16.msra.mxu0 0
  %605 = vmatprep.subr.bf16.mxu0 0
  %606 = vmatpush1.bf16.msra.mxu0 0
  %607 = vmatprep.subr.bf16.mxu0 0
  %608 = vmatpush1.bf16.msra.mxu0 0
  %609 = vmatprep.subr.bf16.mxu0 0
  %610 = vmatpush1.bf16.msra.mxu0 0
  %611 = vmatprep.subr.bf16.mxu0 0
  %612 = vmatpush1.bf16.msra.mxu0 0
  %613 = vmatprep.subr.bf16.mxu0 0
  %614 = vmatpush1.bf16.msra.mxu0 0
  %615 = vmatprep.subr.bf16.mxu0 0
  %616 = vmatpush1.bf16.msra.mxu0 0
  %617 = vmatprep.subr.bf16.mxu0 0
  %618 = vmatpush1.bf16.msra.mxu0 0
  %619 = vmatprep.subr.bf16.mxu0 0
  %620 = vmatpush1.bf16.msra.mxu0 0
  %621 = vmatprep.mubr.bf16.mxu0 0
  %622 = vmatmul.mubr.bf16.gmra.mrb[0].mxu0 %v587
  %v623 = vpop.f32.mrb[0].mxu0
  %v624 = vadd.f32 %v572, %v623
  %v625 = vpop.f32.mrb[0].mxu0
  %v626 = vpop.f32.mrb[0].mxu0
  %v627 = vpop.f32.mrb[0].mxu0
  %628 = vdwg.mxu0
  %v629 = vmul.f32 %v624, %v624
  %v630 = vmul.f32 %v624, %v629
  %v631 = vmul.f32 %v630, 0.044715
  %v632 = vadd.f32 %v624, %v631
  %v633 = vmul.f32 %v632, 0.7978846
  %v634 = vtanh.pop %v633
  %v635 = vadd.f32 %v634, 1.0
  %v636 = vmul.f32 %v635, 0.5
  %v637 = vmul.f32 %v624, %v636
  %v638 = vpack.c.bf16 %v637, %v637
  %v639 = vld [vmem:[%s12] sm:$0xf]
  %v640 = vld [vmem:[%s12 + $0x4] sm:$0xf]
  %v641 = vld [vmem:[%s12 + $0x8] sm:$0xf]
  %v642 = vld [vmem:[%s12 + $0xc] sm:$0xf]
  %v643 = vld [vmem:[%s12 + $0x10] sm:$0xf]
  %v644 = vld [vmem:[%s12 + $0x14] sm:$0xf]
  %v645 = vld [vmem:[%s12 + $0x18] sm:$0xf]
  %v646 = vld [vmem:[%s12 + $0x1c] sm:$0xf]
  %v647 = vld [vmem:[%s12 + $0x20] sm:$0xf]
  %v648 = vld [vmem:[%s12 + $0x24] sm:$0xf]
  %v649 = vld [vmem:[%s12 + $0x28] sm:$0xf]
  %v650 = vld [vmem:[%s12 + $0x2c] sm:$0xf]
  %v651 = vld [vmem:[%s12 + $0x30] sm:$0xf]
  %v652 = vld [vmem:[%s12 + $0x34] sm:$0xf]
  %v653 = vld [vmem:[%s12 + $0x38] sm:$0xf]
  %v654 = vld [vmem:[%s12 + $0x3c] sm:$0xf]
  %v655 = vld [vmem:[%s13] sm:$0x1]
  %v657 = vlaneseq
  %v658 = vshrl.u32 %v657, 7
  %v659 = vsub.s32 0, %v658
  %v660 = vrot.slane %v655, %v659
  %v678 = vunpack.c.l.b16 %v639
  %v679 = vunpack.c.l.b16 %v640
  %v680 = vunpack.c.l.b16 %v641
  %v681 = vunpack.c.l.b16 %v642
  %v682 = vunpack.c.l.b16 %v643
  %v683 = vunpack.c.l.b16 %v644
  %v684 = vunpack.c.l.b16 %v645
  %v685 = vunpack.c.l.b16 %v646
  %v686 = vunpack.c.l.b16 %v647
  %v687 = vunpack.c.l.b16 %v648
  %v688 = vunpack.c.l.b16 %v649
  %v689 = vunpack.c.l.b16 %v650
  %v690 = vunpack.c.l.b16 %v651
  %v691 = vunpack.c.l.b16 %v652
  %v692 = vunpack.c.l.b16 %v653
  %v693 = vunpack.c.l.b16 %v654
  %v694 = vpack.c.b16 %v679, %v678
  %v695 = vpack.c.b16 %v681, %v680
  %v696 = vpack.c.b16 %v683, %v682
  %v697 = vpack.c.b16 %v685, %v684
  %v698 = vpack.c.b16 %v687, %v686
  %v699 = vpack.c.b16 %v689, %v688
  %v700 = vpack.c.b16 %v691, %v690
  %v701 = vpack.c.b16 %v693, %v692
  %710 = vmatprep.subr.bf16.mxu0 0
  %711 = vmatpush1.bf16.msra.mxu0 %v694
  %712 = vmatprep.subr.bf16.mxu0 0
  %713 = vmatpush1.bf16.msra.mxu0 %v695
  %714 = vmatprep.subr.bf16.mxu0 0
  %715 = vmatpush1.bf16.msra.mxu0 %v696
  %716 = vmatprep.subr.bf16.mxu0 0
  %717 = vmatpush1.bf16.msra.mxu0 %v697
  %718 = vmatprep.subr.bf16.mxu0 0
  %719 = vmatpush1.bf16.msra.mxu0 %v698
  %720 = vmatprep.subr.bf16.mxu0 0
  %721 = vmatpush1.bf16.msra.mxu0 %v699
  %722 = vmatprep.subr.bf16.mxu0 0
  %723 = vmatpush1.bf16.msra.mxu0 %v700
  %724 = vmatprep.subr.bf16.mxu0 0
  %725 = vmatpush1.bf16.msra.mxu0 %v701
  %726 = vmatprep.subr.bf16.mxu0 0
  %727 = vmatpush1.bf16.msra.mxu0 0
  %728 = vmatprep.subr.bf16.mxu0 0
  %729 = vmatpush1.bf16.msra.mxu0 0
  %730 = vmatprep.subr.bf16.mxu0 0
  %731 = vmatpush1.bf16.msra.mxu0 0
  %732 = vmatprep.subr.bf16.mxu0 0
  %733 = vmatpush1.bf16.msra.mxu0 0
  %734 = vmatprep.subr.bf16.mxu0 0
  %735 = vmatpush1.bf16.msra.mxu0 0
  %736 = vmatprep.subr.bf16.mxu0 0
  %737 = vmatpush1.bf16.msra.mxu0 0
  %738 = vmatprep.subr.bf16.mxu0 0
  %739 = vmatpush1.bf16.msra.mxu0 0
  %740 = vmatprep.subr.bf16.mxu0 0
  %741 = vmatpush1.bf16.msra.mxu0 0
  %742 = vmatprep.mubr.bf16.mxu0 0
  %743 = vmatmul.mubr.bf16.gmra.mrb[0].mxu0 %v638
  %v744 = vpop.f32.mrb[0].mxu0
  %v745 = vadd.f32 %v660, %v744
  %v746 = vpop.f32.mrb[0].mxu0
  %v747 = vpop.f32.mrb[0].mxu0
  %v748 = vpop.f32.mrb[0].mxu0
  %749 = vdwg.mxu0
  %751 = vrot.lane.b32.xlu0 %v745, 32
  %v752 = vpop.permute.xlu0 %751
  %v754 = vmul.f32 %v128, %v752
  %756 = vrot.lane.b32.xlu0 %v754, 96
  %v757 = vpop.permute.xlu0 %756
  %v759 = vadd.f32 %v541, %v757
  %760 = vst.msk [vmem:[%s14] sm:$0x7f] %vm132, %v759
  // Predicated region
  $region58: #{fwd.19} parent=0 // pred_check
    _
  $region59: #{fwd.19} parent=0 // pred_check_branch
    %762 = sbr.rel (0) target = $region61
  $region60: #{fwd.19} parent=0 // pred_region
    _
  $region61: #{fwd.19} parent=0 // pred_fallthru
    _
  // Predicated region
  $region62: #{fwd.19} parent=0 // pred_check
    _
  $region63: #{fwd.19} parent=0 // pred_check_branch
    %764 = sbr.rel (0) target = $region65
  $region64: #{fwd.19} parent=0 // pred_region
    _
  $region65: #{fwd.19} parent=0 // pred_fallthru
    _

// kernel: fwd.20
$region0: #{fwd.20}
  #allocation0 [shape = 'u32[]', space=smem, size = 0x4, offset = 0x4, fixed_abs, tag = 'smem constant byte address 0x4 - core index']
  #allocation1 [shape = 'u32[144,128]{1,0:T(1,128)}', space=vmem, size = 0x12000, scoped, tag = 'internal scratch']
  %s0 = inlined_call_operand.vmem [shape: f32[7,32], index: 0, kind: input, shape index: {}, may-alias: {0,17}]
  %s1 = inlined_call_operand.vmem [shape: f32[12,64], index: 1, kind: input, shape index: {}]
  %s2 = inlined_call_operand.vmem [shape: f32[7,32], index: 2, kind: input, shape index: {}]
  %s3 = inlined_call_operand.vmem [shape: f32[7,12], index: 3, kind: input, shape index: {}]
  %s4 = inlined_call_operand.vmem [shape: f32[7,1], index: 4, kind: input, shape index: {}]
  %s5 = inlined_call_operand.vmem [shape: bf16[32,192], index: 5, kind: input, shape index: {}]
  %s6 = inlined_call_operand.vmem [shape: f32[1,192], index: 6, kind: input, shape index: {}]
  %s7 = inlined_call_operand.vmem [shape: bf16[32,32], index: 7, kind: input, shape index: {}]
  %s8 = inlined_call_operand.vmem [shape: f32[1,32], index: 8, kind: input, shape index: {}]
  %s9 = inlined_call_operand.vmem [shape: bf16[64,64], index: 9, kind: input, shape index: {}]
  %s10 = inlined_call_operand.vmem [shape: f32[1,64], index: 10, kind: input, shape index: {}]
  %s11 = inlined_call_operand.vmem [shape: bf16[32,32], index: 11, kind: input, shape index: {}]
  %s12 = inlined_call_operand.vmem [shape: f32[1,32], index: 12, kind: input, shape index: {}]
  %s13 = inlined_call_operand.vmem [shape: bf16[32,128], index: 13, kind: input, shape index: {}]
  %s14 = inlined_call_operand.vmem [shape: f32[1,128], index: 14, kind: input, shape index: {}]
  %s15 = inlined_call_operand.vmem [shape: bf16[128,32], index: 15, kind: input, shape index: {}]
  %s16 = inlined_call_operand.vmem [shape: f32[1,32], index: 16, kind: input, shape index: {}]
  %s17 = inlined_call_operand.vmem [shape: f32[7,32], index: 17, kind: output, shape index: {}, may-alias: {0,17}]
  %s18 = sld [smem:[#allocation0]]
  $region78: #{fwd.20} parent=0
    _
  %s20 = ssub.s32 1, %s18
  %s21 = scalar_select 0, %s20, %s18
  // Predicated region
  $region2: #{fwd.20} parent=0 // pred_check
    _
  $region3: #{fwd.20} parent=0 // pred_check_branch
    %23 = sbr.rel (0) target = $region5
  $region4: #{fwd.20} parent=0 // pred_region
    _
  $region5: #{fwd.20} parent=0 // pred_fallthru
    _
  // Predicated region
  $region6: #{fwd.20} parent=0 // pred_check
    _
  $region7: #{fwd.20} parent=0 // pred_check_branch
    %25 = sbr.rel (0) target = $region9
  $region8: #{fwd.20} parent=0 // pred_region
    _
  $region9: #{fwd.20} parent=0 // pred_fallthru
    _
  // Predicated region
  $region10: #{fwd.20} parent=0 // pred_check
    _
  $region11: #{fwd.20} parent=0 // pred_check_branch
    %27 = sbr.rel (0) target = $region13
  $region12: #{fwd.20} parent=0 // pred_region
    _
  $region13: #{fwd.20} parent=0 // pred_fallthru
    _
  // Predicated region
  $region14: #{fwd.20} parent=0 // pred_check
    _
  $region15: #{fwd.20} parent=0 // pred_check_branch
    %29 = sbr.rel (0) target = $region17
  $region16: #{fwd.20} parent=0 // pred_region
    _
  $region17: #{fwd.20} parent=0 // pred_fallthru
    _
  // Predicated region
  $region18: #{fwd.20} parent=0 // pred_check
    _
  $region19: #{fwd.20} parent=0 // pred_check_branch
    %31 = sbr.rel (0) target = $region21
  $region20: #{fwd.20} parent=0 // pred_region
    _
  $region21: #{fwd.20} parent=0 // pred_fallthru
    _
  // Predicated region
  $region22: #{fwd.20} parent=0 // pred_check
    _
  $region23: #{fwd.20} parent=0 // pred_check_branch
    %33 = sbr.rel (0) target = $region25
  $region24: #{fwd.20} parent=0 // pred_region
    _
  $region25: #{fwd.20} parent=0 // pred_fallthru
    _
  // Predicated region
  $region26: #{fwd.20} parent=0 // pred_check
    _
  $region27: #{fwd.20} parent=0 // pred_check_branch
    %35 = sbr.rel (0) target = $region29
  $region28: #{fwd.20} parent=0 // pred_region
    _
  $region29: #{fwd.20} parent=0 // pred_fallthru
    _
  // Predicated region
  $region30: #{fwd.20} parent=0 // pred_check
    _
  $region31: #{fwd.20} parent=0 // pred_check_branch
    %37 = sbr.rel (0) target = $region33
  $region32: #{fwd.20} parent=0 // pred_region
    _
  $region33: #{fwd.20} parent=0 // pred_fallthru
    _
  // Predicated region
  $region34: #{fwd.20} parent=0 // pred_check
    _
  $region35: #{fwd.20} parent=0 // pred_check_branch
    %39 = sbr.rel (0) target = $region37
  $region36: #{fwd.20} parent=0 // pred_region
    _
  $region37: #{fwd.20} parent=0 // pred_fallthru
    _
  // Predicated region
  $region38: #{fwd.20} parent=0 // pred_check
    _
  $region39: #{fwd.20} parent=0 // pred_check_branch
    %41 = sbr.rel (0) target = $region41
  $region40: #{fwd.20} parent=0 // pred_region
    _
  $region41: #{fwd.20} parent=0 // pred_fallthru
    _
  // Predicated region
  $region42: #{fwd.20} parent=0 // pred_check
    _
  $region43: #{fwd.20} parent=0 // pred_check_branch
    %43 = sbr.rel (0) target = $region45
  $region44: #{fwd.20} parent=0 // pred_region
    _
  $region45: #{fwd.20} parent=0 // pred_fallthru
    _
  // Predicated region
  $region46: #{fwd.20} parent=0 // pred_check
    _
  $region47: #{fwd.20} parent=0 // pred_check_branch
    %45 = sbr.rel (0) target = $region49
  $region48: #{fwd.20} parent=0 // pred_region
    _
  $region49: #{fwd.20} parent=0 // pred_fallthru
    _
  // Predicated region
  $region50: #{fwd.20} parent=0 // pred_check
    _
  $region51: #{fwd.20} parent=0 // pred_check_branch
    %47 = sbr.rel (0) target = $region53
  $region52: #{fwd.20} parent=0 // pred_region
    _
  $region53: #{fwd.20} parent=0 // pred_fallthru
    _
  // Predicated region
  $region54: #{fwd.20} parent=0 // pred_check
    _
  $region55: #{fwd.20} parent=0 // pred_check_branch
    %49 = sbr.rel (0) target = $region57
  $region56: #{fwd.20} parent=0 // pred_region
    _
  $region57: #{fwd.20} parent=0 // pred_fallthru
    _
  // Predicated region
  $region58: #{fwd.20} parent=0 // pred_check
    _
  $region59: #{fwd.20} parent=0 // pred_check_branch
    %51 = sbr.rel (0) target = $region61
  $region60: #{fwd.20} parent=0 // pred_region
    _
  $region61: #{fwd.20} parent=0 // pred_fallthru
    _
  // Predicated region
  $region62: #{fwd.20} parent=0 // pred_check
    _
  $region63: #{fwd.20} parent=0 // pred_check_branch
    %53 = sbr.rel (0) target = $region65
  $region64: #{fwd.20} parent=0 // pred_region
    _
  $region65: #{fwd.20} parent=0 // pred_fallthru
    _
  // Predicated region
  $region66: #{fwd.20} parent=0 // pred_check
    _
  $region67: #{fwd.20} parent=0 // pred_check_branch
    %55 = sbr.rel (0) target = $region69
  $region68: #{fwd.20} parent=0 // pred_region
    _
  $region69: #{fwd.20} parent=0 // pred_fallthru
    _
  %v57 = vld [vmem:[%s0] sm:$0x7f]
  %v58 = vld [vmem:[%s2] sm:$0x7f]
  %v59 = vpack.c.bf16 %v58, %v58
  %v60 = vld [vmem:[%s5] sm:$0xff]
  %v61 = vld [vmem:[%s5 + $0x8] sm:$0xff]
  %v62 = vld [vmem:[%s5 + $0x10] sm:$0xff]
  %v63 = vld [vmem:[%s5 + $0x18] sm:$0xff]
  %v64 = vld [vmem:[%s6] sm:$0x3]
  %v66 = vlaneseq
  %v67 = vshrl.u32 %v66, 7
  %v68 = vsub.s32 0, %v67
  %v69 = vrot.slane %v64, %v68
  %v70 = vlaneseq
  %v71 = vshrl.u32 %v70, 7
  %v72 = vsub.s32 1, %v71
  %v73 = vrot.slane %v64, %v72
  %v80 = vunpack.c.l.b16 %v60
  %v81 = vunpack.c.h.b16 %v60
  %v82 = vunpack.c.l.b16 %v61
  %v83 = vunpack.c.h.b16 %v61
  %v84 = vunpack.c.l.b16 %v62
  %v85 = vunpack.c.h.b16 %v62
  %v86 = vunpack.c.l.b16 %v63
  %v87 = vunpack.c.h.b16 %v63
  %v88 = vpack.c.b16 %v82, %v80
  %v89 = vpack.c.b16 %v83, %v81
  %v90 = vpack.c.b16 %v86, %v84
  %v91 = vpack.c.b16 %v87, %v85
  %vm96 = vcmask 261120
  %v98 = vsel %vm96, %v59, 0
  %100 = vmatprep.subr.bf16.mxu0 %v89
  %101 = vmatpush1.bf16.msra.mxu0 %v88
  %102 = vmatprep.subr.bf16.mxu0 %v91
  %103 = vmatpush1.bf16.msra.mxu0 %v90
  %104 = vmatprep.subr.bf16.mxu0 0
  %105 = vmatpush1.bf16.msra.mxu0 0
  %106 = vmatprep.subr.bf16.mxu0 0
  %107 = vmatpush1.bf16.msra.mxu0 0
  %108 = vmatprep.subr.bf16.mxu0 0
  %109 = vmatpush1.bf16.msra.mxu0 0
  %110 = vmatprep.subr.bf16.mxu0 0
  %111 = vmatpush1.bf16.msra.mxu0 0
  %112 = vmatprep.subr.bf16.mxu0 0
  %113 = vmatpush1.bf16.msra.mxu0 0
  %114 = vmatprep.subr.bf16.mxu0 0
  %115 = vmatpush1.bf16.msra.mxu0 0
  %116 = vmatprep.subr.bf16.mxu0 0
  %117 = vmatpush1.bf16.msra.mxu0 0
  %118 = vmatprep.subr.bf16.mxu0 0
  %119 = vmatpush1.bf16.msra.mxu0 0
  %120 = vmatprep.subr.bf16.mxu0 0
  %121 = vmatpush1.bf16.msra.mxu0 0
  %122 = vmatprep.subr.bf16.mxu0 0
  %123 = vmatpush1.bf16.msra.mxu0 0
  %124 = vmatprep.subr.bf16.mxu0 0
  %125 = vmatpush1.bf16.msra.mxu0 0
  %126 = vmatprep.subr.bf16.mxu0 0
  %127 = vmatpush1.bf16.msra.mxu0 0
  %128 = vmatprep.subr.bf16.mxu0 0
  %129 = vmatpush1.bf16.msra.mxu0 0
  %130 = vmatprep.subr.bf16.mxu0 0
  %131 = vmatpush1.bf16.msra.mxu0 0
  %132 = vmatprep.mubr.bf16.mxu0 0
  %133 = vmatmul.mubr.bf16.gmra.mrb[0].mxu0 %v98
  %v134 = vpop.f32.mrb[0].mxu0
  %v135 = vadd.f32 %v69, %v134
  %v136 = vpop.f32.mrb[0].mxu0
  %v137 = vadd.f32 %v73, %v136
  %v138 = vpop.f32.mrb[0].mxu0
  %v139 = vpop.f32.mrb[0].mxu0
  %140 = vdwg.mxu0
  %vm141 = vcmask 260096
  %v142 = vsel %vm141, %v57, 0.0
  %143 = vadd.xlane.f32.xlu0 %v142
  %v144 = vpop.xlane.xlu0 %143
  %v145 = vrcp.pop 32.0
  %v146 = vmul.f32 %v144, %v145
  %v147 = vsub.f32 %v57, %v146
  %v148 = vmul.f32 %v147, %v147
  %v149 = vsel %vm141, %v148, 0.0
  %150 = vadd.xlane.f32.xlu0 %v149
  %v151 = vpop.xlane.xlu0 %150
  %v152 = vmul.f32 %v151, %v145
  %v153 = vadd.f32 %v152, 1e-06
  %v154 = vrsqrt.pop %v153
  %v155 = vmul.f32 %v147, %v154
  %v156 = vadd.f32 %v135, 1.0
  %158 = vrot.lane.b32.xlu0 %v156, 96
  %v159 = vpop.permute.xlu0 %158
  %v161 = vmul.f32 %v155, %v159
  %v162 = vadd.f32 %v161, %v135
  %v163 = vld [vmem:[%s1] sm:$0xff]
  %v164 = vld [vmem:[%s1 + $0x8] sm:$0xf]
  %vm165 = vcmask 523264
  %v166 = vsel %vm165, %v163, 0.0
  %167 = vadd.xlane.f32.xlu0 %v166
  %v168 = vpop.xlane.xlu0 %167
  %vm169 = vcmask 519168
  %v170 = vsel %vm169, %v164, 0.0
  %171 = vadd.xlane.f32.xlu0 %v170
  %v172 = vpop.xlane.xlu0 %171
  %v173 = vrcp.pop 64.0
  %v174 = vmul.f32 %v168, %v173
  %v175 = vmul.f32 %v172, %v173
  %v176 = vsub.f32 %v163, %v174
  %v177 = vsub.f32 %v164, %v175
  %v178 = vmul.f32 %v176, %v176
  %v179 = vmul.f32 %v177, %v177
  %v180 = vsel %vm165, %v178, 0.0
  %181 = vadd.xlane.f32.xlu0 %v180
  %v182 = vpop.xlane.xlu0 %181
  %v183 = vsel %vm169, %v179, 0.0
  %184 = vadd.xlane.f32.xlu0 %v183
  %v185 = vpop.xlane.xlu0 %184
  %v186 = vmul.f32 %v182, %v173
  %v187 = vmul.f32 %v185, %v173
  %v188 = vadd.f32 %v186, 1e-06
  %v189 = vadd.f32 %v187, 1e-06
  %v190 = vrsqrt.pop %v188
  %v191 = vrsqrt.pop %v189
  %v192 = vmul.f32 %v176, %v190
  %v193 = vmul.f32 %v177, %v191
  %v194 = vpack.c.bf16 %v162, %v162
  %v195 = vld [vmem:[%s7] sm:$0xf]
  %v196 = vld [vmem:[%s7 + $0x4] sm:$0xf]
  %v197 = vld [vmem:[%s7 + $0x8] sm:$0xf]
  %v198 = vld [vmem:[%s7 + $0xc] sm:$0xf]
  %v199 = vld [vmem:[%s8] sm:$0x1]
  %v201 = vlaneseq
  %v202 = vshrl.u32 %v201, 7
  %v203 = vsub.s32 0, %v202
  %v204 = vrot.slane %v199, %v203
  %v210 = vunpack.c.l.b16 %v195
  %v211 = vunpack.c.l.b16 %v196
  %v212 = vunpack.c.l.b16 %v197
  %v213 = vunpack.c.l.b16 %v198
  %v214 = vpack.c.b16 %v211, %v210
  %v215 = vpack.c.b16 %v213, %v212
  %v219 = vsel %vm96, %v194, 0
  %221 = vmatprep.subr.bf16.mxu0 0
  %222 = vmatpush1.bf16.msra.mxu0 %v214
  %223 = vmatprep.subr.bf16.mxu0 0
  %224 = vmatpush1.bf16.msra.mxu0 %v215
  %225 = vmatprep.subr.bf16.mxu0 0
  %226 = vmatpush1.bf16.msra.mxu0 0
  %227 = vmatprep.subr.bf16.mxu0 0
  %228 = vmatpush1.bf16.msra.mxu0 0
  %229 = vmatprep.subr.bf16.mxu0 0
  %230 = vmatpush1.bf16.msra.mxu0 0
  %231 = vmatprep.subr.bf16.mxu0 0
  %232 = vmatpush1.bf16.msra.mxu0 0
  %233 = vmatprep.subr.bf16.mxu0 0
  %234 = vmatpush1.bf16.msra.mxu0 0
  %235 = vmatprep.subr.bf16.mxu0 0
  %236 = vmatpush1.bf16.msra.mxu0 0
  %237 = vmatprep.subr.bf16.mxu0 0
  %238 = vmatpush1.bf16.msra.mxu0 0
  %239 = vmatprep.subr.bf16.mxu0 0
  %240 = vmatpush1.bf16.msra.mxu0 0
  %241 = vmatprep.subr.bf16.mxu0 0
  %242 = vmatpush1.bf16.msra.mxu0 0
  %243 = vmatprep.subr.bf16.mxu0 0
  %244 = vmatpush1.bf16.msra.mxu0 0
  %245 = vmatprep.subr.bf16.mxu0 0
  %246 = vmatpush1.bf16.msra.mxu0 0
  %247 = vmatprep.subr.bf16.mxu0 0
  %248 = vmatpush1.bf16.msra.mxu0 0
  %249 = vmatprep.subr.bf16.mxu0 0
  %250 = vmatpush1.bf16.msra.mxu0 0
  %251 = vmatprep.subr.bf16.mxu0 0
  %252 = vmatpush1.bf16.msra.mxu0 0
  %253 = vmatprep.mubr.bf16.mxu0 0
  %254 = vmatmul.mubr.bf16.gmra.mrb[0].mxu0 %v219
  %v255 = vpop.f32.mrb[0].mxu0
  %v256 = vadd.f32 %v204, %v255
  %v257 = vpop.f32.mrb[0].mxu0
  %v258 = vpop.f32.mrb[0].mxu0
  %v259 = vpop.f32.mrb[0].mxu0
  %260 = vdwg.mxu0
  %v261 = vpack.c.bf16 %v193, %v192
  %v262 = vld [vmem:[%s9] sm:$0xf]
  %v263 = vld [vmem:[%s9 + $0x4] sm:$0xf]
  %v264 = vld [vmem:[%s9 + $0x8] sm:$0xf]
  %v265 = vld [vmem:[%s9 + $0xc] sm:$0xf]
  %v266 = vld [vmem:[%s9 + $0x10] sm:$0xf]
  %v267 = vld [vmem:[%s9 + $0x14] sm:$0xf]
  %v268 = vld [vmem:[%s9 + $0x18] sm:$0xf]
  %v269 = vld [vmem:[%s9 + $0x1c] sm:$0xf]
  %v270 = vld [vmem:[%s10] sm:$0x1]
  %v272 = vlaneseq
  %v273 = vshrl.u32 %v272, 7
  %v274 = vsub.s32 0, %v273
  %v275 = vrot.slane %v270, %v274
  %v285 = vunpack.c.l.b16 %v262
  %v286 = vunpack.c.l.b16 %v263
  %v287 = vunpack.c.l.b16 %v264
  %v288 = vunpack.c.l.b16 %v265
  %v289 = vunpack.c.l.b16 %v266
  %v290 = vunpack.c.l.b16 %v267
  %v291 = vunpack.c.l.b16 %v268
  %v292 = vunpack.c.l.b16 %v269
  %v293 = vpack.c.b16 %v286, %v285
  %v294 = vpack.c.b16 %v288, %v287
  %v295 = vpack.c.b16 %v290, %v289
  %v296 = vpack.c.b16 %v292, %v291
  %v302 = vsel %vm165, %v261, 0
  %304 = vmatprep.subr.bf16.mxu0 0
  %305 = vmatpush1.bf16.msra.mxu0 %v293
  %306 = vmatprep.subr.bf16.mxu0 0
  %307 = vmatpush1.bf16.msra.mxu0 %v294
  %308 = vmatprep.subr.bf16.mxu0 0
  %309 = vmatpush1.bf16.msra.mxu0 %v295
  %310 = vmatprep.subr.bf16.mxu0 0
  %311 = vmatpush1.bf16.msra.mxu0 %v296
  %312 = vmatprep.subr.bf16.mxu0 0
  %313 = vmatpush1.bf16.msra.mxu0 0
  %314 = vmatprep.subr.bf16.mxu0 0
  %315 = vmatpush1.bf16.msra.mxu0 0
  %316 = vmatprep.subr.bf16.mxu0 0
  %317 = vmatpush1.bf16.msra.mxu0 0
  %318 = vmatprep.subr.bf16.mxu0 0
  %319 = vmatpush1.bf16.msra.mxu0 0
  %320 = vmatprep.subr.bf16.mxu0 0
  %321 = vmatpush1.bf16.msra.mxu0 0
  %322 = vmatprep.subr.bf16.mxu0 0
  %323 = vmatpush1.bf16.msra.mxu0 0
  %324 = vmatprep.subr.bf16.mxu0 0
  %325 = vmatpush1.bf16.msra.mxu0 0
  %326 = vmatprep.subr.bf16.mxu0 0
  %327 = vmatpush1.bf16.msra.mxu0 0
  %328 = vmatprep.subr.bf16.mxu0 0
  %329 = vmatpush1.bf16.msra.mxu0 0
  %330 = vmatprep.subr.bf16.mxu0 0
  %331 = vmatpush1.bf16.msra.mxu0 0
  %332 = vmatprep.subr.bf16.mxu0 0
  %333 = vmatpush1.bf16.msra.mxu0 0
  %334 = vmatprep.subr.bf16.mxu0 0
  %335 = vmatpush1.bf16.msra.mxu0 0
  %336 = vmatprep.mubr.bf16.mxu0 0
  %337 = vmatmul.mubr.bf16.gmra.mrb[0].mxu0 %v302
  %v338 = vpop.f32.mrb[0].mxu0
  %v339 = vadd.f32 %v275, %v338
  %v340 = vpop.f32.mrb[0].mxu0
  %v341 = vpop.f32.mrb[0].mxu0
  %v342 = vadd.f32 %v275, %v341
  %v343 = vpop.f32.mrb[0].mxu0
  %344 = vdwg.mxu0
  %v345 = vld [vmem:[%s3] sm:$0x7f]
  %v346 = vld [vmem:[%s4] sm:$0x7f]
  %v347 = vpack.c.bf16 %v256, %v256
  %v348 = vpack.c.bf16 %v342, %v339
  %vm349 = vcmask 130048
  %v351 = vsel %vm349, %v347, 0
  %v354 = vsel %vm349, %v348, 0
  %356 = vmatprep.subr.bf16.mxu0 0
  %357 = vmatpush1.bf16.xpose.msra.mxu0 %v354
  %358 = vmatprep.subr.bf16.mxu0 0
  %359 = vmatpush1.bf16.xpose.msra.mxu0 0
  %360 = vmatprep.subr.bf16.mxu0 0
  %361 = vmatpush1.bf16.xpose.msra.mxu0 0
  %362 = vmatprep.subr.bf16.mxu0 0
  %363 = vmatpush1.bf16.xpose.msra.mxu0 0
  %364 = vmatprep.subr.bf16.mxu0 0
  %365 = vmatpush1.bf16.xpose.msra.mxu0 0
  %366 = vmatprep.subr.bf16.mxu0 0
  %367 = vmatpush1.bf16.xpose.msra.mxu0 0
  %368 = vmatprep.subr.bf16.mxu0 0
  %369 = vmatpush1.bf16.xpose.msra.mxu0 0
  %370 = vmatprep.subr.bf16.mxu0 0
  %371 = vmatpush1.bf16.xpose.msra.mxu0 0
  %372 = vmatprep.subr.bf16.mxu0 0
  %373 = vmatpush1.bf16.xpose.msra.mxu0 0
  %374 = vmatprep.subr.bf16.mxu0 0
  %375 = vmatpush1.bf16.xpose.msra.mxu0 0
  %376 = vmatprep.subr.bf16.mxu0 0
  %377 = vmatpush1.bf16.xpose.msra.mxu0 0
  %378 = vmatprep.subr.bf16.mxu0 0
  %379 = vmatpush1.bf16.xpose.msra.mxu0 0
  %380 = vmatprep.subr.bf16.mxu0 0
  %381 = vmatpush1.bf16.xpose.msra.mxu0 0
  %382 = vmatprep.subr.bf16.mxu0 0
  %383 = vmatpush1.bf16.xpose.msra.mxu0 0
  %384 = vmatprep.subr.bf16.mxu0 0
  %385 = vmatpush1.bf16.xpose.msra.mxu0 0
  %386 = vmatprep.subr.bf16.mxu0 0
  %387 = vmatpush1.bf16.xpose.msra.mxu0 0
  %388 = vmatprep.mubr.bf16.mxu0 0
  %389 = vmatmul.mubr.bf16.gmra.mrb[0].mxu0 %v351
  %v390 = vpop.f32.mrb[0].mxu0
  %v391 = vadd.f32 0.0, %v390
  %v392 = vpop.f32.mrb[0].mxu0
  %v393 = vpop.f32.mrb[0].mxu0
  %v394 = vpop.f32.mrb[0].mxu0
  %395 = vdwg.mxu0
  %v396 = vmul.f32 %v391, 0.25
  %v397 = vadd.f32 %v396, %v345
  %vm398 = vcmask 96256
  %v399 = vsel %vm398, %v397, -inf
  %400 = vmax.xlane.f32.xlu0 %v399
  %v401 = vpop.xlane.xlu0 %400
  %v402 = vsub.f32 %v397, %v401
  %v403 = vmul.f32 %v402, 1.442695
  %v404 = vpow.pop %v403
  %v405 = vsel %vm398, %v404, 0.0
  %406 = vadd.xlane.f32.xlu0 %v405
  %v407 = vpop.xlane.xlu0 %406
  %v408 = vrcp.pop %v407
  %v409 = vmul.f32 %v404, %v408
  %v410 = vpack.c.bf16 %v409, %v409
  %412 = vrot.lane.b32.xlu0 %v348, 96
  %v413 = vpop.permute.xlu0 %412
  %vm414 = vcmask 97280
  %v416 = vsel %vm414, %v410, 0
  %vm418 = vcmask 1045504
  %v420 = vsel %vm418, %v413, 0
  %422 = vmatprep.subr.bf16.mxu0 0
  %423 = vmatpush1.bf16.msra.mxu0 %v420
  %424 = vmatprep.subr.bf16.mxu0 0
  %425 = vmatpush1.bf16.msra.mxu0 0
  %426 = vmatprep.subr.bf16.mxu0 0
  %427 = vmatpush1.bf16.msra.mxu0 0
  %428 = vmatprep.subr.bf16.mxu0 0
  %429 = vmatpush1.bf16.msra.mxu0 0
  %430 = vmatprep.subr.bf16.mxu0 0
  %431 = vmatpush1.bf16.msra.mxu0 0
  %432 = vmatprep.subr.bf16.mxu0 0
  %433 = vmatpush1.bf16.msra.mxu0 0
  %434 = vmatprep.subr.bf16.mxu0 0
  %435 = vmatpush1.bf16.msra.mxu0 0
  %436 = vmatprep.subr.bf16.mxu0 0
  %437 = vmatpush1.bf16.msra.mxu0 0
  %438 = vmatprep.subr.bf16.mxu0 0
  %439 = vmatpush1.bf16.msra.mxu0 0
  %440 = vmatprep.subr.bf16.mxu0 0
  %441 = vmatpush1.bf16.msra.mxu0 0
  %442 = vmatprep.subr.bf16.mxu0 0
  %443 = vmatpush1.bf16.msra.mxu0 0
  %444 = vmatprep.subr.bf16.mxu0 0
  %445 = vmatpush1.bf16.msra.mxu0 0
  %446 = vmatprep.subr.bf16.mxu0 0
  %447 = vmatpush1.bf16.msra.mxu0 0
  %448 = vmatprep.subr.bf16.mxu0 0
  %449 = vmatpush1.bf16.msra.mxu0 0
  %450 = vmatprep.subr.bf16.mxu0 0
  %451 = vmatpush1.bf16.msra.mxu0 0
  %452 = vmatprep.subr.bf16.mxu0 0
  %453 = vmatpush1.bf16.msra.mxu0 0
  %454 = vmatprep.mubr.bf16.mxu0 0
  %455 = vmatmul.mubr.bf16.gmra.mrb[0].mxu0 %v416
  %v456 = vpop.f32.mrb[0].mxu0
  %v457 = vadd.f32 0.0, %v456
  %v458 = vpop.f32.mrb[0].mxu0
  %v459 = vpop.f32.mrb[0].mxu0
  %v460 = vpop.f32.mrb[0].mxu0
  %461 = vdwg.mxu0
  %463 = vrot.lane.b32.xlu0 %v347, 112
  %v464 = vpop.permute.xlu0 %463
  %465 = vrot.lane.b32.xlu0 %v348, 112
  %v466 = vpop.permute.xlu0 %465
  %v468 = vsel %vm349, %v464, 0
  %v471 = vsel %vm349, %v466, 0
  %473 = vmatprep.subr.bf16.mxu0 0
  %474 = vmatpush1.bf16.xpose.msra.mxu0 %v471
  %475 = vmatprep.subr.bf16.mxu0 0
  %476 = vmatpush1.bf16.xpose.msra.mxu0 0
  %477 = vmatprep.subr.bf16.mxu0 0
  %478 = vmatpush1.bf16.xpose.msra.mxu0 0
  %479 = vmatprep.subr.bf16.mxu0 0
  %480 = vmatpush1.bf16.xpose.msra.mxu0 0
  %481 = vmatprep.subr.bf16.mxu0 0
  %482 = vmatpush1.bf16.xpose.msra.mxu0 0
  %483 = vmatprep.subr.bf16.mxu0 0
  %484 = vmatpush1.bf16.xpose.msra.mxu0 0
  %485 = vmatprep.subr.bf16.mxu0 0
  %486 = vmatpush1.bf16.xpose.msra.mxu0 0
  %487 = vmatprep.subr.bf16.mxu0 0
  %488 = vmatpush1.bf16.xpose.msra.mxu0 0
  %489 = vmatprep.subr.bf16.mxu0 0
  %490 = vmatpush1.bf16.xpose.msra.mxu0 0
  %491 = vmatprep.subr.bf16.mxu0 0
  %492 = vmatpush1.bf16.xpose.msra.mxu0 0
  %493 = vmatprep.subr.bf16.mxu0 0
  %494 = vmatpush1.bf16.xpose.msra.mxu0 0
  %495 = vmatprep.subr.bf16.mxu0 0
  %496 = vmatpush1.bf16.xpose.msra.mxu0 0
  %497 = vmatprep.subr.bf16.mxu0 0
  %498 = vmatpush1.bf16.xpose.msra.mxu0 0
  %499 = vmatprep.subr.bf16.mxu0 0
  %500 = vmatpush1.bf16.xpose.msra.mxu0 0
  %501 = vmatprep.subr.bf16.mxu0 0
  %502 = vmatpush1.bf16.xpose.msra.mxu0 0
  %503 = vmatprep.subr.bf16.mxu0 0
  %504 = vmatpush1.bf16.xpose.msra.mxu0 0
  %505 = vmatprep.mubr.bf16.mxu0 0
  %506 = vmatmul.mubr.bf16.gmra.mrb[0].mxu0 %v468
  %v507 = vpop.f32.mrb[0].mxu0
  %v508 = vadd.f32 0.0, %v507
  %v509 = vpop.f32.mrb[0].mxu0
  %v510 = vpop.f32.mrb[0].mxu0
  %v511 = vpop.f32.mrb[0].mxu0
  %512 = vdwg.mxu0
  %v513 = vmul.f32 %v508, 0.25
  %v514 = vadd.f32 %v513, %v345
  %v515 = vsel %vm398, %v514, -inf
  %516 = vmax.xlane.f32.xlu0 %v515
  %v517 = vpop.xlane.xlu0 %516
  %v518 = vsub.f32 %v514, %v517
  %v519 = vmul.f32 %v518, 1.442695
  %v520 = vpow.pop %v519
  %v521 = vsel %vm398, %v520, 0.0
  %522 = vadd.xlane.f32.xlu0 %v521
  %v523 = vpop.xlane.xlu0 %522
  %v524 = vrcp.pop %v523
  %v525 = vmul.f32 %v520, %v524
  %v526 = vpack.c.bf16 %v525, %v525
  %527 = vrot.lane.b32.xlu0 %v348, 80
  %v528 = vpop.permute.xlu0 %527
  %v530 = vsel %vm414, %v526, 0
  %v533 = vsel %vm418, %v528, 0
  %535 = vmatprep.subr.bf16.mxu0 0
  %536 = vmatpush1.bf16.msra.mxu0 %v533
  %537 = vmatprep.subr.bf16.mxu0 0
  %538 = vmatpush1.bf16.msra.mxu0 0
  %539 = vmatprep.subr.bf16.mxu0 0
  %540 = vmatpush1.bf16.msra.mxu0 0
  %541 = vmatprep.subr.bf16.mxu0 0
  %542 = vmatpush1.bf16.msra.mxu0 0
  %543 = vmatprep.subr.bf16.mxu0 0
  %544 = vmatpush1.bf16.msra.mxu0 0
  %545 = vmatprep.subr.bf16.mxu0 0
  %546 = vmatpush1.bf16.msra.mxu0 0
  %547 = vmatprep.subr.bf16.mxu0 0
  %548 = vmatpush1.bf16.msra.mxu0 0
  %549 = vmatprep.subr.bf16.mxu0 0
  %550 = vmatpush1.bf16.msra.mxu0 0
  %551 = vmatprep.subr.bf16.mxu0 0
  %552 = vmatpush1.bf16.msra.mxu0 0
  %553 = vmatprep.subr.bf16.mxu0 0
  %554 = vmatpush1.bf16.msra.mxu0 0
  %555 = vmatprep.subr.bf16.mxu0 0
  %556 = vmatpush1.bf16.msra.mxu0 0
  %557 = vmatprep.subr.bf16.mxu0 0
  %558 = vmatpush1.bf16.msra.mxu0 0
  %559 = vmatprep.subr.bf16.mxu0 0
  %560 = vmatpush1.bf16.msra.mxu0 0
  %561 = vmatprep.subr.bf16.mxu0 0
  %562 = vmatpush1.bf16.msra.mxu0 0
  %563 = vmatprep.subr.bf16.mxu0 0
  %564 = vmatpush1.bf16.msra.mxu0 0
  %565 = vmatprep.subr.bf16.mxu0 0
  %566 = vmatpush1.bf16.msra.mxu0 0
  %567 = vmatprep.mubr.bf16.mxu0 0
  %568 = vmatmul.mubr.bf16.gmra.mrb[0].mxu0 %v530
  %v569 = vpop.f32.mrb[0].mxu0
  %v570 = vadd.f32 0.0, %v569
  %v571 = vpop.f32.mrb[0].mxu0
  %v572 = vpop.f32.mrb[0].mxu0
  %v573 = vpop.f32.mrb[0].mxu0
  %574 = vdwg.mxu0
  %576 = vrot.lane.b32.xlu0 %v570, 16
  %v577 = vpop.permute.xlu0 %576
  %v579 = vsel %vm349, %v457, %v577
  %581 = vset.pattern.permute.xlu0 0
  %582 = vperm.xlu0 %581, %v346
  %v583 = vpop.permute.xlu0 %582
  %v585 = vmul.f32 %v579, %v583
  %v586 = vpack.c.bf16 %v585, %v585
  %v587 = vld [vmem:[%s11] sm:$0xf]
  %v588 = vld [vmem:[%s11 + $0x4] sm:$0xf]
  %v589 = vld [vmem:[%s11 + $0x8] sm:$0xf]
  %v590 = vld [vmem:[%s11 + $0xc] sm:$0xf]
  %v591 = vld [vmem:[%s12] sm:$0x1]
  %v593 = vlaneseq
  %v594 = vshrl.u32 %v593, 7
  %v595 = vsub.s32 0, %v594
  %v596 = vrot.slane %v591, %v595
  %v602 = vunpack.c.l.b16 %v587
  %v603 = vunpack.c.l.b16 %v588
  %v604 = vunpack.c.l.b16 %v589
  %v605 = vunpack.c.l.b16 %v590
  %v606 = vpack.c.b16 %v603, %v602
  %v607 = vpack.c.b16 %v605, %v604
  %v611 = vsel %vm96, %v586, 0
  %613 = vmatprep.subr.bf16.mxu0 0
  %614 = vmatpush1.bf16.msra.mxu0 %v606
  %615 = vmatprep.subr.bf16.mxu0 0
  %616 = vmatpush1.bf16.msra.mxu0 %v607
  %617 = vmatprep.subr.bf16.mxu0 0
  %618 = vmatpush1.bf16.msra.mxu0 0
  %619 = vmatprep.subr.bf16.mxu0 0
  %620 = vmatpush1.bf16.msra.mxu0 0
  %621 = vmatprep.subr.bf16.mxu0 0
  %622 = vmatpush1.bf16.msra.mxu0 0
  %623 = vmatprep.subr.bf16.mxu0 0
  %624 = vmatpush1.bf16.msra.mxu0 0
  %625 = vmatprep.subr.bf16.mxu0 0
  %626 = vmatpush1.bf16.msra.mxu0 0
  %627 = vmatprep.subr.bf16.mxu0 0
  %628 = vmatpush1.bf16.msra.mxu0 0
  %629 = vmatprep.subr.bf16.mxu0 0
  %630 = vmatpush1.bf16.msra.mxu0 0
  %631 = vmatprep.subr.bf16.mxu0 0
  %632 = vmatpush1.bf16.msra.mxu0 0
  %633 = vmatprep.subr.bf16.mxu0 0
  %634 = vmatpush1.bf16.msra.mxu0 0
  %635 = vmatprep.subr.bf16.mxu0 0
  %636 = vmatpush1.bf16.msra.mxu0 0
  %637 = vmatprep.subr.bf16.mxu0 0
  %638 = vmatpush1.bf16.msra.mxu0 0
  %639 = vmatprep.subr.bf16.mxu0 0
  %640 = vmatpush1.bf16.msra.mxu0 0
  %641 = vmatprep.subr.bf16.mxu0 0
  %642 = vmatpush1.bf16.msra.mxu0 0
  %643 = vmatprep.subr.bf16.mxu0 0
  %644 = vmatpush1.bf16.msra.mxu0 0
  %645 = vmatprep.mubr.bf16.mxu0 0
  %646 = vmatmul.mubr.bf16.gmra.mrb[0].mxu0 %v611
  %v647 = vpop.f32.mrb[0].mxu0
  %v648 = vadd.f32 %v596, %v647
  %v649 = vpop.f32.mrb[0].mxu0
  %v650 = vpop.f32.mrb[0].mxu0
  %v651 = vpop.f32.mrb[0].mxu0
  %652 = vdwg.mxu0
  %654 = vrot.lane.b32.xlu0 %v648, 64
  %v655 = vpop.permute.xlu0 %654
  %v657 = vmul.f32 %v135, %v655
  %659 = vrot.lane.b32.xlu0 %v657, 64
  %v660 = vpop.permute.xlu0 %659
  %v662 = vadd.f32 %v57, %v660
  %v663 = vsel %vm141, %v662, 0.0
  %664 = vadd.xlane.f32.xlu0 %v663
  %v665 = vpop.xlane.xlu0 %664
  %v666 = vmul.f32 %v665, %v145
  %v667 = vsub.f32 %v662, %v666
  %v668 = vmul.f32 %v667, %v667
  %v669 = vsel %vm141, %v668, 0.0
  %670 = vadd.xlane.f32.xlu0 %v669
  %v671 = vpop.xlane.xlu0 %670
  %v672 = vmul.f32 %v671, %v145
  %v673 = vadd.f32 %v672, 1e-06
  %v674 = vrsqrt.pop %v673
  %v675 = vmul.f32 %v667, %v674
  %v676 = vadd.f32 %v137, 1.0
  %v677 = vmul.f32 %v675, %v676
  %679 = vrot.lane.b32.xlu0 %v135, 32
  %v680 = vpop.permute.xlu0 %679
  %v682 = vadd.f32 %v677, %v680
  %v683 = vpack.c.bf16 %v682, %v682
  %v684 = vld [vmem:[%s13] sm:$0xf]
  %v685 = vld [vmem:[%s13 + $0x4] sm:$0xf]
  %v686 = vld [vmem:[%s13 + $0x8] sm:$0xf]
  %v687 = vld [vmem:[%s13 + $0xc] sm:$0xf]
  %v688 = vld [vmem:[%s14] sm:$0x1]
  %v690 = vlaneseq
  %v691 = vshrl.u32 %v690, 7
  %v692 = vsub.s32 0, %v691
  %v693 = vrot.slane %v688, %v692
  %v699 = vunpack.c.l.b16 %v684
  %v700 = vunpack.c.l.b16 %v685
  %v701 = vunpack.c.l.b16 %v686
  %v702 = vunpack.c.l.b16 %v687
  %v703 = vpack.c.b16 %v700, %v699
  %v704 = vpack.c.b16 %v702, %v701
  %v708 = vsel %vm96, %v683, 0
  %710 = vmatprep.subr.bf16.mxu0 0
  %711 = vmatpush1.bf16.msra.mxu0 %v703
  %712 = vmatprep.subr.bf16.mxu0 0
  %713 = vmatpush1.bf16.msra.mxu0 %v704
  %714 = vmatprep.subr.bf16.mxu0 0
  %715 = vmatpush1.bf16.msra.mxu0 0
  %716 = vmatprep.subr.bf16.mxu0 0
  %717 = vmatpush1.bf16.msra.mxu0 0
  %718 = vmatprep.subr.bf16.mxu0 0
  %719 = vmatpush1.bf16.msra.mxu0 0
  %720 = vmatprep.subr.bf16.mxu0 0
  %721 = vmatpush1.bf16.msra.mxu0 0
  %722 = vmatprep.subr.bf16.mxu0 0
  %723 = vmatpush1.bf16.msra.mxu0 0
  %724 = vmatprep.subr.bf16.mxu0 0
  %725 = vmatpush1.bf16.msra.mxu0 0
  %726 = vmatprep.subr.bf16.mxu0 0
  %727 = vmatpush1.bf16.msra.mxu0 0
  %728 = vmatprep.subr.bf16.mxu0 0
  %729 = vmatpush1.bf16.msra.mxu0 0
  %730 = vmatprep.subr.bf16.mxu0 0
  %731 = vmatpush1.bf16.msra.mxu0 0
  %732 = vmatprep.subr.bf16.mxu0 0
  %733 = vmatpush1.bf16.msra.mxu0 0
  %734 = vmatprep.subr.bf16.mxu0 0
  %735 = vmatpush1.bf16.msra.mxu0 0
  %736 = vmatprep.subr.bf16.mxu0 0
  %737 = vmatpush1.bf16.msra.mxu0 0
  %738 = vmatprep.subr.bf16.mxu0 0
  %739 = vmatpush1.bf16.msra.mxu0 0
  %740 = vmatprep.subr.bf16.mxu0 0
  %741 = vmatpush1.bf16.msra.mxu0 0
  %742 = vmatprep.mubr.bf16.mxu0 0
  %743 = vmatmul.mubr.bf16.gmra.mrb[0].mxu0 %v708
  %v744 = vpop.f32.mrb[0].mxu0
  %v745 = vadd.f32 %v693, %v744
  %v746 = vpop.f32.mrb[0].mxu0
  %v747 = vpop.f32.mrb[0].mxu0
  %v748 = vpop.f32.mrb[0].mxu0
  %749 = vdwg.mxu0
  %v750 = vmul.f32 %v745, %v745
  %v751 = vmul.f32 %v745, %v750
  %v752 = vmul.f32 %v751, 0.044715
  %v753 = vadd.f32 %v745, %v752
  %v754 = vmul.f32 %v753, 0.7978846
  %v755 = vtanh.pop %v754
  %v756 = vadd.f32 %v755, 1.0
  %v757 = vmul.f32 %v756, 0.5
  %v758 = vmul.f32 %v745, %v757
  %v759 = vpack.c.bf16 %v758, %v758
  %v760 = vld [vmem:[%s15] sm:$0xf]
  %v761 = vld [vmem:[%s15 + $0x4] sm:$0xf]
  %v762 = vld [vmem:[%s15 + $0x8] sm:$0xf]
  %v763 = vld [vmem:[%s15 + $0xc] sm:$0xf]
  %v764 = vld [vmem:[%s15 + $0x10] sm:$0xf]
  %v765 = vld [vmem:[%s15 + $0x14] sm:$0xf]
  %v766 = vld [vmem:[%s15 + $0x18] sm:$0xf]
  %v767 = vld [vmem:[%s15 + $0x1c] sm:$0xf]
  %v768 = vld [vmem:[%s15 + $0x20] sm:$0xf]
  %v769 = vld [vmem:[%s15 + $0x24] sm:$0xf]
  %v770 = vld [vmem:[%s15 + $0x28] sm:$0xf]
  %v771 = vld [vmem:[%s15 + $0x2c] sm:$0xf]
  %v772 = vld [vmem:[%s15 + $0x30] sm:$0xf]
  %v773 = vld [vmem:[%s15 + $0x34] sm:$0xf]
  %v774 = vld [vmem:[%s15 + $0x38] sm:$0xf]
  %v775 = vld [vmem:[%s15 + $0x3c] sm:$0xf]
  %v776 = vld [vmem:[%s16] sm:$0x1]
  %v778 = vlaneseq
  %v779 = vshrl.u32 %v778, 7
  %v780 = vsub.s32 0, %v779
  %v781 = vrot.slane %v776, %v780
  %v799 = vunpack.c.l.b16 %v760
  %v800 = vunpack.c.l.b16 %v761
  %v801 = vunpack.c.l.b16 %v762
  %v802 = vunpack.c.l.b16 %v763
  %v803 = vunpack.c.l.b16 %v764
  %v804 = vunpack.c.l.b16 %v765
  %v805 = vunpack.c.l.b16 %v766
  %v806 = vunpack.c.l.b16 %v767
  %v807 = vunpack.c.l.b16 %v768
  %v808 = vunpack.c.l.b16 %v769
  %v809 = vunpack.c.l.b16 %v770
  %v810 = vunpack.c.l.b16 %v771
  %v811 = vunpack.c.l.b16 %v772
  %v812 = vunpack.c.l.b16 %v773
  %v813 = vunpack.c.l.b16 %v774
  %v814 = vunpack.c.l.b16 %v775
  %v815 = vpack.c.b16 %v800, %v799
  %v816 = vpack.c.b16 %v802, %v801
  %v817 = vpack.c.b16 %v804, %v803
  %v818 = vpack.c.b16 %v806, %v805
  %v819 = vpack.c.b16 %v808, %v807
  %v820 = vpack.c.b16 %v810, %v809
  %v821 = vpack.c.b16 %v812, %v811
  %v822 = vpack.c.b16 %v814, %v813
  %831 = vmatprep.subr.bf16.mxu0 0
  %832 = vmatpush1.bf16.msra.mxu0 %v815
  %833 = vmatprep.subr.bf16.mxu0 0
  %834 = vmatpush1.bf16.msra.mxu0 %v816
  %835 = vmatprep.subr.bf16.mxu0 0
  %836 = vmatpush1.bf16.msra.mxu0 %v817
  %837 = vmatprep.subr.bf16.mxu0 0
  %838 = vmatpush1.bf16.msra.mxu0 %v818
  %839 = vmatprep.subr.bf16.mxu0 0
  %840 = vmatpush1.bf16.msra.mxu0 %v819
  %841 = vmatprep.subr.bf16.mxu0 0
  %842 = vmatpush1.bf16.msra.mxu0 %v820
  %843 = vmatprep.subr.bf16.mxu0 0
  %844 = vmatpush1.bf16.msra.mxu0 %v821
  %845 = vmatprep.subr.bf16.mxu0 0
  %846 = vmatpush1.bf16.msra.mxu0 %v822
  %847 = vmatprep.subr.bf16.mxu0 0
  %848 = vmatpush1.bf16.msra.mxu0 0
  %849 = vmatprep.subr.bf16.mxu0 0
  %850 = vmatpush1.bf16.msra.mxu0 0
  %851 = vmatprep.subr.bf16.mxu0 0
  %852 = vmatpush1.bf16.msra.mxu0 0
  %853 = vmatprep.subr.bf16.mxu0 0
  %854 = vmatpush1.bf16.msra.mxu0 0
  %855 = vmatprep.subr.bf16.mxu0 0
  %856 = vmatpush1.bf16.msra.mxu0 0
  %857 = vmatprep.subr.bf16.mxu0 0
  %858 = vmatpush1.bf16.msra.mxu0 0
  %859 = vmatprep.subr.bf16.mxu0 0
  %860 = vmatpush1.bf16.msra.mxu0 0
  %861 = vmatprep.subr.bf16.mxu0 0
  %862 = vmatpush1.bf16.msra.mxu0 0
  %863 = vmatprep.mubr.bf16.mxu0 0
  %864 = vmatmul.mubr.bf16.gmra.mrb[0].mxu0 %v759
  %v865 = vpop.f32.mrb[0].mxu0
  %v866 = vadd.f32 %v781, %v865
  %v867 = vpop.f32.mrb[0].mxu0
  %v868 = vpop.f32.mrb[0].mxu0
  %v869 = vpop.f32.mrb[0].mxu0
  %870 = vdwg.mxu0
  %872 = vrot.lane.b32.xlu0 %v866, 32
  %v873 = vpop.permute.xlu0 %872
  %v875 = vmul.f32 %v137, %v873
  %877 = vrot.lane.b32.xlu0 %v875, 96
  %v878 = vpop.permute.xlu0 %877
  %v880 = vadd.f32 %v662, %v878
  %881 = vst.msk [vmem:[%s17] sm:$0x7f] %vm141, %v880
  // Predicated region
  $region70: #{fwd.20} parent=0 // pred_check
    _
  $region71: #{fwd.20} parent=0 // pred_check_branch
    %883 = sbr.rel (0) target = $region73
  $region72: #{fwd.20} parent=0 // pred_region
    _
  $region73: #{fwd.20} parent=0 // pred_fallthru
    _
  // Predicated region
  $region74: #{fwd.20} parent=0 // pred_check
    _
  $region75: #{fwd.20} parent=0 // pred_check_branch
    %885 = sbr.rel (0) target = $region77
  $region76: #{fwd.20} parent=0 // pred_region
    _
  $region77: #{fwd.20} parent=0 // pred_fallthru
    _

// kernel: fwd.21
$region0: #{fwd.21}
  #allocation0 [shape = 'u32[]', space=smem, size = 0x4, offset = 0x4, fixed_abs, tag = 'smem constant byte address 0x4 - core index']
  #allocation1 [shape = 'u32[144,128]{1,0:T(1,128)}', space=vmem, size = 0x12000, scoped, tag = 'internal scratch']
  %s0 = inlined_call_operand.vmem [shape: f32[12,64], index: 0, kind: input, shape index: {}, may-alias: {0,17}]
  %s1 = inlined_call_operand.vmem [shape: f32[7,32], index: 1, kind: input, shape index: {}]
  %s2 = inlined_call_operand.vmem [shape: f32[12,64], index: 2, kind: input, shape index: {}]
  %s3 = inlined_call_operand.vmem [shape: f32[12,7], index: 3, kind: input, shape index: {}]
  %s4 = inlined_call_operand.vmem [shape: f32[12,1], index: 4, kind: input, shape index: {}]
  %s5 = inlined_call_operand.vmem [shape: bf16[64,384], index: 5, kind: input, shape index: {}]
  %s6 = inlined_call_operand.vmem [shape: f32[1,384], index: 6, kind: input, shape index: {}]
  %s7 = inlined_call_operand.vmem [shape: bf16[64,64], index: 7, kind: input, shape index: {}]
  %s8 = inlined_call_operand.vmem [shape: f32[1,64], index: 8, kind: input, shape index: {}]
  %s9 = inlined_call_operand.vmem [shape: bf16[32,128], index: 9, kind: input, shape index: {}]
  %s10 = inlined_call_operand.vmem [shape: f32[1,128], index: 10, kind: input, shape index: {}]
  %s11 = inlined_call_operand.vmem [shape: bf16[64,64], index: 11, kind: input, shape index: {}]
  %s12 = inlined_call_operand.vmem [shape: f32[1,64], index: 12, kind: input, shape index: {}]
  %s13 = inlined_call_operand.vmem [shape: bf16[64,256], index: 13, kind: input, shape index: {}]
  %s14 = inlined_call_operand.vmem [shape: f32[1,256], index: 14, kind: input, shape index: {}]
  %s15 = inlined_call_operand.vmem [shape: bf16[256,64], index: 15, kind: input, shape index: {}]
  %s16 = inlined_call_operand.vmem [shape: f32[1,64], index: 16, kind: input, shape index: {}]
  %s17 = inlined_call_operand.vmem [shape: f32[12,64], index: 17, kind: output, shape index: {}, may-alias: {0,17}]
  %s18 = sld [smem:[#allocation0]]
  $region78: #{fwd.21} parent=0
    _
  %s20 = ssub.s32 1, %s18
  %s21 = scalar_select 0, %s20, %s18
  // Predicated region
  $region2: #{fwd.21} parent=0 // pred_check
    _
  $region3: #{fwd.21} parent=0 // pred_check_branch
    %23 = sbr.rel (0) target = $region5
  $region4: #{fwd.21} parent=0 // pred_region
    _
  $region5: #{fwd.21} parent=0 // pred_fallthru
    _
  // Predicated region
  $region6: #{fwd.21} parent=0 // pred_check
    _
  $region7: #{fwd.21} parent=0 // pred_check_branch
    %25 = sbr.rel (0) target = $region9
  $region8: #{fwd.21} parent=0 // pred_region
    _
  $region9: #{fwd.21} parent=0 // pred_fallthru
    _
  // Predicated region
  $region10: #{fwd.21} parent=0 // pred_check
    _
  $region11: #{fwd.21} parent=0 // pred_check_branch
    %27 = sbr.rel (0) target = $region13
  $region12: #{fwd.21} parent=0 // pred_region
    _
  $region13: #{fwd.21} parent=0 // pred_fallthru
    _
  // Predicated region
  $region14: #{fwd.21} parent=0 // pred_check
    _
  $region15: #{fwd.21} parent=0 // pred_check_branch
    %29 = sbr.rel (0) target = $region17
  $region16: #{fwd.21} parent=0 // pred_region
    _
  $region17: #{fwd.21} parent=0 // pred_fallthru
    _
  // Predicated region
  $region18: #{fwd.21} parent=0 // pred_check
    _
  $region19: #{fwd.21} parent=0 // pred_check_branch
    %31 = sbr.rel (0) target = $region21
  $region20: #{fwd.21} parent=0 // pred_region
    _
  $region21: #{fwd.21} parent=0 // pred_fallthru
    _
  // Predicated region
  $region22: #{fwd.21} parent=0 // pred_check
    _
  $region23: #{fwd.21} parent=0 // pred_check_branch
    %33 = sbr.rel (0) target = $region25
  $region24: #{fwd.21} parent=0 // pred_region
    _
  $region25: #{fwd.21} parent=0 // pred_fallthru
    _
  // Predicated region
  $region26: #{fwd.21} parent=0 // pred_check
    _
  $region27: #{fwd.21} parent=0 // pred_check_branch
    %35 = sbr.rel (0) target = $region29
  $region28: #{fwd.21} parent=0 // pred_region
    _
  $region29: #{fwd.21} parent=0 // pred_fallthru
    _
  // Predicated region
  $region30: #{fwd.21} parent=0 // pred_check
    _
  $region31: #{fwd.21} parent=0 // pred_check_branch
    %37 = sbr.rel (0) target = $region33
  $region32: #{fwd.21} parent=0 // pred_region
    _
  $region33: #{fwd.21} parent=0 // pred_fallthru
    _
  // Predicated region
  $region34: #{fwd.21} parent=0 // pred_check
    _
  $region35: #{fwd.21} parent=0 // pred_check_branch
    %39 = sbr.rel (0) target = $region37
  $region36: #{fwd.21} parent=0 // pred_region
    _
  $region37: #{fwd.21} parent=0 // pred_fallthru
    _
  // Predicated region
  $region38: #{fwd.21} parent=0 // pred_check
    _
  $region39: #{fwd.21} parent=0 // pred_check_branch
    %41 = sbr.rel (0) target = $region41
  $region40: #{fwd.21} parent=0 // pred_region
    _
  $region41: #{fwd.21} parent=0 // pred_fallthru
    _
  // Predicated region
  $region42: #{fwd.21} parent=0 // pred_check
    _
  $region43: #{fwd.21} parent=0 // pred_check_branch
    %43 = sbr.rel (0) target = $region45
  $region44: #{fwd.21} parent=0 // pred_region
    _
  $region45: #{fwd.21} parent=0 // pred_fallthru
    _
  // Predicated region
  $region46: #{fwd.21} parent=0 // pred_check
    _
  $region47: #{fwd.21} parent=0 // pred_check_branch
    %45 = sbr.rel (0) target = $region49
  $region48: #{fwd.21} parent=0 // pred_region
    _
  $region49: #{fwd.21} parent=0 // pred_fallthru
    _
  // Predicated region
  $region50: #{fwd.21} parent=0 // pred_check
    _
  $region51: #{fwd.21} parent=0 // pred_check_branch
    %47 = sbr.rel (0) target = $region53
  $region52: #{fwd.21} parent=0 // pred_region
    _
  $region53: #{fwd.21} parent=0 // pred_fallthru
    _
  // Predicated region
  $region54: #{fwd.21} parent=0 // pred_check
    _
  $region55: #{fwd.21} parent=0 // pred_check_branch
    %49 = sbr.rel (0) target = $region57
  $region56: #{fwd.21} parent=0 // pred_region
    _
  $region57: #{fwd.21} parent=0 // pred_fallthru
    _
  // Predicated region
  $region58: #{fwd.21} parent=0 // pred_check
    _
  $region59: #{fwd.21} parent=0 // pred_check_branch
    %51 = sbr.rel (0) target = $region61
  $region60: #{fwd.21} parent=0 // pred_region
    _
  $region61: #{fwd.21} parent=0 // pred_fallthru
    _
  // Predicated region
  $region62: #{fwd.21} parent=0 // pred_check
    _
  $region63: #{fwd.21} parent=0 // pred_check_branch
    %53 = sbr.rel (0) target = $region65
  $region64: #{fwd.21} parent=0 // pred_region
    _
  $region65: #{fwd.21} parent=0 // pred_fallthru
    _
  // Predicated region
  $region66: #{fwd.21} parent=0 // pred_check
    _
  $region67: #{fwd.21} parent=0 // pred_check_branch
    %55 = sbr.rel (0) target = $region69
  $region68: #{fwd.21} parent=0 // pred_region
    _
  $region69: #{fwd.21} parent=0 // pred_fallthru
    _
  %v57 = vld [vmem:[%s0] sm:$0xff]
  %v58 = vld [vmem:[%s0 + $0x8] sm:$0xf]
  %v59 = vld [vmem:[%s2] sm:$0xff]
  %v60 = vld [vmem:[%s2 + $0x8] sm:$0xf]
  %v61 = vpack.c.bf16 %v60, %v59
  %v62 = vld [vmem:[%s5] sm:$0xff]
  %v63 = vld [vmem:[%s5 + $0x8] sm:$0xf]
  %v64 = vld [vmem:[%s5 + $0xc] sm:$0xff]
  %v65 = vld [vmem:[%s5 + $0x14] sm:$0xf]
  %v66 = vld [vmem:[%s5 + $0x18] sm:$0xff]
  %v67 = vld [vmem:[%s5 + $0x20] sm:$0xf]
  %v68 = vld [vmem:[%s5 + $0x24] sm:$0xff]
  %v69 = vld [vmem:[%s5 + $0x2c] sm:$0xf]
  %v70 = vld [vmem:[%s5 + $0x30] sm:$0xff]
  %v71 = vld [vmem:[%s5 + $0x38] sm:$0xf]
  %v72 = vld [vmem:[%s5 + $0x3c] sm:$0xff]
  %v73 = vld [vmem:[%s5 + $0x44] sm:$0xf]
  %v74 = vld [vmem:[%s5 + $0x48] sm:$0xff]
  %v75 = vld [vmem:[%s5 + $0x50] sm:$0xf]
  %v76 = vld [vmem:[%s5 + $0x54] sm:$0xff]
  %v77 = vld [vmem:[%s5 + $0x5c] sm:$0xf]
  %v78 = vld [vmem:[%s6] sm:$0x7]
  %v80 = vlaneseq
  %v81 = vshrl.u32 %v80, 7
  %v82 = vsub.s32 0, %v81
  %v83 = vrot.slane %v78, %v82
  %v84 = vlaneseq
  %v85 = vshrl.u32 %v84, 7
  %v86 = vsub.s32 1, %v85
  %v87 = vrot.slane %v78, %v86
  %v88 = vlaneseq
  %v89 = vshrl.u32 %v88, 7
  %v90 = vsub.s32 2, %v89
  %v91 = vrot.slane %v78, %v90
  %v111 = vunpack.c.l.b16 %v62
  %v112 = vunpack.c.h.b16 %v62
  %v113 = vunpack.c.l.b16 %v63
  %v114 = vunpack.c.l.b16 %v64
  %v115 = vunpack.c.h.b16 %v64
  %v116 = vunpack.c.l.b16 %v65
  %v117 = vunpack.c.l.b16 %v66
  %v118 = vunpack.c.h.b16 %v66
  %v119 = vunpack.c.l.b16 %v67
  %v120 = vunpack.c.l.b16 %v68
  %v121 = vunpack.c.h.b16 %v68
  %v122 = vunpack.c.l.b16 %v69
  %v123 = vunpack.c.l.b16 %v70
  %v124 = vunpack.c.h.b16 %v70
  %v125 = vunpack.c.l.b16 %v71
  %v126 = vunpack.c.l.b16 %v72
  %v127 = vunpack.c.h.b16 %v72
  %v128 = vunpack.c.l.b16 %v73
  %v129 = vunpack.c.l.b16 %v74
  %v130 = vunpack.c.h.b16 %v74
  %v131 = vunpack.c.l.b16 %v75
  %v132 = vunpack.c.l.b16 %v76
  %v133 = vunpack.c.h.b16 %v76
  %v134 = vunpack.c.l.b16 %v77
  %v135 = vpack.c.b16 %v114, %v111
  %v136 = vpack.c.b16 %v115, %v112
  %v137 = vpack.c.b16 %v116, %v113
  %v138 = vpack.c.b16 %v120, %v117
  %v139 = vpack.c.b16 %v121, %v118
  %v140 = vpack.c.b16 %v122, %v119
  %v141 = vpack.c.b16 %v126, %v123
  %v142 = vpack.c.b16 %v127, %v124
  %v143 = vpack.c.b16 %v128, %v125
  %v144 = vpack.c.b16 %v132, %v129
  %v145 = vpack.c.b16 %v133, %v130
  %v146 = vpack.c.b16 %v134, %v131
  %vm159 = vcmask 523264
  %v161 = vsel %vm159, %v61, 0
  %163 = vmatprep.subr.bf16.mxu0 %v136
  %164 = vmatpush1.bf16.msra.mxu0 %v135
  %165 = vmatprep.subr.bf16.mxu0 %v139
  %166 = vmatpush1.bf16.msra.mxu0 %v138
  %167 = vmatprep.subr.bf16.mxu0 %v142
  %168 = vmatpush1.bf16.msra.mxu0 %v141
  %169 = vmatprep.subr.bf16.mxu0 %v145
  %170 = vmatpush1.bf16.msra.mxu0 %v144
  %171 = vmatprep.subr.bf16.mxu0 0
  %172 = vmatpush1.bf16.msra.mxu0 0
  %173 = vmatprep.subr.bf16.mxu0 0
  %174 = vmatpush1.bf16.msra.mxu0 0
  %175 = vmatprep.subr.bf16.mxu0 0
  %176 = vmatpush1.bf16.msra.mxu0 0
  %177 = vmatprep.subr.bf16.mxu0 0
  %178 = vmatpush1.bf16.msra.mxu0 0
  %179 = vmatprep.subr.bf16.mxu0 0
  %180 = vmatpush1.bf16.msra.mxu0 0
  %181 = vmatprep.subr.bf16.mxu0 0
  %182 = vmatpush1.bf16.msra.mxu0 0
  %183 = vmatprep.subr.bf16.mxu0 0
  %184 = vmatpush1.bf16.msra.mxu0 0
  %185 = vmatprep.subr.bf16.mxu0 0
  %186 = vmatpush1.bf16.msra.mxu0 0
  %187 = vmatprep.subr.bf16.mxu0 0
  %188 = vmatpush1.bf16.msra.mxu0 0
  %189 = vmatprep.subr.bf16.mxu0 0
  %190 = vmatpush1.bf16.msra.mxu0 0
  %191 = vmatprep.subr.bf16.mxu0 0
  %192 = vmatpush1.bf16.msra.mxu0 0
  %193 = vmatprep.subr.bf16.mxu0 0
  %194 = vmatpush1.bf16.msra.mxu0 0
  %195 = vmatprep.mubr.bf16.mxu0 0
  %196 = vmatmul.mubr.bf16.gmra.mrb[0].mxu0 %v161
  %v197 = vpop.f32.mrb[0].mxu0
  %v198 = vadd.f32 %v83, %v197
  %v199 = vpop.f32.mrb[0].mxu0
  %v200 = vadd.f32 %v87, %v199
  %v201 = vpop.f32.mrb[0].mxu0
  %v202 = vadd.f32 %v83, %v201
  %v203 = vpop.f32.mrb[0].mxu0
  %v204 = vadd.f32 %v87, %v203
  %205 = vdwg.mxu0
  %206 = vmatprep.subr.bf16.mxu0 0
  %207 = vmatpush1.bf16.msra.mxu0 %v137
  %208 = vmatprep.subr.bf16.mxu0 0
  %209 = vmatpush1.bf16.msra.mxu0 %v140
  %210 = vmatprep.subr.bf16.mxu0 0
  %211 = vmatpush1.bf16.msra.mxu0 %v143
  %212 = vmatprep.subr.bf16.mxu0 0
  %213 = vmatpush1.bf16.msra.mxu0 %v146
  %214 = vmatprep.subr.bf16.mxu0 0
  %215 = vmatpush1.bf16.msra.mxu0 0
  %216 = vmatprep.subr.bf16.mxu0 0
  %217 = vmatpush1.bf16.msra.mxu0 0
  %218 = vmatprep.subr.bf16.mxu0 0
  %219 = vmatpush1.bf16.msra.mxu0 0
  %220 = vmatprep.subr.bf16.mxu0 0
  %221 = vmatpush1.bf16.msra.mxu0 0
  %222 = vmatprep.subr.bf16.mxu0 0
  %223 = vmatpush1.bf16.msra.mxu0 0
  %224 = vmatprep.subr.bf16.mxu0 0
  %225 = vmatpush1.bf16.msra.mxu0 0
  %226 = vmatprep.subr.bf16.mxu0 0
  %227 = vmatpush1.bf16.msra.mxu0 0
  %228 = vmatprep.subr.bf16.mxu0 0
  %229 = vmatpush1.bf16.msra.mxu0 0
  %230 = vmatprep.subr.bf16.mxu0 0
  %231 = vmatpush1.bf16.msra.mxu0 0
  %232 = vmatprep.subr.bf16.mxu0 0
  %233 = vmatpush1.bf16.msra.mxu0 0
  %234 = vmatprep.subr.bf16.mxu0 0
  %235 = vmatpush1.bf16.msra.mxu0 0
  %236 = vmatprep.subr.bf16.mxu0 0
  %237 = vmatpush1.bf16.msra.mxu0 0
  %238 = vmatprep.mubr.bf16.mxu0 0
  %239 = vmatmul.mubr.bf16.gmra.mrb[0].mxu0 %v161
  %v240 = vpop.f32.mrb[0].mxu0
  %v241 = vadd.f32 %v91, %v240
  %v242 = vpop.f32.mrb[0].mxu0
  %v243 = vpop.f32.mrb[0].mxu0
  %v244 = vadd.f32 %v91, %v243
  %v245 = vpop.f32.mrb[0].mxu0
  %246 = vdwg.mxu0
  %v247 = vsel %vm159, %v57, 0.0
  %248 = vadd.xlane.f32.xlu0 %v247
  %v249 = vpop.xlane.xlu0 %248
  %vm250 = vcmask 519168
  %v251 = vsel %vm250, %v58, 0.0
  %252 = vadd.xlane.f32.xlu0 %v251
  %v253 = vpop.xlane.xlu0 %252
  %v254 = vrcp.pop 64.0
  %v255 = vmul.f32 %v249, %v254
  %v256 = vmul.f32 %v253, %v254
  %v257 = vsub.f32 %v57, %v255
  %v258 = vsub.f32 %v58, %v256
  %v259 = vmul.f32 %v257, %v257
  %v260 = vmul.f32 %v258, %v258
  %v261 = vsel %vm159, %v259, 0.0
  %262 = vadd.xlane.f32.xlu0 %v261
  %v263 = vpop.xlane.xlu0 %262
  %v264 = vsel %vm250, %v260, 0.0
  %265 = vadd.xlane.f32.xlu0 %v264
  %v266 = vpop.xlane.xlu0 %265
  %v267 = vmul.f32 %v263, %v254
  %v268 = vmul.f32 %v266, %v254
  %v269 = vadd.f32 %v267, 1e-06
  %v270 = vadd.f32 %v268, 1e-06
  %v271 = vrsqrt.pop %v269
  %v272 = vrsqrt.pop %v270
  %v273 = vmul.f32 %v257, %v271
  %v274 = vmul.f32 %v258, %v272
  %v275 = vadd.f32 %v198, 1.0
  %v276 = vadd.f32 %v202, 1.0
  %279 = vrot.lane.b32.xlu0 %v275, 64
  %v280 = vpop.permute.xlu0 %279
  %281 = vrot.lane.b32.xlu0 %v276, 64
  %v282 = vpop.permute.xlu0 %281
  %v285 = vmul.f32 %v273, %v280
  %v286 = vmul.f32 %v274, %v282
  %v287 = vadd.f32 %v285, %v198
  %v288 = vadd.f32 %v286, %v202
  %v289 = vld [vmem:[%s1] sm:$0x7f]
  %vm290 = vcmask 260096
  %v291 = vsel %vm290, %v289, 0.0
  %292 = vadd.xlane.f32.xlu0 %v291
  %v293 = vpop.xlane.xlu0 %292
  %v294 = vrcp.pop 32.0
  %v295 = vmul.f32 %v293, %v294
  %v296 = vsub.f32 %v289, %v295
  %v297 = vmul.f32 %v296, %v296
  %v298 = vsel %vm290, %v297, 0.0
  %299 = vadd.xlane.f32.xlu0 %v298
  %v300 = vpop.xlane.xlu0 %299
  %v301 = vmul.f32 %v300, %v294
  %v302 = vadd.f32 %v301, 1e-06
  %v303 = vrsqrt.pop %v302
  %v304 = vmul.f32 %v296, %v303
  %v305 = vpack.c.bf16 %v288, %v287
  %v306 = vld [vmem:[%s7] sm:$0xf]
  %v307 = vld [vmem:[%s7 + $0x4] sm:$0xf]
  %v308 = vld [vmem:[%s7 + $0x8] sm:$0xf]
  %v309 = vld [vmem:[%s7 + $0xc] sm:$0xf]
  %v310 = vld [vmem:[%s7 + $0x10] sm:$0xf]
  %v311 = vld [vmem:[%s7 + $0x14] sm:$0xf]
  %v312 = vld [vmem:[%s7 + $0x18] sm:$0xf]
  %v313 = vld [vmem:[%s7 + $0x1c] sm:$0xf]
  %v314 = vld [vmem:[%s8] sm:$0x1]
  %v316 = vlaneseq
  %v317 = vshrl.u32 %v316, 7
  %v318 = vsub.s32 0, %v317
  %v319 = vrot.slane %v314, %v318
  %v329 = vunpack.c.l.b16 %v306
  %v330 = vunpack.c.l.b16 %v307
  %v331 = vunpack.c.l.b16 %v308
  %v332 = vunpack.c.l.b16 %v309
  %v333 = vunpack.c.l.b16 %v310
  %v334 = vunpack.c.l.b16 %v311
  %v335 = vunpack.c.l.b16 %v312
  %v336 = vunpack.c.l.b16 %v313
  %v337 = vpack.c.b16 %v330, %v329
  %v338 = vpack.c.b16 %v332, %v331
  %v339 = vpack.c.b16 %v334, %v333
  %v340 = vpack.c.b16 %v336, %v335
  %v346 = vsel %vm159, %v305, 0
  %348 = vmatprep.subr.bf16.mxu0 0
  %349 = vmatpush1.bf16.msra.mxu0 %v337
  %350 = vmatprep.subr.bf16.mxu0 0
  %351 = vmatpush1.bf16.msra.mxu0 %v338
  %352 = vmatprep.subr.bf16.mxu0 0
  %353 = vmatpush1.bf16.msra.mxu0 %v339
  %354 = vmatprep.subr.bf16.mxu0 0
  %355 = vmatpush1.bf16.msra.mxu0 %v340
  %356 = vmatprep.subr.bf16.mxu0 0
  %357 = vmatpush1.bf16.msra.mxu0 0
  %358 = vmatprep.subr.bf16.mxu0 0
  %359 = vmatpush1.bf16.msra.mxu0 0
  %360 = vmatprep.subr.bf16.mxu0 0
  %361 = vmatpush1.bf16.msra.mxu0 0
  %362 = vmatprep.subr.bf16.mxu0 0
  %363 = vmatpush1.bf16.msra.mxu0 0
  %364 = vmatprep.subr.bf16.mxu0 0
  %365 = vmatpush1.bf16.msra.mxu0 0
  %366 = vmatprep.subr.bf16.mxu0 0
  %367 = vmatpush1.bf16.msra.mxu0 0
  %368 = vmatprep.subr.bf16.mxu0 0
  %369 = vmatpush1.bf16.msra.mxu0 0
  %370 = vmatprep.subr.bf16.mxu0 0
  %371 = vmatpush1.bf16.msra.mxu0 0
  %372 = vmatprep.subr.bf16.mxu0 0
  %373 = vmatpush1.bf16.msra.mxu0 0
  %374 = vmatprep.subr.bf16.mxu0 0
  %375 = vmatpush1.bf16.msra.mxu0 0
  %376 = vmatprep.subr.bf16.mxu0 0
  %377 = vmatpush1.bf16.msra.mxu0 0
  %378 = vmatprep.subr.bf16.mxu0 0
  %379 = vmatpush1.bf16.msra.mxu0 0
  %380 = vmatprep.mubr.bf16.mxu0 0
  %381 = vmatmul.mubr.bf16.gmra.mrb[0].mxu0 %v346
  %v382 = vpop.f32.mrb[0].mxu0
  %v383 = vadd.f32 %v319, %v382
  %v384 = vpop.f32.mrb[0].mxu0
  %v385 = vpop.f32.mrb[0].mxu0
  %v386 = vadd.f32 %v319, %v385
  %v387 = vpop.f32.mrb[0].mxu0
  %388 = vdwg.mxu0
  %v389 = vpack.c.bf16 %v304, %v304
  %v390 = vld [vmem:[%s9] sm:$0xf]
  %v391 = vld [vmem:[%s9 + $0x4] sm:$0xf]
  %v392 = vld [vmem:[%s9 + $0x8] sm:$0xf]
  %v393 = vld [vmem:[%s9 + $0xc] sm:$0xf]
  %v394 = vld [vmem:[%s10] sm:$0x1]
  %v396 = vlaneseq
  %v397 = vshrl.u32 %v396, 7
  %v398 = vsub.s32 0, %v397
  %v399 = vrot.slane %v394, %v398
  %v405 = vunpack.c.l.b16 %v390
  %v406 = vunpack.c.l.b16 %v391
  %v407 = vunpack.c.l.b16 %v392
  %v408 = vunpack.c.l.b16 %v393
  %v409 = vpack.c.b16 %v406, %v405
  %v410 = vpack.c.b16 %v408, %v407
  %vm413 = vcmask 261120
  %v415 = vsel %vm413, %v389, 0
  %417 = vmatprep.subr.bf16.mxu0 0
  %418 = vmatpush1.bf16.msra.mxu0 %v409
  %419 = vmatprep.subr.bf16.mxu0 0
  %420 = vmatpush1.bf16.msra.mxu0 %v410
  %421 = vmatprep.subr.bf16.mxu0 0
  %422 = vmatpush1.bf16.msra.mxu0 0
  %423 = vmatprep.subr.bf16.mxu0 0
  %424 = vmatpush1.bf16.msra.mxu0 0
  %425 = vmatprep.subr.bf16.mxu0 0
  %426 = vmatpush1.bf16.msra.mxu0 0
  %427 = vmatprep.subr.bf16.mxu0 0
  %428 = vmatpush1.bf16.msra.mxu0 0
  %429 = vmatprep.subr.bf16.mxu0 0
  %430 = vmatpush1.bf16.msra.mxu0 0
  %431 = vmatprep.subr.bf16.mxu0 0
  %432 = vmatpush1.bf16.msra.mxu0 0
  %433 = vmatprep.subr.bf16.mxu0 0
  %434 = vmatpush1.bf16.msra.mxu0 0
  %435 = vmatprep.subr.bf16.mxu0 0
  %436 = vmatpush1.bf16.msra.mxu0 0
  %437 = vmatprep.subr.bf16.mxu0 0
  %438 = vmatpush1.bf16.msra.mxu0 0
  %439 = vmatprep.subr.bf16.mxu0 0
  %440 = vmatpush1.bf16.msra.mxu0 0
  %441 = vmatprep.subr.bf16.mxu0 0
  %442 = vmatpush1.bf16.msra.mxu0 0
  %443 = vmatprep.subr.bf16.mxu0 0
  %444 = vmatpush1.bf16.msra.mxu0 0
  %445 = vmatprep.subr.bf16.mxu0 0
  %446 = vmatpush1.bf16.msra.mxu0 0
  %447 = vmatprep.subr.bf16.mxu0 0
  %448 = vmatpush1.bf16.msra.mxu0 0
  %449 = vmatprep.mubr.bf16.mxu0 0
  %450 = vmatmul.mubr.bf16.gmra.mrb[0].mxu0 %v415
  %v451 = vpop.f32.mrb[0].mxu0
  %v452 = vadd.f32 %v399, %v451
  %v453 = vpop.f32.mrb[0].mxu0
  %v454 = vpop.f32.mrb[0].mxu0
  %v455 = vpop.f32.mrb[0].mxu0
  %456 = vdwg.mxu0
  %v457 = vld [vmem:[%s3] sm:$0xff]
  %v458 = vld [vmem:[%s3 + $0x8] sm:$0xf]
  %v459 = vld [vmem:[%s4] sm:$0xff]
  %v460 = vld [vmem:[%s4 + $0x8] sm:$0xf]
  %v461 = vpack.c.bf16 %v386, %v383
  %v462 = vpack.c.bf16 %v452, %v452
  %vm463 = vcmask 130048
  %v465 = vsel %vm463, %v461, 0
  %v468 = vsel %vm463, %v462, 0
  %470 = vmatprep.subr.bf16.mxu0 0
  %471 = vmatpush1.bf16.xpose.msra.mxu0 %v468
  %472 = vmatprep.subr.bf16.mxu0 0
  %473 = vmatpush1.bf16.xpose.msra.mxu0 0
  %474 = vmatprep.subr.bf16.mxu0 0
  %475 = vmatpush1.bf16.xpose.msra.mxu0 0
  %476 = vmatprep.subr.bf16.mxu0 0
  %477 = vmatpush1.bf16.xpose.msra.mxu0 0
  %478 = vmatprep.subr.bf16.mxu0 0
  %479 = vmatpush1.bf16.xpose.msra.mxu0 0
  %480 = vmatprep.subr.bf16.mxu0 0
  %481 = vmatpush1.bf16.xpose.msra.mxu0 0
  %482 = vmatprep.subr.bf16.mxu0 0
  %483 = vmatpush1.bf16.xpose.msra.mxu0 0
  %484 = vmatprep.subr.bf16.mxu0 0
  %485 = vmatpush1.bf16.xpose.msra.mxu0 0
  %486 = vmatprep.subr.bf16.mxu0 0
  %487 = vmatpush1.bf16.xpose.msra.mxu0 0
  %488 = vmatprep.subr.bf16.mxu0 0
  %489 = vmatpush1.bf16.xpose.msra.mxu0 0
  %490 = vmatprep.subr.bf16.mxu0 0
  %491 = vmatpush1.bf16.xpose.msra.mxu0 0
  %492 = vmatprep.subr.bf16.mxu0 0
  %493 = vmatpush1.bf16.xpose.msra.mxu0 0
  %494 = vmatprep.subr.bf16.mxu0 0
  %495 = vmatpush1.bf16.xpose.msra.mxu0 0
  %496 = vmatprep.subr.bf16.mxu0 0
  %497 = vmatpush1.bf16.xpose.msra.mxu0 0
  %498 = vmatprep.subr.bf16.mxu0 0
  %499 = vmatpush1.bf16.xpose.msra.mxu0 0
  %500 = vmatprep.subr.bf16.mxu0 0
  %501 = vmatpush1.bf16.xpose.msra.mxu0 0
  %502 = vmatprep.mubr.bf16.mxu0 0
  %503 = vmatmul.mubr.bf16.gmra.mrb[0].mxu0 %v465
  %v504 = vpop.f32.mrb[0].mxu0
  %v505 = vadd.f32 0.0, %v504
  %v506 = vpop.f32.mrb[0].mxu0
  %v507 = vpop.f32.mrb[0].mxu0
  %v508 = vadd.f32 0.0, %v507
  %v509 = vpop.f32.mrb[0].mxu0
  %510 = vdwg.mxu0
  %v511 = vmul.f32 %v505, 0.25
  %v512 = vmul.f32 %v508, 0.25
  %v513 = vadd.f32 %v511, %v457
  %v514 = vadd.f32 %v512, %v458
  %vm515 = vcmask 56320
  %v516 = vsel %vm515, %v513, -inf
  %517 = vmax.xlane.f32.xlu0 %v516
  %v518 = vpop.xlane.xlu0 %517
  %vm519 = vcmask 52224
  %v520 = vsel %vm519, %v514, -inf
  %521 = vmax.xlane.f32.xlu0 %v520
  %v522 = vpop.xlane.xlu0 %521
  %v523 = vsub.f32 %v513, %v518
  %v524 = vsub.f32 %v514, %v522
  %v525 = vmul.f32 %v523, 1.442695
  %v526 = vpow.pop %v525
  %v527 = vmul.f32 %v524, 1.442695
  %v528 = vpow.pop %v527
  %v529 = vsel %vm515, %v526, 0.0
  %530 = vadd.xlane.f32.xlu0 %v529
  %v531 = vpop.xlane.xlu0 %530
  %v532 = vsel %vm519, %v528, 0.0
  %533 = vadd.xlane.f32.xlu0 %v532
  %v534 = vpop.xlane.xlu0 %533
  %v535 = vrcp.pop %v531
  %v536 = vrcp.pop %v534
  %v537 = vmul.f32 %v526, %v535
  %v538 = vmul.f32 %v528, %v536
  %v539 = vpack.c.bf16 %v538, %v537
  %541 = vrot.lane.b32.xlu0 %v462, 64
  %v542 = vpop.permute.xlu0 %541
  %v544 = vsel %vm515, %v539, 0
  %vm546 = vcmask 1042432
  %vm547 = vcmask 1043456
  %v548 = vsel %vm546, 4294967295, 65535
  %v549 = vsel %vm547, %v548, 0
  %v551 = vand.u32 %v542, %v549
  %553 = vmatprep.subr.bf16.mxu0 0
  %554 = vmatpush1.bf16.msra.mxu0 %v551
  %555 = vmatprep.subr.bf16.mxu0 0
  %556 = vmatpush1.bf16.msra.mxu0 0
  %557 = vmatprep.subr.bf16.mxu0 0
  %558 = vmatpush1.bf16.msra.mxu0 0
  %559 = vmatprep.subr.bf16.mxu0 0
  %560 = vmatpush1.bf16.msra.mxu0 0
  %561 = vmatprep.subr.bf16.mxu0 0
  %562 = vmatpush1.bf16.msra.mxu0 0
  %563 = vmatprep.subr.bf16.mxu0 0
  %564 = vmatpush1.bf16.msra.mxu0 0
  %565 = vmatprep.subr.bf16.mxu0 0
  %566 = vmatpush1.bf16.msra.mxu0 0
  %567 = vmatprep.subr.bf16.mxu0 0
  %568 = vmatpush1.bf16.msra.mxu0 0
  %569 = vmatprep.subr.bf16.mxu0 0
  %570 = vmatpush1.bf16.msra.mxu0 0
  %571 = vmatprep.subr.bf16.mxu0 0
  %572 = vmatpush1.bf16.msra.mxu0 0
  %573 = vmatprep.subr.bf16.mxu0 0
  %574 = vmatpush1.bf16.msra.mxu0 0
  %575 = vmatprep.subr.bf16.mxu0 0
  %576 = vmatpush1.bf16.msra.mxu0 0
  %577 = vmatprep.subr.bf16.mxu0 0
  %578 = vmatpush1.bf16.msra.mxu0 0
  %579 = vmatprep.subr.bf16.mxu0 0
  %580 = vmatpush1.bf16.msra.mxu0 0
  %581 = vmatprep.subr.bf16.mxu0 0
  %582 = vmatpush1.bf16.msra.mxu0 0
  %583 = vmatprep.subr.bf16.mxu0 0
  %584 = vmatpush1.bf16.msra.mxu0 0
  %585 = vmatprep.mubr.bf16.mxu0 0
  %586 = vmatmul.mubr.bf16.gmra.mrb[0].mxu0 %v544
  %v587 = vpop.f32.mrb[0].mxu0
  %v588 = vadd.f32 0.0, %v587
  %v589 = vpop.f32.mrb[0].mxu0
  %v590 = vpop.f32.mrb[0].mxu0
  %v591 = vadd.f32 0.0, %v590
  %v592 = vpop.f32.mrb[0].mxu0
  %593 = vdwg.mxu0
  %595 = vrot.lane.b32.xlu0 %v461, 112
  %v596 = vpop.permute.xlu0 %595
  %597 = vrot.lane.b32.xlu0 %v462, 112
  %v598 = vpop.permute.xlu0 %597
  %v600 = vsel %vm463, %v596, 0
  %v603 = vsel %vm463, %v598, 0
  %605 = vmatprep.subr.bf16.mxu0 0
  %606 = vmatpush1.bf16.xpose.msra.mxu0 %v603
  %607 = vmatprep.subr.bf16.mxu0 0
  %608 = vmatpush1.bf16.xpose.msra.mxu0 0
  %609 = vmatprep.subr.bf16.mxu0 0
  %610 = vmatpush1.bf16.xpose.msra.mxu0 0
  %611 = vmatprep.subr.bf16.mxu0 0
  %612 = vmatpush1.bf16.xpose.msra.mxu0 0
  %613 = vmatprep.subr.bf16.mxu0 0
  %614 = vmatpush1.bf16.xpose.msra.mxu0 0
  %615 = vmatprep.subr.bf16.mxu0 0
  %616 = vmatpush1.bf16.xpose.msra.mxu0 0
  %617 = vmatprep.subr.bf16.mxu0 0
  %618 = vmatpush1.bf16.xpose.msra.mxu0 0
  %619 = vmatprep.subr.bf16.mxu0 0
  %620 = vmatpush1.bf16.xpose.msra.mxu0 0
  %621 = vmatprep.subr.bf16.mxu0 0
  %622 = vmatpush1.bf16.xpose.msra.mxu0 0
  %623 = vmatprep.subr.bf16.mxu0 0
  %624 = vmatpush1.bf16.xpose.msra.mxu0 0
  %625 = vmatprep.subr.bf16.mxu0 0
  %626 = vmatpush1.bf16.xpose.msra.mxu0 0
  %627 = vmatprep.subr.bf16.mxu0 0
  %628 = vmatpush1.bf16.xpose.msra.mxu0 0
  %629 = vmatprep.subr.bf16.mxu0 0
  %630 = vmatpush1.bf16.xpose.msra.mxu0 0
  %631 = vmatprep.subr.bf16.mxu0 0
  %632 = vmatpush1.bf16.xpose.msra.mxu0 0
  %633 = vmatprep.subr.bf16.mxu0 0
  %634 = vmatpush1.bf16.xpose.msra.mxu0 0
  %635 = vmatprep.subr.bf16.mxu0 0
  %636 = vmatpush1.bf16.xpose.msra.mxu0 0
  %637 = vmatprep.mubr.bf16.mxu0 0
  %638 = vmatmul.mubr.bf16.gmra.mrb[0].mxu0 %v600
  %v639 = vpop.f32.mrb[0].mxu0
  %v640 = vadd.f32 0.0, %v639
  %v641 = vpop.f32.mrb[0].mxu0
  %v642 = vpop.f32.mrb[0].mxu0
  %v643 = vadd.f32 0.0, %v642
  %v644 = vpop.f32.mrb[0].mxu0
  %645 = vdwg.mxu0
  %v646 = vmul.f32 %v640, 0.25
  %v647 = vmul.f32 %v643, 0.25
  %v648 = vadd.f32 %v646, %v457
  %v649 = vadd.f32 %v647, %v458
  %v650 = vsel %vm515, %v648, -inf
  %651 = vmax.xlane.f32.xlu0 %v650
  %v652 = vpop.xlane.xlu0 %651
  %v653 = vsel %vm519, %v649, -inf
  %654 = vmax.xlane.f32.xlu0 %v653
  %v655 = vpop.xlane.xlu0 %654
  %v656 = vsub.f32 %v648, %v652
  %v657 = vsub.f32 %v649, %v655
  %v658 = vmul.f32 %v656, 1.442695
  %v659 = vpow.pop %v658
  %v660 = vmul.f32 %v657, 1.442695
  %v661 = vpow.pop %v660
  %v662 = vsel %vm515, %v659, 0.0
  %663 = vadd.xlane.f32.xlu0 %v662
  %v664 = vpop.xlane.xlu0 %663
  %v665 = vsel %vm519, %v661, 0.0
  %666 = vadd.xlane.f32.xlu0 %v665
  %v667 = vpop.xlane.xlu0 %666
  %v668 = vrcp.pop %v664
  %v669 = vrcp.pop %v667
  %v670 = vmul.f32 %v659, %v668
  %v671 = vmul.f32 %v661, %v669
  %v672 = vpack.c.bf16 %v671, %v670
  %673 = vrot.lane.b32.xlu0 %v462, 48
  %v674 = vpop.permute.xlu0 %673
  %v676 = vsel %vm515, %v672, 0
  %v679 = vand.u32 %v674, %v549
  %681 = vmatprep.subr.bf16.mxu0 0
  %682 = vmatpush1.bf16.msra.mxu0 %v679
  %683 = vmatprep.subr.bf16.mxu0 0
  %684 = vmatpush1.bf16.msra.mxu0 0
  %685 = vmatprep.subr.bf16.mxu0 0
  %686 = vmatpush1.bf16.msra.mxu0 0
  %687 = vmatprep.subr.bf16.mxu0 0
  %688 = vmatpush1.bf16.msra.mxu0 0
  %689 = vmatprep.subr.bf16.mxu0 0
  %690 = vmatpush1.bf16.msra.mxu0 0
  %691 = vmatprep.subr.bf16.mxu0 0
  %692 = vmatpush1.bf16.msra.mxu0 0
  %693 = vmatprep.subr.bf16.mxu0 0
  %694 = vmatpush1.bf16.msra.mxu0 0
  %695 = vmatprep.subr.bf16.mxu0 0
  %696 = vmatpush1.bf16.msra.mxu0 0
  %697 = vmatprep.subr.bf16.mxu0 0
  %698 = vmatpush1.bf16.msra.mxu0 0
  %699 = vmatprep.subr.bf16.mxu0 0
  %700 = vmatpush1.bf16.msra.mxu0 0
  %701 = vmatprep.subr.bf16.mxu0 0
  %702 = vmatpush1.bf16.msra.mxu0 0
  %703 = vmatprep.subr.bf16.mxu0 0
  %704 = vmatpush1.bf16.msra.mxu0 0
  %705 = vmatprep.subr.bf16.mxu0 0
  %706 = vmatpush1.bf16.msra.mxu0 0
  %707 = vmatprep.subr.bf16.mxu0 0
  %708 = vmatpush1.bf16.msra.mxu0 0
  %709 = vmatprep.subr.bf16.mxu0 0
  %710 = vmatpush1.bf16.msra.mxu0 0
  %711 = vmatprep.subr.bf16.mxu0 0
  %712 = vmatpush1.bf16.msra.mxu0 0
  %713 = vmatprep.mubr.bf16.mxu0 0
  %714 = vmatmul.mubr.bf16.gmra.mrb[0].mxu0 %v676
  %v715 = vpop.f32.mrb[0].mxu0
  %v716 = vadd.f32 0.0, %v715
  %v717 = vpop.f32.mrb[0].mxu0
  %v718 = vpop.f32.mrb[0].mxu0
  %v719 = vadd.f32 0.0, %v718
  %v720 = vpop.f32.mrb[0].mxu0
  %721 = vdwg.mxu0
  %722 = vrot.lane.b32.xlu0 %v461, 96
  %v723 = vpop.permute.xlu0 %722
  %724 = vrot.lane.b32.xlu0 %v462, 96
  %v725 = vpop.permute.xlu0 %724
  %v727 = vsel %vm463, %v723, 0
  %v730 = vsel %vm463, %v725, 0
  %732 = vmatprep.subr.bf16.mxu0 0
  %733 = vmatpush1.bf16.xpose.msra.mxu0 %v730
  %734 = vmatprep.subr.bf16.mxu0 0
  %735 = vmatpush1.bf16.xpose.msra.mxu0 0
  %736 = vmatprep.subr.bf16.mxu0 0
  %737 = vmatpush1.bf16.xpose.msra.mxu0 0
  %738 = vmatprep.subr.bf16.mxu0 0
  %739 = vmatpush1.bf16.xpose.msra.mxu0 0
  %740 = vmatprep.subr.bf16.mxu0 0
  %741 = vmatpush1.bf16.xpose.msra.mxu0 0
  %742 = vmatprep.subr.bf16.mxu0 0
  %743 = vmatpush1.bf16.xpose.msra.mxu0 0
  %744 = vmatprep.subr.bf16.mxu0 0
  %745 = vmatpush1.bf16.xpose.msra.mxu0 0
  %746 = vmatprep.subr.bf16.mxu0 0
  %747 = vmatpush1.bf16.xpose.msra.mxu0 0
  %748 = vmatprep.subr.bf16.mxu0 0
  %749 = vmatpush1.bf16.xpose.msra.mxu0 0
  %750 = vmatprep.subr.bf16.mxu0 0
  %751 = vmatpush1.bf16.xpose.msra.mxu0 0
  %752 = vmatprep.subr.bf16.mxu0 0
  %753 = vmatpush1.bf16.xpose.msra.mxu0 0
  %754 = vmatprep.subr.bf16.mxu0 0
  %755 = vmatpush1.bf16.xpose.msra.mxu0 0
  %756 = vmatprep.subr.bf16.mxu0 0
  %757 = vmatpush1.bf16.xpose.msra.mxu0 0
  %758 = vmatprep.subr.bf16.mxu0 0
  %759 = vmatpush1.bf16.xpose.msra.mxu0 0
  %760 = vmatprep.subr.bf16.mxu0 0
  %761 = vmatpush1.bf16.xpose.msra.mxu0 0
  %762 = vmatprep.subr.bf16.mxu0 0
  %763 = vmatpush1.bf16.xpose.msra.mxu0 0
  %764 = vmatprep.mubr.bf16.mxu0 0
  %765 = vmatmul.mubr.bf16.gmra.mrb[0].mxu0 %v727
  %v766 = vpop.f32.mrb[0].mxu0
  %v767 = vadd.f32 0.0, %v766
  %v768 = vpop.f32.mrb[0].mxu0
  %v769 = vpop.f32.mrb[0].mxu0
  %v770 = vadd.f32 0.0, %v769
  %v771 = vpop.f32.mrb[0].mxu0
  %772 = vdwg.mxu0
  %v773 = vmul.f32 %v767, 0.25
  %v774 = vmul.f32 %v770, 0.25
  %v775 = vadd.f32 %v773, %v457
  %v776 = vadd.f32 %v774, %v458
  %v777 = vsel %vm515, %v775, -inf
  %778 = vmax.xlane.f32.xlu0 %v777
  %v779 = vpop.xlane.xlu0 %778
  %v780 = vsel %vm519, %v776, -inf
  %781 = vmax.xlane.f32.xlu0 %v780
  %v782 = vpop.xlane.xlu0 %781
  %v783 = vsub.f32 %v775, %v779
  %v784 = vsub.f32 %v776, %v782
  %v785 = vmul.f32 %v783, 1.442695
  %v786 = vpow.pop %v785
  %v787 = vmul.f32 %v784, 1.442695
  %v788 = vpow.pop %v787
  %v789 = vsel %vm515, %v786, 0.0
  %790 = vadd.xlane.f32.xlu0 %v789
  %v791 = vpop.xlane.xlu0 %790
  %v792 = vsel %vm519, %v788, 0.0
  %793 = vadd.xlane.f32.xlu0 %v792
  %v794 = vpop.xlane.xlu0 %793
  %v795 = vrcp.pop %v791
  %v796 = vrcp.pop %v794
  %v797 = vmul.f32 %v786, %v795
  %v798 = vmul.f32 %v788, %v796
  %v799 = vpack.c.bf16 %v798, %v797
  %800 = vrot.lane.b32.xlu0 %v462, 32
  %v801 = vpop.permute.xlu0 %800
  %v803 = vsel %vm515, %v799, 0
  %v806 = vand.u32 %v801, %v549
  %808 = vmatprep.subr.bf16.mxu0 0
  %809 = vmatpush1.bf16.msra.mxu0 %v806
  %810 = vmatprep.subr.bf16.mxu0 0
  %811 = vmatpush1.bf16.msra.mxu0 0
  %812 = vmatprep.subr.bf16.mxu0 0
  %813 = vmatpush1.bf16.msra.mxu0 0
  %814 = vmatprep.subr.bf16.mxu0 0
  %815 = vmatpush1.bf16.msra.mxu0 0
  %816 = vmatprep.subr.bf16.mxu0 0
  %817 = vmatpush1.bf16.msra.mxu0 0
  %818 = vmatprep.subr.bf16.mxu0 0
  %819 = vmatpush1.bf16.msra.mxu0 0
  %820 = vmatprep.subr.bf16.mxu0 0
  %821 = vmatpush1.bf16.msra.mxu0 0
  %822 = vmatprep.subr.bf16.mxu0 0
  %823 = vmatpush1.bf16.msra.mxu0 0
  %824 = vmatprep.subr.bf16.mxu0 0
  %825 = vmatpush1.bf16.msra.mxu0 0
  %826 = vmatprep.subr.bf16.mxu0 0
  %827 = vmatpush1.bf16.msra.mxu0 0
  %828 = vmatprep.subr.bf16.mxu0 0
  %829 = vmatpush1.bf16.msra.mxu0 0
  %830 = vmatprep.subr.bf16.mxu0 0
  %831 = vmatpush1.bf16.msra.mxu0 0
  %832 = vmatprep.subr.bf16.mxu0 0
  %833 = vmatpush1.bf16.msra.mxu0 0
  %834 = vmatprep.subr.bf16.mxu0 0
  %835 = vmatpush1.bf16.msra.mxu0 0
  %836 = vmatprep.subr.bf16.mxu0 0
  %837 = vmatpush1.bf16.msra.mxu0 0
  %838 = vmatprep.subr.bf16.mxu0 0
  %839 = vmatpush1.bf16.msra.mxu0 0
  %840 = vmatprep.mubr.bf16.mxu0 0
  %841 = vmatmul.mubr.bf16.gmra.mrb[0].mxu0 %v803
  %v842 = vpop.f32.mrb[0].mxu0
  %v843 = vadd.f32 0.0, %v842
  %v844 = vpop.f32.mrb[0].mxu0
  %v845 = vpop.f32.mrb[0].mxu0
  %v846 = vadd.f32 0.0, %v845
  %v847 = vpop.f32.mrb[0].mxu0
  %848 = vdwg.mxu0
  %849 = vrot.lane.b32.xlu0 %v461, 80
  %v850 = vpop.permute.xlu0 %849
  %851 = vrot.lane.b32.xlu0 %v462, 80
  %v852 = vpop.permute.xlu0 %851
  %v854 = vsel %vm463, %v850, 0
  %v857 = vsel %vm463, %v852, 0
  %859 = vmatprep.subr.bf16.mxu0 0
  %860 = vmatpush1.bf16.xpose.msra.mxu0 %v857
  %861 = vmatprep.subr.bf16.mxu0 0
  %862 = vmatpush1.bf16.xpose.msra.mxu0 0
  %863 = vmatprep.subr.bf16.mxu0 0
  %864 = vmatpush1.bf16.xpose.msra.mxu0 0
  %865 = vmatprep.subr.bf16.mxu0 0
  %866 = vmatpush1.bf16.xpose.msra.mxu0 0
  %867 = vmatprep.subr.bf16.mxu0 0
  %868 = vmatpush1.bf16.xpose.msra.mxu0 0
  %869 = vmatprep.subr.bf16.mxu0 0
  %870 = vmatpush1.bf16.xpose.msra.mxu0 0
  %871 = vmatprep.subr.bf16.mxu0 0
  %872 = vmatpush1.bf16.xpose.msra.mxu0 0
  %873 = vmatprep.subr.bf16.mxu0 0
  %874 = vmatpush1.bf16.xpose.msra.mxu0 0
  %875 = vmatprep.subr.bf16.mxu0 0
  %876 = vmatpush1.bf16.xpose.msra.mxu0 0
  %877 = vmatprep.subr.bf16.mxu0 0
  %878 = vmatpush1.bf16.xpose.msra.mxu0 0
  %879 = vmatprep.subr.bf16.mxu0 0
  %880 = vmatpush1.bf16.xpose.msra.mxu0 0
  %881 = vmatprep.subr.bf16.mxu0 0
  %882 = vmatpush1.bf16.xpose.msra.mxu0 0
  %883 = vmatprep.subr.bf16.mxu0 0
  %884 = vmatpush1.bf16.xpose.msra.mxu0 0
  %885 = vmatprep.subr.bf16.mxu0 0
  %886 = vmatpush1.bf16.xpose.msra.mxu0 0
  %887 = vmatprep.subr.bf16.mxu0 0
  %888 = vmatpush1.bf16.xpose.msra.mxu0 0
  %889 = vmatprep.subr.bf16.mxu0 0
  %890 = vmatpush1.bf16.xpose.msra.mxu0 0
  %891 = vmatprep.mubr.bf16.mxu0 0
  %892 = vmatmul.mubr.bf16.gmra.mrb[0].mxu0 %v854
  %v893 = vpop.f32.mrb[0].mxu0
  %v894 = vadd.f32 0.0, %v893
  %v895 = vpop.f32.mrb[0].mxu0
  %v896 = vpop.f32.mrb[0].mxu0
  %v897 = vadd.f32 0.0, %v896
  %v898 = vpop.f32.mrb[0].mxu0
  %899 = vdwg.mxu0
  %v900 = vmul.f32 %v894, 0.25
  %v901 = vmul.f32 %v897, 0.25
  %v902 = vadd.f32 %v900, %v457
  %v903 = vadd.f32 %v901, %v458
  %v904 = vsel %vm515, %v902, -inf
  %905 = vmax.xlane.f32.xlu0 %v904
  %v906 = vpop.xlane.xlu0 %905
  %v907 = vsel %vm519, %v903, -inf
  %908 = vmax.xlane.f32.xlu0 %v907
  %v909 = vpop.xlane.xlu0 %908
  %v910 = vsub.f32 %v902, %v906
  %v911 = vsub.f32 %v903, %v909
  %v912 = vmul.f32 %v910, 1.442695
  %v913 = vpow.pop %v912
  %v914 = vmul.f32 %v911, 1.442695
  %v915 = vpow.pop %v914
  %v916 = vsel %vm515, %v913, 0.0
  %917 = vadd.xlane.f32.xlu0 %v916
  %v918 = vpop.xlane.xlu0 %917
  %v919 = vsel %vm519, %v915, 0.0
  %920 = vadd.xlane.f32.xlu0 %v919
  %v921 = vpop.xlane.xlu0 %920
  %v922 = vrcp.pop %v918
  %v923 = vrcp.pop %v921
  %v924 = vmul.f32 %v913, %v922
  %v925 = vmul.f32 %v915, %v923
  %v926 = vpack.c.bf16 %v925, %v924
  %927 = vrot.lane.b32.xlu0 %v462, 16
  %v928 = vpop.permute.xlu0 %927
  %v930 = vsel %vm515, %v926, 0
  %v933 = vand.u32 %v928, %v549
  %935 = vmatprep.subr.bf16.mxu0 0
  %936 = vmatpush1.bf16.msra.mxu0 %v933
  %937 = vmatprep.subr.bf16.mxu0 0
  %938 = vmatpush1.bf16.msra.mxu0 0
  %939 = vmatprep.subr.bf16.mxu0 0
  %940 = vmatpush1.bf16.msra.mxu0 0
  %941 = vmatprep.subr.bf16.mxu0 0
  %942 = vmatpush1.bf16.msra.mxu0 0
  %943 = vmatprep.subr.bf16.mxu0 0
  %944 = vmatpush1.bf16.msra.mxu0 0
  %945 = vmatprep.subr.bf16.mxu0 0
  %946 = vmatpush1.bf16.msra.mxu0 0
  %947 = vmatprep.subr.bf16.mxu0 0
  %948 = vmatpush1.bf16.msra.mxu0 0
  %949 = vmatprep.subr.bf16.mxu0 0
  %950 = vmatpush1.bf16.msra.mxu0 0
  %951 = vmatprep.subr.bf16.mxu0 0
  %952 = vmatpush1.bf16.msra.mxu0 0
  %953 = vmatprep.subr.bf16.mxu0 0
  %954 = vmatpush1.bf16.msra.mxu0 0
  %955 = vmatprep.subr.bf16.mxu0 0
  %956 = vmatpush1.bf16.msra.mxu0 0
  %957 = vmatprep.subr.bf16.mxu0 0
  %958 = vmatpush1.bf16.msra.mxu0 0
  %959 = vmatprep.subr.bf16.mxu0 0
  %960 = vmatpush1.bf16.msra.mxu0 0
  %961 = vmatprep.subr.bf16.mxu0 0
  %962 = vmatpush1.bf16.msra.mxu0 0
  %963 = vmatprep.subr.bf16.mxu0 0
  %964 = vmatpush1.bf16.msra.mxu0 0
  %965 = vmatprep.subr.bf16.mxu0 0
  %966 = vmatpush1.bf16.msra.mxu0 0
  %967 = vmatprep.mubr.bf16.mxu0 0
  %968 = vmatmul.mubr.bf16.gmra.mrb[0].mxu0 %v930
  %v969 = vpop.f32.mrb[0].mxu0
  %v970 = vadd.f32 0.0, %v969
  %v971 = vpop.f32.mrb[0].mxu0
  %v972 = vpop.f32.mrb[0].mxu0
  %v973 = vadd.f32 0.0, %v972
  %v974 = vpop.f32.mrb[0].mxu0
  %975 = vdwg.mxu0
  %978 = vrot.lane.b32.xlu0 %v716, 16
  %v979 = vpop.permute.xlu0 %978
  %980 = vrot.lane.b32.xlu0 %v719, 16
  %v981 = vpop.permute.xlu0 %980
  %986 = vrot.lane.b32.xlu0 %v843, 32
  %v987 = vpop.permute.xlu0 %986
  %988 = vrot.lane.b32.xlu0 %v846, 32
  %v989 = vpop.permute.xlu0 %988
  %994 = vrot.lane.b32.xlu0 %v970, 48
  %v995 = vpop.permute.xlu0 %994
  %996 = vrot.lane.b32.xlu0 %v973, 48
  %v997 = vpop.permute.xlu0 %996
  %v1000 = vsel %vm463, %v588, %v979
  %v1001 = vsel %vm463, %v591, %v981
  %v1002 = vsel %vm413, %v1000, %v987
  %v1003 = vsel %vm413, %v1001, %v989
  %vm1004 = vcmask 392192
  %v1005 = vsel %vm1004, %v1002, %v995
  %v1006 = vsel %vm1004, %v1003, %v997
  %1008 = vset.pattern.permute.xlu0 0
  %1009 = vperm.xlu0 %1008, %v459
  %v1010 = vpop.permute.xlu0 %1009
  %1013 = vset.pattern.permute.xlu0 0
  %1014 = vperm.xlu0 %1013, %v460
  %v1015 = vpop.permute.xlu0 %1014
  %v1017 = vmul.f32 %v1005, %v1010
  %v1018 = vmul.f32 %v1006, %v1015
  %v1019 = vpack.c.bf16 %v1018, %v1017
  %v1020 = vld [vmem:[%s11] sm:$0xf]
  %v1021 = vld [vmem:[%s11 + $0x4] sm:$0xf]
  %v1022 = vld [vmem:[%s11 + $0x8] sm:$0xf]
  %v1023 = vld [vmem:[%s11 + $0xc] sm:$0xf]
  %v1024 = vld [vmem:[%s11 + $0x10] sm:$0xf]
  %v1025 = vld [vmem:[%s11 + $0x14] sm:$0xf]
  %v1026 = vld [vmem:[%s11 + $0x18] sm:$0xf]
  %v1027 = vld [vmem:[%s11 + $0x1c] sm:$0xf]
  %v1028 = vld [vmem:[%s12] sm:$0x1]
  %v1030 = vlaneseq
  %v1031 = vshrl.u32 %v1030, 7
  %v1032 = vsub.s32 0, %v1031
  %v1033 = vrot.slane %v1028, %v1032
  %v1043 = vunpack.c.l.b16 %v1020
  %v1044 = vunpack.c.l.b16 %v1021
  %v1045 = vunpack.c.l.b16 %v1022
  %v1046 = vunpack.c.l.b16 %v1023
  %v1047 = vunpack.c.l.b16 %v1024
  %v1048 = vunpack.c.l.b16 %v1025
  %v1049 = vunpack.c.l.b16 %v1026
  %v1050 = vunpack.c.l.b16 %v1027
  %v1051 = vpack.c.b16 %v1044, %v1043
  %v1052 = vpack.c.b16 %v1046, %v1045
  %v1053 = vpack.c.b16 %v1048, %v1047
  %v1054 = vpack.c.b16 %v1050, %v1049
  %v1060 = vsel %vm159, %v1019, 0
  %1062 = vmatprep.subr.bf16.mxu0 0
  %1063 = vmatpush1.bf16.msra.mxu0 %v1051
  %1064 = vmatprep.subr.bf16.mxu0 0
  %1065 = vmatpush1.bf16.msra.mxu0 %v1052
  %1066 = vmatprep.subr.bf16.mxu0 0
  %1067 = vmatpush1.bf16.msra.mxu0 %v1053
  %1068 = vmatprep.subr.bf16.mxu0 0
  %1069 = vmatpush1.bf16.msra.mxu0 %v1054
  %1070 = vmatprep.subr.bf16.mxu0 0
  %1071 = vmatpush1.bf16.msra.mxu0 0
  %1072 = vmatprep.subr.bf16.mxu0 0
  %1073 = vmatpush1.bf16.msra.mxu0 0
  %1074 = vmatprep.subr.bf16.mxu0 0
  %1075 = vmatpush1.bf16.msra.mxu0 0
  %1076 = vmatprep.subr.bf16.mxu0 0
  %1077 = vmatpush1.bf16.msra.mxu0 0
  %1078 = vmatprep.subr.bf16.mxu0 0
  %1079 = vmatpush1.bf16.msra.mxu0 0
  %1080 = vmatprep.subr.bf16.mxu0 0
  %1081 = vmatpush1.bf16.msra.mxu0 0
  %1082 = vmatprep.subr.bf16.mxu0 0
  %1083 = vmatpush1.bf16.msra.mxu0 0
  %1084 = vmatprep.subr.bf16.mxu0 0
  %1085 = vmatpush1.bf16.msra.mxu0 0
  %1086 = vmatprep.subr.bf16.mxu0 0
  %1087 = vmatpush1.bf16.msra.mxu0 0
  %1088 = vmatprep.subr.bf16.mxu0 0
  %1089 = vmatpush1.bf16.msra.mxu0 0
  %1090 = vmatprep.subr.bf16.mxu0 0
  %1091 = vmatpush1.bf16.msra.mxu0 0
  %1092 = vmatprep.subr.bf16.mxu0 0
  %1093 = vmatpush1.bf16.msra.mxu0 0
  %1094 = vmatprep.mubr.bf16.mxu0 0
  %1095 = vmatmul.mubr.bf16.gmra.mrb[0].mxu0 %v1060
  %v1096 = vpop.f32.mrb[0].mxu0
  %v1097 = vadd.f32 %v1033, %v1096
  %v1098 = vpop.f32.mrb[0].mxu0
  %v1099 = vpop.f32.mrb[0].mxu0
  %v1100 = vadd.f32 %v1033, %v1099
  %v1101 = vpop.f32.mrb[0].mxu0
  %1102 = vdwg.mxu0
  %v1103 = vmul.f32 %v200, %v1097
  %v1104 = vmul.f32 %v204, %v1100
  %v1105 = vadd.f32 %v57, %v1103
  %v1106 = vadd.f32 %v58, %v1104
  %v1107 = vsel %vm159, %v1105, 0.0
  %1108 = vadd.xlane.f32.xlu0 %v1107
  %v1109 = vpop.xlane.xlu0 %1108
  %v1110 = vsel %vm250, %v1106, 0.0
  %1111 = vadd.xlane.f32.xlu0 %v1110
  %v1112 = vpop.xlane.xlu0 %1111
  %v1113 = vmul.f32 %v1109, %v254
  %v1114 = vmul.f32 %v1112, %v254
  %v1115 = vsub.f32 %v1105, %v1113
  %v1116 = vsub.f32 %v1106, %v1114
  %v1117 = vmul.f32 %v1115, %v1115
  %v1118 = vmul.f32 %v1116, %v1116
  %v1119 = vsel %vm159, %v1117, 0.0
  %1120 = vadd.xlane.f32.xlu0 %v1119
  %v1121 = vpop.xlane.xlu0 %1120
  %v1122 = vsel %vm250, %v1118, 0.0
  %1123 = vadd.xlane.f32.xlu0 %v1122
  %v1124 = vpop.xlane.xlu0 %1123
  %v1125 = vmul.f32 %v1121, %v254
  %v1126 = vmul.f32 %v1124, %v254
  %v1127 = vadd.f32 %v1125, 1e-06
  %v1128 = vadd.f32 %v1126, 1e-06
  %v1129 = vrsqrt.pop %v1127
  %v1130 = vrsqrt.pop %v1128
  %v1131 = vmul.f32 %v1115, %v1129
  %v1132 = vmul.f32 %v1116, %v1130
  %v1133 = vadd.f32 %v241, 1.0
  %v1134 = vadd.f32 %v244, 1.0
  %v1135 = vmul.f32 %v1131, %v1133
  %v1136 = vmul.f32 %v1132, %v1134
  %1139 = vrot.lane.b32.xlu0 %v200, 64
  %v1140 = vpop.permute.xlu0 %1139
  %1141 = vrot.lane.b32.xlu0 %v204, 64
  %v1142 = vpop.permute.xlu0 %1141
  %v1145 = vadd.f32 %v1135, %v1140
  %v1146 = vadd.f32 %v1136, %v1142
  %v1147 = vpack.c.bf16 %v1146, %v1145
  %v1148 = vld [vmem:[%s13] sm:$0xff]
  %v1149 = vld [vmem:[%s13 + $0x8] sm:$0xff]
  %v1150 = vld [vmem:[%s13 + $0x10] sm:$0xff]
  %v1151 = vld [vmem:[%s13 + $0x18] sm:$0xff]
  %v1152 = vld [vmem:[%s13 + $0x20] sm:$0xff]
  %v1153 = vld [vmem:[%s13 + $0x28] sm:$0xff]
  %v1154 = vld [vmem:[%s13 + $0x30] sm:$0xff]
  %v1155 = vld [vmem:[%s13 + $0x38] sm:$0xff]
  %v1156 = vld [vmem:[%s14] sm:$0x3]
  %v1158 = vlaneseq
  %v1159 = vshrl.u32 %v1158, 7
  %v1160 = vsub.s32 0, %v1159
  %v1161 = vrot.slane %v1156, %v1160
  %v1162 = vlaneseq
  %v1163 = vshrl.u32 %v1162, 7
  %v1164 = vsub.s32 1, %v1163
  %v1165 = vrot.slane %v1156, %v1164
  %v1176 = vunpack.c.l.b16 %v1148
  %v1177 = vunpack.c.h.b16 %v1148
  %v1178 = vunpack.c.l.b16 %v1149
  %v1179 = vunpack.c.h.b16 %v1149
  %v1180 = vunpack.c.l.b16 %v1150
  %v1181 = vunpack.c.h.b16 %v1150
  %v1182 = vunpack.c.l.b16 %v1151
  %v1183 = vunpack.c.h.b16 %v1151
  %v1184 = vunpack.c.l.b16 %v1152
  %v1185 = vunpack.c.h.b16 %v1152
  %v1186 = vunpack.c.l.b16 %v1153
  %v1187 = vunpack.c.h.b16 %v1153
  %v1188 = vunpack.c.l.b16 %v1154
  %v1189 = vunpack.c.h.b16 %v1154
  %v1190 = vunpack.c.l.b16 %v1155
  %v1191 = vunpack.c.h.b16 %v1155
  %v1192 = vpack.c.b16 %v1178, %v1176
  %v1193 = vpack.c.b16 %v1179, %v1177
  %v1194 = vpack.c.b16 %v1182, %v1180
  %v1195 = vpack.c.b16 %v1183, %v1181
  %v1196 = vpack.c.b16 %v1186, %v1184
  %v1197 = vpack.c.b16 %v1187, %v1185
  %v1198 = vpack.c.b16 %v1190, %v1188
  %v1199 = vpack.c.b16 %v1191, %v1189
  %v1209 = vsel %vm159, %v1147, 0
  %1211 = vmatprep.subr.bf16.mxu0 %v1193
  %1212 = vmatpush1.bf16.msra.mxu0 %v1192
  %1213 = vmatprep.subr.bf16.mxu0 %v1195
  %1214 = vmatpush1.bf16.msra.mxu0 %v1194
  %1215 = vmatprep.subr.bf16.mxu0 %v1197
  %1216 = vmatpush1.bf16.msra.mxu0 %v1196
  %1217 = vmatprep.subr.bf16.mxu0 %v1199
  %1218 = vmatpush1.bf16.msra.mxu0 %v1198
  %1219 = vmatprep.subr.bf16.mxu0 0
  %1220 = vmatpush1.bf16.msra.mxu0 0
  %1221 = vmatprep.subr.bf16.mxu0 0
  %1222 = vmatpush1.bf16.msra.mxu0 0
  %1223 = vmatprep.subr.bf16.mxu0 0
  %1224 = vmatpush1.bf16.msra.mxu0 0
  %1225 = vmatprep.subr.bf16.mxu0 0
  %1226 = vmatpush1.bf16.msra.mxu0 0
  %1227 = vmatprep.subr.bf16.mxu0 0
  %1228 = vmatpush1.bf16.msra.mxu0 0
  %1229 = vmatprep.subr.bf16.mxu0 0
  %1230 = vmatpush1.bf16.msra.mxu0 0
  %1231 = vmatprep.subr.bf16.mxu0 0
  %1232 = vmatpush1.bf16.msra.mxu0 0
  %1233 = vmatprep.subr.bf16.mxu0 0
  %1234 = vmatpush1.bf16.msra.mxu0 0
  %1235 = vmatprep.subr.bf16.mxu0 0
  %1236 = vmatpush1.bf16.msra.mxu0 0
  %1237 = vmatprep.subr.bf16.mxu0 0
  %1238 = vmatpush1.bf16.msra.mxu0 0
  %1239 = vmatprep.subr.bf16.mxu0 0
  %1240 = vmatpush1.bf16.msra.mxu0 0
  %1241 = vmatprep.subr.bf16.mxu0 0
  %1242 = vmatpush1.bf16.msra.mxu0 0
  %1243 = vmatprep.mubr.bf16.mxu0 0
  %1244 = vmatmul.mubr.bf16.gmra.mrb[0].mxu0 %v1209
  %v1245 = vpop.f32.mrb[0].mxu0
  %v1246 = vadd.f32 %v1161, %v1245
  %v1247 = vpop.f32.mrb[0].mxu0
  %v1248 = vadd.f32 %v1165, %v1247
  %v1249 = vpop.f32.mrb[0].mxu0
  %v1250 = vadd.f32 %v1161, %v1249
  %v1251 = vpop.f32.mrb[0].mxu0
  %v1252 = vadd.f32 %v1165, %v1251
  %1253 = vdwg.mxu0
  %v1254 = vmul.f32 %v1246, %v1246
  %v1255 = vmul.f32 %v1248, %v1248
  %v1256 = vmul.f32 %v1250, %v1250
  %v1257 = vmul.f32 %v1252, %v1252
  %v1258 = vmul.f32 %v1246, %v1254
  %v1259 = vmul.f32 %v1248, %v1255
  %v1260 = vmul.f32 %v1250, %v1256
  %v1261 = vmul.f32 %v1252, %v1257
  %v1262 = vmul.f32 %v1258, 0.044715
  %v1263 = vmul.f32 %v1259, 0.044715
  %v1264 = vmul.f32 %v1260, 0.044715
  %v1265 = vmul.f32 %v1261, 0.044715
  %v1266 = vadd.f32 %v1246, %v1262
  %v1267 = vadd.f32 %v1248, %v1263
  %v1268 = vadd.f32 %v1250, %v1264
  %v1269 = vadd.f32 %v1252, %v1265
  %v1270 = vmul.f32 %v1266, 0.7978846
  %v1271 = vmul.f32 %v1267, 0.7978846
  %v1272 = vmul.f32 %v1268, 0.7978846
  %v1273 = vmul.f32 %v1269, 0.7978846
  %v1274 = vtanh.pop %v1270
  %v1275 = vtanh.pop %v1271
  %v1276 = vtanh.pop %v1272
  %v1277 = vtanh.pop %v1273
  %v1278 = vadd.f32 %v1274, 1.0
  %v1279 = vadd.f32 %v1275, 1.0
  %v1280 = vadd.f32 %v1276, 1.0
  %v1281 = vadd.f32 %v1277, 1.0
  %v1282 = vmul.f32 %v1278, 0.5
  %v1283 = vmul.f32 %v1279, 0.5
  %v1284 = vmul.f32 %v1280, 0.5
  %v1285 = vmul.f32 %v1281, 0.5
  %v1286 = vmul.f32 %v1246, %v1282
  %v1287 = vmul.f32 %v1248, %v1283
  %v1288 = vmul.f32 %v1250, %v1284
  %v1289 = vmul.f32 %v1252, %v1285
  %v1290 = vpack.c.bf16 %v1288, %v1286
  %v1291 = vpack.c.bf16 %v1289, %v1287
  %v1292 = vld [vmem:[%s15] sm:$0xf]
  %v1293 = vld [vmem:[%s15 + $0x4] sm:$0xf]
  %v1294 = vld [vmem:[%s15 + $0x8] sm:$0xf]
  %v1295 = vld [vmem:[%s15 + $0xc] sm:$0xf]
  %v1296 = vld [vmem:[%s15 + $0x10] sm:$0xf]
  %v1297 = vld [vmem:[%s15 + $0x14] sm:$0xf]
  %v1298 = vld [vmem:[%s15 + $0x18] sm:$0xf]
  %v1299 = vld [vmem:[%s15 + $0x1c] sm:$0xf]
  %v1300 = vld [vmem:[%s15 + $0x20] sm:$0xf]
  %v1301 = vld [vmem:[%s15 + $0x24] sm:$0xf]
  %v1302 = vld [vmem:[%s15 + $0x28] sm:$0xf]
  %v1303 = vld [vmem:[%s15 + $0x2c] sm:$0xf]
  %v1304 = vld [vmem:[%s15 + $0x30] sm:$0xf]
  %v1305 = vld [vmem:[%s15 + $0x34] sm:$0xf]
  %v1306 = vld [vmem:[%s15 + $0x38] sm:$0xf]
  %v1307 = vld [vmem:[%s15 + $0x3c] sm:$0xf]
  %v1308 = vld [vmem:[%s15 + $0x40] sm:$0xf]
  %v1309 = vld [vmem:[%s15 + $0x44] sm:$0xf]
  %v1310 = vld [vmem:[%s15 + $0x48] sm:$0xf]
  %v1311 = vld [vmem:[%s15 + $0x4c] sm:$0xf]
  %v1312 = vld [vmem:[%s15 + $0x50] sm:$0xf]
  %v1313 = vld [vmem:[%s15 + $0x54] sm:$0xf]
  %v1314 = vld [vmem:[%s15 + $0x58] sm:$0xf]
  %v1315 = vld [vmem:[%s15 + $0x5c] sm:$0xf]
  %v1316 = vld [vmem:[%s15 + $0x60] sm:$0xf]
  %v1317 = vld [vmem:[%s15 + $0x64] sm:$0xf]
  %v1318 = vld [vmem:[%s15 + $0x68] sm:$0xf]
  %v1319 = vld [vmem:[%s15 + $0x6c] sm:$0xf]
  %v1320 = vld [vmem:[%s15 + $0x70] sm:$0xf]
  %v1321 = vld [vmem:[%s15 + $0x74] sm:$0xf]
  %v1322 = vld [vmem:[%s15 + $0x78] sm:$0xf]
  %v1323 = vld [vmem:[%s15 + $0x7c] sm:$0xf]
  %v1324 = vld [vmem:[%s16] sm:$0x1]
  %v1326 = vlaneseq
  %v1327 = vshrl.u32 %v1326, 7
  %v1328 = vsub.s32 0, %v1327
  %v1329 = vrot.slane %v1324, %v1328
  %v1363 = vunpack.c.l.b16 %v1292
  %v1364 = vunpack.c.l.b16 %v1293
  %v1365 = vunpack.c.l.b16 %v1294
  %v1366 = vunpack.c.l.b16 %v1295
  %v1367 = vunpack.c.l.b16 %v1296
  %v1368 = vunpack.c.l.b16 %v1297
  %v1369 = vunpack.c.l.b16 %v1298
  %v1370 = vunpack.c.l.b16 %v1299
  %v1371 = vunpack.c.l.b16 %v1300
  %v1372 = vunpack.c.l.b16 %v1301
  %v1373 = vunpack.c.l.b16 %v1302
  %v1374 = vunpack.c.l.b16 %v1303
  %v1375 = vunpack.c.l.b16 %v1304
  %v1376 = vunpack.c.l.b16 %v1305
  %v1377 = vunpack.c.l.b16 %v1306
  %v1378 = vunpack.c.l.b16 %v1307
  %v1379 = vunpack.c.l.b16 %v1308
  %v1380 = vunpack.c.l.b16 %v1309
  %v1381 = vunpack.c.l.b16 %v1310
  %v1382 = vunpack.c.l.b16 %v1311
  %v1383 = vunpack.c.l.b16 %v1312
  %v1384 = vunpack.c.l.b16 %v1313
  %v1385 = vunpack.c.l.b16 %v1314
  %v1386 = vunpack.c.l.b16 %v1315
  %v1387 = vunpack.c.l.b16 %v1316
  %v1388 = vunpack.c.l.b16 %v1317
  %v1389 = vunpack.c.l.b16 %v1318
  %v1390 = vunpack.c.l.b16 %v1319
  %v1391 = vunpack.c.l.b16 %v1320
  %v1392 = vunpack.c.l.b16 %v1321
  %v1393 = vunpack.c.l.b16 %v1322
  %v1394 = vunpack.c.l.b16 %v1323
  %v1395 = vpack.c.b16 %v1364, %v1363
  %v1396 = vpack.c.b16 %v1366, %v1365
  %v1397 = vpack.c.b16 %v1368, %v1367
  %v1398 = vpack.c.b16 %v1370, %v1369
  %v1399 = vpack.c.b16 %v1372, %v1371
  %v1400 = vpack.c.b16 %v1374, %v1373
  %v1401 = vpack.c.b16 %v1376, %v1375
  %v1402 = vpack.c.b16 %v1378, %v1377
  %v1403 = vpack.c.b16 %v1380, %v1379
  %v1404 = vpack.c.b16 %v1382, %v1381
  %v1405 = vpack.c.b16 %v1384, %v1383
  %v1406 = vpack.c.b16 %v1386, %v1385
  %v1407 = vpack.c.b16 %v1388, %v1387
  %v1408 = vpack.c.b16 %v1390, %v1389
  %v1409 = vpack.c.b16 %v1392, %v1391
  %v1410 = vpack.c.b16 %v1394, %v1393
  %1427 = vmatprep.subr.bf16.mxu0 0
  %1428 = vmatpush1.bf16.msra.mxu0 %v1395
  %1429 = vmatprep.subr.bf16.mxu0 0
  %1430 = vmatpush1.bf16.msra.mxu0 %v1396
  %1431 = vmatprep.subr.bf16.mxu0 0
  %1432 = vmatpush1.bf16.msra.mxu0 %v1397
  %1433 = vmatprep.subr.bf16.mxu0 0
  %1434 = vmatpush1.bf16.msra.mxu0 %v1398
  %1435 = vmatprep.subr.bf16.mxu0 0
  %1436 = vmatpush1.bf16.msra.mxu0 %v1399
  %1437 = vmatprep.subr.bf16.mxu0 0
  %1438 = vmatpush1.bf16.msra.mxu0 %v1400
  %1439 = vmatprep.subr.bf16.mxu0 0
  %1440 = vmatpush1.bf16.msra.mxu0 %v1401
  %1441 = vmatprep.subr.bf16.mxu0 0
  %1442 = vmatpush1.bf16.msra.mxu0 %v1402
  %1443 = vmatprep.subr.bf16.mxu0 0
  %1444 = vmatpush1.bf16.msra.mxu0 %v1403
  %1445 = vmatprep.subr.bf16.mxu0 0
  %1446 = vmatpush1.bf16.msra.mxu0 %v1404
  %1447 = vmatprep.subr.bf16.mxu0 0
  %1448 = vmatpush1.bf16.msra.mxu0 %v1405
  %1449 = vmatprep.subr.bf16.mxu0 0
  %1450 = vmatpush1.bf16.msra.mxu0 %v1406
  %1451 = vmatprep.subr.bf16.mxu0 0
  %1452 = vmatpush1.bf16.msra.mxu0 %v1407
  %1453 = vmatprep.subr.bf16.mxu0 0
  %1454 = vmatpush1.bf16.msra.mxu0 %v1408
  %1455 = vmatprep.subr.bf16.mxu0 0
  %1456 = vmatpush1.bf16.msra.mxu0 %v1409
  %1457 = vmatprep.subr.bf16.mxu0 0
  %1458 = vmatpush1.bf16.msra.mxu0 %v1410
  %1459 = vmatprep.mubr.bf16.mxu0 %v1291
  %1460 = vmatmul.mubr.bf16.gmra.mrb[0].mxu0 %v1290
  %v1461 = vpop.f32.mrb[0].mxu0
  %v1462 = vadd.f32 %v1329, %v1461
  %v1463 = vpop.f32.mrb[0].mxu0
  %v1464 = vpop.f32.mrb[0].mxu0
  %v1465 = vadd.f32 %v1329, %v1464
  %v1466 = vpop.f32.mrb[0].mxu0
  %1467 = vdwg.mxu0
  %1470 = vrot.lane.b32.xlu0 %v1462, 64
  %v1471 = vpop.permute.xlu0 %1470
  %1472 = vrot.lane.b32.xlu0 %v1465, 64
  %v1473 = vpop.permute.xlu0 %1472
  %v1476 = vmul.f32 %v241, %v1471
  %v1477 = vmul.f32 %v244, %v1473
  %1480 = vrot.lane.b32.xlu0 %v1476, 64
  %v1481 = vpop.permute.xlu0 %1480
  %1482 = vrot.lane.b32.xlu0 %v1477, 64
  %v1483 = vpop.permute.xlu0 %1482
  %v1486 = vadd.f32 %v1105, %v1481
  %v1487 = vadd.f32 %v1106, %v1483
  %1488 = vst.msk [vmem:[%s17] sm:$0xff] %vm159, %v1486
  %1489 = vst.msk [vmem:[%s17 + $0x8] sm:$0xf] %vm250, %v1487
  // Predicated region
  $region70: #{fwd.21} parent=0 // pred_check
    _
  $region71: #{fwd.21} parent=0 // pred_check_branch
    %1491 = sbr.rel (0) target = $region73
  $region72: #{fwd.21} parent=0 // pred_region
    _
  $region73: #{fwd.21} parent=0 // pred_fallthru
    _
  // Predicated region
  $region74: #{fwd.21} parent=0 // pred_check
    _
  $region75: #{fwd.21} parent=0 // pred_check_branch
    %1493 = sbr.rel (0) target = $region77
  $region76: #{fwd.21} parent=0 // pred_region
    _
  $region77: #{fwd.21} parent=0 // pred_fallthru
    _

// kernel: fwd.26
$region0: #{fwd.26}
  #allocation0 [shape = 'u32[]', space=smem, size = 0x4, offset = 0x4, fixed_abs, tag = 'smem constant byte address 0x4 - core index']
  #allocation1 [shape = 'u32[144,128]{1,0:T(1,128)}', space=vmem, size = 0x12000, scoped, tag = 'internal scratch']
  %s0 = inlined_call_operand.vmem [shape: f32[12,64], index: 0, kind: input, shape index: {}]
  %s1 = inlined_call_operand.vmem [shape: f32[12,64], index: 1, kind: input, shape index: {}]
  %s2 = inlined_call_operand.vmem [shape: bf16[64,128], index: 2, kind: input, shape index: {}]
  %s3 = inlined_call_operand.vmem [shape: f32[1,128], index: 3, kind: input, shape index: {}]
  %s4 = inlined_call_operand.vmem [shape: bf16[64,16], index: 4, kind: input, shape index: {}]
  %s5 = inlined_call_operand.vmem [shape: f32[1,16], index: 5, kind: input, shape index: {}]
  %s6 = inlined_call_operand.vmem [shape: f32[12,16], index: 6, kind: output, shape index: {}]
  %s7 = sld [smem:[#allocation0]]
  $region34: #{fwd.26} parent=0
    _
  %s9 = ssub.s32 1, %s7
  %s10 = scalar_select 0, %s9, %s7
  // Predicated region
  $region2: #{fwd.26} parent=0 // pred_check
    _
  $region3: #{fwd.26} parent=0 // pred_check_branch
    %12 = sbr.rel (0) target = $region5
  $region4: #{fwd.26} parent=0 // pred_region
    _
  $region5: #{fwd.26} parent=0 // pred_fallthru
    _
  // Predicated region
  $region6: #{fwd.26} parent=0 // pred_check
    _
  $region7: #{fwd.26} parent=0 // pred_check_branch
    %14 = sbr.rel (0) target = $region9
  $region8: #{fwd.26} parent=0 // pred_region
    _
  $region9: #{fwd.26} parent=0 // pred_fallthru
    _
  // Predicated region
  $region10: #{fwd.26} parent=0 // pred_check
    _
  $region11: #{fwd.26} parent=0 // pred_check_branch
    %16 = sbr.rel (0) target = $region13
  $region12: #{fwd.26} parent=0 // pred_region
    _
  $region13: #{fwd.26} parent=0 // pred_fallthru
    _
  // Predicated region
  $region14: #{fwd.26} parent=0 // pred_check
    _
  $region15: #{fwd.26} parent=0 // pred_check_branch
    %18 = sbr.rel (0) target = $region17
  $region16: #{fwd.26} parent=0 // pred_region
    _
  $region17: #{fwd.26} parent=0 // pred_fallthru
    _
  // Predicated region
  $region18: #{fwd.26} parent=0 // pred_check
    _
  $region19: #{fwd.26} parent=0 // pred_check_branch
    %20 = sbr.rel (0) target = $region21
  $region20: #{fwd.26} parent=0 // pred_region
    _
  $region21: #{fwd.26} parent=0 // pred_fallthru
    _
  // Predicated region
  $region22: #{fwd.26} parent=0 // pred_check
    _
  $region23: #{fwd.26} parent=0 // pred_check_branch
    %22 = sbr.rel (0) target = $region25
  $region24: #{fwd.26} parent=0 // pred_region
    _
  $region25: #{fwd.26} parent=0 // pred_fallthru
    _
  %v24 = vld [vmem:[%s1] sm:$0xff]
  %v25 = vld [vmem:[%s1 + $0x8] sm:$0xf]
  %v26 = vpack.c.bf16 %v25, %v24
  %v27 = vld [vmem:[%s2] sm:$0xf]
  %v28 = vld [vmem:[%s2 + $0x4] sm:$0xf]
  %v29 = vld [vmem:[%s2 + $0x8] sm:$0xf]
  %v30 = vld [vmem:[%s2 + $0xc] sm:$0xf]
  %v31 = vld [vmem:[%s2 + $0x10] sm:$0xf]
  %v32 = vld [vmem:[%s2 + $0x14] sm:$0xf]
  %v33 = vld [vmem:[%s2 + $0x18] sm:$0xf]
  %v34 = vld [vmem:[%s2 + $0x1c] sm:$0xf]
  %v35 = vld [vmem:[%s3] sm:$0x1]
  %v37 = vlaneseq
  %v38 = vshrl.u32 %v37, 7
  %v39 = vsub.s32 0, %v38
  %v40 = vrot.slane %v35, %v39
  %v50 = vunpack.c.l.b16 %v27
  %v51 = vunpack.c.l.b16 %v28
  %v52 = vunpack.c.l.b16 %v29
  %v53 = vunpack.c.l.b16 %v30
  %v54 = vunpack.c.l.b16 %v31
  %v55 = vunpack.c.l.b16 %v32
  %v56 = vunpack.c.l.b16 %v33
  %v57 = vunpack.c.l.b16 %v34
  %v58 = vpack.c.b16 %v51, %v50
  %v59 = vpack.c.b16 %v53, %v52
  %v60 = vpack.c.b16 %v55, %v54
  %v61 = vpack.c.b16 %v57, %v56
  %vm66 = vcmask 523264
  %v68 = vsel %vm66, %v26, 0
  %70 = vmatprep.subr.bf16.mxu0 0
  %71 = vmatpush1.bf16.msra.mxu0 %v58
  %72 = vmatprep.subr.bf16.mxu0 0
  %73 = vmatpush1.bf16.msra.mxu0 %v59
  %74 = vmatprep.subr.bf16.mxu0 0
  %75 = vmatpush1.bf16.msra.mxu0 %v60
  %76 = vmatprep.subr.bf16.mxu0 0
  %77 = vmatpush1.bf16.msra.mxu0 %v61
  %78 = vmatprep.subr.bf16.mxu0 0
  %79 = vmatpush1.bf16.msra.mxu0 0
  %80 = vmatprep.subr.bf16.mxu0 0
  %81 = vmatpush1.bf16.msra.mxu0 0
  %82 = vmatprep.subr.bf16.mxu0 0
  %83 = vmatpush1.bf16.msra.mxu0 0
  %84 = vmatprep.subr.bf16.mxu0 0
  %85 = vmatpush1.bf16.msra.mxu0 0
  %86 = vmatprep.subr.bf16.mxu0 0
  %87 = vmatpush1.bf16.msra.mxu0 0
  %88 = vmatprep.subr.bf16.mxu0 0
  %89 = vmatpush1.bf16.msra.mxu0 0
  %90 = vmatprep.subr.bf16.mxu0 0
  %91 = vmatpush1.bf16.msra.mxu0 0
  %92 = vmatprep.subr.bf16.mxu0 0
  %93 = vmatpush1.bf16.msra.mxu0 0
  %94 = vmatprep.subr.bf16.mxu0 0
  %95 = vmatpush1.bf16.msra.mxu0 0
  %96 = vmatprep.subr.bf16.mxu0 0
  %97 = vmatpush1.bf16.msra.mxu0 0
  %98 = vmatprep.subr.bf16.mxu0 0
  %99 = vmatpush1.bf16.msra.mxu0 0
  %100 = vmatprep.subr.bf16.mxu0 0
  %101 = vmatpush1.bf16.msra.mxu0 0
  %102 = vmatprep.mubr.bf16.mxu0 0
  %103 = vmatmul.mubr.bf16.gmra.mrb[0].mxu0 %v68
  %v104 = vpop.f32.mrb[0].mxu0
  %v105 = vadd.f32 %v40, %v104
  %v106 = vpop.f32.mrb[0].mxu0
  %v107 = vpop.f32.mrb[0].mxu0
  %v108 = vadd.f32 %v40, %v107
  %v109 = vpop.f32.mrb[0].mxu0
  %110 = vdwg.mxu0
  %v111 = vld [vmem:[%s0] sm:$0xff]
  %v112 = vld [vmem:[%s0 + $0x8] sm:$0xf]
  %v113 = vsel %vm66, %v111, 0.0
  %114 = vadd.xlane.f32.xlu0 %v113
  %v115 = vpop.xlane.xlu0 %114
  %vm116 = vcmask 519168
  %v117 = vsel %vm116, %v112, 0.0
  %118 = vadd.xlane.f32.xlu0 %v117
  %v119 = vpop.xlane.xlu0 %118
  %v120 = vrcp.pop 64.0
  %v121 = vmul.f32 %v115, %v120
  %v122 = vmul.f32 %v119, %v120
  %v123 = vsub.f32 %v111, %v121
  %v124 = vsub.f32 %v112, %v122
  %v125 = vmul.f32 %v123, %v123
  %v126 = vmul.f32 %v124, %v124
  %v127 = vsel %vm66, %v125, 0.0
  %128 = vadd.xlane.f32.xlu0 %v127
  %v129 = vpop.xlane.xlu0 %128
  %v130 = vsel %vm116, %v126, 0.0
  %131 = vadd.xlane.f32.xlu0 %v130
  %v132 = vpop.xlane.xlu0 %131
  %v133 = vmul.f32 %v129, %v120
  %v134 = vmul.f32 %v132, %v120
  %v135 = vadd.f32 %v133, 1e-06
  %v136 = vadd.f32 %v134, 1e-06
  %v137 = vrsqrt.pop %v135
  %v138 = vrsqrt.pop %v136
  %v139 = vmul.f32 %v123, %v137
  %v140 = vmul.f32 %v124, %v138
  %v141 = vadd.f32 %v105, 1.0
  %v142 = vadd.f32 %v108, 1.0
  %145 = vrot.lane.b32.xlu0 %v141, 64
  %v146 = vpop.permute.xlu0 %145
  %147 = vrot.lane.b32.xlu0 %v142, 64
  %v148 = vpop.permute.xlu0 %147
  %v151 = vmul.f32 %v139, %v146
  %v152 = vmul.f32 %v140, %v148
  %v153 = vadd.f32 %v151, %v105
  %v154 = vadd.f32 %v152, %v108
  %v155 = vpack.c.bf16 %v154, %v153
  %v156 = vld [vmem:[%s4] sm:$0xf]
  %v157 = vld [vmem:[%s4 + $0x4] sm:$0xf]
  %v158 = vld [vmem:[%s4 + $0x8] sm:$0xf]
  %v159 = vld [vmem:[%s4 + $0xc] sm:$0xf]
  %v160 = vld [vmem:[%s4 + $0x10] sm:$0xf]
  %v161 = vld [vmem:[%s4 + $0x14] sm:$0xf]
  %v162 = vld [vmem:[%s4 + $0x18] sm:$0xf]
  %v163 = vld [vmem:[%s4 + $0x1c] sm:$0xf]
  %v164 = vld [vmem:[%s5] sm:$0x1]
  %v166 = vlaneseq
  %v167 = vshrl.u32 %v166, 7
  %v168 = vsub.s32 0, %v167
  %v169 = vrot.slane %v164, %v168
  %v179 = vunpack.c.l.b16 %v156
  %v180 = vunpack.c.l.b16 %v157
  %v181 = vunpack.c.l.b16 %v158
  %v182 = vunpack.c.l.b16 %v159
  %v183 = vunpack.c.l.b16 %v160
  %v184 = vunpack.c.l.b16 %v161
  %v185 = vunpack.c.l.b16 %v162
  %v186 = vunpack.c.l.b16 %v163
  %v187 = vpack.c.b16 %v180, %v179
  %v188 = vpack.c.b16 %v182, %v181
  %v189 = vpack.c.b16 %v184, %v183
  %v190 = vpack.c.b16 %v186, %v185
  %v196 = vsel %vm66, %v155, 0
  %198 = vmatprep.subr.bf16.mxu0 0
  %199 = vmatpush1.bf16.msra.mxu0 %v187
  %200 = vmatprep.subr.bf16.mxu0 0
  %201 = vmatpush1.bf16.msra.mxu0 %v188
  %202 = vmatprep.subr.bf16.mxu0 0
  %203 = vmatpush1.bf16.msra.mxu0 %v189
  %204 = vmatprep.subr.bf16.mxu0 0
  %205 = vmatpush1.bf16.msra.mxu0 %v190
  %206 = vmatprep.subr.bf16.mxu0 0
  %207 = vmatpush1.bf16.msra.mxu0 0
  %208 = vmatprep.subr.bf16.mxu0 0
  %209 = vmatpush1.bf16.msra.mxu0 0
  %210 = vmatprep.subr.bf16.mxu0 0
  %211 = vmatpush1.bf16.msra.mxu0 0
  %212 = vmatprep.subr.bf16.mxu0 0
  %213 = vmatpush1.bf16.msra.mxu0 0
  %214 = vmatprep.subr.bf16.mxu0 0
  %215 = vmatpush1.bf16.msra.mxu0 0
  %216 = vmatprep.subr.bf16.mxu0 0
  %217 = vmatpush1.bf16.msra.mxu0 0
  %218 = vmatprep.subr.bf16.mxu0 0
  %219 = vmatpush1.bf16.msra.mxu0 0
  %220 = vmatprep.subr.bf16.mxu0 0
  %221 = vmatpush1.bf16.msra.mxu0 0
  %222 = vmatprep.subr.bf16.mxu0 0
  %223 = vmatpush1.bf16.msra.mxu0 0
  %224 = vmatprep.subr.bf16.mxu0 0
  %225 = vmatpush1.bf16.msra.mxu0 0
  %226 = vmatprep.subr.bf16.mxu0 0
  %227 = vmatpush1.bf16.msra.mxu0 0
  %228 = vmatprep.subr.bf16.mxu0 0
  %229 = vmatpush1.bf16.msra.mxu0 0
  %230 = vmatprep.mubr.bf16.mxu0 0
  %231 = vmatmul.mubr.bf16.gmra.mrb[0].mxu0 %v196
  %v232 = vpop.f32.mrb[0].mxu0
  %v233 = vadd.f32 %v169, %v232
  %v234 = vpop.f32.mrb[0].mxu0
  %v235 = vpop.f32.mrb[0].mxu0
  %v236 = vadd.f32 %v169, %v235
  %v237 = vpop.f32.mrb[0].mxu0
  %238 = vdwg.mxu0
  %vm239 = vcmask 130048
  %240 = vst.msk [vmem:[%s6] sm:$0xff] %vm239, %v233
  %vm241 = vcmask 125952
  %242 = vst.msk [vmem:[%s6 + $0x8] sm:$0xf] %vm241, %v236
  // Predicated region
  $region26: #{fwd.26} parent=0 // pred_check
    _
  $region27: #{fwd.26} parent=0 // pred_check_branch
    %244 = sbr.rel (0) target = $region29
  $region28: #{fwd.26} parent=0 // pred_region
    _
  $region29: #{fwd.26} parent=0 // pred_fallthru
    _
  // Predicated region
  $region30: #{fwd.26} parent=0 // pred_check
    _
  $region31: #{fwd.26} parent=0 // pred_check_branch
    %246 = sbr.rel (0) target = $region33
  $region32: #{fwd.26} parent=0 // pred_region
    _
  $region33: #{fwd.26} parent=0 // pred_fallthru
    _

// kernel: fwd.27
$region0: #{fwd.27}
  #allocation0 [shape = 'u32[]', space=smem, size = 0x4, offset = 0x4, fixed_abs, tag = 'smem constant byte address 0x4 - core index']
  #allocation1 [shape = 'u32[144,128]{1,0:T(1,128)}', space=vmem, size = 0x12000, scoped, tag = 'internal scratch']
  %s0 = inlined_call_operand.vmem [shape: f32[7,32], index: 0, kind: input, shape index: {}]
  %s1 = inlined_call_operand.vmem [shape: f32[7,32], index: 1, kind: input, shape index: {}]
  %s2 = inlined_call_operand.vmem [shape: bf16[32,64], index: 2, kind: input, shape index: {}]
  %s3 = inlined_call_operand.vmem [shape: f32[1,64], index: 3, kind: input, shape index: {}]
  %s4 = inlined_call_operand.vmem [shape: bf16[32,8], index: 4, kind: input, shape index: {}]
  %s5 = inlined_call_operand.vmem [shape: f32[1,8], index: 5, kind: input, shape index: {}]
  %s6 = inlined_call_operand.vmem [shape: f32[7,8], index: 6, kind: output, shape index: {}]
  %s7 = sld [smem:[#allocation0]]
  $region34: #{fwd.27} parent=0
    _
  %s9 = ssub.s32 1, %s7
  %s10 = scalar_select 0, %s9, %s7
  // Predicated region
  $region2: #{fwd.27} parent=0 // pred_check
    _
  $region3: #{fwd.27} parent=0 // pred_check_branch
    %12 = sbr.rel (0) target = $region5
  $region4: #{fwd.27} parent=0 // pred_region
    _
  $region5: #{fwd.27} parent=0 // pred_fallthru
    _
  // Predicated region
  $region6: #{fwd.27} parent=0 // pred_check
    _
  $region7: #{fwd.27} parent=0 // pred_check_branch
    %14 = sbr.rel (0) target = $region9
  $region8: #{fwd.27} parent=0 // pred_region
    _
  $region9: #{fwd.27} parent=0 // pred_fallthru
    _
  // Predicated region
  $region10: #{fwd.27} parent=0 // pred_check
    _
  $region11: #{fwd.27} parent=0 // pred_check_branch
    %16 = sbr.rel (0) target = $region13
  $region12: #{fwd.27} parent=0 // pred_region
    _
  $region13: #{fwd.27} parent=0 // pred_fallthru
    _
  // Predicated region
  $region14: #{fwd.27} parent=0 // pred_check
    _
  $region15: #{fwd.27} parent=0 // pred_check_branch
    %18 = sbr.rel (0) target = $region17
  $region16: #{fwd.27} parent=0 // pred_region
    _
  $region17: #{fwd.27} parent=0 // pred_fallthru
    _
  // Predicated region
  $region18: #{fwd.27} parent=0 // pred_check
    _
  $region19: #{fwd.27} parent=0 // pred_check_branch
    %20 = sbr.rel (0) target = $region21
  $region20: #{fwd.27} parent=0 // pred_region
    _
  $region21: #{fwd.27} parent=0 // pred_fallthru
    _
  // Predicated region
  $region22: #{fwd.27} parent=0 // pred_check
    _
  $region23: #{fwd.27} parent=0 // pred_check_branch
    %22 = sbr.rel (0) target = $region25
  $region24: #{fwd.27} parent=0 // pred_region
    _
  $region25: #{fwd.27} parent=0 // pred_fallthru
    _
  %v24 = vld [vmem:[%s1] sm:$0x7f]
  %v25 = vpack.c.bf16 %v24, %v24
  %v26 = vld [vmem:[%s2] sm:$0xf]
  %v27 = vld [vmem:[%s2 + $0x4] sm:$0xf]
  %v28 = vld [vmem:[%s2 + $0x8] sm:$0xf]
  %v29 = vld [vmem:[%s2 + $0xc] sm:$0xf]
  %v30 = vld [vmem:[%s3] sm:$0x1]
  %v32 = vlaneseq
  %v33 = vshrl.u32 %v32, 7
  %v34 = vsub.s32 0, %v33
  %v35 = vrot.slane %v30, %v34
  %v41 = vunpack.c.l.b16 %v26
  %v42 = vunpack.c.l.b16 %v27
  %v43 = vunpack.c.l.b16 %v28
  %v44 = vunpack.c.l.b16 %v29
  %v45 = vpack.c.b16 %v42, %v41
  %v46 = vpack.c.b16 %v44, %v43
  %vm49 = vcmask 261120
  %v51 = vsel %vm49, %v25, 0
  %53 = vmatprep.subr.bf16.mxu0 0
  %54 = vmatpush1.bf16.msra.mxu0 %v45
  %55 = vmatprep.subr.bf16.mxu0 0
  %56 = vmatpush1.bf16.msra.mxu0 %v46
  %57 = vmatprep.subr.bf16.mxu0 0
  %58 = vmatpush1.bf16.msra.mxu0 0
  %59 = vmatprep.subr.bf16.mxu0 0
  %60 = vmatpush1.bf16.msra.mxu0 0
  %61 = vmatprep.subr.bf16.mxu0 0
  %62 = vmatpush1.bf16.msra.mxu0 0
  %63 = vmatprep.subr.bf16.mxu0 0
  %64 = vmatpush1.bf16.msra.mxu0 0
  %65 = vmatprep.subr.bf16.mxu0 0
  %66 = vmatpush1.bf16.msra.mxu0 0
  %67 = vmatprep.subr.bf16.mxu0 0
  %68 = vmatpush1.bf16.msra.mxu0 0
  %69 = vmatprep.subr.bf16.mxu0 0
  %70 = vmatpush1.bf16.msra.mxu0 0
  %71 = vmatprep.subr.bf16.mxu0 0
  %72 = vmatpush1.bf16.msra.mxu0 0
  %73 = vmatprep.subr.bf16.mxu0 0
  %74 = vmatpush1.bf16.msra.mxu0 0
  %75 = vmatprep.subr.bf16.mxu0 0
  %76 = vmatpush1.bf16.msra.mxu0 0
  %77 = vmatprep.subr.bf16.mxu0 0
  %78 = vmatpush1.bf16.msra.mxu0 0
  %79 = vmatprep.subr.bf16.mxu0 0
  %80 = vmatpush1.bf16.msra.mxu0 0
  %81 = vmatprep.subr.bf16.mxu0 0
  %82 = vmatpush1.bf16.msra.mxu0 0
  %83 = vmatprep.subr.bf16.mxu0 0
  %84 = vmatpush1.bf16.msra.mxu0 0
  %85 = vmatprep.mubr.bf16.mxu0 0
  %86 = vmatmul.mubr.bf16.gmra.mrb[0].mxu0 %v51
  %v87 = vpop.f32.mrb[0].mxu0
  %v88 = vadd.f32 %v35, %v87
  %v89 = vpop.f32.mrb[0].mxu0
  %v90 = vpop.f32.mrb[0].mxu0
  %v91 = vpop.f32.mrb[0].mxu0
  %92 = vdwg.mxu0
  %v93 = vld [vmem:[%s0] sm:$0x7f]
  %vm94 = vcmask 260096
  %v95 = vsel %vm94, %v93, 0.0
  %96 = vadd.xlane.f32.xlu0 %v95
  %v97 = vpop.xlane.xlu0 %96
  %v98 = vrcp.pop 32.0
  %v99 = vmul.f32 %v97, %v98
  %v100 = vsub.f32 %v93, %v99
  %v101 = vmul.f32 %v100, %v100
  %v102 = vsel %vm94, %v101, 0.0
  %103 = vadd.xlane.f32.xlu0 %v102
  %v104 = vpop.xlane.xlu0 %103
  %v105 = vmul.f32 %v104, %v98
  %v106 = vadd.f32 %v105, 1e-06
  %v107 = vrsqrt.pop %v106
  %v108 = vmul.f32 %v100, %v107
  %v109 = vadd.f32 %v88, 1.0
  %111 = vrot.lane.b32.xlu0 %v109, 96
  %v112 = vpop.permute.xlu0 %111
  %v114 = vmul.f32 %v108, %v112
  %v115 = vadd.f32 %v114, %v88
  %v116 = vpack.c.bf16 %v115, %v115
  %v117 = vld [vmem:[%s4] sm:$0xf]
  %v118 = vld [vmem:[%s4 + $0x4] sm:$0xf]
  %v119 = vld [vmem:[%s4 + $0x8] sm:$0xf]
  %v120 = vld [vmem:[%s4 + $0xc] sm:$0xf]
  %v121 = vld [vmem:[%s5] sm:$0x1]
  %v123 = vlaneseq
  %v124 = vshrl.u32 %v123, 7
  %v125 = vsub.s32 0, %v124
  %v126 = vrot.slane %v121, %v125
  %v132 = vunpack.c.l.b16 %v117
  %v133 = vunpack.c.l.b16 %v118
  %v134 = vunpack.c.l.b16 %v119
  %v135 = vunpack.c.l.b16 %v120
  %v136 = vpack.c.b16 %v133, %v132
  %v137 = vpack.c.b16 %v135, %v134
  %v141 = vsel %vm49, %v116, 0
  %143 = vmatprep.subr.bf16.mxu0 0
  %144 = vmatpush1.bf16.msra.mxu0 %v136
  %145 = vmatprep.subr.bf16.mxu0 0
  %146 = vmatpush1.bf16.msra.mxu0 %v137
  %147 = vmatprep.subr.bf16.mxu0 0
  %148 = vmatpush1.bf16.msra.mxu0 0
  %149 = vmatprep.subr.bf16.mxu0 0
  %150 = vmatpush1.bf16.msra.mxu0 0
  %151 = vmatprep.subr.bf16.mxu0 0
  %152 = vmatpush1.bf16.msra.mxu0 0
  %153 = vmatprep.subr.bf16.mxu0 0
  %154 = vmatpush1.bf16.msra.mxu0 0
  %155 = vmatprep.subr.bf16.mxu0 0
  %156 = vmatpush1.bf16.msra.mxu0 0
  %157 = vmatprep.subr.bf16.mxu0 0
  %158 = vmatpush1.bf16.msra.mxu0 0
  %159 = vmatprep.subr.bf16.mxu0 0
  %160 = vmatpush1.bf16.msra.mxu0 0
  %161 = vmatprep.subr.bf16.mxu0 0
  %162 = vmatpush1.bf16.msra.mxu0 0
  %163 = vmatprep.subr.bf16.mxu0 0
  %164 = vmatpush1.bf16.msra.mxu0 0
  %165 = vmatprep.subr.bf16.mxu0 0
  %166 = vmatpush1.bf16.msra.mxu0 0
  %167 = vmatprep.subr.bf16.mxu0 0
  %168 = vmatpush1.bf16.msra.mxu0 0
  %169 = vmatprep.subr.bf16.mxu0 0
  %170 = vmatpush1.bf16.msra.mxu0 0
  %171 = vmatprep.subr.bf16.mxu0 0
  %172 = vmatpush1.bf16.msra.mxu0 0
  %173 = vmatprep.subr.bf16.mxu0 0
  %174 = vmatpush1.bf16.msra.mxu0 0
  %175 = vmatprep.mubr.bf16.mxu0 0
  %176 = vmatmul.mubr.bf16.gmra.mrb[0].mxu0 %v141
  %v177 = vpop.f32.mrb[0].mxu0
  %v178 = vadd.f32 %v126, %v177
  %v179 = vpop.f32.mrb[0].mxu0
  %v180 = vpop.f32.mrb[0].mxu0
  %v181 = vpop.f32.mrb[0].mxu0
  %182 = vdwg.mxu0
  %vm183 = vcmask 63488
  %184 = vst.msk [vmem:[%s6] sm:$0x7f] %vm183, %v178
  // Predicated region
  $region26: #{fwd.27} parent=0 // pred_check
    _
  $region27: #{fwd.27} parent=0 // pred_check_branch
    %186 = sbr.rel (0) target = $region29
  $region28: #{fwd.27} parent=0 // pred_region
    _
  $region29: #{fwd.27} parent=0 // pred_fallthru
    _
  // Predicated region
  $region30: #{fwd.27} parent=0 // pred_check
    _
  $region31: #{fwd.27} parent=0 // pred_check_branch
    %188 = sbr.rel (0) target = $region33
  $region32: #{fwd.27} parent=0 // pred_region
    _
  $region33: #{fwd.27} parent=0 // pred_fallthru
    _

</llo_original>
